<compile_context>
chip_gen: v6e
topology: v6e:2x2x1
jax: 0.10.0
libtpu: 0.0.40
codegen_flags: <defaults>
</compile_context>

<pallas_src>
import functools

import jax
import jax.numpy as jnp
from jax.experimental import pallas as pl
from jax.experimental.pallas import tpu as pltpu

_LN_EPS = 1e-5
_ATTN_KEYS = ("wq", "bq", "wk", "bk", "wv", "bv", "wo", "bo", "ln_w", "ln_b")
_FFN_KEYS = ("w1", "b1", "w2", "b2", "ln_w", "ln_b")


# --------------------------------------------------------------------------- #
# In-kernel building blocks (pure value functions called from the fused kernels)
# --------------------------------------------------------------------------- #
def _ane_layer_norm(y, ln_w, ln_b, eps):
    """LayerNormANE: normalize over channels (last dim), then (out + bias) * weight."""
    mean = jnp.mean(y, axis=-1, keepdims=True)
    zm = y - mean
    var = jnp.mean(zm * zm, axis=-1, keepdims=True)
    return (zm * jax.lax.rsqrt(var + eps) + ln_b) * ln_w


def _residual_attention(x_q, x_kv, pos_q, pos_k, qk_mask, k_mask, p,
                        *, n_head, d_head, eps):
    """ResidualMultiHeadAttention: attention + residual(x_q) + LayerNormANE.

    x_q: (Sq, C) f32;   x_kv: (Sk, C) f32
    qk_mask: (Sq, Sk) f32 or None
    k_mask:  (1, Sk)  f32 or None (broadcast over queries in-kernel)
    p: (wq, bq, wk, bk, wv, bv, wo, bo, ln_w, ln_b); matmul weights in bf16.
    """
    wq, bq, wk, bk, wv, bv, wo, bo, ln_w, ln_b = p
    cdt = wq.dtype                                  # MXU compute dtype (bf16)

    q_in = x_q if pos_q is None else x_q + pos_q    # pos-embed on q, k only
    k_in = x_kv if pos_k is None else x_kv + pos_k

    # 1x1 conv == full-width channel matmul; f32 accumulation.
    q = jnp.dot(q_in.astype(cdt), wq, preferred_element_type=jnp.float32) + bq
    k = jnp.dot(k_in.astype(cdt), wk, preferred_element_type=jnp.float32) + bk
    v = jnp.dot(x_kv.astype(cdt), wv, preferred_element_type=jnp.float32) + bv

    add_mask = None
    if qk_mask is not None:
        add_mask = qk_mask
    if k_mask is not None:
        add_mask = k_mask if add_mask is None else add_mask + k_mask

    scale = float(d_head) ** -0.5
    acc = None
    for h in range(n_head):                         # static unroll, no concat / .T
        sl = slice(h * d_head, (h + 1) * d_head)
        qh = q[:, sl].astype(cdt)
        kh = k[:, sl].astype(cdt)
        vh = v[:, sl].astype(cdt)
        # scores = qh @ kh^T via contraction on the last dims of both operands.
        s = jax.lax.dot_general(qh, kh, (((1,), (1,)), ((), ())),
                                preferred_element_type=jnp.float32) * scale
        if add_mask is not None:
            s = s + add_mask
        m = jnp.max(s, axis=-1, keepdims=True)      # softmax over keys, f32
        e = jnp.exp(s - m)
        denom = jnp.sum(e, axis=-1, keepdims=True)
        prob = e * pl.reciprocal(denom, approx=True)
        ctx = jnp.dot(prob.astype(cdt), vh, preferred_element_type=jnp.float32)
        # Fold this head's context straight into the output projection.
        contrib = jnp.dot(ctx.astype(cdt), wo[sl, :],
                          preferred_element_type=jnp.float32)
        acc = contrib if acc is None else acc + contrib
    out = acc + bo

    y = x_q + out                 # residual on the un-pos-embedded query input
    return _ane_layer_norm(y, ln_w, ln_b, eps)


def _residual_ffn(x, p, *, eps):
    w1, b1, w2, b2, ln_w, ln_b = p
    cdt = w1.dtype
    h = jnp.dot(x.astype(cdt), w1, preferred_element_type=jnp.float32) + b1
    h = jnp.maximum(h, 0.0)                         # ReLU
    r = jnp.dot(h.astype(cdt), w2, preferred_element_type=jnp.float32) + b2
    return _ane_layer_norm(x + r, ln_w, ln_b, eps)


# --------------------------------------------------------------------------- #
# Fused stack kernels: grid = (batch, layer); activation resident in VMEM scratch
# --------------------------------------------------------------------------- #
def _encoder_kernel(*refs, n_head, d_head, eps, has_pos, has_qk, has_km):
    it = iter(refs)
    x_ref = next(it)
    pos_ref = next(it) if has_pos else None
    qkm_ref = next(it) if has_qk else None
    km_ref = next(it) if has_km else None
    attn_refs = tuple(next(it) for _ in range(len(_ATTN_KEYS)))
    ffn_refs = tuple(next(it) for _ in range(len(_FFN_KEYS)))
    o_ref = next(it)
    act_ref = next(it)

    layer = pl.program_id(1)

    @pl.when(layer == 0)
    def _():
        act_ref[...] = x_ref[0].astype(jnp.float32)

    x = act_ref[...]
    pos = pos_ref[0].astype(jnp.float32) if has_pos else None
    qkm = qkm_ref[0] if has_qk else None
    km = km_ref[0] if has_km else None

    y = _residual_attention(x, x, pos, pos, qkm, km,
                            tuple(r[0] for r in attn_refs),
                            n_head=n_head, d_head=d_head, eps=eps)
    y = _residual_ffn(y, tuple(r[0] for r in ffn_refs), eps=eps)

    act_ref[...] = y

    @pl.when(layer == pl.num_programs(1) - 1)
    def _():
        o_ref[0] = y.astype(o_ref.dtype)


def _decoder_kernel(*refs, n_head, d_head, eps,
                    has_dpos, has_epos, has_dqk, has_dkm, has_ekm):
    it = iter(refs)
    y_ref = next(it)
    mem_ref = next(it)
    dpos_ref = next(it) if has_dpos else None
    epos_ref = next(it) if has_epos else None
    dqk_ref = next(it) if has_dqk else None
    dkm_ref = next(it) if has_dkm else None
    ekm_ref = next(it) if has_ekm else None
    self_refs = tuple(next(it) for _ in range(len(_ATTN_KEYS)))
    cross_refs = tuple(next(it) for _ in range(len(_ATTN_KEYS)))
    ffn_refs = tuple(next(it) for _ in range(len(_FFN_KEYS)))
    o_ref = next(it)
    act_ref = next(it)

    layer = pl.program_id(1)

    @pl.when(layer == 0)
    def _():
        act_ref[...] = y_ref[0].astype(jnp.float32)

    y = act_ref[...]
    mem = mem_ref[0].astype(jnp.float32)
    dpos = dpos_ref[0].astype(jnp.float32) if has_dpos else None
    epos = epos_ref[0].astype(jnp.float32) if has_epos else None
    dqk = dqk_ref[0] if has_dqk else None
    dkm = dkm_ref[0] if has_dkm else None
    ekm = ekm_ref[0] if has_ekm else None

    # Masked self-attention on the decoder stream.
    y = _residual_attention(y, y, dpos, dpos, dqk, dkm,
                            tuple(r[0] for r in self_refs),
                            n_head=n_head, d_head=d_head, eps=eps)
    # Encoder-decoder cross-attention (no qk_mask; k_mask = encoder_k_mask).
    y = _residual_attention(y, mem, dpos, epos, None, ekm,
                            tuple(r[0] for r in cross_refs),
                            n_head=n_head, d_head=d_head, eps=eps)
    y = _residual_ffn(y, tuple(r[0] for r in ffn_refs), eps=eps)

    act_ref[...] = y

    @pl.when(layer == pl.num_programs(1) - 1)
    def _():
        o_ref[0] = y.astype(o_ref.dtype)


# --------------------------------------------------------------------------- #
# pallas_call wrappers
# --------------------------------------------------------------------------- #
def _bmap(b, l):        # per-batch block, constant across the layer axis
    return (b, 0, 0)


def _lmap(b, l):        # per-layer weight block, constant across the batch axis
    return (l, 0, 0)


def encoder_forward(x, pos, qk_mask, k_mask, layer_params, *, n_head):
    """x: (B, S, C) f32.  Runs the whole encoder stack in ONE pallas_call."""
    B, S, C = x.shape
    attn_p, ffn_p = layer_params["self_attn"], layer_params["ffn"]
    n_layers = attn_p["wq"].shape[0]
    d_head = C // n_head

    in_specs, args = [], []

    def add(arr, imap):
        in_specs.append(pl.BlockSpec((1,) + arr.shape[1:], imap))
        args.append(arr)

    add(x, _bmap)
    if pos is not None:
        add(pos, _bmap)
    if qk_mask is not None:
        add(qk_mask, _bmap)
    if k_mask is not None:
        add(k_mask, _bmap)
    for key in _ATTN_KEYS:
        add(attn_p[key], _lmap)
    for key in _FFN_KEYS:
        add(ffn_p[key], _lmap)

    kernel = functools.partial(
        _encoder_kernel, n_head=n_head, d_head=d_head, eps=_LN_EPS,
        has_pos=pos is not None, has_qk=qk_mask is not None,
        has_km=k_mask is not None)

    return pl.pallas_call(
        kernel,
        out_shape=jax.ShapeDtypeStruct((B, S, C), jnp.float32),
        grid=(B, n_layers),
        in_specs=in_specs,
        out_specs=pl.BlockSpec((1, S, C), _bmap),
        scratch_shapes=[pltpu.VMEM((S, C), jnp.float32)],
        compiler_params=pltpu.CompilerParams(
            dimension_semantics=("parallel", "arbitrary")),
    )(*args)


def decoder_forward(y, memory, dec_pos, enc_pos, dec_qk, dec_km, enc_km,
                    layer_params, *, n_head):
    """y: (B, St, C), memory: (B, Ss, C).  Whole decoder stack in ONE pallas_call."""
    B, St, C = y.shape
    self_p = layer_params["self_attn"]
    cross_p = layer_params["cross_attn"]
    ffn_p = layer_params["ffn"]
    n_layers = self_p["wq"].shape[0]
    d_head = C // n_head

    in_specs, args = [], []

    def add(arr, imap):
        in_specs.append(pl.BlockSpec((1,) + arr.shape[1:], imap))
        args.append(arr)

    add(y, _bmap)
    add(memory, _bmap)
    if dec_pos is not None:
        add(dec_pos, _bmap)
    if enc_pos is not None:
        add(enc_pos, _bmap)
    if dec_qk is not None:
        add(dec_qk, _bmap)
    if dec_km is not None:
        add(dec_km, _bmap)
    if enc_km is not None:
        add(enc_km, _bmap)
    for key in _ATTN_KEYS:
        add(self_p[key], _lmap)
    for key in _ATTN_KEYS:
        add(cross_p[key], _lmap)
    for key in _FFN_KEYS:
        add(ffn_p[key], _lmap)

    kernel = functools.partial(
        _decoder_kernel, n_head=n_head, d_head=d_head, eps=_LN_EPS,
        has_dpos=dec_pos is not None, has_epos=enc_pos is not None,
        has_dqk=dec_qk is not None, has_dkm=dec_km is not None,
        has_ekm=enc_km is not None)

    return pl.pallas_call(
        kernel,
        out_shape=jax.ShapeDtypeStruct((B, St, C), jnp.float32),
        grid=(B, n_layers),
        in_specs=in_specs,
        out_specs=pl.BlockSpec((1, St, C), _bmap),
        scratch_shapes=[pltpu.VMEM((St, C), jnp.float32)],
        compiler_params=pltpu.CompilerParams(
            dimension_semantics=("parallel", "arbitrary")),
    )(*args)


# --------------------------------------------------------------------------- #
# Parameter construction (deterministic, synthetic; layers stacked on axis 0)
# --------------------------------------------------------------------------- #
def _init_attn_params(key, n_layers, C, w_dtype):
    ks = jax.random.split(key, 10)
    s = float(C) ** -0.5

    def w(k, shape):
        return (s * jax.random.normal(k, shape, jnp.float32)).astype(w_dtype)

    return dict(
        wq=w(ks[0], (n_layers, C, C)),
        bq=0.01 * jax.random.normal(ks[1], (n_layers, 1, C), jnp.float32),
        wk=w(ks[2], (n_layers, C, C)),
        bk=0.01 * jax.random.normal(ks[3], (n_layers, 1, C), jnp.float32),
        wv=w(ks[4], (n_layers, C, C)),
        bv=0.01 * jax.random.normal(ks[5], (n_layers, 1, C), jnp.float32),
        wo=w(ks[6], (n_layers, C, C)),
        bo=0.01 * jax.random.normal(ks[7], (n_layers, 1, C), jnp.float32),
        ln_w=1.0 + 0.01 * jax.random.normal(ks[8], (n_layers, 1, C), jnp.float32),
        ln_b=0.01 * jax.random.normal(ks[9], (n_layers, 1, C), jnp.float32),
    )


def _init_ffn_params(key, n_layers, C, F, w_dtype):
    ks = jax.random.split(key, 6)
    return dict(
        w1=(float(C) ** -0.5
            * jax.random.normal(ks[0], (n_layers, C, F), jnp.float32)).astype(w_dtype),
        b1=0.01 * jax.random.normal(ks[1], (n_layers, 1, F), jnp.float32),
        w2=(float(F) ** -0.5
            * jax.random.normal(ks[2], (n_layers, F, C), jnp.float32)).astype(w_dtype),
        b2=0.01 * jax.random.normal(ks[3], (n_layers, 1, C), jnp.float32),
        ln_w=1.0 + 0.01 * jax.random.normal(ks[4], (n_layers, 1, C), jnp.float32),
        ln_b=0.01 * jax.random.normal(ks[5], (n_layers, 1, C), jnp.float32),
    )


def init_transformer_params(key, *, embed_dim, ffn_dim, nb_enc_layers,
                            nb_dec_layers, w_dtype=jnp.bfloat16):
    ke = jax.random.split(jax.random.fold_in(key, 0), 2)
    kd = jax.random.split(jax.random.fold_in(key, 1), 3)
    return dict(
        encoder=dict(
            self_attn=_init_attn_params(ke[0], nb_enc_layers, embed_dim, w_dtype),
            ffn=_init_ffn_params(ke[1], nb_enc_layers, embed_dim, ffn_dim, w_dtype),
        ),
        decoder=dict(
            self_attn=_init_attn_params(kd[0], nb_dec_layers, embed_dim, w_dtype),
            cross_attn=_init_attn_params(kd[1], nb_dec_layers, embed_dim, w_dtype),
            ffn=_init_ffn_params(kd[2], nb_dec_layers, embed_dim, ffn_dim, w_dtype),
        ),
    )


# --------------------------------------------------------------------------- #
# Full forward pass (layout glue in plain JAX, all compute in 2 Pallas calls)
# --------------------------------------------------------------------------- #
def ane_transformer_forward(params, encoder_input, decoder_input,
                            encoder_pos_embed=None, decoder_pos_embed=None,
                            encoder_k_mask=None, decoder_k_mask=None,
                            encoder_qk_mask=None, decoder_qk_mask=None,
                            *, n_head):
    f32 = jnp.float32

    def to_bsc(x):      # (B, C, 1, S) -> (B, S, C)
        return jnp.transpose(x[:, :, 0, :], (0, 2, 1)).astype(f32)

    def to_bc1s(x):     # (B, S, C) -> (B, C, 1, S)
        return jnp.transpose(x, (0, 2, 1))[:, :, None, :]

    def qk_t(m):        # torch (B, Sk, 1, Sq) -> (B, Sq, Sk); None stays None
        return None if m is None else jnp.transpose(m[:, :, 0, :], (0, 2, 1)).astype(f32)

    def km_t(m):        # torch (B, Sk, 1, 1) -> (B, 1, Sk); broadcast happens in-kernel
        return None if m is None else m[:, :, 0, 0].astype(f32)[:, None, :]

    enc_x = to_bsc(encoder_input)
    dec_x = to_bsc(decoder_input)
    enc_pos = to_bsc(encoder_pos_embed) if encoder_pos_embed is not None else None
    dec_pos = to_bsc(decoder_pos_embed) if decoder_pos_embed is not None else None
    enc_qk = qk_t(encoder_qk_mask)
    enc_km = km_t(encoder_k_mask)
    dec_qk = qk_t(decoder_qk_mask)
    dec_km = km_t(decoder_k_mask)

    # ---- Encoder stack (single fused kernel) ----
    memory = encoder_forward(enc_x, enc_pos, enc_qk, enc_km,
                             params["encoder"], n_head=n_head)

    # ---- Decoder stack (single fused kernel: self-attn + cross-attn + ffn) ----
    dec_out = decoder_forward(dec_x, memory, dec_pos, enc_pos,
                              dec_qk, dec_km, enc_km,
                              params["decoder"], n_head=n_head)

    # TODO(synk): return_intermediate_decoder_layers=True (stacking all decoder
    # layer outputs) not wired up; only the default False path is implemented.
    return to_bc1s(dec_out), to_bc1s(memory)


# --------------------------------------------------------------------------- #
# Demo
# --------------------------------------------------------------------------- #
if __name__ == "__main__":
    # Small, module-consistent, lane-dense configuration (embed_dim multiple of 128).
    B = 2
    EMBED_DIM = 128
    FFN_DIM = 256
    N_HEAD = 4
    N_ENC = 2
    N_DEC = 2
    S_SRC = 16
    S_TGT = 16

    key = jax.random.PRNGKey(0)
    k_in = jax.random.split(key, 4)

    # PyTorch-convention NCHW inputs: (B, C, 1, S)
    encoder_input = jax.random.normal(k_in[0], (B, EMBED_DIM, 1, S_SRC), jnp.float32)
    decoder_input = jax.random.normal(k_in[1], (B, EMBED_DIM, 1, S_TGT), jnp.float32)
    encoder_pos_embed = 0.1 * jax.random.normal(k_in[2], (B, EMBED_DIM, 1, S_SRC), jnp.float32)
    decoder_pos_embed = 0.1 * jax.random.normal(k_in[3], (B, EMBED_DIM, 1, S_TGT), jnp.float32)

    # Additive masks: 0 keeps attention, -1e4 prevents it (per the reference docs).
    # Mask the last source token (simulated padding) -> exercises k_mask in both
    # encoder self-attention and decoder cross-attention.
    encoder_k_mask = jnp.zeros((B, S_SRC, 1, 1), jnp.float32).at[:, -1, 0, 0].set(-1e4)
    # Causal decoder self-attention mask, torch layout (B, key, 1, query).
    k_idx = jnp.arange(S_TGT)[:, None]
    q_idx = jnp.arange(S_TGT)[None, :]
    causal = jnp.where(k_idx > q_idx, -1e4, 0.0).astype(jnp.float32)
    decoder_qk_mask = jnp.broadcast_to(causal[None, :, None, :], (B, S_TGT, 1, S_TGT))

    params = init_transformer_params(jax.random.PRNGKey(42),
                                     embed_dim=EMBED_DIM, ffn_dim=FFN_DIM,
                                     nb_enc_layers=N_ENC, nb_dec_layers=N_DEC)

    fwd = jax.jit(functools.partial(ane_transformer_forward, params, n_head=N_HEAD))
    decoder_output, encoder_output = fwd(
        encoder_input, decoder_input,
        encoder_pos_embed=encoder_pos_embed, decoder_pos_embed=decoder_pos_embed,
        encoder_k_mask=encoder_k_mask, decoder_k_mask=None,
        encoder_qk_mask=None, decoder_qk_mask=decoder_qk_mask)
    jax.block_until_ready((decoder_output, encoder_output))

    assert decoder_output.shape == (B, EMBED_DIM, 1, S_TGT)
    assert encoder_output.shape == (B, EMBED_DIM, 1, S_SRC)
    assert bool(jnp.all(jnp.isfinite(decoder_output)))
    assert bool(jnp.all(jnp.isfinite(encoder_output)))
    print("KERNEL_OK")
</pallas_src>

<mosaic_0001>
module attributes {stable_mosaic.version = 11 : i64} {
  func.func @_encoder_kernel(%arg0: i32, %arg1: i32, %arg2: memref<1x16x128xf32, #tpu.memory_space<vmem>>, %arg3: memref<1x16x128xf32, #tpu.memory_space<vmem>>, %arg4: memref<1x1x16xf32, #tpu.memory_space<vmem>>, %arg5: memref<1x128x128xbf16, #tpu.memory_space<vmem>>, %arg6: memref<1x1x128xf32, #tpu.memory_space<vmem>>, %arg7: memref<1x128x128xbf16, #tpu.memory_space<vmem>>, %arg8: memref<1x1x128xf32, #tpu.memory_space<vmem>>, %arg9: memref<1x128x128xbf16, #tpu.memory_space<vmem>>, %arg10: memref<1x1x128xf32, #tpu.memory_space<vmem>>, %arg11: memref<1x128x128xbf16, #tpu.memory_space<vmem>>, %arg12: memref<1x1x128xf32, #tpu.memory_space<vmem>>, %arg13: memref<1x1x128xf32, #tpu.memory_space<vmem>>, %arg14: memref<1x1x128xf32, #tpu.memory_space<vmem>>, %arg15: memref<1x128x256xbf16, #tpu.memory_space<vmem>>, %arg16: memref<1x1x256xf32, #tpu.memory_space<vmem>>, %arg17: memref<1x256x128xbf16, #tpu.memory_space<vmem>>, %arg18: memref<1x1x128xf32, #tpu.memory_space<vmem>>, %arg19: memref<1x1x128xf32, #tpu.memory_space<vmem>>, %arg20: memref<1x1x128xf32, #tpu.memory_space<vmem>>, %arg21: memref<1x16x128xf32, #tpu.memory_space<vmem>>, %arg22: memref<16x128xf32, #tpu.memory_space<vmem>>) attributes {dimension_semantics = [#tpu.dimension_semantics<parallel>, #tpu.dimension_semantics<arbitrary>], iteration_bounds = array<i64: 2, 2>, scalar_prefetch = 0 : i64, scratch_operands = 1 : i64, tpu.core_type = #tpu.core_type<tc>, window_params = [{transform_indices = @transform_0, window_bounds = array<i64: 1, 16, 128>}, {transform_indices = @transform_1, window_bounds = array<i64: 1, 16, 128>}, {transform_indices = @transform_2, window_bounds = array<i64: 1, 1, 16>}, {transform_indices = @transform_3, window_bounds = array<i64: 1, 128, 128>}, {transform_indices = @transform_4, window_bounds = array<i64: 1, 1, 128>}, {transform_indices = @transform_5, window_bounds = array<i64: 1, 128, 128>}, {transform_indices = @transform_6, window_bounds = array<i64: 1, 1, 128>}, {transform_indices = @transform_7, window_bounds = array<i64: 1, 128, 128>}, {transform_indices = @transform_8, window_bounds = array<i64: 1, 1, 128>}, {transform_indices = @transform_9, window_bounds = array<i64: 1, 128, 128>}, {transform_indices = @transform_10, window_bounds = array<i64: 1, 1, 128>}, {transform_indices = @transform_11, window_bounds = array<i64: 1, 1, 128>}, {transform_indices = @transform_12, window_bounds = array<i64: 1, 1, 128>}, {transform_indices = @transform_13, window_bounds = array<i64: 1, 128, 256>}, {transform_indices = @transform_14, window_bounds = array<i64: 1, 1, 256>}, {transform_indices = @transform_15, window_bounds = array<i64: 1, 256, 128>}, {transform_indices = @transform_16, window_bounds = array<i64: 1, 1, 128>}, {transform_indices = @transform_17, window_bounds = array<i64: 1, 1, 128>}, {transform_indices = @transform_18, window_bounds = array<i64: 1, 1, 128>}, {transform_indices = @transform_19, window_bounds = array<i64: 1, 16, 128>}]} {
    %c0_i32 = arith.constant 0 : i32
    %0 = arith.cmpi eq, %arg1, %c0_i32 : i32
    %1 = arith.extui %0 : i1 to i32
    %c0_i32_0 = arith.constant 0 : i32
    %2 = arith.cmpi ne, %1, %c0_i32_0 : i32
    scf.if %2 {
      %c0_98 = arith.constant 0 : index
      %c0_99 = arith.constant 0 : index
      %c0_100 = arith.constant 0 : index
      %219 = vector.load %arg2[%c0_98, %c0_99, %c0_100] : memref<1x16x128xf32, #tpu.memory_space<vmem>>, vector<1x16x128xf32>
      %220 = vector.shape_cast %219 : vector<1x16x128xf32> to vector<16x128xf32>
      %c0_101 = arith.constant 0 : index
      %c0_102 = arith.constant 0 : index
      %221 = vector.load %arg22[%c0_101, %c0_102] : memref<16x128xf32, #tpu.memory_space<vmem>>, vector<16x128xf32>
      tpu.vector_store %arg22[%c0_101, %c0_102], %220 {strides = array<i32>} : memref<16x128xf32, #tpu.memory_space<vmem>>, vector<16x128xf32>,
    } else {
    }
    %c0 = arith.constant 0 : index
    %c0_1 = arith.constant 0 : index
    %3 = vector.load %arg22[%c0, %c0_1] : memref<16x128xf32, #tpu.memory_space<vmem>>, vector<16x128xf32>
    %c0_2 = arith.constant 0 : index
    %c0_3 = arith.constant 0 : index
    %c0_4 = arith.constant 0 : index
    %4 = vector.load %arg3[%c0_2, %c0_3, %c0_4] : memref<1x16x128xf32, #tpu.memory_space<vmem>>, vector<1x16x128xf32>
    %5 = vector.shape_cast %4 : vector<1x16x128xf32> to vector<16x128xf32>
    %c0_5 = arith.constant 0 : index
    %c0_6 = arith.constant 0 : index
    %c0_7 = arith.constant 0 : index
    %6 = vector.load %arg4[%c0_5, %c0_6, %c0_7] : memref<1x1x16xf32, #tpu.memory_space<vmem>>, vector<1x1x16xf32>
    %7 = vector.shape_cast %6 : vector<1x1x16xf32> to vector<1x16xf32>
    %c0_8 = arith.constant 0 : index
    %c0_9 = arith.constant 0 : index
    %c0_10 = arith.constant 0 : index
    %8 = vector.load %arg5[%c0_8, %c0_9, %c0_10] : memref<1x128x128xbf16, #tpu.memory_space<vmem>>, vector<1x128x128xbf16>
    %9 = vector.shape_cast %8 : vector<1x128x128xbf16> to vector<128x128xbf16>
    %c0_11 = arith.constant 0 : index
    %c0_12 = arith.constant 0 : index
    %c0_13 = arith.constant 0 : index
    %10 = vector.load %arg6[%c0_11, %c0_12, %c0_13] : memref<1x1x128xf32, #tpu.memory_space<vmem>>, vector<1x1x128xf32>
    %11 = vector.shape_cast %10 : vector<1x1x128xf32> to vector<1x128xf32>
    %c0_14 = arith.constant 0 : index
    %c0_15 = arith.constant 0 : index
    %c0_16 = arith.constant 0 : index
    %12 = vector.load %arg7[%c0_14, %c0_15, %c0_16] : memref<1x128x128xbf16, #tpu.memory_space<vmem>>, vector<1x128x128xbf16>
    %13 = vector.shape_cast %12 : vector<1x128x128xbf16> to vector<128x128xbf16>
    %c0_17 = arith.constant 0 : index
    %c0_18 = arith.constant 0 : index
    %c0_19 = arith.constant 0 : index
    %14 = vector.load %arg8[%c0_17, %c0_18, %c0_19] : memref<1x1x128xf32, #tpu.memory_space<vmem>>, vector<1x1x128xf32>
    %15 = vector.shape_cast %14 : vector<1x1x128xf32> to vector<1x128xf32>
    %c0_20 = arith.constant 0 : index
    %c0_21 = arith.constant 0 : index
    %c0_22 = arith.constant 0 : index
    %16 = vector.load %arg9[%c0_20, %c0_21, %c0_22] : memref<1x128x128xbf16, #tpu.memory_space<vmem>>, vector<1x128x128xbf16>
    %17 = vector.shape_cast %16 : vector<1x128x128xbf16> to vector<128x128xbf16>
    %c0_23 = arith.constant 0 : index
    %c0_24 = arith.constant 0 : index
    %c0_25 = arith.constant 0 : index
    %18 = vector.load %arg10[%c0_23, %c0_24, %c0_25] : memref<1x1x128xf32, #tpu.memory_space<vmem>>, vector<1x1x128xf32>
    %19 = vector.shape_cast %18 : vector<1x1x128xf32> to vector<1x128xf32>
    %c0_26 = arith.constant 0 : index
    %c0_27 = arith.constant 0 : index
    %c0_28 = arith.constant 0 : index
    %20 = vector.load %arg11[%c0_26, %c0_27, %c0_28] : memref<1x128x128xbf16, #tpu.memory_space<vmem>>, vector<1x128x128xbf16>
    %21 = vector.shape_cast %20 : vector<1x128x128xbf16> to vector<128x128xbf16>
    %c0_29 = arith.constant 0 : index
    %c0_30 = arith.constant 0 : index
    %c0_31 = arith.constant 0 : index
    %22 = vector.load %arg12[%c0_29, %c0_30, %c0_31] : memref<1x1x128xf32, #tpu.memory_space<vmem>>, vector<1x1x128xf32>
    %23 = vector.shape_cast %22 : vector<1x1x128xf32> to vector<1x128xf32>
    %c0_32 = arith.constant 0 : index
    %c0_33 = arith.constant 0 : index
    %c0_34 = arith.constant 0 : index
    %24 = vector.load %arg13[%c0_32, %c0_33, %c0_34] : memref<1x1x128xf32, #tpu.memory_space<vmem>>, vector<1x1x128xf32>
    %25 = vector.shape_cast %24 : vector<1x1x128xf32> to vector<1x128xf32>
    %c0_35 = arith.constant 0 : index
    %c0_36 = arith.constant 0 : index
    %c0_37 = arith.constant 0 : index
    %26 = vector.load %arg14[%c0_35, %c0_36, %c0_37] : memref<1x1x128xf32, #tpu.memory_space<vmem>>, vector<1x1x128xf32>
    %27 = vector.shape_cast %26 : vector<1x1x128xf32> to vector<1x128xf32>
    %28 = arith.addf %3, %5 : vector<16x128xf32>
    %29 = arith.addf %3, %5 : vector<16x128xf32>
    %30 = arith.truncf %28 : vector<16x128xf32> to vector<16x128xbf16>
    %cst = arith.constant dense<0.000000e+00> : vector<16x128xf32>
    %31 = tpu.matmul %30, %9, %cst {dimension_numbers = #tpu.dot_dimension_numbers<[1], [0], [0], [1], [0, 0, 1, 1], [], []>} : vector<16x128xbf16>, vector<128x128xbf16>, vector<16x128xf32> -> vector<16x128xf32>
    %32 = vector.broadcast %11 : vector<1x128xf32> to vector<16x128xf32>
    %33 = arith.addf %31, %32 : vector<16x128xf32>
    %34 = arith.truncf %29 : vector<16x128xf32> to vector<16x128xbf16>
    %cst_38 = arith.constant dense<0.000000e+00> : vector<16x128xf32>
    %35 = tpu.matmul %34, %13, %cst_38 {dimension_numbers = #tpu.dot_dimension_numbers<[1], [0], [0], [1], [0, 0, 1, 1], [], []>} : vector<16x128xbf16>, vector<128x128xbf16>, vector<16x128xf32> -> vector<16x128xf32>
    %36 = vector.broadcast %15 : vector<1x128xf32> to vector<16x128xf32>
    %37 = arith.addf %35, %36 : vector<16x128xf32>
    %38 = arith.truncf %3 : vector<16x128xf32> to vector<16x128xbf16>
    %cst_39 = arith.constant dense<0.000000e+00> : vector<16x128xf32>
    %39 = tpu.matmul %38, %17, %cst_39 {dimension_numbers = #tpu.dot_dimension_numbers<[1], [0], [0], [1], [0, 0, 1, 1], [], []>} : vector<16x128xbf16>, vector<128x128xbf16>, vector<16x128xf32> -> vector<16x128xf32>
    %40 = vector.broadcast %19 : vector<1x128xf32> to vector<16x128xf32>
    %41 = arith.addf %39, %40 : vector<16x128xf32>
    %42 = vector.extract_strided_slice %33 {offsets = [0, 0], sizes = [16, 32], strides = [1, 1]} : vector<16x128xf32> to vector<16x32xf32>
    %43 = arith.truncf %42 : vector<16x32xf32> to vector<16x32xbf16>
    %44 = vector.extract_strided_slice %37 {offsets = [0, 0], sizes = [16, 32], strides = [1, 1]} : vector<16x128xf32> to vector<16x32xf32>
    %45 = arith.truncf %44 : vector<16x32xf32> to vector<16x32xbf16>
    %46 = vector.extract_strided_slice %41 {offsets = [0, 0], sizes = [16, 32], strides = [1, 1]} : vector<16x128xf32> to vector<16x32xf32>
    %47 = arith.truncf %46 : vector<16x32xf32> to vector<16x32xbf16>
    %cst_40 = arith.constant dense<0.000000e+00> : vector<16x16xf32>
    %48 = tpu.matmul %43, %45, %cst_40 {dimension_numbers = #tpu.dot_dimension_numbers<[1], [1], [0], [0], [0, 0, 1, 0], [], []>} : vector<16x32xbf16>, vector<16x32xbf16>, vector<16x16xf32> -> vector<16x16xf32>
    %cst_41 = arith.constant 0.176776692 : f32
    %49 = vector.broadcast %cst_41 : f32 to vector<16x16xf32>
    %50 = arith.mulf %48, %49 : vector<16x16xf32>
    %51 = vector.broadcast %7 : vector<1x16xf32> to vector<16x16xf32>
    %52 = arith.addf %50, %51 : vector<16x16xf32>
    %cst_42 = arith.constant dense<0xFF800000> : vector<16xf32>
    %53 = vector.multi_reduction <maximumf>, %52, %cst_42 [1] : vector<16x16xf32> to vector<16xf32>
    %54 = vector.shape_cast %53 : vector<16xf32> to vector<16x1xf32>
    %55 = vector.broadcast %54 : vector<16x1xf32> to vector<16x16xf32>
    %56 = arith.subf %52, %55 : vector<16x16xf32>
    %57 = math.exp %56 : vector<16x16xf32>
    %cst_43 = arith.constant dense<0.000000e+00> : vector<16xf32>
    %58 = vector.multi_reduction <add>, %57, %cst_43 [1] : vector<16x16xf32> to vector<16xf32>
    %59 = vector.shape_cast %58 : vector<16xf32> to vector<16x1xf32>
    %60 = tpu.reciprocal %59 {approx = true} : vector<16x1xf32> -> vector<16x1xf32>
    %61 = vector.broadcast %60 : vector<16x1xf32> to vector<16x16xf32>
    %62 = arith.mulf %57, %61 : vector<16x16xf32>
    %63 = arith.truncf %62 : vector<16x16xf32> to vector<16x16xbf16>
    %cst_44 = arith.constant dense<0.000000e+00> : vector<16x32xf32>
    %64 = tpu.matmul %63, %47, %cst_44 {dimension_numbers = #tpu.dot_dimension_numbers<[1], [0], [0], [1], [0, 0, 1, 1], [], []>} : vector<16x16xbf16>, vector<16x32xbf16>, vector<16x32xf32> -> vector<16x32xf32>
    %65 = arith.truncf %64 : vector<16x32xf32> to vector<16x32xbf16>
    %66 = vector.extract_strided_slice %21 {offsets = [0, 0], sizes = [32, 128], strides = [1, 1]} : vector<128x128xbf16> to vector<32x128xbf16>
    %cst_45 = arith.constant dense<0.000000e+00> : vector<16x128xf32>
    %67 = tpu.matmul %65, %66, %cst_45 {dimension_numbers = #tpu.dot_dimension_numbers<[1], [0], [0], [1], [0, 0, 1, 1], [], []>} : vector<16x32xbf16>, vector<32x128xbf16>, vector<16x128xf32> -> vector<16x128xf32>
    %68 = vector.extract_strided_slice %33 {offsets = [0, 32], sizes = [16, 32], strides = [1, 1]} : vector<16x128xf32> to vector<16x32xf32>
    %69 = arith.truncf %68 : vector<16x32xf32> to vector<16x32xbf16>
    %70 = vector.extract_strided_slice %37 {offsets = [0, 32], sizes = [16, 32], strides = [1, 1]} : vector<16x128xf32> to vector<16x32xf32>
    %71 = arith.truncf %70 : vector<16x32xf32> to vector<16x32xbf16>
    %72 = vector.extract_strided_slice %41 {offsets = [0, 32], sizes = [16, 32], strides = [1, 1]} : vector<16x128xf32> to vector<16x32xf32>
    %73 = arith.truncf %72 : vector<16x32xf32> to vector<16x32xbf16>
    %cst_46 = arith.constant dense<0.000000e+00> : vector<16x16xf32>
    %74 = tpu.matmul %69, %71, %cst_46 {dimension_numbers = #tpu.dot_dimension_numbers<[1], [1], [0], [0], [0, 0, 1, 0], [], []>} : vector<16x32xbf16>, vector<16x32xbf16>, vector<16x16xf32> -> vector<16x16xf32>
    %cst_47 = arith.constant 0.176776692 : f32
    %75 = vector.broadcast %cst_47 : f32 to vector<16x16xf32>
    %76 = arith.mulf %74, %75 : vector<16x16xf32>
    %77 = vector.broadcast %7 : vector<1x16xf32> to vector<16x16xf32>
    %78 = arith.addf %76, %77 : vector<16x16xf32>
    %cst_48 = arith.constant dense<0xFF800000> : vector<16xf32>
    %79 = vector.multi_reduction <maximumf>, %78, %cst_48 [1] : vector<16x16xf32> to vector<16xf32>
    %80 = vector.shape_cast %79 : vector<16xf32> to vector<16x1xf32>
    %81 = vector.broadcast %80 : vector<16x1xf32> to vector<16x16xf32>
    %82 = arith.subf %78, %81 : vector<16x16xf32>
    %83 = math.exp %82 : vector<16x16xf32>
    %cst_49 = arith.constant dense<0.000000e+00> : vector<16xf32>
    %84 = vector.multi_reduction <add>, %83, %cst_49 [1] : vector<16x16xf32> to vector<16xf32>
    %85 = vector.shape_cast %84 : vector<16xf32> to vector<16x1xf32>
    %86 = tpu.reciprocal %85 {approx = true} : vector<16x1xf32> -> vector<16x1xf32>
    %87 = vector.broadcast %86 : vector<16x1xf32> to vector<16x16xf32>
    %88 = arith.mulf %83, %87 : vector<16x16xf32>
    %89 = arith.truncf %88 : vector<16x16xf32> to vector<16x16xbf16>
    %cst_50 = arith.constant dense<0.000000e+00> : vector<16x32xf32>
    %90 = tpu.matmul %89, %73, %cst_50 {dimension_numbers = #tpu.dot_dimension_numbers<[1], [0], [0], [1], [0, 0, 1, 1], [], []>} : vector<16x16xbf16>, vector<16x32xbf16>, vector<16x32xf32> -> vector<16x32xf32>
    %91 = arith.truncf %90 : vector<16x32xf32> to vector<16x32xbf16>
    %92 = vector.extract_strided_slice %21 {offsets = [32, 0], sizes = [32, 128], strides = [1, 1]} : vector<128x128xbf16> to vector<32x128xbf16>
    %cst_51 = arith.constant dense<0.000000e+00> : vector<16x128xf32>
    %93 = tpu.matmul %91, %92, %cst_51 {dimension_numbers = #tpu.dot_dimension_numbers<[1], [0], [0], [1], [0, 0, 1, 1], [], []>} : vector<16x32xbf16>, vector<32x128xbf16>, vector<16x128xf32> -> vector<16x128xf32>
    %94 = arith.addf %67, %93 : vector<16x128xf32>
    %95 = vector.extract_strided_slice %33 {offsets = [0, 64], sizes = [16, 32], strides = [1, 1]} : vector<16x128xf32> to vector<16x32xf32>
    %96 = arith.truncf %95 : vector<16x32xf32> to vector<16x32xbf16>
    %97 = vector.extract_strided_slice %37 {offsets = [0, 64], sizes = [16, 32], strides = [1, 1]} : vector<16x128xf32> to vector<16x32xf32>
    %98 = arith.truncf %97 : vector<16x32xf32> to vector<16x32xbf16>
    %99 = vector.extract_strided_slice %41 {offsets = [0, 64], sizes = [16, 32], strides = [1, 1]} : vector<16x128xf32> to vector<16x32xf32>
    %100 = arith.truncf %99 : vector<16x32xf32> to vector<16x32xbf16>
    %cst_52 = arith.constant dense<0.000000e+00> : vector<16x16xf32>
    %101 = tpu.matmul %96, %98, %cst_52 {dimension_numbers = #tpu.dot_dimension_numbers<[1], [1], [0], [0], [0, 0, 1, 0], [], []>} : vector<16x32xbf16>, vector<16x32xbf16>, vector<16x16xf32> -> vector<16x16xf32>
    %cst_53 = arith.constant 0.176776692 : f32
    %102 = vector.broadcast %cst_53 : f32 to vector<16x16xf32>
    %103 = arith.mulf %101, %102 : vector<16x16xf32>
    %104 = vector.broadcast %7 : vector<1x16xf32> to vector<16x16xf32>
    %105 = arith.addf %103, %104 : vector<16x16xf32>
    %cst_54 = arith.constant dense<0xFF800000> : vector<16xf32>
    %106 = vector.multi_reduction <maximumf>, %105, %cst_54 [1] : vector<16x16xf32> to vector<16xf32>
    %107 = vector.shape_cast %106 : vector<16xf32> to vector<16x1xf32>
    %108 = vector.broadcast %107 : vector<16x1xf32> to vector<16x16xf32>
    %109 = arith.subf %105, %108 : vector<16x16xf32>
    %110 = math.exp %109 : vector<16x16xf32>
    %cst_55 = arith.constant dense<0.000000e+00> : vector<16xf32>
    %111 = vector.multi_reduction <add>, %110, %cst_55 [1] : vector<16x16xf32> to vector<16xf32>
    %112 = vector.shape_cast %111 : vector<16xf32> to vector<16x1xf32>
    %113 = tpu.reciprocal %112 {approx = true} : vector<16x1xf32> -> vector<16x1xf32>
    %114 = vector.broadcast %113 : vector<16x1xf32> to vector<16x16xf32>
    %115 = arith.mulf %110, %114 : vector<16x16xf32>
    %116 = arith.truncf %115 : vector<16x16xf32> to vector<16x16xbf16>
    %cst_56 = arith.constant dense<0.000000e+00> : vector<16x32xf32>
    %117 = tpu.matmul %116, %100, %cst_56 {dimension_numbers = #tpu.dot_dimension_numbers<[1], [0], [0], [1], [0, 0, 1, 1], [], []>} : vector<16x16xbf16>, vector<16x32xbf16>, vector<16x32xf32> -> vector<16x32xf32>
    %118 = arith.truncf %117 : vector<16x32xf32> to vector<16x32xbf16>
    %119 = vector.extract_strided_slice %21 {offsets = [64, 0], sizes = [32, 128], strides = [1, 1]} : vector<128x128xbf16> to vector<32x128xbf16>
    %cst_57 = arith.constant dense<0.000000e+00> : vector<16x128xf32>
    %120 = tpu.matmul %118, %119, %cst_57 {dimension_numbers = #tpu.dot_dimension_numbers<[1], [0], [0], [1], [0, 0, 1, 1], [], []>} : vector<16x32xbf16>, vector<32x128xbf16>, vector<16x128xf32> -> vector<16x128xf32>
    %121 = arith.addf %94, %120 : vector<16x128xf32>
    %122 = vector.extract_strided_slice %33 {offsets = [0, 96], sizes = [16, 32], strides = [1, 1]} : vector<16x128xf32> to vector<16x32xf32>
    %123 = arith.truncf %122 : vector<16x32xf32> to vector<16x32xbf16>
    %124 = vector.extract_strided_slice %37 {offsets = [0, 96], sizes = [16, 32], strides = [1, 1]} : vector<16x128xf32> to vector<16x32xf32>
    %125 = arith.truncf %124 : vector<16x32xf32> to vector<16x32xbf16>
    %126 = vector.extract_strided_slice %41 {offsets = [0, 96], sizes = [16, 32], strides = [1, 1]} : vector<16x128xf32> to vector<16x32xf32>
    %127 = arith.truncf %126 : vector<16x32xf32> to vector<16x32xbf16>
    %cst_58 = arith.constant dense<0.000000e+00> : vector<16x16xf32>
    %128 = tpu.matmul %123, %125, %cst_58 {dimension_numbers = #tpu.dot_dimension_numbers<[1], [1], [0], [0], [0, 0, 1, 0], [], []>} : vector<16x32xbf16>, vector<16x32xbf16>, vector<16x16xf32> -> vector<16x16xf32>
    %cst_59 = arith.constant 0.176776692 : f32
    %129 = vector.broadcast %cst_59 : f32 to vector<16x16xf32>
    %130 = arith.mulf %128, %129 : vector<16x16xf32>
    %131 = vector.broadcast %7 : vector<1x16xf32> to vector<16x16xf32>
    %132 = arith.addf %130, %131 : vector<16x16xf32>
    %cst_60 = arith.constant dense<0xFF800000> : vector<16xf32>
    %133 = vector.multi_reduction <maximumf>, %132, %cst_60 [1] : vector<16x16xf32> to vector<16xf32>
    %134 = vector.shape_cast %133 : vector<16xf32> to vector<16x1xf32>
    %135 = vector.broadcast %134 : vector<16x1xf32> to vector<16x16xf32>
    %136 = arith.subf %132, %135 : vector<16x16xf32>
    %137 = math.exp %136 : vector<16x16xf32>
    %cst_61 = arith.constant dense<0.000000e+00> : vector<16xf32>
    %138 = vector.multi_reduction <add>, %137, %cst_61 [1] : vector<16x16xf32> to vector<16xf32>
    %139 = vector.shape_cast %138 : vector<16xf32> to vector<16x1xf32>
    %140 = tpu.reciprocal %139 {approx = true} : vector<16x1xf32> -> vector<16x1xf32>
    %141 = vector.broadcast %140 : vector<16x1xf32> to vector<16x16xf32>
    %142 = arith.mulf %137, %141 : vector<16x16xf32>
    %143 = arith.truncf %142 : vector<16x16xf32> to vector<16x16xbf16>
    %cst_62 = arith.constant dense<0.000000e+00> : vector<16x32xf32>
    %144 = tpu.matmul %143, %127, %cst_62 {dimension_numbers = #tpu.dot_dimension_numbers<[1], [0], [0], [1], [0, 0, 1, 1], [], []>} : vector<16x16xbf16>, vector<16x32xbf16>, vector<16x32xf32> -> vector<16x32xf32>
    %145 = arith.truncf %144 : vector<16x32xf32> to vector<16x32xbf16>
    %146 = vector.extract_strided_slice %21 {offsets = [96, 0], sizes = [32, 128], strides = [1, 1]} : vector<128x128xbf16> to vector<32x128xbf16>
    %cst_63 = arith.constant dense<0.000000e+00> : vector<16x128xf32>
    %147 = tpu.matmul %145, %146, %cst_63 {dimension_numbers = #tpu.dot_dimension_numbers<[1], [0], [0], [1], [0, 0, 1, 1], [], []>} : vector<16x32xbf16>, vector<32x128xbf16>, vector<16x128xf32> -> vector<16x128xf32>
    %148 = arith.addf %121, %147 : vector<16x128xf32>
    %149 = vector.broadcast %23 : vector<1x128xf32> to vector<16x128xf32>
    %150 = arith.addf %148, %149 : vector<16x128xf32>
    %151 = arith.addf %3, %150 : vector<16x128xf32>
    %cst_64 = arith.constant dense<0.000000e+00> : vector<16xf32>
    %152 = vector.multi_reduction <add>, %151, %cst_64 [1] : vector<16x128xf32> to vector<16xf32>
    %153 = vector.shape_cast %152 : vector<16xf32> to vector<16x1xf32>
    %cst_65 = arith.constant 1.280000e+02 : f32
    %154 = vector.broadcast %cst_65 : f32 to vector<16x1xf32>
    %155 = arith.divf %153, %154 : vector<16x1xf32>
    %156 = vector.broadcast %155 : vector<16x1xf32> to vector<16x128xf32>
    %157 = arith.subf %151, %156 : vector<16x128xf32>
    %158 = arith.mulf %157, %157 : vector<16x128xf32>
    %cst_66 = arith.constant dense<0.000000e+00> : vector<16xf32>
    %159 = vector.multi_reduction <add>, %158, %cst_66 [1] : vector<16x128xf32> to vector<16xf32>
    %160 = vector.shape_cast %159 : vector<16xf32> to vector<16x1xf32>
    %cst_67 = arith.constant 1.280000e+02 : f32
    %161 = vector.broadcast %cst_67 : f32 to vector<16x1xf32>
    %162 = arith.divf %160, %161 : vector<16x1xf32>
    %cst_68 = arith.constant 9.99999974E-6 : f32
    %163 = vector.broadcast %cst_68 : f32 to vector<16x1xf32>
    %164 = arith.addf %162, %163 : vector<16x1xf32>
    %165 = math.rsqrt %164 : vector<16x1xf32>
    %166 = vector.broadcast %165 : vector<16x1xf32> to vector<16x128xf32>
    %167 = arith.mulf %157, %166 : vector<16x128xf32>
    %168 = vector.broadcast %27 : vector<1x128xf32> to vector<16x128xf32>
    %169 = arith.addf %167, %168 : vector<16x128xf32>
    %170 = vector.broadcast %25 : vector<1x128xf32> to vector<16x128xf32>
    %171 = arith.mulf %169, %170 : vector<16x128xf32>
    %c0_69 = arith.constant 0 : index
    %c0_70 = arith.constant 0 : index
    %c0_71 = arith.constant 0 : index
    %172 = vector.load %arg15[%c0_69, %c0_70, %c0_71] : memref<1x128x256xbf16, #tpu.memory_space<vmem>>, vector<1x128x256xbf16>
    %173 = vector.shape_cast %172 : vector<1x128x256xbf16> to vector<128x256xbf16>
    %c0_72 = arith.constant 0 : index
    %c0_73 = arith.constant 0 : index
    %c0_74 = arith.constant 0 : index
    %174 = vector.load %arg16[%c0_72, %c0_73, %c0_74] : memref<1x1x256xf32, #tpu.memory_space<vmem>>, vector<1x1x256xf32>
    %175 = vector.shape_cast %174 : vector<1x1x256xf32> to vector<1x256xf32>
    %c0_75 = arith.constant 0 : index
    %c0_76 = arith.constant 0 : index
    %c0_77 = arith.constant 0 : index
    %176 = vector.load %arg17[%c0_75, %c0_76, %c0_77] : memref<1x256x128xbf16, #tpu.memory_space<vmem>>, vector<1x256x128xbf16>
    %177 = vector.shape_cast %176 : vector<1x256x128xbf16> to vector<256x128xbf16>
    %c0_78 = arith.constant 0 : index
    %c0_79 = arith.constant 0 : index
    %c0_80 = arith.constant 0 : index
    %178 = vector.load %arg18[%c0_78, %c0_79, %c0_80] : memref<1x1x128xf32, #tpu.memory_space<vmem>>, vector<1x1x128xf32>
    %179 = vector.shape_cast %178 : vector<1x1x128xf32> to vector<1x128xf32>
    %c0_81 = arith.constant 0 : index
    %c0_82 = arith.constant 0 : index
    %c0_83 = arith.constant 0 : index
    %180 = vector.load %arg19[%c0_81, %c0_82, %c0_83] : memref<1x1x128xf32, #tpu.memory_space<vmem>>, vector<1x1x128xf32>
    %181 = vector.shape_cast %180 : vector<1x1x128xf32> to vector<1x128xf32>
    %c0_84 = arith.constant 0 : index
    %c0_85 = arith.constant 0 : index
    %c0_86 = arith.constant 0 : index
    %182 = vector.load %arg20[%c0_84, %c0_85, %c0_86] : memref<1x1x128xf32, #tpu.memory_space<vmem>>, vector<1x1x128xf32>
    %183 = vector.shape_cast %182 : vector<1x1x128xf32> to vector<1x128xf32>
    %184 = arith.truncf %171 : vector<16x128xf32> to vector<16x128xbf16>
    %cst_87 = arith.constant dense<0.000000e+00> : vector<16x256xf32>
    %185 = tpu.matmul %184, %173, %cst_87 {dimension_numbers = #tpu.dot_dimension_numbers<[1], [0], [0], [1], [0, 0, 1, 1], [], []>} : vector<16x128xbf16>, vector<128x256xbf16>, vector<16x256xf32> -> vector<16x256xf32>
    %186 = vector.broadcast %175 : vector<1x256xf32> to vector<16x256xf32>
    %187 = arith.addf %185, %186 : vector<16x256xf32>
    %cst_88 = arith.constant 0.000000e+00 : f32
    %188 = vector.broadcast %cst_88 : f32 to vector<16x256xf32>
    %189 = arith.maximumf %187, %188 : vector<16x256xf32>
    %190 = arith.truncf %189 : vector<16x256xf32> to vector<16x256xbf16>
    %cst_89 = arith.constant dense<0.000000e+00> : vector<16x128xf32>
    %191 = tpu.matmul %190, %177, %cst_89 {dimension_numbers = #tpu.dot_dimension_numbers<[1], [0], [0], [1], [0, 0, 1, 1], [], []>} : vector<16x256xbf16>, vector<256x128xbf16>, vector<16x128xf32> -> vector<16x128xf32>
    %192 = vector.broadcast %179 : vector<1x128xf32> to vector<16x128xf32>
    %193 = arith.addf %191, %192 : vector<16x128xf32>
    %194 = arith.addf %171, %193 : vector<16x128xf32>
    %cst_90 = arith.constant dense<0.000000e+00> : vector<16xf32>
    %195 = vector.multi_reduction <add>, %194, %cst_90 [1] : vector<16x128xf32> to vector<16xf32>
    %196 = vector.shape_cast %195 : vector<16xf32> to vector<16x1xf32>
    %cst_91 = arith.constant 1.280000e+02 : f32
    %197 = vector.broadcast %cst_91 : f32 to vector<16x1xf32>
    %198 = arith.divf %196, %197 : vector<16x1xf32>
    %199 = vector.broadcast %198 : vector<16x1xf32> to vector<16x128xf32>
    %200 = arith.subf %194, %199 : vector<16x128xf32>
    %201 = arith.mulf %200, %200 : vector<16x128xf32>
    %cst_92 = arith.constant dense<0.000000e+00> : vector<16xf32>
    %202 = vector.multi_reduction <add>, %201, %cst_92 [1] : vector<16x128xf32> to vector<16xf32>
    %203 = vector.shape_cast %202 : vector<16xf32> to vector<16x1xf32>
    %cst_93 = arith.constant 1.280000e+02 : f32
    %204 = vector.broadcast %cst_93 : f32 to vector<16x1xf32>
    %205 = arith.divf %203, %204 : vector<16x1xf32>
    %cst_94 = arith.constant 9.99999974E-6 : f32
    %206 = vector.broadcast %cst_94 : f32 to vector<16x1xf32>
    %207 = arith.addf %205, %206 : vector<16x1xf32>
    %208 = math.rsqrt %207 : vector<16x1xf32>
    %209 = vector.broadcast %208 : vector<16x1xf32> to vector<16x128xf32>
    %210 = arith.mulf %200, %209 : vector<16x128xf32>
    %211 = vector.broadcast %183 : vector<1x128xf32> to vector<16x128xf32>
    %212 = arith.addf %210, %211 : vector<16x128xf32>
    %213 = vector.broadcast %181 : vector<1x128xf32> to vector<16x128xf32>
    %214 = arith.mulf %212, %213 : vector<16x128xf32>
    %c0_95 = arith.constant 0 : index
    %c0_96 = arith.constant 0 : index
    %215 = vector.load %arg22[%c0_95, %c0_96] : memref<16x128xf32, #tpu.memory_space<vmem>>, vector<16x128xf32>
    tpu.vector_store %arg22[%c0_95, %c0_96], %214 {strides = array<i32>} : memref<16x128xf32, #tpu.memory_space<vmem>>, vector<16x128xf32>,
    %c1_i32 = arith.constant 1 : i32
    %216 = arith.cmpi eq, %arg1, %c1_i32 : i32
    %217 = arith.extui %216 : i1 to i32
    %c0_i32_97 = arith.constant 0 : i32
    %218 = arith.cmpi ne, %217, %c0_i32_97 : i32
    scf.if %218 {
      %c0_98 = arith.constant 0 : index
      %c0_99 = arith.constant 0 : index
      %c0_100 = arith.constant 0 : index
      %219 = vector.load %arg21[%c0_98, %c0_99, %c0_100] : memref<1x16x128xf32, #tpu.memory_space<vmem>>, vector<1x16x128xf32>
      %220 = vector.shape_cast %219 : vector<1x16x128xf32> to vector<16x128xf32>
      %221 = vector.shape_cast %214 : vector<16x128xf32> to vector<1x16x128xf32>
      tpu.vector_store %arg21[%c0_98, %c0_99, %c0_100], %221 {strides = array<i32>} : memref<1x16x128xf32, #tpu.memory_space<vmem>>, vector<1x16x128xf32>,
    } else {
    }
    return
  }
  func.func @transform_0(%arg0: i32, %arg1: i32) -> (i32, i32, i32) {
    %c0_i32 = arith.constant 0 : i32
    %c0_i32_0 = arith.constant 0 : i32
    %c0_i32_1 = arith.constant 0 : i32
    return %arg0, %c0_i32, %c0_i32_0 : i32, i32, i32
  }
  func.func @transform_1(%arg0: i32, %arg1: i32) -> (i32, i32, i32) {
    %c0_i32 = arith.constant 0 : i32
    %c0_i32_0 = arith.constant 0 : i32
    %c0_i32_1 = arith.constant 0 : i32
    return %arg0, %c0_i32, %c0_i32_0 : i32, i32, i32
  }
  func.func @transform_2(%arg0: i32, %arg1: i32) -> (i32, i32, i32) {
    %c0_i32 = arith.constant 0 : i32
    %c0_i32_0 = arith.constant 0 : i32
    %c0_i32_1 = arith.constant 0 : i32
    return %arg0, %c0_i32, %c0_i32_0 : i32, i32, i32
  }
  func.func @transform_3(%arg0: i32, %arg1: i32) -> (i32, i32, i32) {
    %c0_i32 = arith.constant 0 : i32
    %c0_i32_0 = arith.constant 0 : i32
    %c0_i32_1 = arith.constant 0 : i32
    return %arg1, %c0_i32, %c0_i32_0 : i32, i32, i32
  }
  func.func @transform_4(%arg0: i32, %arg1: i32) -> (i32, i32, i32) {
    %c0_i32 = arith.constant 0 : i32
    %c0_i32_0 = arith.constant 0 : i32
    %c0_i32_1 = arith.constant 0 : i32
    return %arg1, %c0_i32, %c0_i32_0 : i32, i32, i32
  }
  func.func @transform_5(%arg0: i32, %arg1: i32) -> (i32, i32, i32) {
    %c0_i32 = arith.constant 0 : i32
    %c0_i32_0 = arith.constant 0 : i32
    %c0_i32_1 = arith.constant 0 : i32
    return %arg1, %c0_i32, %c0_i32_0 : i32, i32, i32
  }
  func.func @transform_6(%arg0: i32, %arg1: i32) -> (i32, i32, i32) {
    %c0_i32 = arith.constant 0 : i32
    %c0_i32_0 = arith.constant 0 : i32
    %c0_i32_1 = arith.constant 0 : i32
    return %arg1, %c0_i32, %c0_i32_0 : i32, i32, i32
  }
  func.func @transform_7(%arg0: i32, %arg1: i32) -> (i32, i32, i32) {
    %c0_i32 = arith.constant 0 : i32
    %c0_i32_0 = arith.constant 0 : i32
    %c0_i32_1 = arith.constant 0 : i32
    return %arg1, %c0_i32, %c0_i32_0 : i32, i32, i32
  }
  func.func @transform_8(%arg0: i32, %arg1: i32) -> (i32, i32, i32) {
    %c0_i32 = arith.constant 0 : i32
    %c0_i32_0 = arith.constant 0 : i32
    %c0_i32_1 = arith.constant 0 : i32
    return %arg1, %c0_i32, %c0_i32_0 : i32, i32, i32
  }
  func.func @transform_9(%arg0: i32, %arg1: i32) -> (i32, i32, i32) {
    %c0_i32 = arith.constant 0 : i32
    %c0_i32_0 = arith.constant 0 : i32
    %c0_i32_1 = arith.constant 0 : i32
    return %arg1, %c0_i32, %c0_i32_0 : i32, i32, i32
  }
  func.func @transform_10(%arg0: i32, %arg1: i32) -> (i32, i32, i32) {
    %c0_i32 = arith.constant 0 : i32
    %c0_i32_0 = arith.constant 0 : i32
    %c0_i32_1 = arith.constant 0 : i32
    return %arg1, %c0_i32, %c0_i32_0 : i32, i32, i32
  }
  func.func @transform_11(%arg0: i32, %arg1: i32) -> (i32, i32, i32) {
    %c0_i32 = arith.constant 0 : i32
    %c0_i32_0 = arith.constant 0 : i32
    %c0_i32_1 = arith.constant 0 : i32
    return %arg1, %c0_i32, %c0_i32_0 : i32, i32, i32
  }
  func.func @transform_12(%arg0: i32, %arg1: i32) -> (i32, i32, i32) {
    %c0_i32 = arith.constant 0 : i32
    %c0_i32_0 = arith.constant 0 : i32
    %c0_i32_1 = arith.constant 0 : i32
    return %arg1, %c0_i32, %c0_i32_0 : i32, i32, i32
  }
  func.func @transform_13(%arg0: i32, %arg1: i32) -> (i32, i32, i32) {
    %c0_i32 = arith.constant 0 : i32
    %c0_i32_0 = arith.constant 0 : i32
    %c0_i32_1 = arith.constant 0 : i32
    return %arg1, %c0_i32, %c0_i32_0 : i32, i32, i32
  }
  func.func @transform_14(%arg0: i32, %arg1: i32) -> (i32, i32, i32) {
    %c0_i32 = arith.constant 0 : i32
    %c0_i32_0 = arith.constant 0 : i32
    %c0_i32_1 = arith.constant 0 : i32
    return %arg1, %c0_i32, %c0_i32_0 : i32, i32, i32
  }
  func.func @transform_15(%arg0: i32, %arg1: i32) -> (i32, i32, i32) {
    %c0_i32 = arith.constant 0 : i32
    %c0_i32_0 = arith.constant 0 : i32
    %c0_i32_1 = arith.constant 0 : i32
    return %arg1, %c0_i32, %c0_i32_0 : i32, i32, i32
  }
  func.func @transform_16(%arg0: i32, %arg1: i32) -> (i32, i32, i32) {
    %c0_i32 = arith.constant 0 : i32
    %c0_i32_0 = arith.constant 0 : i32
    %c0_i32_1 = arith.constant 0 : i32
    return %arg1, %c0_i32, %c0_i32_0 : i32, i32, i32
  }
  func.func @transform_17(%arg0: i32, %arg1: i32) -> (i32, i32, i32) {
    %c0_i32 = arith.constant 0 : i32
    %c0_i32_0 = arith.constant 0 : i32
    %c0_i32_1 = arith.constant 0 : i32
    return %arg1, %c0_i32, %c0_i32_0 : i32, i32, i32
  }
  func.func @transform_18(%arg0: i32, %arg1: i32) -> (i32, i32, i32) {
    %c0_i32 = arith.constant 0 : i32
    %c0_i32_0 = arith.constant 0 : i32
    %c0_i32_1 = arith.constant 0 : i32
    return %arg1, %c0_i32, %c0_i32_0 : i32, i32, i32
  }
  func.func @transform_19(%arg0: i32, %arg1: i32) -> (i32, i32, i32) {
    %c0_i32 = arith.constant 0 : i32
    %c0_i32_0 = arith.constant 0 : i32
    %c0_i32_1 = arith.constant 0 : i32
    return %arg0, %c0_i32, %c0_i32_0 : i32, i32, i32
  }
}

module attributes {stable_mosaic.version = 11 : i64} {
  func.func @_decoder_kernel(%arg0: i32, %arg1: i32, %arg2: memref<1x16x128xf32, #tpu.memory_space<vmem>>, %arg3: memref<1x16x128xf32, #tpu.memory_space<vmem>>, %arg4: memref<1x16x128xf32, #tpu.memory_space<vmem>>, %arg5: memref<1x16x128xf32, #tpu.memory_space<vmem>>, %arg6: memref<1x16x16xf32, #tpu.memory_space<vmem>>, %arg7: memref<1x1x16xf32, #tpu.memory_space<vmem>>, %arg8: memref<1x128x128xbf16, #tpu.memory_space<vmem>>, %arg9: memref<1x1x128xf32, #tpu.memory_space<vmem>>, %arg10: memref<1x128x128xbf16, #tpu.memory_space<vmem>>, %arg11: memref<1x1x128xf32, #tpu.memory_space<vmem>>, %arg12: memref<1x128x128xbf16, #tpu.memory_space<vmem>>, %arg13: memref<1x1x128xf32, #tpu.memory_space<vmem>>, %arg14: memref<1x128x128xbf16, #tpu.memory_space<vmem>>, %arg15: memref<1x1x128xf32, #tpu.memory_space<vmem>>, %arg16: memref<1x1x128xf32, #tpu.memory_space<vmem>>, %arg17: memref<1x1x128xf32, #tpu.memory_space<vmem>>, %arg18: memref<1x128x128xbf16, #tpu.memory_space<vmem>>, %arg19: memref<1x1x128xf32, #tpu.memory_space<vmem>>, %arg20: memref<1x128x128xbf16, #tpu.memory_space<vmem>>, %arg21: memref<1x1x128xf32, #tpu.memory_space<vmem>>, %arg22: memref<1x128x128xbf16, #tpu.memory_space<vmem>>, %arg23: memref<1x1x128xf32, #tpu.memory_space<vmem>>, %arg24: memref<1x128x128xbf16, #tpu.memory_space<vmem>>, %arg25: memref<1x1x128xf32, #tpu.memory_space<vmem>>, %arg26: memref<1x1x128xf32, #tpu.memory_space<vmem>>, %arg27: memref<1x1x128xf32, #tpu.memory_space<vmem>>, %arg28: memref<1x128x256xbf16, #tpu.memory_space<vmem>>, %arg29: memref<1x1x256xf32, #tpu.memory_space<vmem>>, %arg30: memref<1x256x128xbf16, #tpu.memory_space<vmem>>, %arg31: memref<1x1x128xf32, #tpu.memory_space<vmem>>, %arg32: memref<1x1x128xf32, #tpu.memory_space<vmem>>, %arg33: memref<1x1x128xf32, #tpu.memory_space<vmem>>, %arg34: memref<1x16x128xf32, #tpu.memory_space<vmem>>, %arg35: memref<16x128xf32, #tpu.memory_space<vmem>>) attributes {dimension_semantics = [#tpu.dimension_semantics<parallel>, #tpu.dimension_semantics<arbitrary>], iteration_bounds = array<i64: 2, 2>, scalar_prefetch = 0 : i64, scratch_operands = 1 : i64, tpu.core_type = #tpu.core_type<tc>, window_params = [{transform_indices = @transform_0, window_bounds = array<i64: 1, 16, 128>}, {transform_indices = @transform_1, window_bounds = array<i64: 1, 16, 128>}, {transform_indices = @transform_2, window_bounds = array<i64: 1, 16, 128>}, {transform_indices = @transform_3, window_bounds = array<i64: 1, 16, 128>}, {transform_indices = @transform_4, window_bounds = array<i64: 1, 16, 16>}, {transform_indices = @transform_5, window_bounds = array<i64: 1, 1, 16>}, {transform_indices = @transform_6, window_bounds = array<i64: 1, 128, 128>}, {transform_indices = @transform_7, window_bounds = array<i64: 1, 1, 128>}, {transform_indices = @transform_8, window_bounds = array<i64: 1, 128, 128>}, {transform_indices = @transform_9, window_bounds = array<i64: 1, 1, 128>}, {transform_indices = @transform_10, window_bounds = array<i64: 1, 128, 128>}, {transform_indices = @transform_11, window_bounds = array<i64: 1, 1, 128>}, {transform_indices = @transform_12, window_bounds = array<i64: 1, 128, 128>}, {transform_indices = @transform_13, window_bounds = array<i64: 1, 1, 128>}, {transform_indices = @transform_14, window_bounds = array<i64: 1, 1, 128>}, {transform_indices = @transform_15, window_bounds = array<i64: 1, 1, 128>}, {transform_indices = @transform_16, window_bounds = array<i64: 1, 128, 128>}, {transform_indices = @transform_17, window_bounds = array<i64: 1, 1, 128>}, {transform_indices = @transform_18, window_bounds = array<i64: 1, 128, 128>}, {transform_indices = @transform_19, window_bounds = array<i64: 1, 1, 128>}, {transform_indices = @transform_20, window_bounds = array<i64: 1, 128, 128>}, {transform_indices = @transform_21, window_bounds = array<i64: 1, 1, 128>}, {transform_indices = @transform_22, window_bounds = array<i64: 1, 128, 128>}, {transform_indices = @transform_23, window_bounds = array<i64: 1, 1, 128>}, {transform_indices = @transform_24, window_bounds = array<i64: 1, 1, 128>}, {transform_indices = @transform_25, window_bounds = array<i64: 1, 1, 128>}, {transform_indices = @transform_26, window_bounds = array<i64: 1, 128, 256>}, {transform_indices = @transform_27, window_bounds = array<i64: 1, 1, 256>}, {transform_indices = @transform_28, window_bounds = array<i64: 1, 256, 128>}, {transform_indices = @transform_29, window_bounds = array<i64: 1, 1, 128>}, {transform_indices = @transform_30, window_bounds = array<i64: 1, 1, 128>}, {transform_indices = @transform_31, window_bounds = array<i64: 1, 1, 128>}, {transform_indices = @transform_32, window_bounds = array<i64: 1, 16, 128>}]} {
    %c0_i32 = arith.constant 0 : i32
    %0 = arith.cmpi eq, %arg1, %c0_i32 : i32
    %1 = arith.extui %0 : i1 to i32
    %c0_i32_0 = arith.constant 0 : i32
    %2 = arith.cmpi ne, %1, %c0_i32_0 : i32
    scf.if %2 {
      %c0_169 = arith.constant 0 : index
      %c0_170 = arith.constant 0 : index
      %c0_171 = arith.constant 0 : index
      %385 = vector.load %arg2[%c0_169, %c0_170, %c0_171] : memref<1x16x128xf32, #tpu.memory_space<vmem>>, vector<1x16x128xf32>
      %386 = vector.shape_cast %385 : vector<1x16x128xf32> to vector<16x128xf32>
      %c0_172 = arith.constant 0 : index
      %c0_173 = arith.constant 0 : index
      %387 = vector.load %arg35[%c0_172, %c0_173] : memref<16x128xf32, #tpu.memory_space<vmem>>, vector<16x128xf32>
      tpu.vector_store %arg35[%c0_172, %c0_173], %386 {strides = array<i32>} : memref<16x128xf32, #tpu.memory_space<vmem>>, vector<16x128xf32>,
    } else {
    }
    %c0 = arith.constant 0 : index
    %c0_1 = arith.constant 0 : index
    %3 = vector.load %arg35[%c0, %c0_1] : memref<16x128xf32, #tpu.memory_space<vmem>>, vector<16x128xf32>
    %c0_2 = arith.constant 0 : index
    %c0_3 = arith.constant 0 : index
    %c0_4 = arith.constant 0 : index
    %4 = vector.load %arg3[%c0_2, %c0_3, %c0_4] : memref<1x16x128xf32, #tpu.memory_space<vmem>>, vector<1x16x128xf32>
    %5 = vector.shape_cast %4 : vector<1x16x128xf32> to vector<16x128xf32>
    %c0_5 = arith.constant 0 : index
    %c0_6 = arith.constant 0 : index
    %c0_7 = arith.constant 0 : index
    %6 = vector.load %arg4[%c0_5, %c0_6, %c0_7] : memref<1x16x128xf32, #tpu.memory_space<vmem>>, vector<1x16x128xf32>
    %7 = vector.shape_cast %6 : vector<1x16x128xf32> to vector<16x128xf32>
    %c0_8 = arith.constant 0 : index
    %c0_9 = arith.constant 0 : index
    %c0_10 = arith.constant 0 : index
    %8 = vector.load %arg5[%c0_8, %c0_9, %c0_10] : memref<1x16x128xf32, #tpu.memory_space<vmem>>, vector<1x16x128xf32>
    %9 = vector.shape_cast %8 : vector<1x16x128xf32> to vector<16x128xf32>
    %c0_11 = arith.constant 0 : index
    %c0_12 = arith.constant 0 : index
    %c0_13 = arith.constant 0 : index
    %10 = vector.load %arg6[%c0_11, %c0_12, %c0_13] : memref<1x16x16xf32, #tpu.memory_space<vmem>>, vector<1x16x16xf32>
    %11 = vector.shape_cast %10 : vector<1x16x16xf32> to vector<16x16xf32>
    %c0_14 = arith.constant 0 : index
    %c0_15 = arith.constant 0 : index
    %c0_16 = arith.constant 0 : index
    %12 = vector.load %arg7[%c0_14, %c0_15, %c0_16] : memref<1x1x16xf32, #tpu.memory_space<vmem>>, vector<1x1x16xf32>
    %13 = vector.shape_cast %12 : vector<1x1x16xf32> to vector<1x16xf32>
    %c0_17 = arith.constant 0 : index
    %c0_18 = arith.constant 0 : index
    %c0_19 = arith.constant 0 : index
    %14 = vector.load %arg8[%c0_17, %c0_18, %c0_19] : memref<1x128x128xbf16, #tpu.memory_space<vmem>>, vector<1x128x128xbf16>
    %15 = vector.shape_cast %14 : vector<1x128x128xbf16> to vector<128x128xbf16>
    %c0_20 = arith.constant 0 : index
    %c0_21 = arith.constant 0 : index
    %c0_22 = arith.constant 0 : index
    %16 = vector.load %arg9[%c0_20, %c0_21, %c0_22] : memref<1x1x128xf32, #tpu.memory_space<vmem>>, vector<1x1x128xf32>
    %17 = vector.shape_cast %16 : vector<1x1x128xf32> to vector<1x128xf32>
    %c0_23 = arith.constant 0 : index
    %c0_24 = arith.constant 0 : index
    %c0_25 = arith.constant 0 : index
    %18 = vector.load %arg10[%c0_23, %c0_24, %c0_25] : memref<1x128x128xbf16, #tpu.memory_space<vmem>>, vector<1x128x128xbf16>
    %19 = vector.shape_cast %18 : vector<1x128x128xbf16> to vector<128x128xbf16>
    %c0_26 = arith.constant 0 : index
    %c0_27 = arith.constant 0 : index
    %c0_28 = arith.constant 0 : index
    %20 = vector.load %arg11[%c0_26, %c0_27, %c0_28] : memref<1x1x128xf32, #tpu.memory_space<vmem>>, vector<1x1x128xf32>
    %21 = vector.shape_cast %20 : vector<1x1x128xf32> to vector<1x128xf32>
    %c0_29 = arith.constant 0 : index
    %c0_30 = arith.constant 0 : index
    %c0_31 = arith.constant 0 : index
    %22 = vector.load %arg12[%c0_29, %c0_30, %c0_31] : memref<1x128x128xbf16, #tpu.memory_space<vmem>>, vector<1x128x128xbf16>
    %23 = vector.shape_cast %22 : vector<1x128x128xbf16> to vector<128x128xbf16>
    %c0_32 = arith.constant 0 : index
    %c0_33 = arith.constant 0 : index
    %c0_34 = arith.constant 0 : index
    %24 = vector.load %arg13[%c0_32, %c0_33, %c0_34] : memref<1x1x128xf32, #tpu.memory_space<vmem>>, vector<1x1x128xf32>
    %25 = vector.shape_cast %24 : vector<1x1x128xf32> to vector<1x128xf32>
    %c0_35 = arith.constant 0 : index
    %c0_36 = arith.constant 0 : index
    %c0_37 = arith.constant 0 : index
    %26 = vector.load %arg14[%c0_35, %c0_36, %c0_37] : memref<1x128x128xbf16, #tpu.memory_space<vmem>>, vector<1x128x128xbf16>
    %27 = vector.shape_cast %26 : vector<1x128x128xbf16> to vector<128x128xbf16>
    %c0_38 = arith.constant 0 : index
    %c0_39 = arith.constant 0 : index
    %c0_40 = arith.constant 0 : index
    %28 = vector.load %arg15[%c0_38, %c0_39, %c0_40] : memref<1x1x128xf32, #tpu.memory_space<vmem>>, vector<1x1x128xf32>
    %29 = vector.shape_cast %28 : vector<1x1x128xf32> to vector<1x128xf32>
    %c0_41 = arith.constant 0 : index
    %c0_42 = arith.constant 0 : index
    %c0_43 = arith.constant 0 : index
    %30 = vector.load %arg16[%c0_41, %c0_42, %c0_43] : memref<1x1x128xf32, #tpu.memory_space<vmem>>, vector<1x1x128xf32>
    %31 = vector.shape_cast %30 : vector<1x1x128xf32> to vector<1x128xf32>
    %c0_44 = arith.constant 0 : index
    %c0_45 = arith.constant 0 : index
    %c0_46 = arith.constant 0 : index
    %32 = vector.load %arg17[%c0_44, %c0_45, %c0_46] : memref<1x1x128xf32, #tpu.memory_space<vmem>>, vector<1x1x128xf32>
    %33 = vector.shape_cast %32 : vector<1x1x128xf32> to vector<1x128xf32>
    %34 = arith.addf %3, %7 : vector<16x128xf32>
    %35 = arith.addf %3, %7 : vector<16x128xf32>
    %36 = arith.truncf %34 : vector<16x128xf32> to vector<16x128xbf16>
    %cst = arith.constant dense<0.000000e+00> : vector<16x128xf32>
    %37 = tpu.matmul %36, %15, %cst {dimension_numbers = #tpu.dot_dimension_numbers<[1], [0], [0], [1], [0, 0, 1, 1], [], []>} : vector<16x128xbf16>, vector<128x128xbf16>, vector<16x128xf32> -> vector<16x128xf32>
    %38 = vector.broadcast %17 : vector<1x128xf32> to vector<16x128xf32>
    %39 = arith.addf %37, %38 : vector<16x128xf32>
    %40 = arith.truncf %35 : vector<16x128xf32> to vector<16x128xbf16>
    %cst_47 = arith.constant dense<0.000000e+00> : vector<16x128xf32>
    %41 = tpu.matmul %40, %19, %cst_47 {dimension_numbers = #tpu.dot_dimension_numbers<[1], [0], [0], [1], [0, 0, 1, 1], [], []>} : vector<16x128xbf16>, vector<128x128xbf16>, vector<16x128xf32> -> vector<16x128xf32>
    %42 = vector.broadcast %21 : vector<1x128xf32> to vector<16x128xf32>
    %43 = arith.addf %41, %42 : vector<16x128xf32>
    %44 = arith.truncf %3 : vector<16x128xf32> to vector<16x128xbf16>
    %cst_48 = arith.constant dense<0.000000e+00> : vector<16x128xf32>
    %45 = tpu.matmul %44, %23, %cst_48 {dimension_numbers = #tpu.dot_dimension_numbers<[1], [0], [0], [1], [0, 0, 1, 1], [], []>} : vector<16x128xbf16>, vector<128x128xbf16>, vector<16x128xf32> -> vector<16x128xf32>
    %46 = vector.broadcast %25 : vector<1x128xf32> to vector<16x128xf32>
    %47 = arith.addf %45, %46 : vector<16x128xf32>
    %48 = vector.extract_strided_slice %39 {offsets = [0, 0], sizes = [16, 32], strides = [1, 1]} : vector<16x128xf32> to vector<16x32xf32>
    %49 = arith.truncf %48 : vector<16x32xf32> to vector<16x32xbf16>
    %50 = vector.extract_strided_slice %43 {offsets = [0, 0], sizes = [16, 32], strides = [1, 1]} : vector<16x128xf32> to vector<16x32xf32>
    %51 = arith.truncf %50 : vector<16x32xf32> to vector<16x32xbf16>
    %52 = vector.extract_strided_slice %47 {offsets = [0, 0], sizes = [16, 32], strides = [1, 1]} : vector<16x128xf32> to vector<16x32xf32>
    %53 = arith.truncf %52 : vector<16x32xf32> to vector<16x32xbf16>
    %cst_49 = arith.constant dense<0.000000e+00> : vector<16x16xf32>
    %54 = tpu.matmul %49, %51, %cst_49 {dimension_numbers = #tpu.dot_dimension_numbers<[1], [1], [0], [0], [0, 0, 1, 0], [], []>} : vector<16x32xbf16>, vector<16x32xbf16>, vector<16x16xf32> -> vector<16x16xf32>
    %cst_50 = arith.constant 0.176776692 : f32
    %55 = vector.broadcast %cst_50 : f32 to vector<16x16xf32>
    %56 = arith.mulf %54, %55 : vector<16x16xf32>
    %57 = arith.addf %56, %11 : vector<16x16xf32>
    %cst_51 = arith.constant dense<0xFF800000> : vector<16xf32>
    %58 = vector.multi_reduction <maximumf>, %57, %cst_51 [1] : vector<16x16xf32> to vector<16xf32>
    %59 = vector.shape_cast %58 : vector<16xf32> to vector<16x1xf32>
    %60 = vector.broadcast %59 : vector<16x1xf32> to vector<16x16xf32>
    %61 = arith.subf %57, %60 : vector<16x16xf32>
    %62 = math.exp %61 : vector<16x16xf32>
    %cst_52 = arith.constant dense<0.000000e+00> : vector<16xf32>
    %63 = vector.multi_reduction <add>, %62, %cst_52 [1] : vector<16x16xf32> to vector<16xf32>
    %64 = vector.shape_cast %63 : vector<16xf32> to vector<16x1xf32>
    %65 = tpu.reciprocal %64 {approx = true} : vector<16x1xf32> -> vector<16x1xf32>
    %66 = vector.broadcast %65 : vector<16x1xf32> to vector<16x16xf32>
    %67 = arith.mulf %62, %66 : vector<16x16xf32>
    %68 = arith.truncf %67 : vector<16x16xf32> to vector<16x16xbf16>
    %cst_53 = arith.constant dense<0.000000e+00> : vector<16x32xf32>
    %69 = tpu.matmul %68, %53, %cst_53 {dimension_numbers = #tpu.dot_dimension_numbers<[1], [0], [0], [1], [0, 0, 1, 1], [], []>} : vector<16x16xbf16>, vector<16x32xbf16>, vector<16x32xf32> -> vector<16x32xf32>
    %70 = arith.truncf %69 : vector<16x32xf32> to vector<16x32xbf16>
    %71 = vector.extract_strided_slice %27 {offsets = [0, 0], sizes = [32, 128], strides = [1, 1]} : vector<128x128xbf16> to vector<32x128xbf16>
    %cst_54 = arith.constant dense<0.000000e+00> : vector<16x128xf32>
    %72 = tpu.matmul %70, %71, %cst_54 {dimension_numbers = #tpu.dot_dimension_numbers<[1], [0], [0], [1], [0, 0, 1, 1], [], []>} : vector<16x32xbf16>, vector<32x128xbf16>, vector<16x128xf32> -> vector<16x128xf32>
    %73 = vector.extract_strided_slice %39 {offsets = [0, 32], sizes = [16, 32], strides = [1, 1]} : vector<16x128xf32> to vector<16x32xf32>
    %74 = arith.truncf %73 : vector<16x32xf32> to vector<16x32xbf16>
    %75 = vector.extract_strided_slice %43 {offsets = [0, 32], sizes = [16, 32], strides = [1, 1]} : vector<16x128xf32> to vector<16x32xf32>
    %76 = arith.truncf %75 : vector<16x32xf32> to vector<16x32xbf16>
    %77 = vector.extract_strided_slice %47 {offsets = [0, 32], sizes = [16, 32], strides = [1, 1]} : vector<16x128xf32> to vector<16x32xf32>
    %78 = arith.truncf %77 : vector<16x32xf32> to vector<16x32xbf16>
    %cst_55 = arith.constant dense<0.000000e+00> : vector<16x16xf32>
    %79 = tpu.matmul %74, %76, %cst_55 {dimension_numbers = #tpu.dot_dimension_numbers<[1], [1], [0], [0], [0, 0, 1, 0], [], []>} : vector<16x32xbf16>, vector<16x32xbf16>, vector<16x16xf32> -> vector<16x16xf32>
    %cst_56 = arith.constant 0.176776692 : f32
    %80 = vector.broadcast %cst_56 : f32 to vector<16x16xf32>
    %81 = arith.mulf %79, %80 : vector<16x16xf32>
    %82 = arith.addf %81, %11 : vector<16x16xf32>
    %cst_57 = arith.constant dense<0xFF800000> : vector<16xf32>
    %83 = vector.multi_reduction <maximumf>, %82, %cst_57 [1] : vector<16x16xf32> to vector<16xf32>
    %84 = vector.shape_cast %83 : vector<16xf32> to vector<16x1xf32>
    %85 = vector.broadcast %84 : vector<16x1xf32> to vector<16x16xf32>
    %86 = arith.subf %82, %85 : vector<16x16xf32>
    %87 = math.exp %86 : vector<16x16xf32>
    %cst_58 = arith.constant dense<0.000000e+00> : vector<16xf32>
    %88 = vector.multi_reduction <add>, %87, %cst_58 [1] : vector<16x16xf32> to vector<16xf32>
    %89 = vector.shape_cast %88 : vector<16xf32> to vector<16x1xf32>
    %90 = tpu.reciprocal %89 {approx = true} : vector<16x1xf32> -> vector<16x1xf32>
    %91 = vector.broadcast %90 : vector<16x1xf32> to vector<16x16xf32>
    %92 = arith.mulf %87, %91 : vector<16x16xf32>
    %93 = arith.truncf %92 : vector<16x16xf32> to vector<16x16xbf16>
    %cst_59 = arith.constant dense<0.000000e+00> : vector<16x32xf32>
    %94 = tpu.matmul %93, %78, %cst_59 {dimension_numbers = #tpu.dot_dimension_numbers<[1], [0], [0], [1], [0, 0, 1, 1], [], []>} : vector<16x16xbf16>, vector<16x32xbf16>, vector<16x32xf32> -> vector<16x32xf32>
    %95 = arith.truncf %94 : vector<16x32xf32> to vector<16x32xbf16>
    %96 = vector.extract_strided_slice %27 {offsets = [32, 0], sizes = [32, 128], strides = [1, 1]} : vector<128x128xbf16> to vector<32x128xbf16>
    %cst_60 = arith.constant dense<0.000000e+00> : vector<16x128xf32>
    %97 = tpu.matmul %95, %96, %cst_60 {dimension_numbers = #tpu.dot_dimension_numbers<[1], [0], [0], [1], [0, 0, 1, 1], [], []>} : vector<16x32xbf16>, vector<32x128xbf16>, vector<16x128xf32> -> vector<16x128xf32>
    %98 = arith.addf %72, %97 : vector<16x128xf32>
    %99 = vector.extract_strided_slice %39 {offsets = [0, 64], sizes = [16, 32], strides = [1, 1]} : vector<16x128xf32> to vector<16x32xf32>
    %100 = arith.truncf %99 : vector<16x32xf32> to vector<16x32xbf16>
    %101 = vector.extract_strided_slice %43 {offsets = [0, 64], sizes = [16, 32], strides = [1, 1]} : vector<16x128xf32> to vector<16x32xf32>
    %102 = arith.truncf %101 : vector<16x32xf32> to vector<16x32xbf16>
    %103 = vector.extract_strided_slice %47 {offsets = [0, 64], sizes = [16, 32], strides = [1, 1]} : vector<16x128xf32> to vector<16x32xf32>
    %104 = arith.truncf %103 : vector<16x32xf32> to vector<16x32xbf16>
    %cst_61 = arith.constant dense<0.000000e+00> : vector<16x16xf32>
    %105 = tpu.matmul %100, %102, %cst_61 {dimension_numbers = #tpu.dot_dimension_numbers<[1], [1], [0], [0], [0, 0, 1, 0], [], []>} : vector<16x32xbf16>, vector<16x32xbf16>, vector<16x16xf32> -> vector<16x16xf32>
    %cst_62 = arith.constant 0.176776692 : f32
    %106 = vector.broadcast %cst_62 : f32 to vector<16x16xf32>
    %107 = arith.mulf %105, %106 : vector<16x16xf32>
    %108 = arith.addf %107, %11 : vector<16x16xf32>
    %cst_63 = arith.constant dense<0xFF800000> : vector<16xf32>
    %109 = vector.multi_reduction <maximumf>, %108, %cst_63 [1] : vector<16x16xf32> to vector<16xf32>
    %110 = vector.shape_cast %109 : vector<16xf32> to vector<16x1xf32>
    %111 = vector.broadcast %110 : vector<16x1xf32> to vector<16x16xf32>
    %112 = arith.subf %108, %111 : vector<16x16xf32>
    %113 = math.exp %112 : vector<16x16xf32>
    %cst_64 = arith.constant dense<0.000000e+00> : vector<16xf32>
    %114 = vector.multi_reduction <add>, %113, %cst_64 [1] : vector<16x16xf32> to vector<16xf32>
    %115 = vector.shape_cast %114 : vector<16xf32> to vector<16x1xf32>
    %116 = tpu.reciprocal %115 {approx = true} : vector<16x1xf32> -> vector<16x1xf32>
    %117 = vector.broadcast %116 : vector<16x1xf32> to vector<16x16xf32>
    %118 = arith.mulf %113, %117 : vector<16x16xf32>
    %119 = arith.truncf %118 : vector<16x16xf32> to vector<16x16xbf16>
    %cst_65 = arith.constant dense<0.000000e+00> : vector<16x32xf32>
    %120 = tpu.matmul %119, %104, %cst_65 {dimension_numbers = #tpu.dot_dimension_numbers<[1], [0], [0], [1], [0, 0, 1, 1], [], []>} : vector<16x16xbf16>, vector<16x32xbf16>, vector<16x32xf32> -> vector<16x32xf32>
    %121 = arith.truncf %120 : vector<16x32xf32> to vector<16x32xbf16>
    %122 = vector.extract_strided_slice %27 {offsets = [64, 0], sizes = [32, 128], strides = [1, 1]} : vector<128x128xbf16> to vector<32x128xbf16>
    %cst_66 = arith.constant dense<0.000000e+00> : vector<16x128xf32>
    %123 = tpu.matmul %121, %122, %cst_66 {dimension_numbers = #tpu.dot_dimension_numbers<[1], [0], [0], [1], [0, 0, 1, 1], [], []>} : vector<16x32xbf16>, vector<32x128xbf16>, vector<16x128xf32> -> vector<16x128xf32>
    %124 = arith.addf %98, %123 : vector<16x128xf32>
    %125 = vector.extract_strided_slice %39 {offsets = [0, 96], sizes = [16, 32], strides = [1, 1]} : vector<16x128xf32> to vector<16x32xf32>
    %126 = arith.truncf %125 : vector<16x32xf32> to vector<16x32xbf16>
    %127 = vector.extract_strided_slice %43 {offsets = [0, 96], sizes = [16, 32], strides = [1, 1]} : vector<16x128xf32> to vector<16x32xf32>
    %128 = arith.truncf %127 : vector<16x32xf32> to vector<16x32xbf16>
    %129 = vector.extract_strided_slice %47 {offsets = [0, 96], sizes = [16, 32], strides = [1, 1]} : vector<16x128xf32> to vector<16x32xf32>
    %130 = arith.truncf %129 : vector<16x32xf32> to vector<16x32xbf16>
    %cst_67 = arith.constant dense<0.000000e+00> : vector<16x16xf32>
    %131 = tpu.matmul %126, %128, %cst_67 {dimension_numbers = #tpu.dot_dimension_numbers<[1], [1], [0], [0], [0, 0, 1, 0], [], []>} : vector<16x32xbf16>, vector<16x32xbf16>, vector<16x16xf32> -> vector<16x16xf32>
    %cst_68 = arith.constant 0.176776692 : f32
    %132 = vector.broadcast %cst_68 : f32 to vector<16x16xf32>
    %133 = arith.mulf %131, %132 : vector<16x16xf32>
    %134 = arith.addf %133, %11 : vector<16x16xf32>
    %cst_69 = arith.constant dense<0xFF800000> : vector<16xf32>
    %135 = vector.multi_reduction <maximumf>, %134, %cst_69 [1] : vector<16x16xf32> to vector<16xf32>
    %136 = vector.shape_cast %135 : vector<16xf32> to vector<16x1xf32>
    %137 = vector.broadcast %136 : vector<16x1xf32> to vector<16x16xf32>
    %138 = arith.subf %134, %137 : vector<16x16xf32>
    %139 = math.exp %138 : vector<16x16xf32>
    %cst_70 = arith.constant dense<0.000000e+00> : vector<16xf32>
    %140 = vector.multi_reduction <add>, %139, %cst_70 [1] : vector<16x16xf32> to vector<16xf32>
    %141 = vector.shape_cast %140 : vector<16xf32> to vector<16x1xf32>
    %142 = tpu.reciprocal %141 {approx = true} : vector<16x1xf32> -> vector<16x1xf32>
    %143 = vector.broadcast %142 : vector<16x1xf32> to vector<16x16xf32>
    %144 = arith.mulf %139, %143 : vector<16x16xf32>
    %145 = arith.truncf %144 : vector<16x16xf32> to vector<16x16xbf16>
    %cst_71 = arith.constant dense<0.000000e+00> : vector<16x32xf32>
    %146 = tpu.matmul %145, %130, %cst_71 {dimension_numbers = #tpu.dot_dimension_numbers<[1], [0], [0], [1], [0, 0, 1, 1], [], []>} : vector<16x16xbf16>, vector<16x32xbf16>, vector<16x32xf32> -> vector<16x32xf32>
    %147 = arith.truncf %146 : vector<16x32xf32> to vector<16x32xbf16>
    %148 = vector.extract_strided_slice %27 {offsets = [96, 0], sizes = [32, 128], strides = [1, 1]} : vector<128x128xbf16> to vector<32x128xbf16>
    %cst_72 = arith.constant dense<0.000000e+00> : vector<16x128xf32>
    %149 = tpu.matmul %147, %148, %cst_72 {dimension_numbers = #tpu.dot_dimension_numbers<[1], [0], [0], [1], [0, 0, 1, 1], [], []>} : vector<16x32xbf16>, vector<32x128xbf16>, vector<16x128xf32> -> vector<16x128xf32>
    %150 = arith.addf %124, %149 : vector<16x128xf32>
    %151 = vector.broadcast %29 : vector<1x128xf32> to vector<16x128xf32>
    %152 = arith.addf %150, %151 : vector<16x128xf32>
    %153 = arith.addf %3, %152 : vector<16x128xf32>
    %cst_73 = arith.constant dense<0.000000e+00> : vector<16xf32>
    %154 = vector.multi_reduction <add>, %153, %cst_73 [1] : vector<16x128xf32> to vector<16xf32>
    %155 = vector.shape_cast %154 : vector<16xf32> to vector<16x1xf32>
    %cst_74 = arith.constant 1.280000e+02 : f32
    %156 = vector.broadcast %cst_74 : f32 to vector<16x1xf32>
    %157 = arith.divf %155, %156 : vector<16x1xf32>
    %158 = vector.broadcast %157 : vector<16x1xf32> to vector<16x128xf32>
    %159 = arith.subf %153, %158 : vector<16x128xf32>
    %160 = arith.mulf %159, %159 : vector<16x128xf32>
    %cst_75 = arith.constant dense<0.000000e+00> : vector<16xf32>
    %161 = vector.multi_reduction <add>, %160, %cst_75 [1] : vector<16x128xf32> to vector<16xf32>
    %162 = vector.shape_cast %161 : vector<16xf32> to vector<16x1xf32>
    %cst_76 = arith.constant 1.280000e+02 : f32
    %163 = vector.broadcast %cst_76 : f32 to vector<16x1xf32>
    %164 = arith.divf %162, %163 : vector<16x1xf32>
    %cst_77 = arith.constant 9.99999974E-6 : f32
    %165 = vector.broadcast %cst_77 : f32 to vector<16x1xf32>
    %166 = arith.addf %164, %165 : vector<16x1xf32>
    %167 = math.rsqrt %166 : vector<16x1xf32>
    %168 = vector.broadcast %167 : vector<16x1xf32> to vector<16x128xf32>
    %169 = arith.mulf %159, %168 : vector<16x128xf32>
    %170 = vector.broadcast %33 : vector<1x128xf32> to vector<16x128xf32>
    %171 = arith.addf %169, %170 : vector<16x128xf32>
    %172 = vector.broadcast %31 : vector<1x128xf32> to vector<16x128xf32>
    %173 = arith.mulf %171, %172 : vector<16x128xf32>
    %c0_78 = arith.constant 0 : index
    %c0_79 = arith.constant 0 : index
    %c0_80 = arith.constant 0 : index
    %174 = vector.load %arg18[%c0_78, %c0_79, %c0_80] : memref<1x128x128xbf16, #tpu.memory_space<vmem>>, vector<1x128x128xbf16>
    %175 = vector.shape_cast %174 : vector<1x128x128xbf16> to vector<128x128xbf16>
    %c0_81 = arith.constant 0 : index
    %c0_82 = arith.constant 0 : index
    %c0_83 = arith.constant 0 : index
    %176 = vector.load %arg19[%c0_81, %c0_82, %c0_83] : memref<1x1x128xf32, #tpu.memory_space<vmem>>, vector<1x1x128xf32>
    %177 = vector.shape_cast %176 : vector<1x1x128xf32> to vector<1x128xf32>
    %c0_84 = arith.constant 0 : index
    %c0_85 = arith.constant 0 : index
    %c0_86 = arith.constant 0 : index
    %178 = vector.load %arg20[%c0_84, %c0_85, %c0_86] : memref<1x128x128xbf16, #tpu.memory_space<vmem>>, vector<1x128x128xbf16>
    %179 = vector.shape_cast %178 : vector<1x128x128xbf16> to vector<128x128xbf16>
    %c0_87 = arith.constant 0 : index
    %c0_88 = arith.constant 0 : index
    %c0_89 = arith.constant 0 : index
    %180 = vector.load %arg21[%c0_87, %c0_88, %c0_89] : memref<1x1x128xf32, #tpu.memory_space<vmem>>, vector<1x1x128xf32>
    %181 = vector.shape_cast %180 : vector<1x1x128xf32> to vector<1x128xf32>
    %c0_90 = arith.constant 0 : index
    %c0_91 = arith.constant 0 : index
    %c0_92 = arith.constant 0 : index
    %182 = vector.load %arg22[%c0_90, %c0_91, %c0_92] : memref<1x128x128xbf16, #tpu.memory_space<vmem>>, vector<1x128x128xbf16>
    %183 = vector.shape_cast %182 : vector<1x128x128xbf16> to vector<128x128xbf16>
    %c0_93 = arith.constant 0 : index
    %c0_94 = arith.constant 0 : index
    %c0_95 = arith.constant 0 : index
    %184 = vector.load %arg23[%c0_93, %c0_94, %c0_95] : memref<1x1x128xf32, #tpu.memory_space<vmem>>, vector<1x1x128xf32>
    %185 = vector.shape_cast %184 : vector<1x1x128xf32> to vector<1x128xf32>
    %c0_96 = arith.constant 0 : index
    %c0_97 = arith.constant 0 : index
    %c0_98 = arith.constant 0 : index
    %186 = vector.load %arg24[%c0_96, %c0_97, %c0_98] : memref<1x128x128xbf16, #tpu.memory_space<vmem>>, vector<1x128x128xbf16>
    %187 = vector.shape_cast %186 : vector<1x128x128xbf16> to vector<128x128xbf16>
    %c0_99 = arith.constant 0 : index
    %c0_100 = arith.constant 0 : index
    %c0_101 = arith.constant 0 : index
    %188 = vector.load %arg25[%c0_99, %c0_100, %c0_101] : memref<1x1x128xf32, #tpu.memory_space<vmem>>, vector<1x1x128xf32>
    %189 = vector.shape_cast %188 : vector<1x1x128xf32> to vector<1x128xf32>
    %c0_102 = arith.constant 0 : index
    %c0_103 = arith.constant 0 : index
    %c0_104 = arith.constant 0 : index
    %190 = vector.load %arg26[%c0_102, %c0_103, %c0_104] : memref<1x1x128xf32, #tpu.memory_space<vmem>>, vector<1x1x128xf32>
    %191 = vector.shape_cast %190 : vector<1x1x128xf32> to vector<1x128xf32>
    %c0_105 = arith.constant 0 : index
    %c0_106 = arith.constant 0 : index
    %c0_107 = arith.constant 0 : index
    %192 = vector.load %arg27[%c0_105, %c0_106, %c0_107] : memref<1x1x128xf32, #tpu.memory_space<vmem>>, vector<1x1x128xf32>
    %193 = vector.shape_cast %192 : vector<1x1x128xf32> to vector<1x128xf32>
    %194 = arith.addf %173, %7 : vector<16x128xf32>
    %195 = arith.addf %5, %9 : vector<16x128xf32>
    %196 = arith.truncf %194 : vector<16x128xf32> to vector<16x128xbf16>
    %cst_108 = arith.constant dense<0.000000e+00> : vector<16x128xf32>
    %197 = tpu.matmul %196, %175, %cst_108 {dimension_numbers = #tpu.dot_dimension_numbers<[1], [0], [0], [1], [0, 0, 1, 1], [], []>} : vector<16x128xbf16>, vector<128x128xbf16>, vector<16x128xf32> -> vector<16x128xf32>
    %198 = vector.broadcast %177 : vector<1x128xf32> to vector<16x128xf32>
    %199 = arith.addf %197, %198 : vector<16x128xf32>
    %200 = arith.truncf %195 : vector<16x128xf32> to vector<16x128xbf16>
    %cst_109 = arith.constant dense<0.000000e+00> : vector<16x128xf32>
    %201 = tpu.matmul %200, %179, %cst_109 {dimension_numbers = #tpu.dot_dimension_numbers<[1], [0], [0], [1], [0, 0, 1, 1], [], []>} : vector<16x128xbf16>, vector<128x128xbf16>, vector<16x128xf32> -> vector<16x128xf32>
    %202 = vector.broadcast %181 : vector<1x128xf32> to vector<16x128xf32>
    %203 = arith.addf %201, %202 : vector<16x128xf32>
    %204 = arith.truncf %5 : vector<16x128xf32> to vector<16x128xbf16>
    %cst_110 = arith.constant dense<0.000000e+00> : vector<16x128xf32>
    %205 = tpu.matmul %204, %183, %cst_110 {dimension_numbers = #tpu.dot_dimension_numbers<[1], [0], [0], [1], [0, 0, 1, 1], [], []>} : vector<16x128xbf16>, vector<128x128xbf16>, vector<16x128xf32> -> vector<16x128xf32>
    %206 = vector.broadcast %185 : vector<1x128xf32> to vector<16x128xf32>
    %207 = arith.addf %205, %206 : vector<16x128xf32>
    %208 = vector.extract_strided_slice %199 {offsets = [0, 0], sizes = [16, 32], strides = [1, 1]} : vector<16x128xf32> to vector<16x32xf32>
    %209 = arith.truncf %208 : vector<16x32xf32> to vector<16x32xbf16>
    %210 = vector.extract_strided_slice %203 {offsets = [0, 0], sizes = [16, 32], strides = [1, 1]} : vector<16x128xf32> to vector<16x32xf32>
    %211 = arith.truncf %210 : vector<16x32xf32> to vector<16x32xbf16>
    %212 = vector.extract_strided_slice %207 {offsets = [0, 0], sizes = [16, 32], strides = [1, 1]} : vector<16x128xf32> to vector<16x32xf32>
    %213 = arith.truncf %212 : vector<16x32xf32> to vector<16x32xbf16>
    %cst_111 = arith.constant dense<0.000000e+00> : vector<16x16xf32>
    %214 = tpu.matmul %209, %211, %cst_111 {dimension_numbers = #tpu.dot_dimension_numbers<[1], [1], [0], [0], [0, 0, 1, 0], [], []>} : vector<16x32xbf16>, vector<16x32xbf16>, vector<16x16xf32> -> vector<16x16xf32>
    %cst_112 = arith.constant 0.176776692 : f32
    %215 = vector.broadcast %cst_112 : f32 to vector<16x16xf32>
    %216 = arith.mulf %214, %215 : vector<16x16xf32>
    %217 = vector.broadcast %13 : vector<1x16xf32> to vector<16x16xf32>
    %218 = arith.addf %216, %217 : vector<16x16xf32>
    %cst_113 = arith.constant dense<0xFF800000> : vector<16xf32>
    %219 = vector.multi_reduction <maximumf>, %218, %cst_113 [1] : vector<16x16xf32> to vector<16xf32>
    %220 = vector.shape_cast %219 : vector<16xf32> to vector<16x1xf32>
    %221 = vector.broadcast %220 : vector<16x1xf32> to vector<16x16xf32>
    %222 = arith.subf %218, %221 : vector<16x16xf32>
    %223 = math.exp %222 : vector<16x16xf32>
    %cst_114 = arith.constant dense<0.000000e+00> : vector<16xf32>
    %224 = vector.multi_reduction <add>, %223, %cst_114 [1] : vector<16x16xf32> to vector<16xf32>
    %225 = vector.shape_cast %224 : vector<16xf32> to vector<16x1xf32>
    %226 = tpu.reciprocal %225 {approx = true} : vector<16x1xf32> -> vector<16x1xf32>
    %227 = vector.broadcast %226 : vector<16x1xf32> to vector<16x16xf32>
    %228 = arith.mulf %223, %227 : vector<16x16xf32>
    %229 = arith.truncf %228 : vector<16x16xf32> to vector<16x16xbf16>
    %cst_115 = arith.constant dense<0.000000e+00> : vector<16x32xf32>
    %230 = tpu.matmul %229, %213, %cst_115 {dimension_numbers = #tpu.dot_dimension_numbers<[1], [0], [0], [1], [0, 0, 1, 1], [], []>} : vector<16x16xbf16>, vector<16x32xbf16>, vector<16x32xf32> -> vector<16x32xf32>
    %231 = arith.truncf %230 : vector<16x32xf32> to vector<16x32xbf16>
    %232 = vector.extract_strided_slice %187 {offsets = [0, 0], sizes = [32, 128], strides = [1, 1]} : vector<128x128xbf16> to vector<32x128xbf16>
    %cst_116 = arith.constant dense<0.000000e+00> : vector<16x128xf32>
    %233 = tpu.matmul %231, %232, %cst_116 {dimension_numbers = #tpu.dot_dimension_numbers<[1], [0], [0], [1], [0, 0, 1, 1], [], []>} : vector<16x32xbf16>, vector<32x128xbf16>, vector<16x128xf32> -> vector<16x128xf32>
    %234 = vector.extract_strided_slice %199 {offsets = [0, 32], sizes = [16, 32], strides = [1, 1]} : vector<16x128xf32> to vector<16x32xf32>
    %235 = arith.truncf %234 : vector<16x32xf32> to vector<16x32xbf16>
    %236 = vector.extract_strided_slice %203 {offsets = [0, 32], sizes = [16, 32], strides = [1, 1]} : vector<16x128xf32> to vector<16x32xf32>
    %237 = arith.truncf %236 : vector<16x32xf32> to vector<16x32xbf16>
    %238 = vector.extract_strided_slice %207 {offsets = [0, 32], sizes = [16, 32], strides = [1, 1]} : vector<16x128xf32> to vector<16x32xf32>
    %239 = arith.truncf %238 : vector<16x32xf32> to vector<16x32xbf16>
    %cst_117 = arith.constant dense<0.000000e+00> : vector<16x16xf32>
    %240 = tpu.matmul %235, %237, %cst_117 {dimension_numbers = #tpu.dot_dimension_numbers<[1], [1], [0], [0], [0, 0, 1, 0], [], []>} : vector<16x32xbf16>, vector<16x32xbf16>, vector<16x16xf32> -> vector<16x16xf32>
    %cst_118 = arith.constant 0.176776692 : f32
    %241 = vector.broadcast %cst_118 : f32 to vector<16x16xf32>
    %242 = arith.mulf %240, %241 : vector<16x16xf32>
    %243 = vector.broadcast %13 : vector<1x16xf32> to vector<16x16xf32>
    %244 = arith.addf %242, %243 : vector<16x16xf32>
    %cst_119 = arith.constant dense<0xFF800000> : vector<16xf32>
    %245 = vector.multi_reduction <maximumf>, %244, %cst_119 [1] : vector<16x16xf32> to vector<16xf32>
    %246 = vector.shape_cast %245 : vector<16xf32> to vector<16x1xf32>
    %247 = vector.broadcast %246 : vector<16x1xf32> to vector<16x16xf32>
    %248 = arith.subf %244, %247 : vector<16x16xf32>
    %249 = math.exp %248 : vector<16x16xf32>
    %cst_120 = arith.constant dense<0.000000e+00> : vector<16xf32>
    %250 = vector.multi_reduction <add>, %249, %cst_120 [1] : vector<16x16xf32> to vector<16xf32>
    %251 = vector.shape_cast %250 : vector<16xf32> to vector<16x1xf32>
    %252 = tpu.reciprocal %251 {approx = true} : vector<16x1xf32> -> vector<16x1xf32>
    %253 = vector.broadcast %252 : vector<16x1xf32> to vector<16x16xf32>
    %254 = arith.mulf %249, %253 : vector<16x16xf32>
    %255 = arith.truncf %254 : vector<16x16xf32> to vector<16x16xbf16>
    %cst_121 = arith.constant dense<0.000000e+00> : vector<16x32xf32>
    %256 = tpu.matmul %255, %239, %cst_121 {dimension_numbers = #tpu.dot_dimension_numbers<[1], [0], [0], [1], [0, 0, 1, 1], [], []>} : vector<16x16xbf16>, vector<16x32xbf16>, vector<16x32xf32> -> vector<16x32xf32>
    %257 = arith.truncf %256 : vector<16x32xf32> to vector<16x32xbf16>
    %258 = vector.extract_strided_slice %187 {offsets = [32, 0], sizes = [32, 128], strides = [1, 1]} : vector<128x128xbf16> to vector<32x128xbf16>
    %cst_122 = arith.constant dense<0.000000e+00> : vector<16x128xf32>
    %259 = tpu.matmul %257, %258, %cst_122 {dimension_numbers = #tpu.dot_dimension_numbers<[1], [0], [0], [1], [0, 0, 1, 1], [], []>} : vector<16x32xbf16>, vector<32x128xbf16>, vector<16x128xf32> -> vector<16x128xf32>
    %260 = arith.addf %233, %259 : vector<16x128xf32>
    %261 = vector.extract_strided_slice %199 {offsets = [0, 64], sizes = [16, 32], strides = [1, 1]} : vector<16x128xf32> to vector<16x32xf32>
    %262 = arith.truncf %261 : vector<16x32xf32> to vector<16x32xbf16>
    %263 = vector.extract_strided_slice %203 {offsets = [0, 64], sizes = [16, 32], strides = [1, 1]} : vector<16x128xf32> to vector<16x32xf32>
    %264 = arith.truncf %263 : vector<16x32xf32> to vector<16x32xbf16>
    %265 = vector.extract_strided_slice %207 {offsets = [0, 64], sizes = [16, 32], strides = [1, 1]} : vector<16x128xf32> to vector<16x32xf32>
    %266 = arith.truncf %265 : vector<16x32xf32> to vector<16x32xbf16>
    %cst_123 = arith.constant dense<0.000000e+00> : vector<16x16xf32>
    %267 = tpu.matmul %262, %264, %cst_123 {dimension_numbers = #tpu.dot_dimension_numbers<[1], [1], [0], [0], [0, 0, 1, 0], [], []>} : vector<16x32xbf16>, vector<16x32xbf16>, vector<16x16xf32> -> vector<16x16xf32>
    %cst_124 = arith.constant 0.176776692 : f32
    %268 = vector.broadcast %cst_124 : f32 to vector<16x16xf32>
    %269 = arith.mulf %267, %268 : vector<16x16xf32>
    %270 = vector.broadcast %13 : vector<1x16xf32> to vector<16x16xf32>
    %271 = arith.addf %269, %270 : vector<16x16xf32>
    %cst_125 = arith.constant dense<0xFF800000> : vector<16xf32>
    %272 = vector.multi_reduction <maximumf>, %271, %cst_125 [1] : vector<16x16xf32> to vector<16xf32>
    %273 = vector.shape_cast %272 : vector<16xf32> to vector<16x1xf32>
    %274 = vector.broadcast %273 : vector<16x1xf32> to vector<16x16xf32>
    %275 = arith.subf %271, %274 : vector<16x16xf32>
    %276 = math.exp %275 : vector<16x16xf32>
    %cst_126 = arith.constant dense<0.000000e+00> : vector<16xf32>
    %277 = vector.multi_reduction <add>, %276, %cst_126 [1] : vector<16x16xf32> to vector<16xf32>
    %278 = vector.shape_cast %277 : vector<16xf32> to vector<16x1xf32>
    %279 = tpu.reciprocal %278 {approx = true} : vector<16x1xf32> -> vector<16x1xf32>
    %280 = vector.broadcast %279 : vector<16x1xf32> to vector<16x16xf32>
    %281 = arith.mulf %276, %280 : vector<16x16xf32>
    %282 = arith.truncf %281 : vector<16x16xf32> to vector<16x16xbf16>
    %cst_127 = arith.constant dense<0.000000e+00> : vector<16x32xf32>
    %283 = tpu.matmul %282, %266, %cst_127 {dimension_numbers = #tpu.dot_dimension_numbers<[1], [0], [0], [1], [0, 0, 1, 1], [], []>} : vector<16x16xbf16>, vector<16x32xbf16>, vector<16x32xf32> -> vector<16x32xf32>
    %284 = arith.truncf %283 : vector<16x32xf32> to vector<16x32xbf16>
    %285 = vector.extract_strided_slice %187 {offsets = [64, 0], sizes = [32, 128], strides = [1, 1]} : vector<128x128xbf16> to vector<32x128xbf16>
    %cst_128 = arith.constant dense<0.000000e+00> : vector<16x128xf32>
    %286 = tpu.matmul %284, %285, %cst_128 {dimension_numbers = #tpu.dot_dimension_numbers<[1], [0], [0], [1], [0, 0, 1, 1], [], []>} : vector<16x32xbf16>, vector<32x128xbf16>, vector<16x128xf32> -> vector<16x128xf32>
    %287 = arith.addf %260, %286 : vector<16x128xf32>
    %288 = vector.extract_strided_slice %199 {offsets = [0, 96], sizes = [16, 32], strides = [1, 1]} : vector<16x128xf32> to vector<16x32xf32>
    %289 = arith.truncf %288 : vector<16x32xf32> to vector<16x32xbf16>
    %290 = vector.extract_strided_slice %203 {offsets = [0, 96], sizes = [16, 32], strides = [1, 1]} : vector<16x128xf32> to vector<16x32xf32>
    %291 = arith.truncf %290 : vector<16x32xf32> to vector<16x32xbf16>
    %292 = vector.extract_strided_slice %207 {offsets = [0, 96], sizes = [16, 32], strides = [1, 1]} : vector<16x128xf32> to vector<16x32xf32>
    %293 = arith.truncf %292 : vector<16x32xf32> to vector<16x32xbf16>
    %cst_129 = arith.constant dense<0.000000e+00> : vector<16x16xf32>
    %294 = tpu.matmul %289, %291, %cst_129 {dimension_numbers = #tpu.dot_dimension_numbers<[1], [1], [0], [0], [0, 0, 1, 0], [], []>} : vector<16x32xbf16>, vector<16x32xbf16>, vector<16x16xf32> -> vector<16x16xf32>
    %cst_130 = arith.constant 0.176776692 : f32
    %295 = vector.broadcast %cst_130 : f32 to vector<16x16xf32>
    %296 = arith.mulf %294, %295 : vector<16x16xf32>
    %297 = vector.broadcast %13 : vector<1x16xf32> to vector<16x16xf32>
    %298 = arith.addf %296, %297 : vector<16x16xf32>
    %cst_131 = arith.constant dense<0xFF800000> : vector<16xf32>
    %299 = vector.multi_reduction <maximumf>, %298, %cst_131 [1] : vector<16x16xf32> to vector<16xf32>
    %300 = vector.shape_cast %299 : vector<16xf32> to vector<16x1xf32>
    %301 = vector.broadcast %300 : vector<16x1xf32> to vector<16x16xf32>
    %302 = arith.subf %298, %301 : vector<16x16xf32>
    %303 = math.exp %302 : vector<16x16xf32>
    %cst_132 = arith.constant dense<0.000000e+00> : vector<16xf32>
    %304 = vector.multi_reduction <add>, %303, %cst_132 [1] : vector<16x16xf32> to vector<16xf32>
    %305 = vector.shape_cast %304 : vector<16xf32> to vector<16x1xf32>
    %306 = tpu.reciprocal %305 {approx = true} : vector<16x1xf32> -> vector<16x1xf32>
    %307 = vector.broadcast %306 : vector<16x1xf32> to vector<16x16xf32>
    %308 = arith.mulf %303, %307 : vector<16x16xf32>
    %309 = arith.truncf %308 : vector<16x16xf32> to vector<16x16xbf16>
    %cst_133 = arith.constant dense<0.000000e+00> : vector<16x32xf32>
    %310 = tpu.matmul %309, %293, %cst_133 {dimension_numbers = #tpu.dot_dimension_numbers<[1], [0], [0], [1], [0, 0, 1, 1], [], []>} : vector<16x16xbf16>, vector<16x32xbf16>, vector<16x32xf32> -> vector<16x32xf32>
    %311 = arith.truncf %310 : vector<16x32xf32> to vector<16x32xbf16>
    %312 = vector.extract_strided_slice %187 {offsets = [96, 0], sizes = [32, 128], strides = [1, 1]} : vector<128x128xbf16> to vector<32x128xbf16>
    %cst_134 = arith.constant dense<0.000000e+00> : vector<16x128xf32>
    %313 = tpu.matmul %311, %312, %cst_134 {dimension_numbers = #tpu.dot_dimension_numbers<[1], [0], [0], [1], [0, 0, 1, 1], [], []>} : vector<16x32xbf16>, vector<32x128xbf16>, vector<16x128xf32> -> vector<16x128xf32>
    %314 = arith.addf %287, %313 : vector<16x128xf32>
    %315 = vector.broadcast %189 : vector<1x128xf32> to vector<16x128xf32>
    %316 = arith.addf %314, %315 : vector<16x128xf32>
    %317 = arith.addf %173, %316 : vector<16x128xf32>
    %cst_135 = arith.constant dense<0.000000e+00> : vector<16xf32>
    %318 = vector.multi_reduction <add>, %317, %cst_135 [1] : vector<16x128xf32> to vector<16xf32>
    %319 = vector.shape_cast %318 : vector<16xf32> to vector<16x1xf32>
    %cst_136 = arith.constant 1.280000e+02 : f32
    %320 = vector.broadcast %cst_136 : f32 to vector<16x1xf32>
    %321 = arith.divf %319, %320 : vector<16x1xf32>
    %322 = vector.broadcast %321 : vector<16x1xf32> to vector<16x128xf32>
    %323 = arith.subf %317, %322 : vector<16x128xf32>
    %324 = arith.mulf %323, %323 : vector<16x128xf32>
    %cst_137 = arith.constant dense<0.000000e+00> : vector<16xf32>
    %325 = vector.multi_reduction <add>, %324, %cst_137 [1] : vector<16x128xf32> to vector<16xf32>
    %326 = vector.shape_cast %325 : vector<16xf32> to vector<16x1xf32>
    %cst_138 = arith.constant 1.280000e+02 : f32
    %327 = vector.broadcast %cst_138 : f32 to vector<16x1xf32>
    %328 = arith.divf %326, %327 : vector<16x1xf32>
    %cst_139 = arith.constant 9.99999974E-6 : f32
    %329 = vector.broadcast %cst_139 : f32 to vector<16x1xf32>
    %330 = arith.addf %328, %329 : vector<16x1xf32>
    %331 = math.rsqrt %330 : vector<16x1xf32>
    %332 = vector.broadcast %331 : vector<16x1xf32> to vector<16x128xf32>
    %333 = arith.mulf %323, %332 : vector<16x128xf32>
    %334 = vector.broadcast %193 : vector<1x128xf32> to vector<16x128xf32>
    %335 = arith.addf %333, %334 : vector<16x128xf32>
    %336 = vector.broadcast %191 : vector<1x128xf32> to vector<16x128xf32>
    %337 = arith.mulf %335, %336 : vector<16x128xf32>
    %c0_140 = arith.constant 0 : index
    %c0_141 = arith.constant 0 : index
    %c0_142 = arith.constant 0 : index
    %338 = vector.load %arg28[%c0_140, %c0_141, %c0_142] : memref<1x128x256xbf16, #tpu.memory_space<vmem>>, vector<1x128x256xbf16>
    %339 = vector.shape_cast %338 : vector<1x128x256xbf16> to vector<128x256xbf16>
    %c0_143 = arith.constant 0 : index
    %c0_144 = arith.constant 0 : index
    %c0_145 = arith.constant 0 : index
    %340 = vector.load %arg29[%c0_143, %c0_144, %c0_145] : memref<1x1x256xf32, #tpu.memory_space<vmem>>, vector<1x1x256xf32>
    %341 = vector.shape_cast %340 : vector<1x1x256xf32> to vector<1x256xf32>
    %c0_146 = arith.constant 0 : index
    %c0_147 = arith.constant 0 : index
    %c0_148 = arith.constant 0 : index
    %342 = vector.load %arg30[%c0_146, %c0_147, %c0_148] : memref<1x256x128xbf16, #tpu.memory_space<vmem>>, vector<1x256x128xbf16>
    %343 = vector.shape_cast %342 : vector<1x256x128xbf16> to vector<256x128xbf16>
    %c0_149 = arith.constant 0 : index
    %c0_150 = arith.constant 0 : index
    %c0_151 = arith.constant 0 : index
    %344 = vector.load %arg31[%c0_149, %c0_150, %c0_151] : memref<1x1x128xf32, #tpu.memory_space<vmem>>, vector<1x1x128xf32>
    %345 = vector.shape_cast %344 : vector<1x1x128xf32> to vector<1x128xf32>
    %c0_152 = arith.constant 0 : index
    %c0_153 = arith.constant 0 : index
    %c0_154 = arith.constant 0 : index
    %346 = vector.load %arg32[%c0_152, %c0_153, %c0_154] : memref<1x1x128xf32, #tpu.memory_space<vmem>>, vector<1x1x128xf32>
    %347 = vector.shape_cast %346 : vector<1x1x128xf32> to vector<1x128xf32>
    %c0_155 = arith.constant 0 : index
    %c0_156 = arith.constant 0 : index
    %c0_157 = arith.constant 0 : index
    %348 = vector.load %arg33[%c0_155, %c0_156, %c0_157] : memref<1x1x128xf32, #tpu.memory_space<vmem>>, vector<1x1x128xf32>
    %349 = vector.shape_cast %348 : vector<1x1x128xf32> to vector<1x128xf32>
    %350 = arith.truncf %337 : vector<16x128xf32> to vector<16x128xbf16>
    %cst_158 = arith.constant dense<0.000000e+00> : vector<16x256xf32>
    %351 = tpu.matmul %350, %339, %cst_158 {dimension_numbers = #tpu.dot_dimension_numbers<[1], [0], [0], [1], [0, 0, 1, 1], [], []>} : vector<16x128xbf16>, vector<128x256xbf16>, vector<16x256xf32> -> vector<16x256xf32>
    %352 = vector.broadcast %341 : vector<1x256xf32> to vector<16x256xf32>
    %353 = arith.addf %351, %352 : vector<16x256xf32>
    %cst_159 = arith.constant 0.000000e+00 : f32
    %354 = vector.broadcast %cst_159 : f32 to vector<16x256xf32>
    %355 = arith.maximumf %353, %354 : vector<16x256xf32>
    %356 = arith.truncf %355 : vector<16x256xf32> to vector<16x256xbf16>
    %cst_160 = arith.constant dense<0.000000e+00> : vector<16x128xf32>
    %357 = tpu.matmul %356, %343, %cst_160 {dimension_numbers = #tpu.dot_dimension_numbers<[1], [0], [0], [1], [0, 0, 1, 1], [], []>} : vector<16x256xbf16>, vector<256x128xbf16>, vector<16x128xf32> -> vector<16x128xf32>
    %358 = vector.broadcast %345 : vector<1x128xf32> to vector<16x128xf32>
    %359 = arith.addf %357, %358 : vector<16x128xf32>
    %360 = arith.addf %337, %359 : vector<16x128xf32>
    %cst_161 = arith.constant dense<0.000000e+00> : vector<16xf32>
    %361 = vector.multi_reduction <add>, %360, %cst_161 [1] : vector<16x128xf32> to vector<16xf32>
    %362 = vector.shape_cast %361 : vector<16xf32> to vector<16x1xf32>
    %cst_162 = arith.constant 1.280000e+02 : f32
    %363 = vector.broadcast %cst_162 : f32 to vector<16x1xf32>
    %364 = arith.divf %362, %363 : vector<16x1xf32>
    %365 = vector.broadcast %364 : vector<16x1xf32> to vector<16x128xf32>
    %366 = arith.subf %360, %365 : vector<16x128xf32>
    %367 = arith.mulf %366, %366 : vector<16x128xf32>
    %cst_163 = arith.constant dense<0.000000e+00> : vector<16xf32>
    %368 = vector.multi_reduction <add>, %367, %cst_163 [1] : vector<16x128xf32> to vector<16xf32>
    %369 = vector.shape_cast %368 : vector<16xf32> to vector<16x1xf32>
    %cst_164 = arith.constant 1.280000e+02 : f32
    %370 = vector.broadcast %cst_164 : f32 to vector<16x1xf32>
    %371 = arith.divf %369, %370 : vector<16x1xf32>
    %cst_165 = arith.constant 9.99999974E-6 : f32
    %372 = vector.broadcast %cst_165 : f32 to vector<16x1xf32>
    %373 = arith.addf %371, %372 : vector<16x1xf32>
    %374 = math.rsqrt %373 : vector<16x1xf32>
    %375 = vector.broadcast %374 : vector<16x1xf32> to vector<16x128xf32>
    %376 = arith.mulf %366, %375 : vector<16x128xf32>
    %377 = vector.broadcast %349 : vector<1x128xf32> to vector<16x128xf32>
    %378 = arith.addf %376, %377 : vector<16x128xf32>
    %379 = vector.broadcast %347 : vector<1x128xf32> to vector<16x128xf32>
    %380 = arith.mulf %378, %379 : vector<16x128xf32>
    %c0_166 = arith.constant 0 : index
    %c0_167 = arith.constant 0 : index
    %381 = vector.load %arg35[%c0_166, %c0_167] : memref<16x128xf32, #tpu.memory_space<vmem>>, vector<16x128xf32>
    tpu.vector_store %arg35[%c0_166, %c0_167], %380 {strides = array<i32>} : memref<16x128xf32, #tpu.memory_space<vmem>>, vector<16x128xf32>,
    %c1_i32 = arith.constant 1 : i32
    %382 = arith.cmpi eq, %arg1, %c1_i32 : i32
    %383 = arith.extui %382 : i1 to i32
    %c0_i32_168 = arith.constant 0 : i32
    %384 = arith.cmpi ne, %383, %c0_i32_168 : i32
    scf.if %384 {
      %c0_169 = arith.constant 0 : index
      %c0_170 = arith.constant 0 : index
      %c0_171 = arith.constant 0 : index
      %385 = vector.load %arg34[%c0_169, %c0_170, %c0_171] : memref<1x16x128xf32, #tpu.memory_space<vmem>>, vector<1x16x128xf32>
      %386 = vector.shape_cast %385 : vector<1x16x128xf32> to vector<16x128xf32>
      %387 = vector.shape_cast %380 : vector<16x128xf32> to vector<1x16x128xf32>
      tpu.vector_store %arg34[%c0_169, %c0_170, %c0_171], %387 {strides = array<i32>} : memref<1x16x128xf32, #tpu.memory_space<vmem>>, vector<1x16x128xf32>,
    } else {
    }
    return
  }
  func.func @transform_0(%arg0: i32, %arg1: i32) -> (i32, i32, i32) {
    %c0_i32 = arith.constant 0 : i32
    %c0_i32_0 = arith.constant 0 : i32
    %c0_i32_1 = arith.constant 0 : i32
    return %arg0, %c0_i32, %c0_i32_0 : i32, i32, i32
  }
  func.func @transform_1(%arg0: i32, %arg1: i32) -> (i32, i32, i32) {
    %c0_i32 = arith.constant 0 : i32
    %c0_i32_0 = arith.constant 0 : i32
    %c0_i32_1 = arith.constant 0 : i32
    return %arg0, %c0_i32, %c0_i32_0 : i32, i32, i32
  }
  func.func @transform_2(%arg0: i32, %arg1: i32) -> (i32, i32, i32) {
    %c0_i32 = arith.constant 0 : i32
    %c0_i32_0 = arith.constant 0 : i32
    %c0_i32_1 = arith.constant 0 : i32
    return %arg0, %c0_i32, %c0_i32_0 : i32, i32, i32
  }
  func.func @transform_3(%arg0: i32, %arg1: i32) -> (i32, i32, i32) {
    %c0_i32 = arith.constant 0 : i32
    %c0_i32_0 = arith.constant 0 : i32
    %c0_i32_1 = arith.constant 0 : i32
    return %arg0, %c0_i32, %c0_i32_0 : i32, i32, i32
  }
  func.func @transform_4(%arg0: i32, %arg1: i32) -> (i32, i32, i32) {
    %c0_i32 = arith.constant 0 : i32
    %c0_i32_0 = arith.constant 0 : i32
    %c0_i32_1 = arith.constant 0 : i32
    return %arg0, %c0_i32, %c0_i32_0 : i32, i32, i32
  }
  func.func @transform_5(%arg0: i32, %arg1: i32) -> (i32, i32, i32) {
    %c0_i32 = arith.constant 0 : i32
    %c0_i32_0 = arith.constant 0 : i32
    %c0_i32_1 = arith.constant 0 : i32
    return %arg0, %c0_i32, %c0_i32_0 : i32, i32, i32
  }
  func.func @transform_6(%arg0: i32, %arg1: i32) -> (i32, i32, i32) {
    %c0_i32 = arith.constant 0 : i32
    %c0_i32_0 = arith.constant 0 : i32
    %c0_i32_1 = arith.constant 0 : i32
    return %arg1, %c0_i32, %c0_i32_0 : i32, i32, i32
  }
  func.func @transform_7(%arg0: i32, %arg1: i32) -> (i32, i32, i32) {
    %c0_i32 = arith.constant 0 : i32
    %c0_i32_0 = arith.constant 0 : i32
    %c0_i32_1 = arith.constant 0 : i32
    return %arg1, %c0_i32, %c0_i32_0 : i32, i32, i32
  }
  func.func @transform_8(%arg0: i32, %arg1: i32) -> (i32, i32, i32) {
    %c0_i32 = arith.constant 0 : i32
    %c0_i32_0 = arith.constant 0 : i32
    %c0_i32_1 = arith.constant 0 : i32
    return %arg1, %c0_i32, %c0_i32_0 : i32, i32, i32
  }
  func.func @transform_9(%arg0: i32, %arg1: i32) -> (i32, i32, i32) {
    %c0_i32 = arith.constant 0 : i32
    %c0_i32_0 = arith.constant 0 : i32
    %c0_i32_1 = arith.constant 0 : i32
    return %arg1, %c0_i32, %c0_i32_0 : i32, i32, i32
  }
  func.func @transform_10(%arg0: i32, %arg1: i32) -> (i32, i32, i32) {
    %c0_i32 = arith.constant 0 : i32
    %c0_i32_0 = arith.constant 0 : i32
    %c0_i32_1 = arith.constant 0 : i32
    return %arg1, %c0_i32, %c0_i32_0 : i32, i32, i32
  }
  func.func @transform_11(%arg0: i32, %arg1: i32) -> (i32, i32, i32) {
    %c0_i32 = arith.constant 0 : i32
    %c0_i32_0 = arith.constant 0 : i32
    %c0_i32_1 = arith.constant 0 : i32
    return %arg1, %c0_i32, %c0_i32_0 : i32, i32, i32
  }
  func.func @transform_12(%arg0: i32, %arg1: i32) -> (i32, i32, i32) {
    %c0_i32 = arith.constant 0 : i32
    %c0_i32_0 = arith.constant 0 : i32
    %c0_i32_1 = arith.constant 0 : i32
    return %arg1, %c0_i32, %c0_i32_0 : i32, i32, i32
  }
  func.func @transform_13(%arg0: i32, %arg1: i32) -> (i32, i32, i32) {
    %c0_i32 = arith.constant 0 : i32
    %c0_i32_0 = arith.constant 0 : i32
    %c0_i32_1 = arith.constant 0 : i32
    return %arg1, %c0_i32, %c0_i32_0 : i32, i32, i32
  }
  func.func @transform_14(%arg0: i32, %arg1: i32) -> (i32, i32, i32) {
    %c0_i32 = arith.constant 0 : i32
    %c0_i32_0 = arith.constant 0 : i32
    %c0_i32_1 = arith.constant 0 : i32
    return %arg1, %c0_i32, %c0_i32_0 : i32, i32, i32
  }
  func.func @transform_15(%arg0: i32, %arg1: i32) -> (i32, i32, i32) {
    %c0_i32 = arith.constant 0 : i32
    %c0_i32_0 = arith.constant 0 : i32
    %c0_i32_1 = arith.constant 0 : i32
    return %arg1, %c0_i32, %c0_i32_0 : i32, i32, i32
  }
  func.func @transform_16(%arg0: i32, %arg1: i32) -> (i32, i32, i32) {
    %c0_i32 = arith.constant 0 : i32
    %c0_i32_0 = arith.constant 0 : i32
    %c0_i32_1 = arith.constant 0 : i32
    return %arg1, %c0_i32, %c0_i32_0 : i32, i32, i32
  }
  func.func @transform_17(%arg0: i32, %arg1: i32) -> (i32, i32, i32) {
    %c0_i32 = arith.constant 0 : i32
    %c0_i32_0 = arith.constant 0 : i32
    %c0_i32_1 = arith.constant 0 : i32
    return %arg1, %c0_i32, %c0_i32_0 : i32, i32, i32
  }
  func.func @transform_18(%arg0: i32, %arg1: i32) -> (i32, i32, i32) {
    %c0_i32 = arith.constant 0 : i32
    %c0_i32_0 = arith.constant 0 : i32
    %c0_i32_1 = arith.constant 0 : i32
    return %arg1, %c0_i32, %c0_i32_0 : i32, i32, i32
  }
  func.func @transform_19(%arg0: i32, %arg1: i32) -> (i32, i32, i32) {
    %c0_i32 = arith.constant 0 : i32
    %c0_i32_0 = arith.constant 0 : i32
    %c0_i32_1 = arith.constant 0 : i32
    return %arg1, %c0_i32, %c0_i32_0 : i32, i32, i32
  }
  func.func @transform_20(%arg0: i32, %arg1: i32) -> (i32, i32, i32) {
    %c0_i32 = arith.constant 0 : i32
    %c0_i32_0 = arith.constant 0 : i32
    %c0_i32_1 = arith.constant 0 : i32
    return %arg1, %c0_i32, %c0_i32_0 : i32, i32, i32
  }
  func.func @transform_21(%arg0: i32, %arg1: i32) -> (i32, i32, i32) {
    %c0_i32 = arith.constant 0 : i32
    %c0_i32_0 = arith.constant 0 : i32
    %c0_i32_1 = arith.constant 0 : i32
    return %arg1, %c0_i32, %c0_i32_0 : i32, i32, i32
  }
  func.func @transform_22(%arg0: i32, %arg1: i32) -> (i32, i32, i32) {
    %c0_i32 = arith.constant 0 : i32
    %c0_i32_0 = arith.constant 0 : i32
    %c0_i32_1 = arith.constant 0 : i32
    return %arg1, %c0_i32, %c0_i32_0 : i32, i32, i32
  }
  func.func @transform_23(%arg0: i32, %arg1: i32) -> (i32, i32, i32) {
    %c0_i32 = arith.constant 0 : i32
    %c0_i32_0 = arith.constant 0 : i32
    %c0_i32_1 = arith.constant 0 : i32
    return %arg1, %c0_i32, %c0_i32_0 : i32, i32, i32
  }
  func.func @transform_24(%arg0: i32, %arg1: i32) -> (i32, i32, i32) {
    %c0_i32 = arith.constant 0 : i32
    %c0_i32_0 = arith.constant 0 : i32
    %c0_i32_1 = arith.constant 0 : i32
    return %arg1, %c0_i32, %c0_i32_0 : i32, i32, i32
  }
  func.func @transform_25(%arg0: i32, %arg1: i32) -> (i32, i32, i32) {
    %c0_i32 = arith.constant 0 : i32
    %c0_i32_0 = arith.constant 0 : i32
    %c0_i32_1 = arith.constant 0 : i32
    return %arg1, %c0_i32, %c0_i32_0 : i32, i32, i32
  }
  func.func @transform_26(%arg0: i32, %arg1: i32) -> (i32, i32, i32) {
    %c0_i32 = arith.constant 0 : i32
    %c0_i32_0 = arith.constant 0 : i32
    %c0_i32_1 = arith.constant 0 : i32
    return %arg1, %c0_i32, %c0_i32_0 : i32, i32, i32
  }
  func.func @transform_27(%arg0: i32, %arg1: i32) -> (i32, i32, i32) {
    %c0_i32 = arith.constant 0 : i32
    %c0_i32_0 = arith.constant 0 : i32
    %c0_i32_1 = arith.constant 0 : i32
    return %arg1, %c0_i32, %c0_i32_0 : i32, i32, i32
  }
  func.func @transform_28(%arg0: i32, %arg1: i32) -> (i32, i32, i32) {
    %c0_i32 = arith.constant 0 : i32
    %c0_i32_0 = arith.constant 0 : i32
    %c0_i32_1 = arith.constant 0 : i32
    return %arg1, %c0_i32, %c0_i32_0 : i32, i32, i32
  }
  func.func @transform_29(%arg0: i32, %arg1: i32) -> (i32, i32, i32) {
    %c0_i32 = arith.constant 0 : i32
    %c0_i32_0 = arith.constant 0 : i32
    %c0_i32_1 = arith.constant 0 : i32
    return %arg1, %c0_i32, %c0_i32_0 : i32, i32, i32
  }
  func.func @transform_30(%arg0: i32, %arg1: i32) -> (i32, i32, i32) {
    %c0_i32 = arith.constant 0 : i32
    %c0_i32_0 = arith.constant 0 : i32
    %c0_i32_1 = arith.constant 0 : i32
    return %arg1, %c0_i32, %c0_i32_0 : i32, i32, i32
  }
  func.func @transform_31(%arg0: i32, %arg1: i32) -> (i32, i32, i32) {
    %c0_i32 = arith.constant 0 : i32
    %c0_i32_0 = arith.constant 0 : i32
    %c0_i32_1 = arith.constant 0 : i32
    return %arg1, %c0_i32, %c0_i32_0 : i32, i32, i32
  }
  func.func @transform_32(%arg0: i32, %arg1: i32) -> (i32, i32, i32) {
    %c0_i32 = arith.constant 0 : i32
    %c0_i32_0 = arith.constant 0 : i32
    %c0_i32_1 = arith.constant 0 : i32
    return %arg0, %c0_i32, %c0_i32_0 : i32, i32, i32
  }
}

</mosaic_0001>

<llo_original>
// kernel: ane_transformer_forward.2
$region0: #{ane_transformer_forward.2}
  #allocation0 [shape = 'u32[]', space=smem, size = 0x4, offset = 0x4, fixed_abs, tag = 'smem constant byte address 0x4 - core index']
  #allocation1 [shape = 'u32[144,128]{1,0:T(1,128)}', space=vmem, size = 0x12000, scoped, tag = 'internal scratch']
  #allocation2 [shape = 'f32[16,128]{1,0:T(8,128)}', space=vmem, size = 0x2000, scoped, tag = 'scratch operand']
  %s0 = inlined_call_operand.hbm [shape: f32[2,16,128], index: 0, kind: input, shape index: {}]
  %s1 = inlined_call_operand.hbm [shape: f32[2,16,128], index: 1, kind: input, shape index: {}]
  %s2 = inlined_call_operand.vmem [shape: f32[2,1,16], index: 2, kind: input, shape index: {}]
  %s3 = inlined_call_operand.hbm [shape: bf16[2,128,128], index: 3, kind: input, shape index: {}]
  %s4 = inlined_call_operand.vmem [shape: f32[2,1,128], index: 4, kind: input, shape index: {}]
  %s5 = inlined_call_operand.hbm [shape: bf16[2,128,128], index: 5, kind: input, shape index: {}]
  %s6 = inlined_call_operand.vmem [shape: f32[2,1,128], index: 6, kind: input, shape index: {}]
  %s7 = inlined_call_operand.hbm [shape: bf16[2,128,128], index: 7, kind: input, shape index: {}]
  %s8 = inlined_call_operand.vmem [shape: f32[2,1,128], index: 8, kind: input, shape index: {}]
  %s9 = inlined_call_operand.hbm [shape: bf16[2,128,128], index: 9, kind: input, shape index: {}]
  %s10 = inlined_call_operand.vmem [shape: f32[2,1,128], index: 10, kind: input, shape index: {}]
  %s11 = inlined_call_operand.vmem [shape: f32[2,1,128], index: 11, kind: input, shape index: {}]
  %s12 = inlined_call_operand.vmem [shape: f32[2,1,128], index: 12, kind: input, shape index: {}]
  %s13 = inlined_call_operand.hbm [shape: bf16[2,128,256], index: 13, kind: input, shape index: {}]
  %s14 = inlined_call_operand.vmem [shape: f32[2,1,256], index: 14, kind: input, shape index: {}]
  %s15 = inlined_call_operand.hbm [shape: bf16[2,256,128], index: 15, kind: input, shape index: {}]
  %s16 = inlined_call_operand.vmem [shape: f32[2,1,128], index: 16, kind: input, shape index: {}]
  %s17 = inlined_call_operand.vmem [shape: f32[2,1,128], index: 17, kind: input, shape index: {}]
  %s18 = inlined_call_operand.vmem [shape: f32[2,1,128], index: 18, kind: input, shape index: {}]
  %s19 = inlined_call_operand.vmem [shape: f32[2,16,128], index: 19, kind: output, shape index: {}]
  %s20 = sld [smem:[#allocation0]]
  $region149: #{ane_transformer_forward.2} parent=0
    _
  %s22 = ssub.s32 1, %s20
  %s23 = scalar_select 0, %s22, %s20
  $region1: #{ane_transformer_forward.2} parent=0
    #allocation3 [shape = 'u8[16384]{0}', space=vmem, size = 0x4000, scoped, tag = 'input window, operand 0']
    #allocation4 [shape = 's32[2]{0}', space=sflag, size = 0x8, scoped, tag = 'scoped memory for ane_transformer_forward.2']
    #allocation5 [shape = 'u8[16384]{0}', space=vmem, size = 0x4000, scoped, tag = 'input window, operand 1']
    #allocation6 [shape = 's32[2]{0}', space=sflag, size = 0x8, scoped, tag = 'scoped memory for ane_transformer_forward.2']
    #allocation7 [shape = 'u8[65536]{0}', space=vmem, size = 0x10000, scoped, tag = 'input window, operand 3']
    #allocation8 [shape = 'u8[65536]{0}', space=vmem, size = 0x10000, scoped, tag = 'input window, operand 5']
    #allocation9 [shape = 's32[2]{0}', space=sflag, size = 0x8, scoped, tag = 'scoped memory for ane_transformer_forward.2']
    #allocation10 [shape = 'u8[65536]{0}', space=vmem, size = 0x10000, scoped, tag = 'input window, operand 7']
    #allocation11 [shape = 'u8[65536]{0}', space=vmem, size = 0x10000, scoped, tag = 'input window, operand 9']
    #allocation12 [shape = 's32[2]{0}', space=sflag, size = 0x8, scoped, tag = 'scoped memory for ane_transformer_forward.2']
    #allocation13 [shape = 'u8[131072]{0}', space=vmem, size = 0x20000, scoped, tag = 'input window, operand 13']
    #allocation14 [shape = 'u8[131072]{0}', space=vmem, size = 0x20000, scoped, tag = 'input window, operand 15']
    #allocation15 [shape = 's32[2]{0}', space=sflag, size = 0x8, scoped, tag = 'scoped memory for ane_transformer_forward.2']
    %24 = vsyncpa [#allocation4], 0
    %s25 = scalar_lea.sflag [#allocation4], 1
    %26 = vsyncpa %s25, 0
    %27 = vsyncpa [#allocation6], 0
    %s28 = scalar_lea.sflag [#allocation6], 1
    %29 = vsyncpa %s28, 0
    %30 = vsyncpa [#allocation9], 0
    %s31 = scalar_lea.sflag [#allocation9], 1
    %32 = vsyncpa %s31, 0
    %33 = vsyncpa [#allocation12], 0
    %s34 = scalar_lea.sflag [#allocation12], 1
    %35 = vsyncpa %s34, 0
    %36 = vsyncpa [#allocation15], 0
    %s37 = scalar_lea.sflag [#allocation15], 1
    %38 = vsyncpa %s37, 0
    loop: start=0, step=1, limit=6
    $region2: #{ane_transformer_forward.2} parent=1 // loop_pre_header
      _
    $region3: #{ane_transformer_forward.2} parent=1 // loop_header
      %s40 = sphi 0, %s44
      %p41 = scmp.ge.s32.totalorder %s40, 6
      %s47 = sphi 0, %s59
      %s48 = sphi 0, %s55
      %s49 = sphi 0, %s47
      %s50 = sphi 0, %s48
      %s51 = sphi 0, %s49
      %s52 = sphi 0, %s50
      %s62 = sphi 0, %s64
      %s65 = sphi 0, %s62
      %s66 = sphi 0, %s65
      %s82 = sphi 0, %s66
      %s88 = sphi 0, %s90
      %s91 = sphi 0, %s88
      %s92 = sphi 0, %s91
      %s108 = sphi 0, %s92
      %s114 = sphi 0, %s116
      %s117 = sphi 0, %s114
      %s118 = sphi 0, %s117
      %s134 = sphi 0, %s118
      %s140 = sphi 0, %s142
      %s143 = sphi 0, %s140
      %s144 = sphi 0, %s143
      %s160 = sphi 0, %s144
      %s166 = sphi 0, %s168
      %s169 = sphi 0, %s166
      %s170 = sphi 0, %s169
      %s186 = sphi 0, %s170
      %s192 = sphi 0, %s194
      %s195 = sphi 0, %s192
      %s196 = sphi 0, %s195
      %s212 = sphi 0, %s196
      %s218 = sphi 0, %s220
      %s221 = sphi 0, %s218
      %s222 = sphi 0, %s221
      %s238 = sphi 0, %s222
      %s244 = sphi 0, %s246
      %s247 = sphi 0, %s244
      %s248 = sphi 0, %s247
      %s264 = sphi 0, %s248
      %s270 = sphi 0, %s272
      %s273 = sphi 0, %s270
      %s274 = sphi 0, %s273
      %s290 = sphi 0, %s274
      %s296 = sphi 0, %s298
      %s299 = sphi 0, %s296
      %s300 = sphi 0, %s299
      %s316 = sphi 0, %s300
      %s322 = sphi 0, %s324
      %s325 = sphi 0, %s322
      %s326 = sphi 0, %s325
      %s342 = sphi 0, %s326
      %s348 = sphi 0, %s350
      %s351 = sphi 0, %s348
      %s352 = sphi 0, %s351
      %s368 = sphi 0, %s352
      %s374 = sphi 0, %s376
      %s377 = sphi 0, %s374
      %s378 = sphi 0, %s377
      %s394 = sphi 0, %s378
      %s400 = sphi 0, %s402
      %s403 = sphi 0, %s400
      %s404 = sphi 0, %s403
      %s420 = sphi 0, %s404
      %s426 = sphi 0, %s428
      %s429 = sphi 0, %s426
      %s430 = sphi 0, %s429
      %s446 = sphi 0, %s430
      %s452 = sphi 0, %s454
      %s455 = sphi 0, %s452
      %s456 = sphi 0, %s455
      %s472 = sphi 0, %s456
      %s478 = sphi 0, %s480
      %s481 = sphi 0, %s478
      %s482 = sphi 0, %s481
      %s498 = sphi 0, %s482
      %s504 = sphi 0, %s506
      %s507 = sphi 0, %s504
      %s508 = sphi 0, %s507
      %s524 = sphi 0, %s508
      %s530 = sphi 0, %s532
      %s533 = sphi 0, %s530
      %s534 = sphi 0, %s533
      %s550 = sphi 0, %s534
      %s556 = sphi 0, %s558
      %s559 = sphi 0, %s556
      %s560 = sphi 0, %s559
      %s576 = sphi 0, %s560
    $region4: #{ane_transformer_forward.2} parent=1 // loop_header_branch
      %43 = sbr.rel (%p41) target = $region8
    $region5: #{ane_transformer_forward.2} parent=1 // loop_body
      %s45 = ssub.s32 %s40, 1
      %s46 = ssub.s32 %s40, 2
      %s53 = sadd.s32 1, %s48
      %p54 = scmp.ge.s32.totalorder %s53, 2
      %s55 = scalar_select %p54, 0, %s53
      %s56 = sadd.s32 1, %s47
      %s57 = scalar_select %p54, %s56, %s47
      %p58 = scmp.ge.s32.totalorder %s57, 2
      %s59 = scalar_select %p58, 0, %s57
      %s60 = ssub.s32 %s47, %s59
      %p61 = scmp.eq.s32.totalorder %s60, 0
      %s63 = sadd.s32 %s62, 1
      %s64 = scalar_select %p61, %s62, %s63
      %p67 = pneg %p61
      %p68 = scmp.eq.s32.totalorder %s40, 3
      %p69 = por %p67, %p68
      %p70 = scmp.ne.s32.totalorder %s62, %s65
      %p71 = scmp.eq.s32.totalorder %s40, 0
      %p72 = por %p70, %p71
      %p73 = scmp.ne.s32.totalorder %s62, %s65
      %p74 = scmp.eq.s32.totalorder %s45, 3
      %p75 = por %p73, %p74
      %p76 = scmp.ne.s32.totalorder %s65, %s66
      %p77 = scmp.eq.s32.totalorder %s45, 0
      %p78 = por %p76, %p77
      %p79 = scmp.ne.s32.totalorder %s65, %s66
      %p80 = scmp.eq.s32.totalorder %s46, 3
      %p81 = por %p79, %p80
      %p83 = scmp.ne.s32.totalorder %s66, %s82
      %p84 = scmp.eq.s32.totalorder %s46, 0
      %p85 = por %p83, %p84
      %s86 = ssub.s32 %s47, %s59
      %p87 = scmp.eq.s32.totalorder %s86, 0
      %s89 = sadd.s32 %s88, 1
      %s90 = scalar_select %p87, %s88, %s89
      %p93 = pneg %p87
      %p94 = scmp.eq.s32.totalorder %s40, 3
      %p95 = por %p93, %p94
      %p96 = scmp.ne.s32.totalorder %s88, %s91
      %p97 = scmp.eq.s32.totalorder %s40, 0
      %p98 = por %p96, %p97
      %p99 = scmp.ne.s32.totalorder %s88, %s91
      %p100 = scmp.eq.s32.totalorder %s45, 3
      %p101 = por %p99, %p100
      %p102 = scmp.ne.s32.totalorder %s91, %s92
      %p103 = scmp.eq.s32.totalorder %s45, 0
      %p104 = por %p102, %p103
      %p105 = scmp.ne.s32.totalorder %s91, %s92
      %p106 = scmp.eq.s32.totalorder %s46, 3
      %p107 = por %p105, %p106
      %p109 = scmp.ne.s32.totalorder %s92, %s108
      %p110 = scmp.eq.s32.totalorder %s46, 0
      %p111 = por %p109, %p110
      %s112 = ssub.s32 %s47, %s59
      %p113 = scmp.eq.s32.totalorder %s112, 0
      %s115 = sadd.s32 %s114, 1
      %s116 = scalar_select %p113, %s114, %s115
      %p119 = pneg %p113
      %p120 = scmp.eq.s32.totalorder %s40, 3
      %p121 = por %p119, %p120
      %p122 = scmp.ne.s32.totalorder %s114, %s117
      %p123 = scmp.eq.s32.totalorder %s40, 0
      %p124 = por %p122, %p123
      %p125 = scmp.ne.s32.totalorder %s114, %s117
      %p126 = scmp.eq.s32.totalorder %s45, 3
      %p127 = por %p125, %p126
      %p128 = scmp.ne.s32.totalorder %s117, %s118
      %p129 = scmp.eq.s32.totalorder %s45, 0
      %p130 = por %p128, %p129
      %p131 = scmp.ne.s32.totalorder %s117, %s118
      %p132 = scmp.eq.s32.totalorder %s46, 3
      %p133 = por %p131, %p132
      %p135 = scmp.ne.s32.totalorder %s118, %s134
      %p136 = scmp.eq.s32.totalorder %s46, 0
      %p137 = por %p135, %p136
      %s138 = ssub.s32 %s48, %s55
      %p139 = scmp.eq.s32.totalorder %s138, 0
      %s141 = sadd.s32 %s140, 1
      %s142 = scalar_select %p139, %s140, %s141
      %p145 = pneg %p139
      %p146 = scmp.eq.s32.totalorder %s40, 3
      %p147 = por %p145, %p146
      %p148 = scmp.ne.s32.totalorder %s140, %s143
      %p149 = scmp.eq.s32.totalorder %s40, 0
      %p150 = por %p148, %p149
      %p151 = scmp.ne.s32.totalorder %s140, %s143
      %p152 = scmp.eq.s32.totalorder %s45, 3
      %p153 = por %p151, %p152
      %p154 = scmp.ne.s32.totalorder %s143, %s144
      %p155 = scmp.eq.s32.totalorder %s45, 0
      %p156 = por %p154, %p155
      %p157 = scmp.ne.s32.totalorder %s143, %s144
      %p158 = scmp.eq.s32.totalorder %s46, 3
      %p159 = por %p157, %p158
      %p161 = scmp.ne.s32.totalorder %s144, %s160
      %p162 = scmp.eq.s32.totalorder %s46, 0
      %p163 = por %p161, %p162
      %s164 = ssub.s32 %s48, %s55
      %p165 = scmp.eq.s32.totalorder %s164, 0
      %s167 = sadd.s32 %s166, 1
      %s168 = scalar_select %p165, %s166, %s167
      %p171 = pneg %p165
      %p172 = scmp.eq.s32.totalorder %s40, 3
      %p173 = por %p171, %p172
      %p174 = scmp.ne.s32.totalorder %s166, %s169
      %p175 = scmp.eq.s32.totalorder %s40, 0
      %p176 = por %p174, %p175
      %p177 = scmp.ne.s32.totalorder %s166, %s169
      %p178 = scmp.eq.s32.totalorder %s45, 3
      %p179 = por %p177, %p178
      %p180 = scmp.ne.s32.totalorder %s169, %s170
      %p181 = scmp.eq.s32.totalorder %s45, 0
      %p182 = por %p180, %p181
      %p183 = scmp.ne.s32.totalorder %s169, %s170
      %p184 = scmp.eq.s32.totalorder %s46, 3
      %p185 = por %p183, %p184
      %p187 = scmp.ne.s32.totalorder %s170, %s186
      %p188 = scmp.eq.s32.totalorder %s46, 0
      %p189 = por %p187, %p188
      %s190 = ssub.s32 %s48, %s55
      %p191 = scmp.eq.s32.totalorder %s190, 0
      %s193 = sadd.s32 %s192, 1
      %s194 = scalar_select %p191, %s192, %s193
      %p197 = pneg %p191
      %p198 = scmp.eq.s32.totalorder %s40, 3
      %p199 = por %p197, %p198
      %p200 = scmp.ne.s32.totalorder %s192, %s195
      %p201 = scmp.eq.s32.totalorder %s40, 0
      %p202 = por %p200, %p201
      %p203 = scmp.ne.s32.totalorder %s192, %s195
      %p204 = scmp.eq.s32.totalorder %s45, 3
      %p205 = por %p203, %p204
      %p206 = scmp.ne.s32.totalorder %s195, %s196
      %p207 = scmp.eq.s32.totalorder %s45, 0
      %p208 = por %p206, %p207
      %p209 = scmp.ne.s32.totalorder %s195, %s196
      %p210 = scmp.eq.s32.totalorder %s46, 3
      %p211 = por %p209, %p210
      %p213 = scmp.ne.s32.totalorder %s196, %s212
      %p214 = scmp.eq.s32.totalorder %s46, 0
      %p215 = por %p213, %p214
      %s216 = ssub.s32 %s48, %s55
      %p217 = scmp.eq.s32.totalorder %s216, 0
      %s219 = sadd.s32 %s218, 1
      %s220 = scalar_select %p217, %s218, %s219
      %p223 = pneg %p217
      %p224 = scmp.eq.s32.totalorder %s40, 3
      %p225 = por %p223, %p224
      %p226 = scmp.ne.s32.totalorder %s218, %s221
      %p227 = scmp.eq.s32.totalorder %s40, 0
      %p228 = por %p226, %p227
      %p229 = scmp.ne.s32.totalorder %s218, %s221
      %p230 = scmp.eq.s32.totalorder %s45, 3
      %p231 = por %p229, %p230
      %p232 = scmp.ne.s32.totalorder %s221, %s222
      %p233 = scmp.eq.s32.totalorder %s45, 0
      %p234 = por %p232, %p233
      %p235 = scmp.ne.s32.totalorder %s221, %s222
      %p236 = scmp.eq.s32.totalorder %s46, 3
      %p237 = por %p235, %p236
      %p239 = scmp.ne.s32.totalorder %s222, %s238
      %p240 = scmp.eq.s32.totalorder %s46, 0
      %p241 = por %p239, %p240
      %s242 = ssub.s32 %s48, %s55
      %p243 = scmp.eq.s32.totalorder %s242, 0
      %s245 = sadd.s32 %s244, 1
      %s246 = scalar_select %p243, %s244, %s245
      %p249 = pneg %p243
      %p250 = scmp.eq.s32.totalorder %s40, 3
      %p251 = por %p249, %p250
      %p252 = scmp.ne.s32.totalorder %s244, %s247
      %p253 = scmp.eq.s32.totalorder %s40, 0
      %p254 = por %p252, %p253
      %p255 = scmp.ne.s32.totalorder %s244, %s247
      %p256 = scmp.eq.s32.totalorder %s45, 3
      %p257 = por %p255, %p256
      %p258 = scmp.ne.s32.totalorder %s247, %s248
      %p259 = scmp.eq.s32.totalorder %s45, 0
      %p260 = por %p258, %p259
      %p261 = scmp.ne.s32.totalorder %s247, %s248
      %p262 = scmp.eq.s32.totalorder %s46, 3
      %p263 = por %p261, %p262
      %p265 = scmp.ne.s32.totalorder %s248, %s264
      %p266 = scmp.eq.s32.totalorder %s46, 0
      %p267 = por %p265, %p266
      %s268 = ssub.s32 %s48, %s55
      %p269 = scmp.eq.s32.totalorder %s268, 0
      %s271 = sadd.s32 %s270, 1
      %s272 = scalar_select %p269, %s270, %s271
      %p275 = pneg %p269
      %p276 = scmp.eq.s32.totalorder %s40, 3
      %p277 = por %p275, %p276
      %p278 = scmp.ne.s32.totalorder %s270, %s273
      %p279 = scmp.eq.s32.totalorder %s40, 0
      %p280 = por %p278, %p279
      %p281 = scmp.ne.s32.totalorder %s270, %s273
      %p282 = scmp.eq.s32.totalorder %s45, 3
      %p283 = por %p281, %p282
      %p284 = scmp.ne.s32.totalorder %s273, %s274
      %p285 = scmp.eq.s32.totalorder %s45, 0
      %p286 = por %p284, %p285
      %p287 = scmp.ne.s32.totalorder %s273, %s274
      %p288 = scmp.eq.s32.totalorder %s46, 3
      %p289 = por %p287, %p288
      %p291 = scmp.ne.s32.totalorder %s274, %s290
      %p292 = scmp.eq.s32.totalorder %s46, 0
      %p293 = por %p291, %p292
      %s294 = ssub.s32 %s48, %s55
      %p295 = scmp.eq.s32.totalorder %s294, 0
      %s297 = sadd.s32 %s296, 1
      %s298 = scalar_select %p295, %s296, %s297
      %p301 = pneg %p295
      %p302 = scmp.eq.s32.totalorder %s40, 3
      %p303 = por %p301, %p302
      %p304 = scmp.ne.s32.totalorder %s296, %s299
      %p305 = scmp.eq.s32.totalorder %s40, 0
      %p306 = por %p304, %p305
      %p307 = scmp.ne.s32.totalorder %s296, %s299
      %p308 = scmp.eq.s32.totalorder %s45, 3
      %p309 = por %p307, %p308
      %p310 = scmp.ne.s32.totalorder %s299, %s300
      %p311 = scmp.eq.s32.totalorder %s45, 0
      %p312 = por %p310, %p311
      %p313 = scmp.ne.s32.totalorder %s299, %s300
      %p314 = scmp.eq.s32.totalorder %s46, 3
      %p315 = por %p313, %p314
      %p317 = scmp.ne.s32.totalorder %s300, %s316
      %p318 = scmp.eq.s32.totalorder %s46, 0
      %p319 = por %p317, %p318
      %s320 = ssub.s32 %s48, %s55
      %p321 = scmp.eq.s32.totalorder %s320, 0
      %s323 = sadd.s32 %s322, 1
      %s324 = scalar_select %p321, %s322, %s323
      %p327 = pneg %p321
      %p328 = scmp.eq.s32.totalorder %s40, 3
      %p329 = por %p327, %p328
      %p330 = scmp.ne.s32.totalorder %s322, %s325
      %p331 = scmp.eq.s32.totalorder %s40, 0
      %p332 = por %p330, %p331
      %p333 = scmp.ne.s32.totalorder %s322, %s325
      %p334 = scmp.eq.s32.totalorder %s45, 3
      %p335 = por %p333, %p334
      %p336 = scmp.ne.s32.totalorder %s325, %s326
      %p337 = scmp.eq.s32.totalorder %s45, 0
      %p338 = por %p336, %p337
      %p339 = scmp.ne.s32.totalorder %s325, %s326
      %p340 = scmp.eq.s32.totalorder %s46, 3
      %p341 = por %p339, %p340
      %p343 = scmp.ne.s32.totalorder %s326, %s342
      %p344 = scmp.eq.s32.totalorder %s46, 0
      %p345 = por %p343, %p344
      %s346 = ssub.s32 %s48, %s55
      %p347 = scmp.eq.s32.totalorder %s346, 0
      %s349 = sadd.s32 %s348, 1
      %s350 = scalar_select %p347, %s348, %s349
      %p353 = pneg %p347
      %p354 = scmp.eq.s32.totalorder %s40, 3
      %p355 = por %p353, %p354
      %p356 = scmp.ne.s32.totalorder %s348, %s351
      %p357 = scmp.eq.s32.totalorder %s40, 0
      %p358 = por %p356, %p357
      %p359 = scmp.ne.s32.totalorder %s348, %s351
      %p360 = scmp.eq.s32.totalorder %s45, 3
      %p361 = por %p359, %p360
      %p362 = scmp.ne.s32.totalorder %s351, %s352
      %p363 = scmp.eq.s32.totalorder %s45, 0
      %p364 = por %p362, %p363
      %p365 = scmp.ne.s32.totalorder %s351, %s352
      %p366 = scmp.eq.s32.totalorder %s46, 3
      %p367 = por %p365, %p366
      %p369 = scmp.ne.s32.totalorder %s352, %s368
      %p370 = scmp.eq.s32.totalorder %s46, 0
      %p371 = por %p369, %p370
      %s372 = ssub.s32 %s48, %s55
      %p373 = scmp.eq.s32.totalorder %s372, 0
      %s375 = sadd.s32 %s374, 1
      %s376 = scalar_select %p373, %s374, %s375
      %p379 = pneg %p373
      %p380 = scmp.eq.s32.totalorder %s40, 3
      %p381 = por %p379, %p380
      %p382 = scmp.ne.s32.totalorder %s374, %s377
      %p383 = scmp.eq.s32.totalorder %s40, 0
      %p384 = por %p382, %p383
      %p385 = scmp.ne.s32.totalorder %s374, %s377
      %p386 = scmp.eq.s32.totalorder %s45, 3
      %p387 = por %p385, %p386
      %p388 = scmp.ne.s32.totalorder %s377, %s378
      %p389 = scmp.eq.s32.totalorder %s45, 0
      %p390 = por %p388, %p389
      %p391 = scmp.ne.s32.totalorder %s377, %s378
      %p392 = scmp.eq.s32.totalorder %s46, 3
      %p393 = por %p391, %p392
      %p395 = scmp.ne.s32.totalorder %s378, %s394
      %p396 = scmp.eq.s32.totalorder %s46, 0
      %p397 = por %p395, %p396
      %s398 = ssub.s32 %s48, %s55
      %p399 = scmp.eq.s32.totalorder %s398, 0
      %s401 = sadd.s32 %s400, 1
      %s402 = scalar_select %p399, %s400, %s401
      %p405 = pneg %p399
      %p406 = scmp.eq.s32.totalorder %s40, 3
      %p407 = por %p405, %p406
      %p408 = scmp.ne.s32.totalorder %s400, %s403
      %p409 = scmp.eq.s32.totalorder %s40, 0
      %p410 = por %p408, %p409
      %p411 = scmp.ne.s32.totalorder %s400, %s403
      %p412 = scmp.eq.s32.totalorder %s45, 3
      %p413 = por %p411, %p412
      %p414 = scmp.ne.s32.totalorder %s403, %s404
      %p415 = scmp.eq.s32.totalorder %s45, 0
      %p416 = por %p414, %p415
      %p417 = scmp.ne.s32.totalorder %s403, %s404
      %p418 = scmp.eq.s32.totalorder %s46, 3
      %p419 = por %p417, %p418
      %p421 = scmp.ne.s32.totalorder %s404, %s420
      %p422 = scmp.eq.s32.totalorder %s46, 0
      %p423 = por %p421, %p422
      %s424 = ssub.s32 %s48, %s55
      %p425 = scmp.eq.s32.totalorder %s424, 0
      %s427 = sadd.s32 %s426, 1
      %s428 = scalar_select %p425, %s426, %s427
      %p431 = pneg %p425
      %p432 = scmp.eq.s32.totalorder %s40, 3
      %p433 = por %p431, %p432
      %p434 = scmp.ne.s32.totalorder %s426, %s429
      %p435 = scmp.eq.s32.totalorder %s40, 0
      %p436 = por %p434, %p435
      %p437 = scmp.ne.s32.totalorder %s426, %s429
      %p438 = scmp.eq.s32.totalorder %s45, 3
      %p439 = por %p437, %p438
      %p440 = scmp.ne.s32.totalorder %s429, %s430
      %p441 = scmp.eq.s32.totalorder %s45, 0
      %p442 = por %p440, %p441
      %p443 = scmp.ne.s32.totalorder %s429, %s430
      %p444 = scmp.eq.s32.totalorder %s46, 3
      %p445 = por %p443, %p444
      %p447 = scmp.ne.s32.totalorder %s430, %s446
      %p448 = scmp.eq.s32.totalorder %s46, 0
      %p449 = por %p447, %p448
      %s450 = ssub.s32 %s48, %s55
      %p451 = scmp.eq.s32.totalorder %s450, 0
      %s453 = sadd.s32 %s452, 1
      %s454 = scalar_select %p451, %s452, %s453
      %p457 = pneg %p451
      %p458 = scmp.eq.s32.totalorder %s40, 3
      %p459 = por %p457, %p458
      %p460 = scmp.ne.s32.totalorder %s452, %s455
      %p461 = scmp.eq.s32.totalorder %s40, 0
      %p462 = por %p460, %p461
      %p463 = scmp.ne.s32.totalorder %s452, %s455
      %p464 = scmp.eq.s32.totalorder %s45, 3
      %p465 = por %p463, %p464
      %p466 = scmp.ne.s32.totalorder %s455, %s456
      %p467 = scmp.eq.s32.totalorder %s45, 0
      %p468 = por %p466, %p467
      %p469 = scmp.ne.s32.totalorder %s455, %s456
      %p470 = scmp.eq.s32.totalorder %s46, 3
      %p471 = por %p469, %p470
      %p473 = scmp.ne.s32.totalorder %s456, %s472
      %p474 = scmp.eq.s32.totalorder %s46, 0
      %p475 = por %p473, %p474
      %s476 = ssub.s32 %s48, %s55
      %p477 = scmp.eq.s32.totalorder %s476, 0
      %s479 = sadd.s32 %s478, 1
      %s480 = scalar_select %p477, %s478, %s479
      %p483 = pneg %p477
      %p484 = scmp.eq.s32.totalorder %s40, 3
      %p485 = por %p483, %p484
      %p486 = scmp.ne.s32.totalorder %s478, %s481
      %p487 = scmp.eq.s32.totalorder %s40, 0
      %p488 = por %p486, %p487
      %p489 = scmp.ne.s32.totalorder %s478, %s481
      %p490 = scmp.eq.s32.totalorder %s45, 3
      %p491 = por %p489, %p490
      %p492 = scmp.ne.s32.totalorder %s481, %s482
      %p493 = scmp.eq.s32.totalorder %s45, 0
      %p494 = por %p492, %p493
      %p495 = scmp.ne.s32.totalorder %s481, %s482
      %p496 = scmp.eq.s32.totalorder %s46, 3
      %p497 = por %p495, %p496
      %p499 = scmp.ne.s32.totalorder %s482, %s498
      %p500 = scmp.eq.s32.totalorder %s46, 0
      %p501 = por %p499, %p500
      %s502 = ssub.s32 %s48, %s55
      %p503 = scmp.eq.s32.totalorder %s502, 0
      %s505 = sadd.s32 %s504, 1
      %s506 = scalar_select %p503, %s504, %s505
      %p509 = pneg %p503
      %p510 = scmp.eq.s32.totalorder %s40, 3
      %p511 = por %p509, %p510
      %p512 = scmp.ne.s32.totalorder %s504, %s507
      %p513 = scmp.eq.s32.totalorder %s40, 0
      %p514 = por %p512, %p513
      %p515 = scmp.ne.s32.totalorder %s504, %s507
      %p516 = scmp.eq.s32.totalorder %s45, 3
      %p517 = por %p515, %p516
      %p518 = scmp.ne.s32.totalorder %s507, %s508
      %p519 = scmp.eq.s32.totalorder %s45, 0
      %p520 = por %p518, %p519
      %p521 = scmp.ne.s32.totalorder %s507, %s508
      %p522 = scmp.eq.s32.totalorder %s46, 3
      %p523 = por %p521, %p522
      %p525 = scmp.ne.s32.totalorder %s508, %s524
      %p526 = scmp.eq.s32.totalorder %s46, 0
      %p527 = por %p525, %p526
      %s528 = ssub.s32 %s48, %s55
      %p529 = scmp.eq.s32.totalorder %s528, 0
      %s531 = sadd.s32 %s530, 1
      %s532 = scalar_select %p529, %s530, %s531
      %p535 = pneg %p529
      %p536 = scmp.eq.s32.totalorder %s40, 3
      %p537 = por %p535, %p536
      %p538 = scmp.ne.s32.totalorder %s530, %s533
      %p539 = scmp.eq.s32.totalorder %s40, 0
      %p540 = por %p538, %p539
      %p541 = scmp.ne.s32.totalorder %s530, %s533
      %p542 = scmp.eq.s32.totalorder %s45, 3
      %p543 = por %p541, %p542
      %p544 = scmp.ne.s32.totalorder %s533, %s534
      %p545 = scmp.eq.s32.totalorder %s45, 0
      %p546 = por %p544, %p545
      %p547 = scmp.ne.s32.totalorder %s533, %s534
      %p548 = scmp.eq.s32.totalorder %s46, 3
      %p549 = por %p547, %p548
      %p551 = scmp.ne.s32.totalorder %s534, %s550
      %p552 = scmp.eq.s32.totalorder %s46, 0
      %p553 = por %p551, %p552
      %s554 = ssub.s32 %s47, %s59
      %p555 = scmp.eq.s32.totalorder %s554, 0
      %s557 = sadd.s32 %s556, 1
      %s558 = scalar_select %p555, %s556, %s557
      %p561 = pneg %p555
      %p562 = scmp.eq.s32.totalorder %s40, 3
      %p563 = por %p561, %p562
      %p564 = scmp.ne.s32.totalorder %s556, %s559
      %p565 = scmp.eq.s32.totalorder %s40, 0
      %p566 = por %p564, %p565
      %p567 = scmp.ne.s32.totalorder %s556, %s559
      %p568 = scmp.eq.s32.totalorder %s45, 3
      %p569 = por %p567, %p568
      %p570 = scmp.ne.s32.totalorder %s559, %s560
      %p571 = scmp.eq.s32.totalorder %s45, 0
      %p572 = por %p570, %p571
      %p573 = scmp.ne.s32.totalorder %s559, %s560
      %p574 = scmp.eq.s32.totalorder %s46, 3
      %p575 = por %p573, %p574
      %p577 = scmp.ne.s32.totalorder %s560, %s576
      %p578 = scmp.eq.s32.totalorder %s46, 0
      %p579 = por %p577, %p578
      %p580 = scmp.le.s32.totalorder 1, %s40
      %p581 = scmp.lt.s32.totalorder %s40, 5
      %p582 = pnand %p580, %p581
      %p583 = pneg %p582
      // Predicated region
      $region9: #{ane_transformer_forward.2} parent=5 // pred_check
        _
      $region10: #{ane_transformer_forward.2} parent=5 // pred_check_branch
        %585 = sbr.rel (%p582) target = $region12
      $region11: #{ane_transformer_forward.2} parent=5 // pred_region
        %s586 = ssub.s32 %s40, 1
      $region12: #{ane_transformer_forward.2} parent=5 // pred_fallthru
        _
      %p587 = scmp.lt.s32.totalorder %s40, 4
      // Predicated region
      $region13: #{ane_transformer_forward.2} parent=5 // pred_check
        %p588 = pneg %p587
      $region14: #{ane_transformer_forward.2} parent=5 // pred_check_branch
        %590 = sbr.rel (%p588) target = $region16
      $region15: #{ane_transformer_forward.2} parent=5 // pred_region
        // Predicated region
        $region17: #{ane_transformer_forward.2} parent=15 // pred_check
          %p591 = pneg %p72
        $region18: #{ane_transformer_forward.2} parent=15 // pred_check_branch
          %593 = sbr.rel (%p591) target = $region20
        $region19: #{ane_transformer_forward.2} parent=15 // pred_region
          %s594 = sand.u32 %s62, 1
          %s595 = scalar_lea.sflag [#allocation4], %s594
          %s596 = sand.u32 %s62, 1
          %s597 = smul.addr %s596, 16
          %s598 = scalar_lea.vmem [#allocation3], %s597
          %s600 = ssub.s32 256, 256
          %601 = vsyncadd %s595, %s600
          %s602 = smul.addr %s47, 2
          %s603 = smul.addr %s602, 128
          %s604 = scalar_lea.hbm %s0, %s603
          %s605 = sshll.u32 %s598, 4
          %s606 = int_to_ptr.vmem [resolvable:$true] %s605
          %611 = dma.hbm_to_vmem [thread:$0]  %s604, 256, %s606, %s595, 128, 128, 8
        $region20: #{ane_transformer_forward.2} parent=15 // pred_fallthru
          _
        // Predicated region
        $region21: #{ane_transformer_forward.2} parent=15 // pred_check
          %p612 = pneg %p98
        $region22: #{ane_transformer_forward.2} parent=15 // pred_check_branch
          %614 = sbr.rel (%p612) target = $region24
        $region23: #{ane_transformer_forward.2} parent=15 // pred_region
          %s615 = sand.u32 %s40, 1
          %s616 = scalar_lea.sflag [#allocation6], %s615
          %s617 = sand.u32 %s88, 1
          %s618 = smul.addr %s617, 16
          %s619 = scalar_lea.vmem [#allocation5], %s618
          %s621 = ssub.s32 256, 256
          %622 = vsyncadd %s616, %s621
          %s623 = smul.addr %s47, 2
          %s624 = smul.addr %s623, 128
          %s625 = scalar_lea.hbm %s1, %s624
          %s626 = sshll.u32 %s619, 4
          %s627 = int_to_ptr.vmem [resolvable:$true] %s626
          %632 = dma.hbm_to_vmem [thread:$0]  %s625, 256, %s627, %s616, 128, 128, 8
        $region24: #{ane_transformer_forward.2} parent=15 // pred_fallthru
          _
        // Predicated region
        $region25: #{ane_transformer_forward.2} parent=15 // pred_check
          %p633 = pneg %p124
        $region26: #{ane_transformer_forward.2} parent=15 // pred_check_branch
          %635 = sbr.rel (%p633) target = $region28
        $region27: #{ane_transformer_forward.2} parent=15 // pred_region
          %p636 = scmp.lt.s32.totalorder %s47, 1
          %s637 = scalar_select %p636, %s47, 1
          %s638 = scalar_lea.vmem %s2, %s637
        $region28: #{ane_transformer_forward.2} parent=15 // pred_fallthru
          _
        // Predicated region
        $region29: #{ane_transformer_forward.2} parent=15 // pred_check
          %p639 = pneg %p150
        $region30: #{ane_transformer_forward.2} parent=15 // pred_check_branch
          %641 = sbr.rel (%p639) target = $region32
        $region31: #{ane_transformer_forward.2} parent=15 // pred_region
          %s642 = sand.u32 %s40, 1
          %s643 = scalar_lea.sflag [#allocation6], %s642
          %s644 = sand.u32 %s140, 1
          %s645 = smul.addr %s644, 64
          %s646 = scalar_lea.vmem [#allocation7], %s645
          %s648 = ssub.s32 1024, 1024
          %649 = vsyncadd %s643, %s648
          %s650 = smul.addr %s48, 16
          %s651 = smul.addr %s650, 64
          %s652 = scalar_lea.hbm %s3, %s651
          %s653 = sshll.u32 %s646, 4
          %s654 = int_to_ptr.vmem [resolvable:$true] %s653
          %659 = dma.hbm_to_vmem [thread:$0]  %s652, 1024, %s654, %s643, 64, 64, 4
        $region32: #{ane_transformer_forward.2} parent=15 // pred_fallthru
          _
        // Predicated region
        $region33: #{ane_transformer_forward.2} parent=15 // pred_check
          %p660 = pneg %p176
        $region34: #{ane_transformer_forward.2} parent=15 // pred_check_branch
          %662 = sbr.rel (%p660) target = $region36
        $region35: #{ane_transformer_forward.2} parent=15 // pred_region
          %p663 = scmp.lt.s32.totalorder %s48, 1
          %s664 = scalar_select %p663, %s48, 1
          %s665 = scalar_lea.vmem %s4, %s664
        $region36: #{ane_transformer_forward.2} parent=15 // pred_fallthru
          _
        // Predicated region
        $region37: #{ane_transformer_forward.2} parent=15 // pred_check
          %p666 = pneg %p202
        $region38: #{ane_transformer_forward.2} parent=15 // pred_check_branch
          %668 = sbr.rel (%p666) target = $region40
        $region39: #{ane_transformer_forward.2} parent=15 // pred_region
          %s669 = sand.u32 %s40, 1
          %s670 = scalar_lea.sflag [#allocation9], %s669
          %s671 = sand.u32 %s192, 1
          %s672 = smul.addr %s671, 64
          %s673 = scalar_lea.vmem [#allocation8], %s672
          %s675 = ssub.s32 1024, 1024
          %676 = vsyncadd %s670, %s675
          %s677 = smul.addr %s48, 16
          %s678 = smul.addr %s677, 64
          %s679 = scalar_lea.hbm %s5, %s678
          %s680 = sshll.u32 %s673, 4
          %s681 = int_to_ptr.vmem [resolvable:$true] %s680
          %686 = dma.hbm_to_vmem [thread:$0]  %s679, 1024, %s681, %s670, 64, 64, 4
        $region40: #{ane_transformer_forward.2} parent=15 // pred_fallthru
          _
        // Predicated region
        $region41: #{ane_transformer_forward.2} parent=15 // pred_check
          %p687 = pneg %p228
        $region42: #{ane_transformer_forward.2} parent=15 // pred_check_branch
          %689 = sbr.rel (%p687) target = $region44
        $region43: #{ane_transformer_forward.2} parent=15 // pred_region
          %p690 = scmp.lt.s32.totalorder %s48, 1
          %s691 = scalar_select %p690, %s48, 1
          %s692 = scalar_lea.vmem %s6, %s691
        $region44: #{ane_transformer_forward.2} parent=15 // pred_fallthru
          _
        // Predicated region
        $region45: #{ane_transformer_forward.2} parent=15 // pred_check
          %p693 = pneg %p254
        $region46: #{ane_transformer_forward.2} parent=15 // pred_check_branch
          %695 = sbr.rel (%p693) target = $region48
        $region47: #{ane_transformer_forward.2} parent=15 // pred_region
          %s696 = sand.u32 %s40, 1
          %s697 = scalar_lea.sflag [#allocation9], %s696
          %s698 = sand.u32 %s244, 1
          %s699 = smul.addr %s698, 64
          %s700 = scalar_lea.vmem [#allocation10], %s699
          %s702 = ssub.s32 1024, 1024
          %703 = vsyncadd %s697, %s702
          %s704 = smul.addr %s48, 16
          %s705 = smul.addr %s704, 64
          %s706 = scalar_lea.hbm %s7, %s705
          %s707 = sshll.u32 %s700, 4
          %s708 = int_to_ptr.vmem [resolvable:$true] %s707
          %713 = dma.hbm_to_vmem [thread:$0]  %s706, 1024, %s708, %s697, 64, 64, 4
        $region48: #{ane_transformer_forward.2} parent=15 // pred_fallthru
          _
        // Predicated region
        $region49: #{ane_transformer_forward.2} parent=15 // pred_check
          %p714 = pneg %p280
        $region50: #{ane_transformer_forward.2} parent=15 // pred_check_branch
          %716 = sbr.rel (%p714) target = $region52
        $region51: #{ane_transformer_forward.2} parent=15 // pred_region
          %p717 = scmp.lt.s32.totalorder %s48, 1
          %s718 = scalar_select %p717, %s48, 1
          %s719 = scalar_lea.vmem %s8, %s718
        $region52: #{ane_transformer_forward.2} parent=15 // pred_fallthru
          _
        // Predicated region
        $region53: #{ane_transformer_forward.2} parent=15 // pred_check
          %p720 = pneg %p306
        $region54: #{ane_transformer_forward.2} parent=15 // pred_check_branch
          %722 = sbr.rel (%p720) target = $region56
        $region55: #{ane_transformer_forward.2} parent=15 // pred_region
          %s723 = sand.u32 %s40, 1
          %s724 = scalar_lea.sflag [#allocation12], %s723
          %s725 = sand.u32 %s296, 1
          %s726 = smul.addr %s725, 64
          %s727 = scalar_lea.vmem [#allocation11], %s726
          %s729 = ssub.s32 1024, 1024
          %730 = vsyncadd %s724, %s729
          %s731 = smul.addr %s48, 16
          %s732 = smul.addr %s731, 64
          %s733 = scalar_lea.hbm %s9, %s732
          %s734 = sshll.u32 %s727, 4
          %s735 = int_to_ptr.vmem [resolvable:$true] %s734
          %740 = dma.hbm_to_vmem [thread:$0]  %s733, 1024, %s735, %s724, 64, 64, 4
        $region56: #{ane_transformer_forward.2} parent=15 // pred_fallthru
          _
        // Predicated region
        $region57: #{ane_transformer_forward.2} parent=15 // pred_check
          %p741 = pneg %p332
        $region58: #{ane_transformer_forward.2} parent=15 // pred_check_branch
          %743 = sbr.rel (%p741) target = $region60
        $region59: #{ane_transformer_forward.2} parent=15 // pred_region
          %p744 = scmp.lt.s32.totalorder %s48, 1
          %s745 = scalar_select %p744, %s48, 1
          %s746 = scalar_lea.vmem %s10, %s745
        $region60: #{ane_transformer_forward.2} parent=15 // pred_fallthru
          _
        // Predicated region
        $region61: #{ane_transformer_forward.2} parent=15 // pred_check
          %p747 = pneg %p358
        $region62: #{ane_transformer_forward.2} parent=15 // pred_check_branch
          %749 = sbr.rel (%p747) target = $region64
        $region63: #{ane_transformer_forward.2} parent=15 // pred_region
          %p750 = scmp.lt.s32.totalorder %s48, 1
          %s751 = scalar_select %p750, %s48, 1
          %s752 = scalar_lea.vmem %s11, %s751
        $region64: #{ane_transformer_forward.2} parent=15 // pred_fallthru
          _
        // Predicated region
        $region65: #{ane_transformer_forward.2} parent=15 // pred_check
          %p753 = pneg %p384
        $region66: #{ane_transformer_forward.2} parent=15 // pred_check_branch
          %755 = sbr.rel (%p753) target = $region68
        $region67: #{ane_transformer_forward.2} parent=15 // pred_region
          %p756 = scmp.lt.s32.totalorder %s48, 1
          %s757 = scalar_select %p756, %s48, 1
          %s758 = scalar_lea.vmem %s12, %s757
        $region68: #{ane_transformer_forward.2} parent=15 // pred_fallthru
          _
        // Predicated region
        $region69: #{ane_transformer_forward.2} parent=15 // pred_check
          %p759 = pneg %p410
        $region70: #{ane_transformer_forward.2} parent=15 // pred_check_branch
          %761 = sbr.rel (%p759) target = $region72
        $region71: #{ane_transformer_forward.2} parent=15 // pred_region
          %s762 = sand.u32 %s40, 1
          %s763 = scalar_lea.sflag [#allocation12], %s762
          %s764 = sand.u32 %s400, 1
          %s765 = smul.addr %s764, 128
          %s766 = scalar_lea.vmem [#allocation13], %s765
          %s768 = ssub.s32 2048, 2048
          %769 = vsyncadd %s763, %s768
          %s770 = smul.addr %s48, 32
          %s771 = smul.addr %s770, 64
          %s772 = scalar_lea.hbm %s13, %s771
          %s773 = sshll.u32 %s766, 4
          %s774 = int_to_ptr.vmem [resolvable:$true] %s773
          %779 = dma.hbm_to_vmem [thread:$0]  %s772, 2048, %s774, %s763, 128, 128, 8
        $region72: #{ane_transformer_forward.2} parent=15 // pred_fallthru
          _
        // Predicated region
        $region73: #{ane_transformer_forward.2} parent=15 // pred_check
          %p780 = pneg %p436
        $region74: #{ane_transformer_forward.2} parent=15 // pred_check_branch
          %782 = sbr.rel (%p780) target = $region76
        $region75: #{ane_transformer_forward.2} parent=15 // pred_region
          %p783 = scmp.lt.s32.totalorder %s48, 1
          %s784 = scalar_select %p783, %s48, 1
          %s785 = smul.addr %s784, 2
          %s786 = scalar_lea.vmem %s14, %s785
        $region76: #{ane_transformer_forward.2} parent=15 // pred_fallthru
          _
        // Predicated region
        $region77: #{ane_transformer_forward.2} parent=15 // pred_check
          %p787 = pneg %p462
        $region78: #{ane_transformer_forward.2} parent=15 // pred_check_branch
          %789 = sbr.rel (%p787) target = $region80
        $region79: #{ane_transformer_forward.2} parent=15 // pred_region
          %s790 = sand.u32 %s452, 1
          %s791 = scalar_lea.sflag [#allocation15], %s790
          %s792 = sand.u32 %s452, 1
          %s793 = smul.addr %s792, 128
          %s794 = scalar_lea.vmem [#allocation14], %s793
          %s796 = ssub.s32 2048, 2048
          %797 = vsyncadd %s791, %s796
          %s798 = smul.addr %s48, 32
          %s799 = smul.addr %s798, 64
          %s800 = scalar_lea.hbm %s15, %s799
          %s801 = sshll.u32 %s794, 4
          %s802 = int_to_ptr.vmem [resolvable:$true] %s801
          %807 = dma.hbm_to_vmem [thread:$0]  %s800, 2048, %s802, %s791, 64, 64, 4
        $region80: #{ane_transformer_forward.2} parent=15 // pred_fallthru
          _
        // Predicated region
        $region81: #{ane_transformer_forward.2} parent=15 // pred_check
          %p808 = pneg %p488
        $region82: #{ane_transformer_forward.2} parent=15 // pred_check_branch
          %810 = sbr.rel (%p808) target = $region84
        $region83: #{ane_transformer_forward.2} parent=15 // pred_region
          %p811 = scmp.lt.s32.totalorder %s48, 1
          %s812 = scalar_select %p811, %s48, 1
          %s813 = scalar_lea.vmem %s16, %s812
        $region84: #{ane_transformer_forward.2} parent=15 // pred_fallthru
          _
        // Predicated region
        $region85: #{ane_transformer_forward.2} parent=15 // pred_check
          %p814 = pneg %p514
        $region86: #{ane_transformer_forward.2} parent=15 // pred_check_branch
          %816 = sbr.rel (%p814) target = $region88
        $region87: #{ane_transformer_forward.2} parent=15 // pred_region
          %p817 = scmp.lt.s32.totalorder %s48, 1
          %s818 = scalar_select %p817, %s48, 1
          %s819 = scalar_lea.vmem %s17, %s818
        $region88: #{ane_transformer_forward.2} parent=15 // pred_fallthru
          _
        // Predicated region
        $region89: #{ane_transformer_forward.2} parent=15 // pred_check
          %p820 = pneg %p540
        $region90: #{ane_transformer_forward.2} parent=15 // pred_check_branch
          %822 = sbr.rel (%p820) target = $region92
        $region91: #{ane_transformer_forward.2} parent=15 // pred_region
          %p823 = scmp.lt.s32.totalorder %s48, 1
          %s824 = scalar_select %p823, %s48, 1
          %s825 = scalar_lea.vmem %s18, %s824
        $region92: #{ane_transformer_forward.2} parent=15 // pred_fallthru
          _
      $region16: #{ane_transformer_forward.2} parent=5 // pred_fallthru
        _
      %p826 = scmp.le.s32.totalorder 1, %s40
      %p827 = scmp.lt.s32.totalorder %s40, 5
      %p828 = pnand %p826, %p827
      %p829 = pneg %p828
      // Predicated region
      $region93: #{ane_transformer_forward.2} parent=5 // pred_check
        _
      $region94: #{ane_transformer_forward.2} parent=5 // pred_check_branch
        %831 = sbr.rel (%p828) target = $region96
      $region95: #{ane_transformer_forward.2} parent=5 // pred_region
        %s832 = ssub.s32 %s40, 1
        %s833 = sand.u32 %s65, 1
        %s834 = scalar_lea.sflag [#allocation4], %s833
        %s835 = sand.u32 %s65, 1
        %s836 = smul.addr %s835, 16
        %s837 = scalar_lea.vmem [#allocation3], %s836
        // Predicated region
        $region97: #{ane_transformer_forward.2} parent=95 // pred_check
          %p838 = pneg %p78
        $region98: #{ane_transformer_forward.2} parent=95 // pred_check_branch
          %840 = sbr.rel (%p838) target = $region100
        $region99: #{ane_transformer_forward.2} parent=95 // pred_region
          %841 = dma.done %s834, 256
        $region100: #{ane_transformer_forward.2} parent=95 // pred_fallthru
          _
        %s842 = sand.u32 %s45, 1
        %s843 = scalar_lea.sflag [#allocation6], %s842
        %s844 = sand.u32 %s91, 1
        %s845 = smul.addr %s844, 16
        %s846 = scalar_lea.vmem [#allocation5], %s845
        // Predicated region
        $region101: #{ane_transformer_forward.2} parent=95 // pred_check
          %p847 = pneg %p104
        $region102: #{ane_transformer_forward.2} parent=95 // pred_check_branch
          %849 = sbr.rel (%p847) target = $region104
        $region103: #{ane_transformer_forward.2} parent=95 // pred_region
          %850 = dma.done %s843, 256
        $region104: #{ane_transformer_forward.2} parent=95 // pred_fallthru
          _
        %s851 = sand.u32 %s45, 1
        %s852 = scalar_lea.sflag [#allocation6], %s851
        %s853 = sand.u32 %s143, 1
        %s854 = smul.addr %s853, 64
        %s855 = scalar_lea.vmem [#allocation7], %s854
        // Predicated region
        $region105: #{ane_transformer_forward.2} parent=95 // pred_check
          %p856 = pneg %p156
        $region106: #{ane_transformer_forward.2} parent=95 // pred_check_branch
          %858 = sbr.rel (%p856) target = $region108
        $region107: #{ane_transformer_forward.2} parent=95 // pred_region
          %859 = dma.done %s852, 1024
        $region108: #{ane_transformer_forward.2} parent=95 // pred_fallthru
          _
        %s860 = sand.u32 %s45, 1
        %s861 = scalar_lea.sflag [#allocation9], %s860
        %s862 = sand.u32 %s195, 1
        %s863 = smul.addr %s862, 64
        %s864 = scalar_lea.vmem [#allocation8], %s863
        // Predicated region
        $region109: #{ane_transformer_forward.2} parent=95 // pred_check
          %p865 = pneg %p208
        $region110: #{ane_transformer_forward.2} parent=95 // pred_check_branch
          %867 = sbr.rel (%p865) target = $region112
        $region111: #{ane_transformer_forward.2} parent=95 // pred_region
          %868 = dma.done %s861, 1024
        $region112: #{ane_transformer_forward.2} parent=95 // pred_fallthru
          _
        %s869 = sand.u32 %s45, 1
        %s870 = scalar_lea.sflag [#allocation9], %s869
        %s871 = sand.u32 %s247, 1
        %s872 = smul.addr %s871, 64
        %s873 = scalar_lea.vmem [#allocation10], %s872
        // Predicated region
        $region113: #{ane_transformer_forward.2} parent=95 // pred_check
          %p874 = pneg %p260
        $region114: #{ane_transformer_forward.2} parent=95 // pred_check_branch
          %876 = sbr.rel (%p874) target = $region116
        $region115: #{ane_transformer_forward.2} parent=95 // pred_region
          %877 = dma.done %s870, 1024
        $region116: #{ane_transformer_forward.2} parent=95 // pred_fallthru
          _
        %s878 = sand.u32 %s45, 1
        %s879 = scalar_lea.sflag [#allocation12], %s878
        %s880 = sand.u32 %s299, 1
        %s881 = smul.addr %s880, 64
        %s882 = scalar_lea.vmem [#allocation11], %s881
        // Predicated region
        $region117: #{ane_transformer_forward.2} parent=95 // pred_check
          %p883 = pneg %p312
        $region118: #{ane_transformer_forward.2} parent=95 // pred_check_branch
          %885 = sbr.rel (%p883) target = $region120
        $region119: #{ane_transformer_forward.2} parent=95 // pred_region
          %886 = dma.done %s879, 1024
        $region120: #{ane_transformer_forward.2} parent=95 // pred_fallthru
          _
        %s887 = sand.u32 %s45, 1
        %s888 = scalar_lea.sflag [#allocation12], %s887
        %s889 = sand.u32 %s403, 1
        %s890 = smul.addr %s889, 128
        %s891 = scalar_lea.vmem [#allocation13], %s890
        // Predicated region
        $region121: #{ane_transformer_forward.2} parent=95 // pred_check
          %p892 = pneg %p416
        $region122: #{ane_transformer_forward.2} parent=95 // pred_check_branch
          %894 = sbr.rel (%p892) target = $region124
        $region123: #{ane_transformer_forward.2} parent=95 // pred_region
          %895 = dma.done %s888, 2048
        $region124: #{ane_transformer_forward.2} parent=95 // pred_fallthru
          _
        %s896 = sand.u32 %s455, 1
        %s897 = scalar_lea.sflag [#allocation15], %s896
        %s898 = sand.u32 %s455, 1
        %s899 = smul.addr %s898, 128
        %s900 = scalar_lea.vmem [#allocation14], %s899
        // Predicated region
        $region125: #{ane_transformer_forward.2} parent=95 // pred_check
          %p901 = pneg %p468
        $region126: #{ane_transformer_forward.2} parent=95 // pred_check_branch
          %903 = sbr.rel (%p901) target = $region128
        $region127: #{ane_transformer_forward.2} parent=95 // pred_region
          %904 = dma.done %s897, 2048
        $region128: #{ane_transformer_forward.2} parent=95 // pred_fallthru
          _
        %s905 = sand.u32 %s65, 1
        %s906 = scalar_lea.sflag [#allocation4], %s905
        %s907 = sand.u32 %s65, 1
        %s908 = smul.addr %s907, 16
        %s909 = scalar_lea.vmem [#allocation3], %s908
        %p910 = pneg %p78
        %p911 = pneg %p75
        %s912 = sand.u32 %s45, 1
        %s913 = scalar_lea.sflag [#allocation6], %s912
        %s914 = sand.u32 %s91, 1
        %s915 = smul.addr %s914, 16
        %s916 = scalar_lea.vmem [#allocation5], %s915
        %p917 = pneg %p104
        %p918 = pneg %p101
        %p919 = scmp.lt.s32.totalorder %s49, 1
        %s920 = scalar_select %p919, %s49, 1
        %s921 = scalar_lea.vmem %s2, %s920
        %p922 = pneg %p130
        %p923 = pneg %p127
        %s924 = sand.u32 %s45, 1
        %s925 = scalar_lea.sflag [#allocation6], %s924
        %s926 = sand.u32 %s143, 1
        %s927 = smul.addr %s926, 64
        %s928 = scalar_lea.vmem [#allocation7], %s927
        %p929 = pneg %p156
        %p930 = pneg %p153
        %p931 = scmp.lt.s32.totalorder %s50, 1
        %s932 = scalar_select %p931, %s50, 1
        %s933 = scalar_lea.vmem %s4, %s932
        %p934 = pneg %p182
        %p935 = pneg %p179
        %s936 = sand.u32 %s45, 1
        %s937 = scalar_lea.sflag [#allocation9], %s936
        %s938 = sand.u32 %s195, 1
        %s939 = smul.addr %s938, 64
        %s940 = scalar_lea.vmem [#allocation8], %s939
        %p941 = pneg %p208
        %p942 = pneg %p205
        %p943 = scmp.lt.s32.totalorder %s50, 1
        %s944 = scalar_select %p943, %s50, 1
        %s945 = scalar_lea.vmem %s6, %s944
        %p946 = pneg %p234
        %p947 = pneg %p231
        %s948 = sand.u32 %s45, 1
        %s949 = scalar_lea.sflag [#allocation9], %s948
        %s950 = sand.u32 %s247, 1
        %s951 = smul.addr %s950, 64
        %s952 = scalar_lea.vmem [#allocation10], %s951
        %p953 = pneg %p260
        %p954 = pneg %p257
        %p955 = scmp.lt.s32.totalorder %s50, 1
        %s956 = scalar_select %p955, %s50, 1
        %s957 = scalar_lea.vmem %s8, %s956
        %p958 = pneg %p286
        %p959 = pneg %p283
        %s960 = sand.u32 %s45, 1
        %s961 = scalar_lea.sflag [#allocation12], %s960
        %s962 = sand.u32 %s299, 1
        %s963 = smul.addr %s962, 64
        %s964 = scalar_lea.vmem [#allocation11], %s963
        %p965 = pneg %p312
        %p966 = pneg %p309
        %p967 = scmp.lt.s32.totalorder %s50, 1
        %s968 = scalar_select %p967, %s50, 1
        %s969 = scalar_lea.vmem %s10, %s968
        %p970 = pneg %p338
        %p971 = pneg %p335
        %p972 = scmp.lt.s32.totalorder %s50, 1
        %s973 = scalar_select %p972, %s50, 1
        %s974 = scalar_lea.vmem %s11, %s973
        %p975 = pneg %p364
        %p976 = pneg %p361
        %p977 = scmp.lt.s32.totalorder %s50, 1
        %s978 = scalar_select %p977, %s50, 1
        %s979 = scalar_lea.vmem %s12, %s978
        %p980 = pneg %p390
        %p981 = pneg %p387
        %s982 = sand.u32 %s45, 1
        %s983 = scalar_lea.sflag [#allocation12], %s982
        %s984 = sand.u32 %s403, 1
        %s985 = smul.addr %s984, 128
        %s986 = scalar_lea.vmem [#allocation13], %s985
        %p987 = pneg %p416
        %p988 = pneg %p413
        %p989 = scmp.lt.s32.totalorder %s50, 1
        %s990 = scalar_select %p989, %s50, 1
        %s991 = smul.addr %s990, 2
        %s992 = scalar_lea.vmem %s14, %s991
        %p993 = pneg %p442
        %p994 = pneg %p439
        %s995 = sand.u32 %s455, 1
        %s996 = scalar_lea.sflag [#allocation15], %s995
        %s997 = sand.u32 %s455, 1
        %s998 = smul.addr %s997, 128
        %s999 = scalar_lea.vmem [#allocation14], %s998
        %p1000 = pneg %p468
        %p1001 = pneg %p465
        %p1002 = scmp.lt.s32.totalorder %s50, 1
        %s1003 = scalar_select %p1002, %s50, 1
        %s1004 = scalar_lea.vmem %s16, %s1003
        %p1005 = pneg %p494
        %p1006 = pneg %p491
        %p1007 = scmp.lt.s32.totalorder %s50, 1
        %s1008 = scalar_select %p1007, %s50, 1
        %s1009 = scalar_lea.vmem %s17, %s1008
        %p1010 = pneg %p520
        %p1011 = pneg %p517
        %p1012 = scmp.lt.s32.totalorder %s50, 1
        %s1013 = scalar_select %p1012, %s50, 1
        %s1014 = scalar_lea.vmem %s18, %s1013
        %p1015 = pneg %p546
        %p1016 = pneg %p543
        %p1017 = pneg %p572
        %p1018 = pneg %p569
        %p1019 = scmp.lt.s32.totalorder %s49, 1
        %s1020 = scalar_select %p1019, %s49, 1
        %s1021 = smul.addr %s1020, 2
        %s1022 = smul.addr %s1021, 8
        %s1023 = scalar_lea.vmem %s19, %s1022
        %p1024 = scmp.lt.s32.totalorder %s49, 1
        %s1025 = scalar_select %p1024, %s49, 1
        %s1026 = scalar_lea.vmem %s2, %s1025
        %p1027 = scmp.lt.s32.totalorder %s50, 1
        %s1028 = scalar_select %p1027, %s50, 1
        %s1029 = scalar_lea.vmem %s4, %s1028
        %p1030 = scmp.lt.s32.totalorder %s50, 1
        %s1031 = scalar_select %p1030, %s50, 1
        %s1032 = scalar_lea.vmem %s6, %s1031
        %p1033 = scmp.lt.s32.totalorder %s50, 1
        %s1034 = scalar_select %p1033, %s50, 1
        %s1035 = scalar_lea.vmem %s8, %s1034
        %p1036 = scmp.lt.s32.totalorder %s50, 1
        %s1037 = scalar_select %p1036, %s50, 1
        %s1038 = scalar_lea.vmem %s10, %s1037
        %p1039 = scmp.lt.s32.totalorder %s50, 1
        %s1040 = scalar_select %p1039, %s50, 1
        %s1041 = scalar_lea.vmem %s11, %s1040
        %p1042 = scmp.lt.s32.totalorder %s50, 1
        %s1043 = scalar_select %p1042, %s50, 1
        %s1044 = scalar_lea.vmem %s12, %s1043
        %p1045 = scmp.lt.s32.totalorder %s50, 1
        %s1046 = scalar_select %p1045, %s50, 1
        %s1047 = smul.addr %s1046, 2
        %s1048 = scalar_lea.vmem %s14, %s1047
        %p1049 = scmp.lt.s32.totalorder %s50, 1
        %s1050 = scalar_select %p1049, %s50, 1
        %s1051 = scalar_lea.vmem %s16, %s1050
        %p1052 = scmp.lt.s32.totalorder %s50, 1
        %s1053 = scalar_select %p1052, %s50, 1
        %s1054 = scalar_lea.vmem %s17, %s1053
        %p1055 = scmp.lt.s32.totalorder %s50, 1
        %s1056 = scalar_select %p1055, %s50, 1
        %s1057 = scalar_lea.vmem %s18, %s1056
        %p1058 = scmp.lt.s32.totalorder %s49, 1
        %s1059 = scalar_select %p1058, %s49, 1
        %s1060 = smul.addr %s1059, 2
        %s1061 = smul.addr %s1060, 8
        %s1062 = scalar_lea.vmem %s19, %s1061
        %p1064 = scmp.eq.s32.totalorder %s50, 0
        // Predicated region
        $region129: #{ane_transformer_forward.2} parent=95 // pred_check
          %p1065 = pneg %p1064
        $region130: #{ane_transformer_forward.2} parent=95 // pred_check_branch
          %1067 = sbr.rel (%p1065) target = $region132
        $region131: #{ane_transformer_forward.2} parent=95 // pred_region
          %v1068 = vld [vmem:[%s837] sm:$0xff]
          %v1069 = vld [vmem:[%s837 + $0x8] sm:$0xff]
          %1070 = vst [vmem:[#allocation2] sm:$0xff] %v1068
          %1071 = vst [vmem:[#allocation2 + $0x8] sm:$0xff] %v1069
        $region132: #{ane_transformer_forward.2} parent=95 // pred_fallthru
          _
        %v1072 = vld [vmem:[#allocation2] sm:$0xff]
        %v1073 = vld [vmem:[#allocation2 + $0x8] sm:$0xff]
        %v1074 = vld [vmem:[%s846] sm:$0xff]
        %v1075 = vld [vmem:[%s846 + $0x8] sm:$0xff]
        %v1076 = vld [vmem:[%s1026] sm:$0x1]
        %v1077 = vld [vmem:[%s855] sm:$0xf]
        %v1078 = vld [vmem:[%s855 + $0x4] sm:$0xf]
        %v1079 = vld [vmem:[%s855 + $0x8] sm:$0xf]
        %v1080 = vld [vmem:[%s855 + $0xc] sm:$0xf]
        %v1081 = vld [vmem:[%s855 + $0x10] sm:$0xf]
        %v1082 = vld [vmem:[%s855 + $0x14] sm:$0xf]
        %v1083 = vld [vmem:[%s855 + $0x18] sm:$0xf]
        %v1084 = vld [vmem:[%s855 + $0x1c] sm:$0xf]
        %v1085 = vld [vmem:[%s855 + $0x20] sm:$0xf]
        %v1086 = vld [vmem:[%s855 + $0x24] sm:$0xf]
        %v1087 = vld [vmem:[%s855 + $0x28] sm:$0xf]
        %v1088 = vld [vmem:[%s855 + $0x2c] sm:$0xf]
        %v1089 = vld [vmem:[%s855 + $0x30] sm:$0xf]
        %v1090 = vld [vmem:[%s855 + $0x34] sm:$0xf]
        %v1091 = vld [vmem:[%s855 + $0x38] sm:$0xf]
        %v1092 = vld [vmem:[%s855 + $0x3c] sm:$0xf]
        %v1093 = vld [vmem:[%s1029] sm:$0x1]
        %v1094 = vld [vmem:[%s864] sm:$0xf]
        %v1095 = vld [vmem:[%s864 + $0x4] sm:$0xf]
        %v1096 = vld [vmem:[%s864 + $0x8] sm:$0xf]
        %v1097 = vld [vmem:[%s864 + $0xc] sm:$0xf]
        %v1098 = vld [vmem:[%s864 + $0x10] sm:$0xf]
        %v1099 = vld [vmem:[%s864 + $0x14] sm:$0xf]
        %v1100 = vld [vmem:[%s864 + $0x18] sm:$0xf]
        %v1101 = vld [vmem:[%s864 + $0x1c] sm:$0xf]
        %v1102 = vld [vmem:[%s864 + $0x20] sm:$0xf]
        %v1103 = vld [vmem:[%s864 + $0x24] sm:$0xf]
        %v1104 = vld [vmem:[%s864 + $0x28] sm:$0xf]
        %v1105 = vld [vmem:[%s864 + $0x2c] sm:$0xf]
        %v1106 = vld [vmem:[%s864 + $0x30] sm:$0xf]
        %v1107 = vld [vmem:[%s864 + $0x34] sm:$0xf]
        %v1108 = vld [vmem:[%s864 + $0x38] sm:$0xf]
        %v1109 = vld [vmem:[%s864 + $0x3c] sm:$0xf]
        %v1110 = vld [vmem:[%s1032] sm:$0x1]
        %v1111 = vld [vmem:[%s873] sm:$0xf]
        %v1112 = vld [vmem:[%s873 + $0x4] sm:$0xf]
        %v1113 = vld [vmem:[%s873 + $0x8] sm:$0xf]
        %v1114 = vld [vmem:[%s873 + $0xc] sm:$0xf]
        %v1115 = vld [vmem:[%s873 + $0x10] sm:$0xf]
        %v1116 = vld [vmem:[%s873 + $0x14] sm:$0xf]
        %v1117 = vld [vmem:[%s873 + $0x18] sm:$0xf]
        %v1118 = vld [vmem:[%s873 + $0x1c] sm:$0xf]
        %v1119 = vld [vmem:[%s873 + $0x20] sm:$0xf]
        %v1120 = vld [vmem:[%s873 + $0x24] sm:$0xf]
        %v1121 = vld [vmem:[%s873 + $0x28] sm:$0xf]
        %v1122 = vld [vmem:[%s873 + $0x2c] sm:$0xf]
        %v1123 = vld [vmem:[%s873 + $0x30] sm:$0xf]
        %v1124 = vld [vmem:[%s873 + $0x34] sm:$0xf]
        %v1125 = vld [vmem:[%s873 + $0x38] sm:$0xf]
        %v1126 = vld [vmem:[%s873 + $0x3c] sm:$0xf]
        %v1127 = vld [vmem:[%s1035] sm:$0x1]
        %v1128 = vld [vmem:[%s882] sm:$0xf]
        %v1129 = vld [vmem:[%s882 + $0x4] sm:$0xf]
        %v1130 = vld [vmem:[%s882 + $0x8] sm:$0xf]
        %v1131 = vld [vmem:[%s882 + $0xc] sm:$0xf]
        %v1132 = vld [vmem:[%s882 + $0x10] sm:$0xf]
        %v1133 = vld [vmem:[%s882 + $0x14] sm:$0xf]
        %v1134 = vld [vmem:[%s882 + $0x18] sm:$0xf]
        %v1135 = vld [vmem:[%s882 + $0x1c] sm:$0xf]
        %v1136 = vld [vmem:[%s882 + $0x20] sm:$0xf]
        %v1137 = vld [vmem:[%s882 + $0x24] sm:$0xf]
        %v1138 = vld [vmem:[%s882 + $0x28] sm:$0xf]
        %v1139 = vld [vmem:[%s882 + $0x2c] sm:$0xf]
        %v1140 = vld [vmem:[%s882 + $0x30] sm:$0xf]
        %v1141 = vld [vmem:[%s882 + $0x34] sm:$0xf]
        %v1142 = vld [vmem:[%s882 + $0x38] sm:$0xf]
        %v1143 = vld [vmem:[%s882 + $0x3c] sm:$0xf]
        %v1144 = vld [vmem:[%s1038] sm:$0x1]
        %v1145 = vld [vmem:[%s1041] sm:$0x1]
        %v1146 = vld [vmem:[%s1044] sm:$0x1]
        %v1147 = vadd.f32 %v1072, %v1074
        %v1148 = vadd.f32 %v1073, %v1075
        %v1149 = vpack.c.bf16 %v1148, %v1147
        %v1151 = vlaneseq
        %v1152 = vshrl.u32 %v1151, 7
        %v1153 = vsub.s32 0, %v1152
        %v1154 = vrot.slane %v1093, %v1153
        %v1172 = vunpack.c.l.b16 %v1077
        %v1173 = vunpack.c.l.b16 %v1078
        %v1174 = vunpack.c.l.b16 %v1079
        %v1175 = vunpack.c.l.b16 %v1080
        %v1176 = vunpack.c.l.b16 %v1081
        %v1177 = vunpack.c.l.b16 %v1082
        %v1178 = vunpack.c.l.b16 %v1083
        %v1179 = vunpack.c.l.b16 %v1084
        %v1180 = vunpack.c.l.b16 %v1085
        %v1181 = vunpack.c.l.b16 %v1086
        %v1182 = vunpack.c.l.b16 %v1087
        %v1183 = vunpack.c.l.b16 %v1088
        %v1184 = vunpack.c.l.b16 %v1089
        %v1185 = vunpack.c.l.b16 %v1090
        %v1186 = vunpack.c.l.b16 %v1091
        %v1187 = vunpack.c.l.b16 %v1092
        %v1188 = vpack.c.b16 %v1173, %v1172
        %v1189 = vpack.c.b16 %v1175, %v1174
        %v1190 = vpack.c.b16 %v1177, %v1176
        %v1191 = vpack.c.b16 %v1179, %v1178
        %v1192 = vpack.c.b16 %v1181, %v1180
        %v1193 = vpack.c.b16 %v1183, %v1182
        %v1194 = vpack.c.b16 %v1185, %v1184
        %v1195 = vpack.c.b16 %v1187, %v1186
        %1204 = vmatprep.subr.bf16.mxu0 0
        %1205 = vmatpush1.bf16.msra.mxu0 %v1195
        %1206 = vmatprep.subr.bf16.mxu0 0
        %1207 = vmatpush1.bf16.msra.mxu0 %v1194
        %1208 = vmatprep.subr.bf16.mxu0 0
        %1209 = vmatpush1.bf16.msra.mxu0 %v1193
        %1210 = vmatprep.subr.bf16.mxu0 0
        %1211 = vmatpush1.bf16.msra.mxu0 %v1192
        %1212 = vmatprep.subr.bf16.mxu0 0
        %1213 = vmatpush1.bf16.msra.mxu0 %v1191
        %1214 = vmatprep.subr.bf16.mxu0 0
        %1215 = vmatpush1.bf16.msra.mxu0 %v1190
        %1216 = vmatprep.subr.bf16.mxu0 0
        %1217 = vmatpush1.bf16.msra.mxu0 %v1189
        %1218 = vmatprep.subr.bf16.mxu0 0
        %1219 = vmatpush1.bf16.msra.mxu0 %v1188
        %1220 = vmatprep.subr.bf16.mxu0 0
        %1221 = vmatpush2.bf16.msra.mxu0 0
        %1222 = vmatprep.subr.bf16.mxu0 0
        %1223 = vmatpush2.bf16.msra.mxu0 0
        %1224 = vmatprep.subr.bf16.mxu0 0
        %1225 = vmatpush2.bf16.msra.mxu0 0
        %1226 = vmatprep.subr.bf16.mxu0 0
        %1227 = vmatpush2.bf16.msra.mxu0 0
        %1228 = vmatprep.subr.bf16.mxu0 0
        %1229 = vmatpush2.bf16.msra.mxu0 0
        %1230 = vmatprep.subr.bf16.mxu0 0
        %1231 = vmatpush2.bf16.msra.mxu0 0
        %1232 = vmatprep.subr.bf16.mxu0 0
        %1233 = vmatpush2.bf16.msra.mxu0 0
        %1234 = vmatprep.subr.bf16.mxu0 0
        %1235 = vmatpush2.bf16.msra.mxu0 0
        %1236 = vmatprep.mubr.bf16.mxu0 0
        %1237 = vmatmul.mubr.bf16.gmra.mxu0 %v1149
        %v1238 = vpop.f32.mrf.mxu0
        %v1239 = vadd.f32 %v1154, %v1238
        %v1240 = vpop.f32.mrf.mxu0
        %v1241 = vpop.f32.mrf.mxu0
        %v1242 = vadd.f32 %v1154, %v1241
        %v1243 = vpop.f32.mrf.mxu0
        %1244 = vdwg.mxu0
        %v1246 = vlaneseq
        %v1247 = vshrl.u32 %v1246, 7
        %v1248 = vsub.s32 0, %v1247
        %v1249 = vrot.slane %v1110, %v1248
        %v1267 = vunpack.c.l.b16 %v1094
        %v1268 = vunpack.c.l.b16 %v1095
        %v1269 = vunpack.c.l.b16 %v1096
        %v1270 = vunpack.c.l.b16 %v1097
        %v1271 = vunpack.c.l.b16 %v1098
        %v1272 = vunpack.c.l.b16 %v1099
        %v1273 = vunpack.c.l.b16 %v1100
        %v1274 = vunpack.c.l.b16 %v1101
        %v1275 = vunpack.c.l.b16 %v1102
        %v1276 = vunpack.c.l.b16 %v1103
        %v1277 = vunpack.c.l.b16 %v1104
        %v1278 = vunpack.c.l.b16 %v1105
        %v1279 = vunpack.c.l.b16 %v1106
        %v1280 = vunpack.c.l.b16 %v1107
        %v1281 = vunpack.c.l.b16 %v1108
        %v1282 = vunpack.c.l.b16 %v1109
        %v1283 = vpack.c.b16 %v1268, %v1267
        %v1284 = vpack.c.b16 %v1270, %v1269
        %v1285 = vpack.c.b16 %v1272, %v1271
        %v1286 = vpack.c.b16 %v1274, %v1273
        %v1287 = vpack.c.b16 %v1276, %v1275
        %v1288 = vpack.c.b16 %v1278, %v1277
        %v1289 = vpack.c.b16 %v1280, %v1279
        %v1290 = vpack.c.b16 %v1282, %v1281
        %1299 = vmatprep.subr.bf16.mxu0 0
        %1300 = vmatpush1.bf16.msra.mxu0 %v1290
        %1301 = vmatprep.subr.bf16.mxu0 0
        %1302 = vmatpush1.bf16.msra.mxu0 %v1289
        %1303 = vmatprep.subr.bf16.mxu0 0
        %1304 = vmatpush1.bf16.msra.mxu0 %v1288
        %1305 = vmatprep.subr.bf16.mxu0 0
        %1306 = vmatpush1.bf16.msra.mxu0 %v1287
        %1307 = vmatprep.subr.bf16.mxu0 0
        %1308 = vmatpush1.bf16.msra.mxu0 %v1286
        %1309 = vmatprep.subr.bf16.mxu0 0
        %1310 = vmatpush1.bf16.msra.mxu0 %v1285
        %1311 = vmatprep.subr.bf16.mxu0 0
        %1312 = vmatpush1.bf16.msra.mxu0 %v1284
        %1313 = vmatprep.subr.bf16.mxu0 0
        %1314 = vmatpush1.bf16.msra.mxu0 %v1283
        %1315 = vmatprep.subr.bf16.mxu0 0
        %1316 = vmatpush2.bf16.msra.mxu0 0
        %1317 = vmatprep.subr.bf16.mxu0 0
        %1318 = vmatpush2.bf16.msra.mxu0 0
        %1319 = vmatprep.subr.bf16.mxu0 0
        %1320 = vmatpush2.bf16.msra.mxu0 0
        %1321 = vmatprep.subr.bf16.mxu0 0
        %1322 = vmatpush2.bf16.msra.mxu0 0
        %1323 = vmatprep.subr.bf16.mxu0 0
        %1324 = vmatpush2.bf16.msra.mxu0 0
        %1325 = vmatprep.subr.bf16.mxu0 0
        %1326 = vmatpush2.bf16.msra.mxu0 0
        %1327 = vmatprep.subr.bf16.mxu0 0
        %1328 = vmatpush2.bf16.msra.mxu0 0
        %1329 = vmatprep.subr.bf16.mxu0 0
        %1330 = vmatpush2.bf16.msra.mxu0 0
        %1331 = vmatprep.mubr.bf16.mxu0 0
        %1332 = vmatmul.mubr.bf16.gmra.mxu0 %v1149
        %v1333 = vpop.f32.mrf.mxu0
        %v1334 = vadd.f32 %v1249, %v1333
        %v1335 = vpop.f32.mrf.mxu0
        %v1336 = vpop.f32.mrf.mxu0
        %v1337 = vadd.f32 %v1249, %v1336
        %v1338 = vpop.f32.mrf.mxu0
        %1339 = vdwg.mxu0
        %v1340 = vpack.c.bf16 %v1073, %v1072
        %v1342 = vlaneseq
        %v1343 = vshrl.u32 %v1342, 7
        %v1344 = vsub.s32 0, %v1343
        %v1345 = vrot.slane %v1127, %v1344
        %v1363 = vunpack.c.l.b16 %v1111
        %v1364 = vunpack.c.l.b16 %v1112
        %v1365 = vunpack.c.l.b16 %v1113
        %v1366 = vunpack.c.l.b16 %v1114
        %v1367 = vunpack.c.l.b16 %v1115
        %v1368 = vunpack.c.l.b16 %v1116
        %v1369 = vunpack.c.l.b16 %v1117
        %v1370 = vunpack.c.l.b16 %v1118
        %v1371 = vunpack.c.l.b16 %v1119
        %v1372 = vunpack.c.l.b16 %v1120
        %v1373 = vunpack.c.l.b16 %v1121
        %v1374 = vunpack.c.l.b16 %v1122
        %v1375 = vunpack.c.l.b16 %v1123
        %v1376 = vunpack.c.l.b16 %v1124
        %v1377 = vunpack.c.l.b16 %v1125
        %v1378 = vunpack.c.l.b16 %v1126
        %v1379 = vpack.c.b16 %v1364, %v1363
        %v1380 = vpack.c.b16 %v1366, %v1365
        %v1381 = vpack.c.b16 %v1368, %v1367
        %v1382 = vpack.c.b16 %v1370, %v1369
        %v1383 = vpack.c.b16 %v1372, %v1371
        %v1384 = vpack.c.b16 %v1374, %v1373
        %v1385 = vpack.c.b16 %v1376, %v1375
        %v1386 = vpack.c.b16 %v1378, %v1377
        %1395 = vmatprep.subr.bf16.mxu0 0
        %1396 = vmatpush1.bf16.msra.mxu0 %v1386
        %1397 = vmatprep.subr.bf16.mxu0 0
        %1398 = vmatpush1.bf16.msra.mxu0 %v1385
        %1399 = vmatprep.subr.bf16.mxu0 0
        %1400 = vmatpush1.bf16.msra.mxu0 %v1384
        %1401 = vmatprep.subr.bf16.mxu0 0
        %1402 = vmatpush1.bf16.msra.mxu0 %v1383
        %1403 = vmatprep.subr.bf16.mxu0 0
        %1404 = vmatpush1.bf16.msra.mxu0 %v1382
        %1405 = vmatprep.subr.bf16.mxu0 0
        %1406 = vmatpush1.bf16.msra.mxu0 %v1381
        %1407 = vmatprep.subr.bf16.mxu0 0
        %1408 = vmatpush1.bf16.msra.mxu0 %v1380
        %1409 = vmatprep.subr.bf16.mxu0 0
        %1410 = vmatpush1.bf16.msra.mxu0 %v1379
        %1411 = vmatprep.subr.bf16.mxu0 0
        %1412 = vmatpush2.bf16.msra.mxu0 0
        %1413 = vmatprep.subr.bf16.mxu0 0
        %1414 = vmatpush2.bf16.msra.mxu0 0
        %1415 = vmatprep.subr.bf16.mxu0 0
        %1416 = vmatpush2.bf16.msra.mxu0 0
        %1417 = vmatprep.subr.bf16.mxu0 0
        %1418 = vmatpush2.bf16.msra.mxu0 0
        %1419 = vmatprep.subr.bf16.mxu0 0
        %1420 = vmatpush2.bf16.msra.mxu0 0
        %1421 = vmatprep.subr.bf16.mxu0 0
        %1422 = vmatpush2.bf16.msra.mxu0 0
        %1423 = vmatprep.subr.bf16.mxu0 0
        %1424 = vmatpush2.bf16.msra.mxu0 0
        %1425 = vmatprep.subr.bf16.mxu0 0
        %1426 = vmatpush2.bf16.msra.mxu0 0
        %1427 = vmatprep.mubr.bf16.mxu0 0
        %1428 = vmatmul.mubr.bf16.gmra.mxu0 %v1340
        %v1429 = vpop.f32.mrf.mxu0
        %v1430 = vadd.f32 %v1345, %v1429
        %v1431 = vpop.f32.mrf.mxu0
        %v1432 = vpop.f32.mrf.mxu0
        %v1433 = vadd.f32 %v1345, %v1432
        %v1434 = vpop.f32.mrf.mxu0
        %1435 = vdwg.mxu0
        %v1436 = vpack.c.bf16 %v1242, %v1239
        %v1437 = vpack.c.bf16 %v1337, %v1334
        %v1438 = vpack.c.bf16 %v1433, %v1430
        %vm1439 = vcmask 261120
        %v1441 = vsel %vm1439, %v1436, 0
        %v1444 = vsel %vm1439, %v1437, 0
        %1446 = vmatprep.subr.bf16.mxu0 0
        %1447 = vmatpush1.bf16.xpose.msra.mxu0 0
        %1448 = vmatprep.subr.bf16.mxu0 0
        %1449 = vmatpush1.bf16.xpose.msra.mxu0 0
        %1450 = vmatprep.subr.bf16.mxu0 0
        %1451 = vmatpush1.bf16.xpose.msra.mxu0 0
        %1452 = vmatprep.subr.bf16.mxu0 0
        %1453 = vmatpush1.bf16.xpose.msra.mxu0 0
        %1454 = vmatprep.subr.bf16.mxu0 0
        %1455 = vmatpush1.bf16.xpose.msra.mxu0 0
        %1456 = vmatprep.subr.bf16.mxu0 0
        %1457 = vmatpush1.bf16.xpose.msra.mxu0 0
        %1458 = vmatprep.subr.bf16.mxu0 0
        %1459 = vmatpush1.bf16.xpose.msra.mxu0 0
        %1460 = vmatprep.subr.bf16.mxu0 0
        %1461 = vmatpush1.bf16.xpose.msra.mxu0 %v1444
        %1462 = vmatprep.subr.bf16.mxu0 0
        %1463 = vmatpush2.bf16.xpose.msra.mxu0 0
        %1464 = vmatprep.subr.bf16.mxu0 0
        %1465 = vmatpush2.bf16.xpose.msra.mxu0 0
        %1466 = vmatprep.subr.bf16.mxu0 0
        %1467 = vmatpush2.bf16.xpose.msra.mxu0 0
        %1468 = vmatprep.subr.bf16.mxu0 0
        %1469 = vmatpush2.bf16.xpose.msra.mxu0 0
        %1470 = vmatprep.subr.bf16.mxu0 0
        %1471 = vmatpush2.bf16.xpose.msra.mxu0 0
        %1472 = vmatprep.subr.bf16.mxu0 0
        %1473 = vmatpush2.bf16.xpose.msra.mxu0 0
        %1474 = vmatprep.subr.bf16.mxu0 0
        %1475 = vmatpush2.bf16.xpose.msra.mxu0 0
        %1476 = vmatprep.subr.bf16.mxu0 0
        %1477 = vmatpush2.bf16.xpose.msra.mxu0 0
        %1478 = vmatprep.mubr.bf16.mxu0 0
        %1479 = vmatmul.mubr.bf16.gmra.mxu0 %v1441
        %v1480 = vpop.f32.mrf.mxu0
        %v1481 = vadd.f32 0.0, %v1480
        %v1482 = vpop.f32.mrf.mxu0
        %v1483 = vpop.f32.mrf.mxu0
        %v1484 = vadd.f32 0.0, %v1483
        %v1485 = vpop.f32.mrf.mxu0
        %1486 = vdwg.mxu0
        %v1487 = vmul.f32 %v1481, 0.17677669
        %v1488 = vmul.f32 %v1484, 0.17677669
        %v1490 = vlaneseq
        %v1491 = vshrl.u32 %v1490, 7
        %v1492 = vsub.s32 0, %v1491
        %v1493 = vrot.slane %v1076, %v1492
        %v1495 = vadd.f32 %v1487, %v1493
        %v1496 = vadd.f32 %v1488, %v1493
        %vm1497 = vcmask 130048
        %v1498 = vsel %vm1497, %v1495, -inf
        %1499 = vmax.xlane.f32.xlu0 %v1498
        %v1500 = vpop.xlane.xlu0 %1499
        %v1501 = vsel %vm1497, %v1496, -inf
        %1502 = vmax.xlane.f32.xlu0 %v1501
        %v1503 = vpop.xlane.xlu0 %1502
        %v1504 = vsub.f32 %v1495, %v1500
        %v1505 = vsub.f32 %v1496, %v1503
        %v1506 = vmul.f32 %v1504, 1.442695
        %v1507 = vpow.pop %v1506
        %v1508 = vmul.f32 %v1505, 1.442695
        %v1509 = vpow.pop %v1508
        %v1510 = vsel %vm1497, %v1507, 0.0
        %1511 = vadd.xlane.f32.xlu0 %v1510
        %v1512 = vpop.xlane.xlu0 %1511
        %v1513 = vsel %vm1497, %v1509, 0.0
        %1514 = vadd.xlane.f32.xlu0 %v1513
        %v1515 = vpop.xlane.xlu0 %1514
        %v1516 = vrcp.pop %v1512
        %v1517 = vrcp.pop %v1515
        %v1518 = vmul.f32 %v1507, %v1516
        %v1519 = vmul.f32 %v1509, %v1517
        %v1520 = vpack.c.bf16 %v1519, %v1518
        %v1522 = vsel %vm1497, %v1520, 0
        %1524 = vmatprep.subr.bf16.mxu0 0
        %1525 = vmatpush1.bf16.msra.mxu0 0
        %1526 = vmatprep.subr.bf16.mxu0 0
        %1527 = vmatpush1.bf16.msra.mxu0 0
        %1528 = vmatprep.subr.bf16.mxu0 0
        %1529 = vmatpush1.bf16.msra.mxu0 0
        %1530 = vmatprep.subr.bf16.mxu0 0
        %1531 = vmatpush1.bf16.msra.mxu0 0
        %1532 = vmatprep.subr.bf16.mxu0 0
        %1533 = vmatpush1.bf16.msra.mxu0 0
        %1534 = vmatprep.subr.bf16.mxu0 0
        %1535 = vmatpush1.bf16.msra.mxu0 0
        %1536 = vmatprep.subr.bf16.mxu0 0
        %1537 = vmatpush1.bf16.msra.mxu0 0
        %1538 = vmatprep.subr.bf16.mxu0 0
        %1539 = vmatpush1.bf16.msra.mxu0 %v1438
        %1540 = vmatprep.subr.bf16.mxu0 0
        %1541 = vmatpush2.bf16.msra.mxu0 0
        %1542 = vmatprep.subr.bf16.mxu0 0
        %1543 = vmatpush2.bf16.msra.mxu0 0
        %1544 = vmatprep.subr.bf16.mxu0 0
        %1545 = vmatpush2.bf16.msra.mxu0 0
        %1546 = vmatprep.subr.bf16.mxu0 0
        %1547 = vmatpush2.bf16.msra.mxu0 0
        %1548 = vmatprep.subr.bf16.mxu0 0
        %1549 = vmatpush2.bf16.msra.mxu0 0
        %1550 = vmatprep.subr.bf16.mxu0 0
        %1551 = vmatpush2.bf16.msra.mxu0 0
        %1552 = vmatprep.subr.bf16.mxu0 0
        %1553 = vmatpush2.bf16.msra.mxu0 0
        %1554 = vmatprep.subr.bf16.mxu0 0
        %1555 = vmatpush2.bf16.msra.mxu0 0
        %1556 = vmatprep.mubr.bf16.mxu0 0
        %1557 = vmatmul.mubr.bf16.gmra.mxu0 %v1522
        %v1558 = vpop.f32.mrf.mxu0
        %v1559 = vadd.f32 0.0, %v1558
        %v1560 = vpop.f32.mrf.mxu0
        %v1561 = vpop.f32.mrf.mxu0
        %v1562 = vadd.f32 0.0, %v1561
        %v1563 = vpop.f32.mrf.mxu0
        %1564 = vdwg.mxu0
        %v1565 = vpack.c.bf16 %v1562, %v1559
        %1567 = vrot.lane.b32.xlu0 %v1436, 96
        %v1568 = vpop.permute.xlu0 %1567
        %1570 = vrot.lane.b32.xlu0 %v1437, 96
        %v1571 = vpop.permute.xlu0 %1570
        %v1573 = vsel %vm1439, %v1568, 0
        %v1576 = vsel %vm1439, %v1571, 0
        %1578 = vmatprep.subr.bf16.mxu0 0
        %1579 = vmatpush1.bf16.xpose.msra.mxu0 0
        %1580 = vmatprep.subr.bf16.mxu0 0
        %1581 = vmatpush1.bf16.xpose.msra.mxu0 0
        %1582 = vmatprep.subr.bf16.mxu0 0
        %1583 = vmatpush1.bf16.xpose.msra.mxu0 0
        %1584 = vmatprep.subr.bf16.mxu0 0
        %1585 = vmatpush1.bf16.xpose.msra.mxu0 0
        %1586 = vmatprep.subr.bf16.mxu0 0
        %1587 = vmatpush1.bf16.xpose.msra.mxu0 0
        %1588 = vmatprep.subr.bf16.mxu0 0
        %1589 = vmatpush1.bf16.xpose.msra.mxu0 0
        %1590 = vmatprep.subr.bf16.mxu0 0
        %1591 = vmatpush1.bf16.xpose.msra.mxu0 0
        %1592 = vmatprep.subr.bf16.mxu0 0
        %1593 = vmatpush1.bf16.xpose.msra.mxu0 %v1576
        %1594 = vmatprep.subr.bf16.mxu0 0
        %1595 = vmatpush2.bf16.xpose.msra.mxu0 0
        %1596 = vmatprep.subr.bf16.mxu0 0
        %1597 = vmatpush2.bf16.xpose.msra.mxu0 0
        %1598 = vmatprep.subr.bf16.mxu0 0
        %1599 = vmatpush2.bf16.xpose.msra.mxu0 0
        %1600 = vmatprep.subr.bf16.mxu0 0
        %1601 = vmatpush2.bf16.xpose.msra.mxu0 0
        %1602 = vmatprep.subr.bf16.mxu0 0
        %1603 = vmatpush2.bf16.xpose.msra.mxu0 0
        %1604 = vmatprep.subr.bf16.mxu0 0
        %1605 = vmatpush2.bf16.xpose.msra.mxu0 0
        %1606 = vmatprep.subr.bf16.mxu0 0
        %1607 = vmatpush2.bf16.xpose.msra.mxu0 0
        %1608 = vmatprep.subr.bf16.mxu0 0
        %1609 = vmatpush2.bf16.xpose.msra.mxu0 0
        %1610 = vmatprep.mubr.bf16.mxu0 0
        %1611 = vmatmul.mubr.bf16.gmra.mxu0 %v1573
        %v1612 = vpop.f32.mrf.mxu0
        %v1613 = vadd.f32 0.0, %v1612
        %v1614 = vpop.f32.mrf.mxu0
        %v1615 = vpop.f32.mrf.mxu0
        %v1616 = vadd.f32 0.0, %v1615
        %v1617 = vpop.f32.mrf.mxu0
        %1618 = vdwg.mxu0
        %v1619 = vmul.f32 %v1613, 0.17677669
        %v1620 = vmul.f32 %v1616, 0.17677669
        %v1621 = vadd.f32 %v1619, %v1493
        %v1622 = vadd.f32 %v1620, %v1493
        %v1623 = vsel %vm1497, %v1621, -inf
        %1624 = vmax.xlane.f32.xlu0 %v1623
        %v1625 = vpop.xlane.xlu0 %1624
        %v1626 = vsel %vm1497, %v1622, -inf
        %1627 = vmax.xlane.f32.xlu0 %v1626
        %v1628 = vpop.xlane.xlu0 %1627
        %v1629 = vsub.f32 %v1621, %v1625
        %v1630 = vsub.f32 %v1622, %v1628
        %v1631 = vmul.f32 %v1629, 1.442695
        %v1632 = vpow.pop %v1631
        %v1633 = vmul.f32 %v1630, 1.442695
        %v1634 = vpow.pop %v1633
        %v1635 = vsel %vm1497, %v1632, 0.0
        %1636 = vadd.xlane.f32.xlu0 %v1635
        %v1637 = vpop.xlane.xlu0 %1636
        %v1638 = vsel %vm1497, %v1634, 0.0
        %1639 = vadd.xlane.f32.xlu0 %v1638
        %v1640 = vpop.xlane.xlu0 %1639
        %v1641 = vrcp.pop %v1637
        %v1642 = vrcp.pop %v1640
        %v1643 = vmul.f32 %v1632, %v1641
        %v1644 = vmul.f32 %v1634, %v1642
        %v1645 = vpack.c.bf16 %v1644, %v1643
        %1647 = vrot.lane.b32.xlu0 %v1438, 96
        %v1648 = vpop.permute.xlu0 %1647
        %v1651 = vsel %vm1497, %v1645, 0
        %1653 = vmatprep.subr.bf16.mxu0 0
        %1654 = vmatpush1.bf16.msra.mxu0 0
        %1655 = vmatprep.subr.bf16.mxu0 0
        %1656 = vmatpush1.bf16.msra.mxu0 0
        %1657 = vmatprep.subr.bf16.mxu0 0
        %1658 = vmatpush1.bf16.msra.mxu0 0
        %1659 = vmatprep.subr.bf16.mxu0 0
        %1660 = vmatpush1.bf16.msra.mxu0 0
        %1661 = vmatprep.subr.bf16.mxu0 0
        %1662 = vmatpush1.bf16.msra.mxu0 0
        %1663 = vmatprep.subr.bf16.mxu0 0
        %1664 = vmatpush1.bf16.msra.mxu0 0
        %1665 = vmatprep.subr.bf16.mxu0 0
        %1666 = vmatpush1.bf16.msra.mxu0 0
        %1667 = vmatprep.subr.bf16.mxu0 0
        %1668 = vmatpush1.bf16.msra.mxu0 %v1648
        %1669 = vmatprep.subr.bf16.mxu0 0
        %1670 = vmatpush2.bf16.msra.mxu0 0
        %1671 = vmatprep.subr.bf16.mxu0 0
        %1672 = vmatpush2.bf16.msra.mxu0 0
        %1673 = vmatprep.subr.bf16.mxu0 0
        %1674 = vmatpush2.bf16.msra.mxu0 0
        %1675 = vmatprep.subr.bf16.mxu0 0
        %1676 = vmatpush2.bf16.msra.mxu0 0
        %1677 = vmatprep.subr.bf16.mxu0 0
        %1678 = vmatpush2.bf16.msra.mxu0 0
        %1679 = vmatprep.subr.bf16.mxu0 0
        %1680 = vmatpush2.bf16.msra.mxu0 0
        %1681 = vmatprep.subr.bf16.mxu0 0
        %1682 = vmatpush2.bf16.msra.mxu0 0
        %1683 = vmatprep.subr.bf16.mxu0 0
        %1684 = vmatpush2.bf16.msra.mxu0 0
        %1685 = vmatprep.mubr.bf16.mxu0 0
        %1686 = vmatmul.mubr.bf16.gmra.mxu0 %v1651
        %v1687 = vpop.f32.mrf.mxu0
        %v1688 = vadd.f32 0.0, %v1687
        %v1689 = vpop.f32.mrf.mxu0
        %v1690 = vpop.f32.mrf.mxu0
        %v1691 = vadd.f32 0.0, %v1690
        %v1692 = vpop.f32.mrf.mxu0
        %1693 = vdwg.mxu0
        %v1694 = vpack.c.bf16 %v1691, %v1688
        %v1699 = vunpack.c.l.b16 %v1132
        %v1700 = vunpack.c.l.b16 %v1133
        %v1701 = vunpack.c.l.b16 %v1134
        %v1702 = vunpack.c.l.b16 %v1135
        %v1703 = vpack.c.b16 %v1700, %v1699
        %v1704 = vpack.c.b16 %v1702, %v1701
        %v1708 = vsel %vm1439, %v1694, 0
        %1710 = vmatprep.subr.bf16.mxu0 0
        %1711 = vmatpush1.bf16.msra.mxu0 0
        %1712 = vmatprep.subr.bf16.mxu0 0
        %1713 = vmatpush1.bf16.msra.mxu0 0
        %1714 = vmatprep.subr.bf16.mxu0 0
        %1715 = vmatpush1.bf16.msra.mxu0 0
        %1716 = vmatprep.subr.bf16.mxu0 0
        %1717 = vmatpush1.bf16.msra.mxu0 0
        %1718 = vmatprep.subr.bf16.mxu0 0
        %1719 = vmatpush1.bf16.msra.mxu0 0
        %1720 = vmatprep.subr.bf16.mxu0 0
        %1721 = vmatpush1.bf16.msra.mxu0 0
        %1722 = vmatprep.subr.bf16.mxu0 0
        %1723 = vmatpush1.bf16.msra.mxu0 %v1704
        %1724 = vmatprep.subr.bf16.mxu0 0
        %1725 = vmatpush1.bf16.msra.mxu0 %v1703
        %1726 = vmatprep.subr.bf16.mxu0 0
        %1727 = vmatpush2.bf16.msra.mxu0 0
        %1728 = vmatprep.subr.bf16.mxu0 0
        %1729 = vmatpush2.bf16.msra.mxu0 0
        %1730 = vmatprep.subr.bf16.mxu0 0
        %1731 = vmatpush2.bf16.msra.mxu0 0
        %1732 = vmatprep.subr.bf16.mxu0 0
        %1733 = vmatpush2.bf16.msra.mxu0 0
        %1734 = vmatprep.subr.bf16.mxu0 0
        %1735 = vmatpush2.bf16.msra.mxu0 0
        %1736 = vmatprep.subr.bf16.mxu0 0
        %1737 = vmatpush2.bf16.msra.mxu0 0
        %1738 = vmatprep.subr.bf16.mxu0 0
        %1739 = vmatpush2.bf16.msra.mxu0 0
        %1740 = vmatprep.subr.bf16.mxu0 0
        %1741 = vmatpush2.bf16.msra.mxu0 0
        %1742 = vmatprep.mubr.bf16.mxu0 0
        %1743 = vmatmul.mubr.bf16.gmra.mxu0 %v1708
        %v1744 = vpop.f32.mrf.mxu0
        %v1745 = vadd.f32 0.0, %v1744
        %v1746 = vpop.f32.mrf.mxu0
        %v1747 = vpop.f32.mrf.mxu0
        %v1748 = vadd.f32 0.0, %v1747
        %v1749 = vpop.f32.mrf.mxu0
        %1750 = vdwg.mxu0
        %v1755 = vunpack.c.l.b16 %v1128
        %v1756 = vunpack.c.l.b16 %v1129
        %v1757 = vunpack.c.l.b16 %v1130
        %v1758 = vunpack.c.l.b16 %v1131
        %v1759 = vpack.c.b16 %v1756, %v1755
        %v1760 = vpack.c.b16 %v1758, %v1757
        %v1764 = vsel %vm1439, %v1565, 0
        %1766 = vmatprep.subr.bf16.mxu0 0
        %1767 = vmatpush1.bf16.msra.mxu0 0
        %1768 = vmatprep.subr.bf16.mxu0 0
        %1769 = vmatpush1.bf16.msra.mxu0 0
        %1770 = vmatprep.subr.bf16.mxu0 0
        %1771 = vmatpush1.bf16.msra.mxu0 0
        %1772 = vmatprep.subr.bf16.mxu0 0
        %1773 = vmatpush1.bf16.msra.mxu0 0
        %1774 = vmatprep.subr.bf16.mxu0 0
        %1775 = vmatpush1.bf16.msra.mxu0 0
        %1776 = vmatprep.subr.bf16.mxu0 0
        %1777 = vmatpush1.bf16.msra.mxu0 0
        %1778 = vmatprep.subr.bf16.mxu0 0
        %1779 = vmatpush1.bf16.msra.mxu0 %v1760
        %1780 = vmatprep.subr.bf16.mxu0 0
        %1781 = vmatpush1.bf16.msra.mxu0 %v1759
        %1782 = vmatprep.subr.bf16.mxu0 0
        %1783 = vmatpush2.bf16.msra.mxu0 0
        %1784 = vmatprep.subr.bf16.mxu0 0
        %1785 = vmatpush2.bf16.msra.mxu0 0
        %1786 = vmatprep.subr.bf16.mxu0 0
        %1787 = vmatpush2.bf16.msra.mxu0 0
        %1788 = vmatprep.subr.bf16.mxu0 0
        %1789 = vmatpush2.bf16.msra.mxu0 0
        %1790 = vmatprep.subr.bf16.mxu0 0
        %1791 = vmatpush2.bf16.msra.mxu0 0
        %1792 = vmatprep.subr.bf16.mxu0 0
        %1793 = vmatpush2.bf16.msra.mxu0 0
        %1794 = vmatprep.subr.bf16.mxu0 0
        %1795 = vmatpush2.bf16.msra.mxu0 0
        %1796 = vmatprep.subr.bf16.mxu0 0
        %1797 = vmatpush2.bf16.msra.mxu0 0
        %1798 = vmatprep.mubr.bf16.mxu0 0
        %1799 = vmatmul.mubr.bf16.gmra.mxu0 %v1764
        %v1800 = vpop.f32.mrf.mxu0
        %v1801 = vadd.f32 %v1745, %v1800
        %v1802 = vpop.f32.mrf.mxu0
        %v1803 = vpop.f32.mrf.mxu0
        %v1804 = vadd.f32 %v1748, %v1803
        %v1805 = vpop.f32.mrf.mxu0
        %1806 = vdwg.mxu0
        %1807 = vrot.lane.b32.xlu0 %v1436, 64
        %v1808 = vpop.permute.xlu0 %1807
        %1809 = vrot.lane.b32.xlu0 %v1437, 64
        %v1810 = vpop.permute.xlu0 %1809
        %v1812 = vsel %vm1439, %v1808, 0
        %v1815 = vsel %vm1439, %v1810, 0
        %1817 = vmatprep.subr.bf16.mxu0 0
        %1818 = vmatpush1.bf16.xpose.msra.mxu0 0
        %1819 = vmatprep.subr.bf16.mxu0 0
        %1820 = vmatpush1.bf16.xpose.msra.mxu0 0
        %1821 = vmatprep.subr.bf16.mxu0 0
        %1822 = vmatpush1.bf16.xpose.msra.mxu0 0
        %1823 = vmatprep.subr.bf16.mxu0 0
        %1824 = vmatpush1.bf16.xpose.msra.mxu0 0
        %1825 = vmatprep.subr.bf16.mxu0 0
        %1826 = vmatpush1.bf16.xpose.msra.mxu0 0
        %1827 = vmatprep.subr.bf16.mxu0 0
        %1828 = vmatpush1.bf16.xpose.msra.mxu0 0
        %1829 = vmatprep.subr.bf16.mxu0 0
        %1830 = vmatpush1.bf16.xpose.msra.mxu0 0
        %1831 = vmatprep.subr.bf16.mxu0 0
        %1832 = vmatpush1.bf16.xpose.msra.mxu0 %v1815
        %1833 = vmatprep.subr.bf16.mxu0 0
        %1834 = vmatpush2.bf16.xpose.msra.mxu0 0
        %1835 = vmatprep.subr.bf16.mxu0 0
        %1836 = vmatpush2.bf16.xpose.msra.mxu0 0
        %1837 = vmatprep.subr.bf16.mxu0 0
        %1838 = vmatpush2.bf16.xpose.msra.mxu0 0
        %1839 = vmatprep.subr.bf16.mxu0 0
        %1840 = vmatpush2.bf16.xpose.msra.mxu0 0
        %1841 = vmatprep.subr.bf16.mxu0 0
        %1842 = vmatpush2.bf16.xpose.msra.mxu0 0
        %1843 = vmatprep.subr.bf16.mxu0 0
        %1844 = vmatpush2.bf16.xpose.msra.mxu0 0
        %1845 = vmatprep.subr.bf16.mxu0 0
        %1846 = vmatpush2.bf16.xpose.msra.mxu0 0
        %1847 = vmatprep.subr.bf16.mxu0 0
        %1848 = vmatpush2.bf16.xpose.msra.mxu0 0
        %1849 = vmatprep.mubr.bf16.mxu0 0
        %1850 = vmatmul.mubr.bf16.gmra.mxu0 %v1812
        %v1851 = vpop.f32.mrf.mxu0
        %v1852 = vadd.f32 0.0, %v1851
        %v1853 = vpop.f32.mrf.mxu0
        %v1854 = vpop.f32.mrf.mxu0
        %v1855 = vadd.f32 0.0, %v1854
        %v1856 = vpop.f32.mrf.mxu0
        %1857 = vdwg.mxu0
        %v1858 = vmul.f32 %v1852, 0.17677669
        %v1859 = vmul.f32 %v1855, 0.17677669
        %v1860 = vadd.f32 %v1858, %v1493
        %v1861 = vadd.f32 %v1859, %v1493
        %v1862 = vsel %vm1497, %v1860, -inf
        %1863 = vmax.xlane.f32.xlu0 %v1862
        %v1864 = vpop.xlane.xlu0 %1863
        %v1865 = vsel %vm1497, %v1861, -inf
        %1866 = vmax.xlane.f32.xlu0 %v1865
        %v1867 = vpop.xlane.xlu0 %1866
        %v1868 = vsub.f32 %v1860, %v1864
        %v1869 = vsub.f32 %v1861, %v1867
        %v1870 = vmul.f32 %v1868, 1.442695
        %v1871 = vpow.pop %v1870
        %v1872 = vmul.f32 %v1869, 1.442695
        %v1873 = vpow.pop %v1872
        %v1874 = vsel %vm1497, %v1871, 0.0
        %1875 = vadd.xlane.f32.xlu0 %v1874
        %v1876 = vpop.xlane.xlu0 %1875
        %v1877 = vsel %vm1497, %v1873, 0.0
        %1878 = vadd.xlane.f32.xlu0 %v1877
        %v1879 = vpop.xlane.xlu0 %1878
        %v1880 = vrcp.pop %v1876
        %v1881 = vrcp.pop %v1879
        %v1882 = vmul.f32 %v1871, %v1880
        %v1883 = vmul.f32 %v1873, %v1881
        %v1884 = vpack.c.bf16 %v1883, %v1882
        %1885 = vrot.lane.b32.xlu0 %v1438, 64
        %v1886 = vpop.permute.xlu0 %1885
        %v1889 = vsel %vm1497, %v1884, 0
        %1891 = vmatprep.subr.bf16.mxu0 0
        %1892 = vmatpush1.bf16.msra.mxu0 0
        %1893 = vmatprep.subr.bf16.mxu0 0
        %1894 = vmatpush1.bf16.msra.mxu0 0
        %1895 = vmatprep.subr.bf16.mxu0 0
        %1896 = vmatpush1.bf16.msra.mxu0 0
        %1897 = vmatprep.subr.bf16.mxu0 0
        %1898 = vmatpush1.bf16.msra.mxu0 0
        %1899 = vmatprep.subr.bf16.mxu0 0
        %1900 = vmatpush1.bf16.msra.mxu0 0
        %1901 = vmatprep.subr.bf16.mxu0 0
        %1902 = vmatpush1.bf16.msra.mxu0 0
        %1903 = vmatprep.subr.bf16.mxu0 0
        %1904 = vmatpush1.bf16.msra.mxu0 0
        %1905 = vmatprep.subr.bf16.mxu0 0
        %1906 = vmatpush1.bf16.msra.mxu0 %v1886
        %1907 = vmatprep.subr.bf16.mxu0 0
        %1908 = vmatpush2.bf16.msra.mxu0 0
        %1909 = vmatprep.subr.bf16.mxu0 0
        %1910 = vmatpush2.bf16.msra.mxu0 0
        %1911 = vmatprep.subr.bf16.mxu0 0
        %1912 = vmatpush2.bf16.msra.mxu0 0
        %1913 = vmatprep.subr.bf16.mxu0 0
        %1914 = vmatpush2.bf16.msra.mxu0 0
        %1915 = vmatprep.subr.bf16.mxu0 0
        %1916 = vmatpush2.bf16.msra.mxu0 0
        %1917 = vmatprep.subr.bf16.mxu0 0
        %1918 = vmatpush2.bf16.msra.mxu0 0
        %1919 = vmatprep.subr.bf16.mxu0 0
        %1920 = vmatpush2.bf16.msra.mxu0 0
        %1921 = vmatprep.subr.bf16.mxu0 0
        %1922 = vmatpush2.bf16.msra.mxu0 0
        %1923 = vmatprep.mubr.bf16.mxu0 0
        %1924 = vmatmul.mubr.bf16.gmra.mxu0 %v1889
        %v1925 = vpop.f32.mrf.mxu0
        %v1926 = vadd.f32 0.0, %v1925
        %v1927 = vpop.f32.mrf.mxu0
        %v1928 = vpop.f32.mrf.mxu0
        %v1929 = vadd.f32 0.0, %v1928
        %v1930 = vpop.f32.mrf.mxu0
        %1931 = vdwg.mxu0
        %v1932 = vpack.c.bf16 %v1929, %v1926
        %v1937 = vunpack.c.l.b16 %v1136
        %v1938 = vunpack.c.l.b16 %v1137
        %v1939 = vunpack.c.l.b16 %v1138
        %v1940 = vunpack.c.l.b16 %v1139
        %v1941 = vpack.c.b16 %v1938, %v1937
        %v1942 = vpack.c.b16 %v1940, %v1939
        %v1946 = vsel %vm1439, %v1932, 0
        %1948 = vmatprep.subr.bf16.mxu0 0
        %1949 = vmatpush1.bf16.msra.mxu0 0
        %1950 = vmatprep.subr.bf16.mxu0 0
        %1951 = vmatpush1.bf16.msra.mxu0 0
        %1952 = vmatprep.subr.bf16.mxu0 0
        %1953 = vmatpush1.bf16.msra.mxu0 0
        %1954 = vmatprep.subr.bf16.mxu0 0
        %1955 = vmatpush1.bf16.msra.mxu0 0
        %1956 = vmatprep.subr.bf16.mxu0 0
        %1957 = vmatpush1.bf16.msra.mxu0 0
        %1958 = vmatprep.subr.bf16.mxu0 0
        %1959 = vmatpush1.bf16.msra.mxu0 0
        %1960 = vmatprep.subr.bf16.mxu0 0
        %1961 = vmatpush1.bf16.msra.mxu0 %v1942
        %1962 = vmatprep.subr.bf16.mxu0 0
        %1963 = vmatpush1.bf16.msra.mxu0 %v1941
        %1964 = vmatprep.subr.bf16.mxu0 0
        %1965 = vmatpush2.bf16.msra.mxu0 0
        %1966 = vmatprep.subr.bf16.mxu0 0
        %1967 = vmatpush2.bf16.msra.mxu0 0
        %1968 = vmatprep.subr.bf16.mxu0 0
        %1969 = vmatpush2.bf16.msra.mxu0 0
        %1970 = vmatprep.subr.bf16.mxu0 0
        %1971 = vmatpush2.bf16.msra.mxu0 0
        %1972 = vmatprep.subr.bf16.mxu0 0
        %1973 = vmatpush2.bf16.msra.mxu0 0
        %1974 = vmatprep.subr.bf16.mxu0 0
        %1975 = vmatpush2.bf16.msra.mxu0 0
        %1976 = vmatprep.subr.bf16.mxu0 0
        %1977 = vmatpush2.bf16.msra.mxu0 0
        %1978 = vmatprep.subr.bf16.mxu0 0
        %1979 = vmatpush2.bf16.msra.mxu0 0
        %1980 = vmatprep.mubr.bf16.mxu0 0
        %1981 = vmatmul.mubr.bf16.gmra.mxu0 %v1946
        %v1982 = vpop.f32.mrf.mxu0
        %v1983 = vadd.f32 0.0, %v1982
        %v1984 = vpop.f32.mrf.mxu0
        %v1985 = vpop.f32.mrf.mxu0
        %v1986 = vadd.f32 0.0, %v1985
        %v1987 = vpop.f32.mrf.mxu0
        %1988 = vdwg.mxu0
        %v1989 = vadd.f32 %v1801, %v1983
        %v1990 = vadd.f32 %v1804, %v1986
        %1991 = vrot.lane.b32.xlu0 %v1436, 32
        %v1992 = vpop.permute.xlu0 %1991
        %1993 = vrot.lane.b32.xlu0 %v1437, 32
        %v1994 = vpop.permute.xlu0 %1993
        %v1996 = vsel %vm1439, %v1992, 0
        %v1999 = vsel %vm1439, %v1994, 0
        %2001 = vmatprep.subr.bf16.mxu0 0
        %2002 = vmatpush1.bf16.xpose.msra.mxu0 0
        %2003 = vmatprep.subr.bf16.mxu0 0
        %2004 = vmatpush1.bf16.xpose.msra.mxu0 0
        %2005 = vmatprep.subr.bf16.mxu0 0
        %2006 = vmatpush1.bf16.xpose.msra.mxu0 0
        %2007 = vmatprep.subr.bf16.mxu0 0
        %2008 = vmatpush1.bf16.xpose.msra.mxu0 0
        %2009 = vmatprep.subr.bf16.mxu0 0
        %2010 = vmatpush1.bf16.xpose.msra.mxu0 0
        %2011 = vmatprep.subr.bf16.mxu0 0
        %2012 = vmatpush1.bf16.xpose.msra.mxu0 0
        %2013 = vmatprep.subr.bf16.mxu0 0
        %2014 = vmatpush1.bf16.xpose.msra.mxu0 0
        %2015 = vmatprep.subr.bf16.mxu0 0
        %2016 = vmatpush1.bf16.xpose.msra.mxu0 %v1999
        %2017 = vmatprep.subr.bf16.mxu0 0
        %2018 = vmatpush2.bf16.xpose.msra.mxu0 0
        %2019 = vmatprep.subr.bf16.mxu0 0
        %2020 = vmatpush2.bf16.xpose.msra.mxu0 0
        %2021 = vmatprep.subr.bf16.mxu0 0
        %2022 = vmatpush2.bf16.xpose.msra.mxu0 0
        %2023 = vmatprep.subr.bf16.mxu0 0
        %2024 = vmatpush2.bf16.xpose.msra.mxu0 0
        %2025 = vmatprep.subr.bf16.mxu0 0
        %2026 = vmatpush2.bf16.xpose.msra.mxu0 0
        %2027 = vmatprep.subr.bf16.mxu0 0
        %2028 = vmatpush2.bf16.xpose.msra.mxu0 0
        %2029 = vmatprep.subr.bf16.mxu0 0
        %2030 = vmatpush2.bf16.xpose.msra.mxu0 0
        %2031 = vmatprep.subr.bf16.mxu0 0
        %2032 = vmatpush2.bf16.xpose.msra.mxu0 0
        %2033 = vmatprep.mubr.bf16.mxu0 0
        %2034 = vmatmul.mubr.bf16.gmra.mxu0 %v1996
        %v2035 = vpop.f32.mrf.mxu0
        %v2036 = vadd.f32 0.0, %v2035
        %v2037 = vpop.f32.mrf.mxu0
        %v2038 = vpop.f32.mrf.mxu0
        %v2039 = vadd.f32 0.0, %v2038
        %v2040 = vpop.f32.mrf.mxu0
        %2041 = vdwg.mxu0
        %v2042 = vmul.f32 %v2036, 0.17677669
        %v2043 = vmul.f32 %v2039, 0.17677669
        %v2044 = vadd.f32 %v2042, %v1493
        %v2045 = vadd.f32 %v2043, %v1493
        %v2046 = vsel %vm1497, %v2044, -inf
        %2047 = vmax.xlane.f32.xlu0 %v2046
        %v2048 = vpop.xlane.xlu0 %2047
        %v2049 = vsel %vm1497, %v2045, -inf
        %2050 = vmax.xlane.f32.xlu0 %v2049
        %v2051 = vpop.xlane.xlu0 %2050
        %v2052 = vsub.f32 %v2044, %v2048
        %v2053 = vsub.f32 %v2045, %v2051
        %v2054 = vmul.f32 %v2052, 1.442695
        %v2055 = vpow.pop %v2054
        %v2056 = vmul.f32 %v2053, 1.442695
        %v2057 = vpow.pop %v2056
        %v2058 = vsel %vm1497, %v2055, 0.0
        %2059 = vadd.xlane.f32.xlu0 %v2058
        %v2060 = vpop.xlane.xlu0 %2059
        %v2061 = vsel %vm1497, %v2057, 0.0
        %2062 = vadd.xlane.f32.xlu0 %v2061
        %v2063 = vpop.xlane.xlu0 %2062
        %v2064 = vrcp.pop %v2060
        %v2065 = vrcp.pop %v2063
        %v2066 = vmul.f32 %v2055, %v2064
        %v2067 = vmul.f32 %v2057, %v2065
        %v2068 = vpack.c.bf16 %v2067, %v2066
        %2069 = vrot.lane.b32.xlu0 %v1438, 32
        %v2070 = vpop.permute.xlu0 %2069
        %v2073 = vsel %vm1497, %v2068, 0
        %2075 = vmatprep.subr.bf16.mxu0 0
        %2076 = vmatpush1.bf16.msra.mxu0 0
        %2077 = vmatprep.subr.bf16.mxu0 0
        %2078 = vmatpush1.bf16.msra.mxu0 0
        %2079 = vmatprep.subr.bf16.mxu0 0
        %2080 = vmatpush1.bf16.msra.mxu0 0
        %2081 = vmatprep.subr.bf16.mxu0 0
        %2082 = vmatpush1.bf16.msra.mxu0 0
        %2083 = vmatprep.subr.bf16.mxu0 0
        %2084 = vmatpush1.bf16.msra.mxu0 0
        %2085 = vmatprep.subr.bf16.mxu0 0
        %2086 = vmatpush1.bf16.msra.mxu0 0
        %2087 = vmatprep.subr.bf16.mxu0 0
        %2088 = vmatpush1.bf16.msra.mxu0 0
        %2089 = vmatprep.subr.bf16.mxu0 0
        %2090 = vmatpush1.bf16.msra.mxu0 %v2070
        %2091 = vmatprep.subr.bf16.mxu0 0
        %2092 = vmatpush2.bf16.msra.mxu0 0
        %2093 = vmatprep.subr.bf16.mxu0 0
        %2094 = vmatpush2.bf16.msra.mxu0 0
        %2095 = vmatprep.subr.bf16.mxu0 0
        %2096 = vmatpush2.bf16.msra.mxu0 0
        %2097 = vmatprep.subr.bf16.mxu0 0
        %2098 = vmatpush2.bf16.msra.mxu0 0
        %2099 = vmatprep.subr.bf16.mxu0 0
        %2100 = vmatpush2.bf16.msra.mxu0 0
        %2101 = vmatprep.subr.bf16.mxu0 0
        %2102 = vmatpush2.bf16.msra.mxu0 0
        %2103 = vmatprep.subr.bf16.mxu0 0
        %2104 = vmatpush2.bf16.msra.mxu0 0
        %2105 = vmatprep.subr.bf16.mxu0 0
        %2106 = vmatpush2.bf16.msra.mxu0 0
        %2107 = vmatprep.mubr.bf16.mxu0 0
        %2108 = vmatmul.mubr.bf16.gmra.mxu0 %v2073
        %v2109 = vpop.f32.mrf.mxu0
        %v2110 = vadd.f32 0.0, %v2109
        %v2111 = vpop.f32.mrf.mxu0
        %v2112 = vpop.f32.mrf.mxu0
        %v2113 = vadd.f32 0.0, %v2112
        %v2114 = vpop.f32.mrf.mxu0
        %2115 = vdwg.mxu0
        %v2116 = vpack.c.bf16 %v2113, %v2110
        %v2121 = vunpack.c.l.b16 %v1140
        %v2122 = vunpack.c.l.b16 %v1141
        %v2123 = vunpack.c.l.b16 %v1142
        %v2124 = vunpack.c.l.b16 %v1143
        %v2125 = vpack.c.b16 %v2122, %v2121
        %v2126 = vpack.c.b16 %v2124, %v2123
        %v2130 = vsel %vm1439, %v2116, 0
        %2132 = vmatprep.subr.bf16.mxu0 0
        %2133 = vmatpush1.bf16.msra.mxu0 0
        %2134 = vmatprep.subr.bf16.mxu0 0
        %2135 = vmatpush1.bf16.msra.mxu0 0
        %2136 = vmatprep.subr.bf16.mxu0 0
        %2137 = vmatpush1.bf16.msra.mxu0 0
        %2138 = vmatprep.subr.bf16.mxu0 0
        %2139 = vmatpush1.bf16.msra.mxu0 0
        %2140 = vmatprep.subr.bf16.mxu0 0
        %2141 = vmatpush1.bf16.msra.mxu0 0
        %2142 = vmatprep.subr.bf16.mxu0 0
        %2143 = vmatpush1.bf16.msra.mxu0 0
        %2144 = vmatprep.subr.bf16.mxu0 0
        %2145 = vmatpush1.bf16.msra.mxu0 %v2126
        %2146 = vmatprep.subr.bf16.mxu0 0
        %2147 = vmatpush1.bf16.msra.mxu0 %v2125
        %2148 = vmatprep.subr.bf16.mxu0 0
        %2149 = vmatpush2.bf16.msra.mxu0 0
        %2150 = vmatprep.subr.bf16.mxu0 0
        %2151 = vmatpush2.bf16.msra.mxu0 0
        %2152 = vmatprep.subr.bf16.mxu0 0
        %2153 = vmatpush2.bf16.msra.mxu0 0
        %2154 = vmatprep.subr.bf16.mxu0 0
        %2155 = vmatpush2.bf16.msra.mxu0 0
        %2156 = vmatprep.subr.bf16.mxu0 0
        %2157 = vmatpush2.bf16.msra.mxu0 0
        %2158 = vmatprep.subr.bf16.mxu0 0
        %2159 = vmatpush2.bf16.msra.mxu0 0
        %2160 = vmatprep.subr.bf16.mxu0 0
        %2161 = vmatpush2.bf16.msra.mxu0 0
        %2162 = vmatprep.subr.bf16.mxu0 0
        %2163 = vmatpush2.bf16.msra.mxu0 0
        %2164 = vmatprep.mubr.bf16.mxu0 0
        %2165 = vmatmul.mubr.bf16.gmra.mxu0 %v2130
        %v2166 = vpop.f32.mrf.mxu0
        %v2167 = vadd.f32 0.0, %v2166
        %v2168 = vpop.f32.mrf.mxu0
        %v2169 = vpop.f32.mrf.mxu0
        %v2170 = vadd.f32 0.0, %v2169
        %v2171 = vpop.f32.mrf.mxu0
        %2172 = vdwg.mxu0
        %v2173 = vadd.f32 %v1989, %v2167
        %v2174 = vadd.f32 %v1990, %v2170
        %v2176 = vlaneseq
        %v2177 = vshrl.u32 %v2176, 7
        %v2178 = vsub.s32 0, %v2177
        %v2179 = vrot.slane %v1144, %v2178
        %v2181 = vadd.f32 %v2173, %v2179
        %v2182 = vadd.f32 %v2174, %v2179
        %v2183 = vadd.f32 %v1072, %v2181
        %v2184 = vadd.f32 %v1073, %v2182
        %2185 = vadd.xlane.f32.xlu0 %v2183
        %v2186 = vpop.xlane.xlu0 %2185
        %2187 = vadd.xlane.f32.xlu0 %v2184
        %v2188 = vpop.xlane.xlu0 %2187
        %v2189 = vrcp.pop 128.0
        %v2190 = vmul.f32 %v2186, %v2189
        %v2191 = vmul.f32 %v2188, %v2189
        %v2192 = vsub.f32 %v2183, %v2190
        %v2193 = vsub.f32 %v2184, %v2191
        %v2194 = vmul.f32 %v2192, %v2192
        %v2195 = vmul.f32 %v2193, %v2193
        %2196 = vadd.xlane.f32.xlu0 %v2194
        %v2197 = vpop.xlane.xlu0 %2196
        %2198 = vadd.xlane.f32.xlu0 %v2195
        %v2199 = vpop.xlane.xlu0 %2198
        %v2200 = vmul.f32 %v2197, %v2189
        %v2201 = vmul.f32 %v2199, %v2189
        %v2202 = vadd.f32 %v2200, 1e-05
        %v2203 = vadd.f32 %v2201, 1e-05
        %v2204 = vrsqrt.pop %v2202
        %v2205 = vrsqrt.pop %v2203
        %v2206 = vmul.f32 %v2192, %v2204
        %v2207 = vmul.f32 %v2193, %v2205
        %v2209 = vlaneseq
        %v2210 = vshrl.u32 %v2209, 7
        %v2211 = vsub.s32 0, %v2210
        %v2212 = vrot.slane %v1146, %v2211
        %v2214 = vadd.f32 %v2206, %v2212
        %v2215 = vadd.f32 %v2207, %v2212
        %v2217 = vlaneseq
        %v2218 = vshrl.u32 %v2217, 7
        %v2219 = vsub.s32 0, %v2218
        %v2220 = vrot.slane %v1145, %v2219
        %v2222 = vmul.f32 %v2214, %v2220
        %v2223 = vmul.f32 %v2215, %v2220
        %v2224 = vld [vmem:[%s891] sm:$0xff]
        %v2225 = vld [vmem:[%s891 + $0x8] sm:$0xff]
        %v2226 = vld [vmem:[%s891 + $0x10] sm:$0xff]
        %v2227 = vld [vmem:[%s891 + $0x18] sm:$0xff]
        %v2228 = vld [vmem:[%s891 + $0x20] sm:$0xff]
        %v2229 = vld [vmem:[%s891 + $0x28] sm:$0xff]
        %v2230 = vld [vmem:[%s891 + $0x30] sm:$0xff]
        %v2231 = vld [vmem:[%s891 + $0x38] sm:$0xff]
        %v2232 = vld [vmem:[%s891 + $0x40] sm:$0xff]
        %v2233 = vld [vmem:[%s891 + $0x48] sm:$0xff]
        %v2234 = vld [vmem:[%s891 + $0x50] sm:$0xff]
        %v2235 = vld [vmem:[%s891 + $0x58] sm:$0xff]
        %v2236 = vld [vmem:[%s891 + $0x60] sm:$0xff]
        %v2237 = vld [vmem:[%s891 + $0x68] sm:$0xff]
        %v2238 = vld [vmem:[%s891 + $0x70] sm:$0xff]
        %v2239 = vld [vmem:[%s891 + $0x78] sm:$0xff]
        %v2240 = vld [vmem:[%s1048] sm:$0x3]
        %v2241 = vld [vmem:[%s900] sm:$0xf]
        %v2242 = vld [vmem:[%s900 + $0x4] sm:$0xf]
        %v2243 = vld [vmem:[%s900 + $0x8] sm:$0xf]
        %v2244 = vld [vmem:[%s900 + $0xc] sm:$0xf]
        %v2245 = vld [vmem:[%s900 + $0x10] sm:$0xf]
        %v2246 = vld [vmem:[%s900 + $0x14] sm:$0xf]
        %v2247 = vld [vmem:[%s900 + $0x18] sm:$0xf]
        %v2248 = vld [vmem:[%s900 + $0x1c] sm:$0xf]
        %v2249 = vld [vmem:[%s900 + $0x20] sm:$0xf]
        %v2250 = vld [vmem:[%s900 + $0x24] sm:$0xf]
        %v2251 = vld [vmem:[%s900 + $0x28] sm:$0xf]
        %v2252 = vld [vmem:[%s900 + $0x2c] sm:$0xf]
        %v2253 = vld [vmem:[%s900 + $0x30] sm:$0xf]
        %v2254 = vld [vmem:[%s900 + $0x34] sm:$0xf]
        %v2255 = vld [vmem:[%s900 + $0x38] sm:$0xf]
        %v2256 = vld [vmem:[%s900 + $0x3c] sm:$0xf]
        %v2257 = vld [vmem:[%s900 + $0x40] sm:$0xf]
        %v2258 = vld [vmem:[%s900 + $0x44] sm:$0xf]
        %v2259 = vld [vmem:[%s900 + $0x48] sm:$0xf]
        %v2260 = vld [vmem:[%s900 + $0x4c] sm:$0xf]
        %v2261 = vld [vmem:[%s900 + $0x50] sm:$0xf]
        %v2262 = vld [vmem:[%s900 + $0x54] sm:$0xf]
        %v2263 = vld [vmem:[%s900 + $0x58] sm:$0xf]
        %v2264 = vld [vmem:[%s900 + $0x5c] sm:$0xf]
        %v2265 = vld [vmem:[%s900 + $0x60] sm:$0xf]
        %v2266 = vld [vmem:[%s900 + $0x64] sm:$0xf]
        %v2267 = vld [vmem:[%s900 + $0x68] sm:$0xf]
        %v2268 = vld [vmem:[%s900 + $0x6c] sm:$0xf]
        %v2269 = vld [vmem:[%s900 + $0x70] sm:$0xf]
        %v2270 = vld [vmem:[%s900 + $0x74] sm:$0xf]
        %v2271 = vld [vmem:[%s900 + $0x78] sm:$0xf]
        %v2272 = vld [vmem:[%s900 + $0x7c] sm:$0xf]
        %v2273 = vld [vmem:[%s1051] sm:$0x1]
        %v2274 = vld [vmem:[%s1054] sm:$0x1]
        %v2275 = vld [vmem:[%s1057] sm:$0x1]
        %v2276 = vpack.c.bf16 %v2223, %v2222
        %v2278 = vlaneseq
        %v2279 = vshrl.u32 %v2278, 7
        %v2280 = vsub.s32 0, %v2279
        %v2281 = vrot.slane %v2240, %v2280
        %v2282 = vlaneseq
        %v2283 = vshrl.u32 %v2282, 7
        %v2284 = vsub.s32 1, %v2283
        %v2285 = vrot.slane %v2240, %v2284
        %v2304 = vunpack.c.l.b16 %v2224
        %v2305 = vunpack.c.h.b16 %v2224
        %v2306 = vunpack.c.l.b16 %v2225
        %v2307 = vunpack.c.h.b16 %v2225
        %v2308 = vunpack.c.l.b16 %v2226
        %v2309 = vunpack.c.h.b16 %v2226
        %v2310 = vunpack.c.l.b16 %v2227
        %v2311 = vunpack.c.h.b16 %v2227
        %v2312 = vunpack.c.l.b16 %v2228
        %v2313 = vunpack.c.h.b16 %v2228
        %v2314 = vunpack.c.l.b16 %v2229
        %v2315 = vunpack.c.h.b16 %v2229
        %v2316 = vunpack.c.l.b16 %v2230
        %v2317 = vunpack.c.h.b16 %v2230
        %v2318 = vunpack.c.l.b16 %v2231
        %v2319 = vunpack.c.h.b16 %v2231
        %v2320 = vunpack.c.l.b16 %v2232
        %v2321 = vunpack.c.h.b16 %v2232
        %v2322 = vunpack.c.l.b16 %v2233
        %v2323 = vunpack.c.h.b16 %v2233
        %v2324 = vunpack.c.l.b16 %v2234
        %v2325 = vunpack.c.h.b16 %v2234
        %v2326 = vunpack.c.l.b16 %v2235
        %v2327 = vunpack.c.h.b16 %v2235
        %v2328 = vunpack.c.l.b16 %v2236
        %v2329 = vunpack.c.h.b16 %v2236
        %v2330 = vunpack.c.l.b16 %v2237
        %v2331 = vunpack.c.h.b16 %v2237
        %v2332 = vunpack.c.l.b16 %v2238
        %v2333 = vunpack.c.h.b16 %v2238
        %v2334 = vunpack.c.l.b16 %v2239
        %v2335 = vunpack.c.h.b16 %v2239
        %v2336 = vpack.c.b16 %v2306, %v2304
        %v2337 = vpack.c.b16 %v2307, %v2305
        %v2338 = vpack.c.b16 %v2310, %v2308
        %v2339 = vpack.c.b16 %v2311, %v2309
        %v2340 = vpack.c.b16 %v2314, %v2312
        %v2341 = vpack.c.b16 %v2315, %v2313
        %v2342 = vpack.c.b16 %v2318, %v2316
        %v2343 = vpack.c.b16 %v2319, %v2317
        %v2344 = vpack.c.b16 %v2322, %v2320
        %v2345 = vpack.c.b16 %v2323, %v2321
        %v2346 = vpack.c.b16 %v2326, %v2324
        %v2347 = vpack.c.b16 %v2327, %v2325
        %v2348 = vpack.c.b16 %v2330, %v2328
        %v2349 = vpack.c.b16 %v2331, %v2329
        %v2350 = vpack.c.b16 %v2334, %v2332
        %v2351 = vpack.c.b16 %v2335, %v2333
        %2368 = vmatprep.subr.bf16.mxu0 %v2351
        %2369 = vmatpush1.bf16.msra.mxu0 %v2350
        %2370 = vmatprep.subr.bf16.mxu0 %v2349
        %2371 = vmatpush1.bf16.msra.mxu0 %v2348
        %2372 = vmatprep.subr.bf16.mxu0 %v2347
        %2373 = vmatpush1.bf16.msra.mxu0 %v2346
        %2374 = vmatprep.subr.bf16.mxu0 %v2345
        %2375 = vmatpush1.bf16.msra.mxu0 %v2344
        %2376 = vmatprep.subr.bf16.mxu0 %v2343
        %2377 = vmatpush1.bf16.msra.mxu0 %v2342
        %2378 = vmatprep.subr.bf16.mxu0 %v2341
        %2379 = vmatpush1.bf16.msra.mxu0 %v2340
        %2380 = vmatprep.subr.bf16.mxu0 %v2339
        %2381 = vmatpush1.bf16.msra.mxu0 %v2338
        %2382 = vmatprep.subr.bf16.mxu0 %v2337
        %2383 = vmatpush1.bf16.msra.mxu0 %v2336
        %2384 = vmatprep.subr.bf16.mxu0 0
        %2385 = vmatpush2.bf16.msra.mxu0 0
        %2386 = vmatprep.subr.bf16.mxu0 0
        %2387 = vmatpush2.bf16.msra.mxu0 0
        %2388 = vmatprep.subr.bf16.mxu0 0
        %2389 = vmatpush2.bf16.msra.mxu0 0
        %2390 = vmatprep.subr.bf16.mxu0 0
        %2391 = vmatpush2.bf16.msra.mxu0 0
        %2392 = vmatprep.subr.bf16.mxu0 0
        %2393 = vmatpush2.bf16.msra.mxu0 0
        %2394 = vmatprep.subr.bf16.mxu0 0
        %2395 = vmatpush2.bf16.msra.mxu0 0
        %2396 = vmatprep.subr.bf16.mxu0 0
        %2397 = vmatpush2.bf16.msra.mxu0 0
        %2398 = vmatprep.subr.bf16.mxu0 0
        %2399 = vmatpush2.bf16.msra.mxu0 0
        %2400 = vmatprep.mubr.bf16.mxu0 0
        %2401 = vmatmul.mubr.bf16.gmra.mxu0 %v2276
        %v2402 = vpop.f32.mrf.mxu0
        %v2403 = vadd.f32 %v2281, %v2402
        %v2404 = vpop.f32.mrf.mxu0
        %v2405 = vadd.f32 %v2285, %v2404
        %v2406 = vpop.f32.mrf.mxu0
        %v2407 = vadd.f32 %v2281, %v2406
        %v2408 = vpop.f32.mrf.mxu0
        %v2409 = vadd.f32 %v2285, %v2408
        %2410 = vdwg.mxu0
        %v2411 = vmax.f32 %v2403, 0.0
        %v2412 = vmax.f32 %v2405, 0.0
        %v2413 = vmax.f32 %v2407, 0.0
        %v2414 = vmax.f32 %v2409, 0.0
        %v2415 = vpack.c.bf16 %v2413, %v2411
        %v2416 = vpack.c.bf16 %v2414, %v2412
        %v2418 = vlaneseq
        %v2419 = vshrl.u32 %v2418, 7
        %v2420 = vsub.s32 0, %v2419
        %v2421 = vrot.slane %v2273, %v2420
        %v2455 = vunpack.c.l.b16 %v2241
        %v2456 = vunpack.c.l.b16 %v2242
        %v2457 = vunpack.c.l.b16 %v2243
        %v2458 = vunpack.c.l.b16 %v2244
        %v2459 = vunpack.c.l.b16 %v2245
        %v2460 = vunpack.c.l.b16 %v2246
        %v2461 = vunpack.c.l.b16 %v2247
        %v2462 = vunpack.c.l.b16 %v2248
        %v2463 = vunpack.c.l.b16 %v2249
        %v2464 = vunpack.c.l.b16 %v2250
        %v2465 = vunpack.c.l.b16 %v2251
        %v2466 = vunpack.c.l.b16 %v2252
        %v2467 = vunpack.c.l.b16 %v2253
        %v2468 = vunpack.c.l.b16 %v2254
        %v2469 = vunpack.c.l.b16 %v2255
        %v2470 = vunpack.c.l.b16 %v2256
        %v2471 = vunpack.c.l.b16 %v2257
        %v2472 = vunpack.c.l.b16 %v2258
        %v2473 = vunpack.c.l.b16 %v2259
        %v2474 = vunpack.c.l.b16 %v2260
        %v2475 = vunpack.c.l.b16 %v2261
        %v2476 = vunpack.c.l.b16 %v2262
        %v2477 = vunpack.c.l.b16 %v2263
        %v2478 = vunpack.c.l.b16 %v2264
        %v2479 = vunpack.c.l.b16 %v2265
        %v2480 = vunpack.c.l.b16 %v2266
        %v2481 = vunpack.c.l.b16 %v2267
        %v2482 = vunpack.c.l.b16 %v2268
        %v2483 = vunpack.c.l.b16 %v2269
        %v2484 = vunpack.c.l.b16 %v2270
        %v2485 = vunpack.c.l.b16 %v2271
        %v2486 = vunpack.c.l.b16 %v2272
        %v2487 = vpack.c.b16 %v2456, %v2455
        %v2488 = vpack.c.b16 %v2458, %v2457
        %v2489 = vpack.c.b16 %v2460, %v2459
        %v2490 = vpack.c.b16 %v2462, %v2461
        %v2491 = vpack.c.b16 %v2464, %v2463
        %v2492 = vpack.c.b16 %v2466, %v2465
        %v2493 = vpack.c.b16 %v2468, %v2467
        %v2494 = vpack.c.b16 %v2470, %v2469
        %v2495 = vpack.c.b16 %v2472, %v2471
        %v2496 = vpack.c.b16 %v2474, %v2473
        %v2497 = vpack.c.b16 %v2476, %v2475
        %v2498 = vpack.c.b16 %v2478, %v2477
        %v2499 = vpack.c.b16 %v2480, %v2479
        %v2500 = vpack.c.b16 %v2482, %v2481
        %v2501 = vpack.c.b16 %v2484, %v2483
        %v2502 = vpack.c.b16 %v2486, %v2485
        %2519 = vmatprep.subr.bf16.mxu0 0
        %2520 = vmatpush1.bf16.msra.mxu0 %v2494
        %2521 = vmatprep.subr.bf16.mxu0 0
        %2522 = vmatpush1.bf16.msra.mxu0 %v2493
        %2523 = vmatprep.subr.bf16.mxu0 0
        %2524 = vmatpush1.bf16.msra.mxu0 %v2492
        %2525 = vmatprep.subr.bf16.mxu0 0
        %2526 = vmatpush1.bf16.msra.mxu0 %v2491
        %2527 = vmatprep.subr.bf16.mxu0 0
        %2528 = vmatpush1.bf16.msra.mxu0 %v2490
        %2529 = vmatprep.subr.bf16.mxu0 0
        %2530 = vmatpush1.bf16.msra.mxu0 %v2489
        %2531 = vmatprep.subr.bf16.mxu0 0
        %2532 = vmatpush1.bf16.msra.mxu0 %v2488
        %2533 = vmatprep.subr.bf16.mxu0 0
        %2534 = vmatpush1.bf16.msra.mxu0 %v2487
        %2535 = vmatprep.subr.bf16.mxu0 0
        %2536 = vmatpush2.bf16.msra.mxu0 %v2502
        %2537 = vmatprep.subr.bf16.mxu0 0
        %2538 = vmatpush2.bf16.msra.mxu0 %v2501
        %2539 = vmatprep.subr.bf16.mxu0 0
        %2540 = vmatpush2.bf16.msra.mxu0 %v2500
        %2541 = vmatprep.subr.bf16.mxu0 0
        %2542 = vmatpush2.bf16.msra.mxu0 %v2499
        %2543 = vmatprep.subr.bf16.mxu0 0
        %2544 = vmatpush2.bf16.msra.mxu0 %v2498
        %2545 = vmatprep.subr.bf16.mxu0 0
        %2546 = vmatpush2.bf16.msra.mxu0 %v2497
        %2547 = vmatprep.subr.bf16.mxu0 0
        %2548 = vmatpush2.bf16.msra.mxu0 %v2496
        %2549 = vmatprep.subr.bf16.mxu0 0
        %2550 = vmatpush2.bf16.msra.mxu0 %v2495
        %2551 = vmatprep.mubr.bf16.mxu0 %v2416
        %2552 = vmatmul.mubr.bf16.gmra.mxu0 %v2415
        %v2553 = vpop.f32.mrf.mxu0
        %v2554 = vadd.f32 %v2421, %v2553
        %v2555 = vpop.f32.mrf.mxu0
        %v2556 = vpop.f32.mrf.mxu0
        %v2557 = vadd.f32 %v2421, %v2556
        %v2558 = vpop.f32.mrf.mxu0
        %2559 = vdwg.mxu0
        %v2560 = vadd.f32 %v2222, %v2554
        %v2561 = vadd.f32 %v2223, %v2557
        %2562 = vadd.xlane.f32.xlu0 %v2560
        %v2563 = vpop.xlane.xlu0 %2562
        %2564 = vadd.xlane.f32.xlu0 %v2561
        %v2565 = vpop.xlane.xlu0 %2564
        %v2566 = vmul.f32 %v2563, %v2189
        %v2567 = vmul.f32 %v2565, %v2189
        %v2568 = vsub.f32 %v2560, %v2566
        %v2569 = vsub.f32 %v2561, %v2567
        %v2570 = vmul.f32 %v2568, %v2568
        %v2571 = vmul.f32 %v2569, %v2569
        %2572 = vadd.xlane.f32.xlu0 %v2570
        %v2573 = vpop.xlane.xlu0 %2572
        %2574 = vadd.xlane.f32.xlu0 %v2571
        %v2575 = vpop.xlane.xlu0 %2574
        %v2576 = vmul.f32 %v2573, %v2189
        %v2577 = vmul.f32 %v2575, %v2189
        %v2578 = vadd.f32 %v2576, 1e-05
        %v2579 = vadd.f32 %v2577, 1e-05
        %v2580 = vrsqrt.pop %v2578
        %v2581 = vrsqrt.pop %v2579
        %v2582 = vmul.f32 %v2568, %v2580
        %v2583 = vmul.f32 %v2569, %v2581
        %v2585 = vlaneseq
        %v2586 = vshrl.u32 %v2585, 7
        %v2587 = vsub.s32 0, %v2586
        %v2588 = vrot.slane %v2275, %v2587
        %v2590 = vadd.f32 %v2582, %v2588
        %v2591 = vadd.f32 %v2583, %v2588
        %v2593 = vlaneseq
        %v2594 = vshrl.u32 %v2593, 7
        %v2595 = vsub.s32 0, %v2594
        %v2596 = vrot.slane %v2274, %v2595
        %v2598 = vmul.f32 %v2590, %v2596
        %v2599 = vmul.f32 %v2591, %v2596
        %2600 = vst [vmem:[#allocation2] sm:$0xff] %v2598
        %2601 = vst [vmem:[#allocation2 + $0x8] sm:$0xff] %v2599
        %p2602 = scmp.eq.s32.totalorder %s50, 1
        // Predicated region
        $region133: #{ane_transformer_forward.2} parent=95 // pred_check
          %p2603 = pneg %p2602
        $region134: #{ane_transformer_forward.2} parent=95 // pred_check_branch
          %2605 = sbr.rel (%p2603) target = $region136
        $region135: #{ane_transformer_forward.2} parent=95 // pred_region
          %2606 = vst [vmem:[%s1062] sm:$0xff] %v2598
          %2607 = vst [vmem:[%s1062 + $0x8] sm:$0xff] %v2599
        $region136: #{ane_transformer_forward.2} parent=95 // pred_fallthru
          _
        %p2608 = scmp.lt.s32.totalorder %s49, 1
        %s2609 = scalar_select %p2608, %s49, 1
        %s2610 = smul.addr %s2609, 2
        %s2611 = smul.addr %s2610, 8
        %s2612 = scalar_lea.vmem %s19, %s2611
        // Predicated region
        $region137: #{ane_transformer_forward.2} parent=95 // pred_check
          %p2613 = pneg %p569
        $region138: #{ane_transformer_forward.2} parent=95 // pred_check_branch
          %2615 = sbr.rel (%p2613) target = $region140
        $region139: #{ane_transformer_forward.2} parent=95 // pred_region
          _
        $region140: #{ane_transformer_forward.2} parent=95 // pred_fallthru
          _
      $region96: #{ane_transformer_forward.2} parent=5 // pred_fallthru
        _
      %p2616 = scmp.le.s32.totalorder 2, %s40
      // Predicated region
      $region141: #{ane_transformer_forward.2} parent=5 // pred_check
        %p2617 = pneg %p2616
      $region142: #{ane_transformer_forward.2} parent=5 // pred_check_branch
        %2619 = sbr.rel (%p2617) target = $region144
      $region143: #{ane_transformer_forward.2} parent=5 // pred_region
        %s2620 = ssub.s32 %s40, 2
        // Predicated region
        $region145: #{ane_transformer_forward.2} parent=143 // pred_check
          %p2621 = pneg %p575
        $region146: #{ane_transformer_forward.2} parent=143 // pred_check_branch
          %2623 = sbr.rel (%p2621) target = $region148
        $region147: #{ane_transformer_forward.2} parent=143 // pred_region
          %p2624 = scmp.lt.s32.totalorder %s51, 1
          %s2625 = scalar_select %p2624, %s51, 1
          %s2626 = smul.addr %s2625, 2
          %s2627 = smul.addr %s2626, 8
          %s2628 = scalar_lea.vmem %s19, %s2627
        $region148: #{ane_transformer_forward.2} parent=143 // pred_fallthru
          _
      $region144: #{ane_transformer_forward.2} parent=5 // pred_fallthru
        _
    $region6: #{ane_transformer_forward.2} parent=1 // loop_footer
      %s44 = sadd.s32 1, %s40
    $region7: #{ane_transformer_forward.2} parent=1 // loop_footer_branch
      %39 = sbr.rel target = $region3
    $region8: #{ane_transformer_forward.2} parent=1 // loop_exit
      _
    %2629 = vsyncpa [#allocation4], 1
    %s2630 = scalar_lea.sflag [#allocation4], 1
    %2631 = vsyncpa %s2630, 1
    %2632 = vsyncpa [#allocation6], 1
    %s2633 = scalar_lea.sflag [#allocation6], 1
    %2634 = vsyncpa %s2633, 1
    %2635 = vsyncpa [#allocation9], 1
    %s2636 = scalar_lea.sflag [#allocation9], 1
    %2637 = vsyncpa %s2636, 1
    %2638 = vsyncpa [#allocation12], 1
    %s2639 = scalar_lea.sflag [#allocation12], 1
    %2640 = vsyncpa %s2639, 1
    %2641 = vsyncpa [#allocation15], 1
    %s2642 = scalar_lea.sflag [#allocation15], 1
    %2643 = vsyncpa %s2642, 1

// kernel: ane_transformer_forward.3
$region0: #{ane_transformer_forward.3}
  #allocation0 [shape = 'u32[]', space=smem, size = 0x4, offset = 0x4, fixed_abs, tag = 'smem constant byte address 0x4 - core index']
  #allocation1 [shape = 'u32[144,128]{1,0:T(1,128)}', space=vmem, size = 0x12000, scoped, tag = 'internal scratch']
  #allocation2 [shape = 'f32[16,128]{1,0:T(8,128)}', space=vmem, size = 0x2000, scoped, tag = 'scratch operand']
  %s0 = inlined_call_operand.smem [shape: u32[33], index: -1, kind: input, shape index: {}]
  %s1 = sld [smem:[%s0]]
  %s2 = scalar_lea.smem %s0, 1
  %s3 = sld [smem:[%s2]]
  %s4 = scalar_lea.smem %s0, 2
  %s5 = sld [smem:[%s4]]
  %s6 = scalar_lea.smem %s0, 3
  %s7 = sld [smem:[%s6]]
  %s8 = scalar_lea.smem %s0, 4
  %s9 = sld [smem:[%s8]]
  %s10 = scalar_lea.smem %s0, 5
  %s11 = sld [smem:[%s10]]
  %s12 = scalar_lea.smem %s0, 6
  %s13 = sld [smem:[%s12]]
  %s14 = scalar_lea.smem %s0, 7
  %s15 = sld [smem:[%s14]]
  %s16 = scalar_lea.smem %s0, 8
  %s17 = sld [smem:[%s16]]
  %s18 = scalar_lea.smem %s0, 9
  %s19 = sld [smem:[%s18]]
  %s20 = scalar_lea.smem %s0, 10
  %s21 = sld [smem:[%s20]]
  %s22 = scalar_lea.smem %s0, 11
  %s23 = sld [smem:[%s22]]
  %s24 = scalar_lea.smem %s0, 12
  %s25 = sld [smem:[%s24]]
  %s26 = scalar_lea.smem %s0, 13
  %s27 = sld [smem:[%s26]]
  %s28 = scalar_lea.smem %s0, 14
  %s29 = sld [smem:[%s28]]
  %s30 = scalar_lea.smem %s0, 15
  %s31 = sld [smem:[%s30]]
  %s32 = scalar_lea.smem %s0, 16
  %s33 = sld [smem:[%s32]]
  %s34 = scalar_lea.smem %s0, 17
  %s35 = sld [smem:[%s34]]
  %s36 = scalar_lea.smem %s0, 18
  %s37 = sld [smem:[%s36]]
  %s38 = scalar_lea.smem %s0, 19
  %s39 = sld [smem:[%s38]]
  %s40 = scalar_lea.smem %s0, 20
  %s41 = sld [smem:[%s40]]
  %s42 = scalar_lea.smem %s0, 21
  %s43 = sld [smem:[%s42]]
  %s44 = scalar_lea.smem %s0, 22
  %s45 = sld [smem:[%s44]]
  %s46 = scalar_lea.smem %s0, 23
  %s47 = sld [smem:[%s46]]
  %s48 = scalar_lea.smem %s0, 24
  %s49 = sld [smem:[%s48]]
  %s50 = scalar_lea.smem %s0, 25
  %s51 = sld [smem:[%s50]]
  %s52 = scalar_lea.smem %s0, 26
  %s53 = sld [smem:[%s52]]
  %s54 = scalar_lea.smem %s0, 27
  %s55 = sld [smem:[%s54]]
  %s56 = scalar_lea.smem %s0, 28
  %s57 = sld [smem:[%s56]]
  %s58 = scalar_lea.smem %s0, 29
  %s59 = sld [smem:[%s58]]
  %s60 = scalar_lea.smem %s0, 30
  %s61 = sld [smem:[%s60]]
  %s62 = scalar_lea.smem %s0, 31
  %s63 = sld [smem:[%s62]]
  %s64 = scalar_lea.smem %s0, 32
  %s65 = sld [smem:[%s64]]
  %s66 = sld [smem:[#allocation0]]
  $region213: #{ane_transformer_forward.3} parent=0
    _
  %s68 = ssub.s32 1, %s66
  %s69 = scalar_select 0, %s68, %s66
  $region1: #{ane_transformer_forward.3} parent=0
    #allocation3 [shape = 'u8[16384]{0}', space=vmem, size = 0x4000, scoped, tag = 'input window, operand 0']
    #allocation4 [shape = 's32[2]{0}', space=sflag, size = 0x8, scoped, tag = 'scoped memory for ane_transformer_forward.3']
    #allocation5 [shape = 's32[2]{0}', space=sflag, size = 0x8, scoped, tag = 'scoped memory for ane_transformer_forward.3']
    #allocation6 [shape = 'u8[16384]{0}', space=vmem, size = 0x4000, scoped, tag = 'input window, operand 2']
    #allocation7 [shape = 's32[2]{0}', space=sflag, size = 0x8, scoped, tag = 'scoped memory for ane_transformer_forward.3']
    #allocation8 [shape = 'u8[65536]{0}', space=vmem, size = 0x10000, scoped, tag = 'input window, operand 6']
    #allocation9 [shape = 'u8[1024]{0}', space=vmem, size = 0x400, scoped, tag = 'input window, operand 7']
    #allocation10 [shape = 's32[2]{0}', space=sflag, size = 0x8, scoped, tag = 'scoped memory for ane_transformer_forward.3']
    #allocation11 [shape = 'u8[65536]{0}', space=vmem, size = 0x10000, scoped, tag = 'input window, operand 8']
    #allocation12 [shape = 'u8[1024]{0}', space=vmem, size = 0x400, scoped, tag = 'input window, operand 9']
    #allocation13 [shape = 's32[2]{0}', space=sflag, size = 0x8, scoped, tag = 'scoped memory for ane_transformer_forward.3']
    #allocation14 [shape = 'u8[65536]{0}', space=vmem, size = 0x10000, scoped, tag = 'input window, operand 10']
    #allocation15 [shape = 'u8[1024]{0}', space=vmem, size = 0x400, scoped, tag = 'input window, operand 11']
    #allocation16 [shape = 's32[2]{0}', space=sflag, size = 0x8, scoped, tag = 'scoped memory for ane_transformer_forward.3']
    #allocation17 [shape = 'u8[1024]{0}', space=vmem, size = 0x400, scoped, tag = 'input window, operand 13']
    #allocation18 [shape = 'u8[1024]{0}', space=vmem, size = 0x400, scoped, tag = 'input window, operand 14']
    #allocation19 [shape = 's32[2]{0}', space=sflag, size = 0x8, scoped, tag = 'scoped memory for ane_transformer_forward.3']
    #allocation20 [shape = 'u8[1024]{0}', space=vmem, size = 0x400, scoped, tag = 'input window, operand 15']
    #allocation21 [shape = 'u8[16384]{0}', space=vmem, size = 0x4000, scoped, tag = 'output window, operand 0']
    %70 = vsyncpa [#allocation4], 0
    %s71 = scalar_lea.sflag [#allocation4], 1
    %72 = vsyncpa %s71, 0
    %73 = vsyncpa [#allocation7], 0
    %s74 = scalar_lea.sflag [#allocation7], 1
    %75 = vsyncpa %s74, 0
    %76 = vsyncpa [#allocation10], 0
    %s77 = scalar_lea.sflag [#allocation10], 1
    %78 = vsyncpa %s77, 0
    %79 = vsyncpa [#allocation13], 0
    %s80 = scalar_lea.sflag [#allocation13], 1
    %81 = vsyncpa %s80, 0
    %82 = vsyncpa [#allocation16], 0
    %s83 = scalar_lea.sflag [#allocation16], 1
    %84 = vsyncpa %s83, 0
    %85 = vsyncpa [#allocation19], 0
    %s86 = scalar_lea.sflag [#allocation19], 1
    %87 = vsyncpa %s86, 0
    %88 = vsyncpa [#allocation5], 0
    %s89 = scalar_lea.sflag [#allocation5], 1
    %90 = vsyncpa %s89, 0
    loop: start=0, step=1, limit=6
    $region2: #{ane_transformer_forward.3} parent=1 // loop_pre_header
      _
    $region3: #{ane_transformer_forward.3} parent=1 // loop_header
      %s92 = sphi 0, %s96
      %p93 = scmp.ge.s32.totalorder %s92, 6
      %s99 = sphi 0, %s111
      %s100 = sphi 0, %s107
      %s101 = sphi 0, %s99
      %s102 = sphi 0, %s100
      %s103 = sphi 0, %s101
      %s104 = sphi 0, %s102
      %s114 = sphi 0, %s116
      %s117 = sphi 0, %s114
      %s118 = sphi 0, %s117
      %s134 = sphi 0, %s118
      %s140 = sphi 0, %s142
      %s143 = sphi 0, %s140
      %s144 = sphi 0, %s143
      %s160 = sphi 0, %s144
      %s166 = sphi 0, %s168
      %s169 = sphi 0, %s166
      %s170 = sphi 0, %s169
      %s186 = sphi 0, %s170
      %s192 = sphi 0, %s194
      %s195 = sphi 0, %s192
      %s196 = sphi 0, %s195
      %s212 = sphi 0, %s196
      %s218 = sphi 0, %s220
      %s221 = sphi 0, %s218
      %s222 = sphi 0, %s221
      %s238 = sphi 0, %s222
      %s244 = sphi 0, %s246
      %s247 = sphi 0, %s244
      %s248 = sphi 0, %s247
      %s264 = sphi 0, %s248
      %s270 = sphi 0, %s272
      %s273 = sphi 0, %s270
      %s274 = sphi 0, %s273
      %s290 = sphi 0, %s274
      %s296 = sphi 0, %s298
      %s299 = sphi 0, %s296
      %s300 = sphi 0, %s299
      %s316 = sphi 0, %s300
      %s322 = sphi 0, %s324
      %s325 = sphi 0, %s322
      %s326 = sphi 0, %s325
      %s342 = sphi 0, %s326
      %s348 = sphi 0, %s350
      %s351 = sphi 0, %s348
      %s352 = sphi 0, %s351
      %s368 = sphi 0, %s352
      %s374 = sphi 0, %s376
      %s377 = sphi 0, %s374
      %s378 = sphi 0, %s377
      %s394 = sphi 0, %s378
      %s400 = sphi 0, %s402
      %s403 = sphi 0, %s400
      %s404 = sphi 0, %s403
      %s420 = sphi 0, %s404
      %s426 = sphi 0, %s428
      %s429 = sphi 0, %s426
      %s430 = sphi 0, %s429
      %s446 = sphi 0, %s430
      %s452 = sphi 0, %s454
      %s455 = sphi 0, %s452
      %s456 = sphi 0, %s455
      %s472 = sphi 0, %s456
      %s478 = sphi 0, %s480
      %s481 = sphi 0, %s478
      %s482 = sphi 0, %s481
      %s498 = sphi 0, %s482
      %s504 = sphi 0, %s506
      %s507 = sphi 0, %s504
      %s508 = sphi 0, %s507
      %s524 = sphi 0, %s508
      %s530 = sphi 0, %s532
      %s533 = sphi 0, %s530
      %s534 = sphi 0, %s533
      %s550 = sphi 0, %s534
      %s556 = sphi 0, %s558
      %s559 = sphi 0, %s556
      %s560 = sphi 0, %s559
      %s576 = sphi 0, %s560
      %s582 = sphi 0, %s584
      %s585 = sphi 0, %s582
      %s586 = sphi 0, %s585
      %s602 = sphi 0, %s586
      %s608 = sphi 0, %s610
      %s611 = sphi 0, %s608
      %s612 = sphi 0, %s611
      %s628 = sphi 0, %s612
      %s634 = sphi 0, %s636
      %s637 = sphi 0, %s634
      %s638 = sphi 0, %s637
      %s654 = sphi 0, %s638
      %s660 = sphi 0, %s662
      %s663 = sphi 0, %s660
      %s664 = sphi 0, %s663
      %s680 = sphi 0, %s664
      %s686 = sphi 0, %s688
      %s689 = sphi 0, %s686
      %s690 = sphi 0, %s689
      %s706 = sphi 0, %s690
      %s712 = sphi 0, %s714
      %s715 = sphi 0, %s712
      %s716 = sphi 0, %s715
      %s732 = sphi 0, %s716
      %s738 = sphi 0, %s740
      %s741 = sphi 0, %s738
      %s742 = sphi 0, %s741
      %s758 = sphi 0, %s742
      %s764 = sphi 0, %s766
      %s767 = sphi 0, %s764
      %s768 = sphi 0, %s767
      %s784 = sphi 0, %s768
      %s790 = sphi 0, %s792
      %s793 = sphi 0, %s790
      %s794 = sphi 0, %s793
      %s810 = sphi 0, %s794
      %s816 = sphi 0, %s818
      %s819 = sphi 0, %s816
      %s820 = sphi 0, %s819
      %s836 = sphi 0, %s820
      %s842 = sphi 0, %s844
      %s845 = sphi 0, %s842
      %s846 = sphi 0, %s845
      %s862 = sphi 0, %s846
      %s868 = sphi 0, %s870
      %s871 = sphi 0, %s868
      %s872 = sphi 0, %s871
      %s888 = sphi 0, %s872
      %s894 = sphi 0, %s896
      %s897 = sphi 0, %s894
      %s898 = sphi 0, %s897
      %s914 = sphi 0, %s898
      %s920 = sphi 0, %s922
      %s923 = sphi 0, %s920
      %s924 = sphi 0, %s923
      %s940 = sphi 0, %s924
      %s946 = sphi 0, %s948
      %s949 = sphi 0, %s946
      %s950 = sphi 0, %s949
      %s966 = sphi 0, %s950
    $region4: #{ane_transformer_forward.3} parent=1 // loop_header_branch
      %95 = sbr.rel (%p93) target = $region8
    $region5: #{ane_transformer_forward.3} parent=1 // loop_body
      %s97 = ssub.s32 %s92, 1
      %s98 = ssub.s32 %s92, 2
      %s105 = sadd.s32 1, %s100
      %p106 = scmp.ge.s32.totalorder %s105, 2
      %s107 = scalar_select %p106, 0, %s105
      %s108 = sadd.s32 1, %s99
      %s109 = scalar_select %p106, %s108, %s99
      %p110 = scmp.ge.s32.totalorder %s109, 2
      %s111 = scalar_select %p110, 0, %s109
      %s112 = ssub.s32 %s99, %s111
      %p113 = scmp.eq.s32.totalorder %s112, 0
      %s115 = sadd.s32 %s114, 1
      %s116 = scalar_select %p113, %s114, %s115
      %p119 = pneg %p113
      %p120 = scmp.eq.s32.totalorder %s92, 3
      %p121 = por %p119, %p120
      %p122 = scmp.ne.s32.totalorder %s114, %s117
      %p123 = scmp.eq.s32.totalorder %s92, 0
      %p124 = por %p122, %p123
      %p125 = scmp.ne.s32.totalorder %s114, %s117
      %p126 = scmp.eq.s32.totalorder %s97, 3
      %p127 = por %p125, %p126
      %p128 = scmp.ne.s32.totalorder %s117, %s118
      %p129 = scmp.eq.s32.totalorder %s97, 0
      %p130 = por %p128, %p129
      %p131 = scmp.ne.s32.totalorder %s117, %s118
      %p132 = scmp.eq.s32.totalorder %s98, 3
      %p133 = por %p131, %p132
      %p135 = scmp.ne.s32.totalorder %s118, %s134
      %p136 = scmp.eq.s32.totalorder %s98, 0
      %p137 = por %p135, %p136
      %s138 = ssub.s32 %s99, %s111
      %p139 = scmp.eq.s32.totalorder %s138, 0
      %s141 = sadd.s32 %s140, 1
      %s142 = scalar_select %p139, %s140, %s141
      %p145 = pneg %p139
      %p146 = scmp.eq.s32.totalorder %s92, 3
      %p147 = por %p145, %p146
      %p148 = scmp.ne.s32.totalorder %s140, %s143
      %p149 = scmp.eq.s32.totalorder %s92, 0
      %p150 = por %p148, %p149
      %p151 = scmp.ne.s32.totalorder %s140, %s143
      %p152 = scmp.eq.s32.totalorder %s97, 3
      %p153 = por %p151, %p152
      %p154 = scmp.ne.s32.totalorder %s143, %s144
      %p155 = scmp.eq.s32.totalorder %s97, 0
      %p156 = por %p154, %p155
      %p157 = scmp.ne.s32.totalorder %s143, %s144
      %p158 = scmp.eq.s32.totalorder %s98, 3
      %p159 = por %p157, %p158
      %p161 = scmp.ne.s32.totalorder %s144, %s160
      %p162 = scmp.eq.s32.totalorder %s98, 0
      %p163 = por %p161, %p162
      %s164 = ssub.s32 %s99, %s111
      %p165 = scmp.eq.s32.totalorder %s164, 0
      %s167 = sadd.s32 %s166, 1
      %s168 = scalar_select %p165, %s166, %s167
      %p171 = pneg %p165
      %p172 = scmp.eq.s32.totalorder %s92, 3
      %p173 = por %p171, %p172
      %p174 = scmp.ne.s32.totalorder %s166, %s169
      %p175 = scmp.eq.s32.totalorder %s92, 0
      %p176 = por %p174, %p175
      %p177 = scmp.ne.s32.totalorder %s166, %s169
      %p178 = scmp.eq.s32.totalorder %s97, 3
      %p179 = por %p177, %p178
      %p180 = scmp.ne.s32.totalorder %s169, %s170
      %p181 = scmp.eq.s32.totalorder %s97, 0
      %p182 = por %p180, %p181
      %p183 = scmp.ne.s32.totalorder %s169, %s170
      %p184 = scmp.eq.s32.totalorder %s98, 3
      %p185 = por %p183, %p184
      %p187 = scmp.ne.s32.totalorder %s170, %s186
      %p188 = scmp.eq.s32.totalorder %s98, 0
      %p189 = por %p187, %p188
      %s190 = ssub.s32 %s99, %s111
      %p191 = scmp.eq.s32.totalorder %s190, 0
      %s193 = sadd.s32 %s192, 1
      %s194 = scalar_select %p191, %s192, %s193
      %p197 = pneg %p191
      %p198 = scmp.eq.s32.totalorder %s92, 3
      %p199 = por %p197, %p198
      %p200 = scmp.ne.s32.totalorder %s192, %s195
      %p201 = scmp.eq.s32.totalorder %s92, 0
      %p202 = por %p200, %p201
      %p203 = scmp.ne.s32.totalorder %s192, %s195
      %p204 = scmp.eq.s32.totalorder %s97, 3
      %p205 = por %p203, %p204
      %p206 = scmp.ne.s32.totalorder %s195, %s196
      %p207 = scmp.eq.s32.totalorder %s97, 0
      %p208 = por %p206, %p207
      %p209 = scmp.ne.s32.totalorder %s195, %s196
      %p210 = scmp.eq.s32.totalorder %s98, 3
      %p211 = por %p209, %p210
      %p213 = scmp.ne.s32.totalorder %s196, %s212
      %p214 = scmp.eq.s32.totalorder %s98, 0
      %p215 = por %p213, %p214
      %s216 = ssub.s32 %s99, %s111
      %p217 = scmp.eq.s32.totalorder %s216, 0
      %s219 = sadd.s32 %s218, 1
      %s220 = scalar_select %p217, %s218, %s219
      %p223 = pneg %p217
      %p224 = scmp.eq.s32.totalorder %s92, 3
      %p225 = por %p223, %p224
      %p226 = scmp.ne.s32.totalorder %s218, %s221
      %p227 = scmp.eq.s32.totalorder %s92, 0
      %p228 = por %p226, %p227
      %p229 = scmp.ne.s32.totalorder %s218, %s221
      %p230 = scmp.eq.s32.totalorder %s97, 3
      %p231 = por %p229, %p230
      %p232 = scmp.ne.s32.totalorder %s221, %s222
      %p233 = scmp.eq.s32.totalorder %s97, 0
      %p234 = por %p232, %p233
      %p235 = scmp.ne.s32.totalorder %s221, %s222
      %p236 = scmp.eq.s32.totalorder %s98, 3
      %p237 = por %p235, %p236
      %p239 = scmp.ne.s32.totalorder %s222, %s238
      %p240 = scmp.eq.s32.totalorder %s98, 0
      %p241 = por %p239, %p240
      %s242 = ssub.s32 %s99, %s111
      %p243 = scmp.eq.s32.totalorder %s242, 0
      %s245 = sadd.s32 %s244, 1
      %s246 = scalar_select %p243, %s244, %s245
      %p249 = pneg %p243
      %p250 = scmp.eq.s32.totalorder %s92, 3
      %p251 = por %p249, %p250
      %p252 = scmp.ne.s32.totalorder %s244, %s247
      %p253 = scmp.eq.s32.totalorder %s92, 0
      %p254 = por %p252, %p253
      %p255 = scmp.ne.s32.totalorder %s244, %s247
      %p256 = scmp.eq.s32.totalorder %s97, 3
      %p257 = por %p255, %p256
      %p258 = scmp.ne.s32.totalorder %s247, %s248
      %p259 = scmp.eq.s32.totalorder %s97, 0
      %p260 = por %p258, %p259
      %p261 = scmp.ne.s32.totalorder %s247, %s248
      %p262 = scmp.eq.s32.totalorder %s98, 3
      %p263 = por %p261, %p262
      %p265 = scmp.ne.s32.totalorder %s248, %s264
      %p266 = scmp.eq.s32.totalorder %s98, 0
      %p267 = por %p265, %p266
      %s268 = ssub.s32 %s100, %s107
      %p269 = scmp.eq.s32.totalorder %s268, 0
      %s271 = sadd.s32 %s270, 1
      %s272 = scalar_select %p269, %s270, %s271
      %p275 = pneg %p269
      %p276 = scmp.eq.s32.totalorder %s92, 3
      %p277 = por %p275, %p276
      %p278 = scmp.ne.s32.totalorder %s270, %s273
      %p279 = scmp.eq.s32.totalorder %s92, 0
      %p280 = por %p278, %p279
      %p281 = scmp.ne.s32.totalorder %s270, %s273
      %p282 = scmp.eq.s32.totalorder %s97, 3
      %p283 = por %p281, %p282
      %p284 = scmp.ne.s32.totalorder %s273, %s274
      %p285 = scmp.eq.s32.totalorder %s97, 0
      %p286 = por %p284, %p285
      %p287 = scmp.ne.s32.totalorder %s273, %s274
      %p288 = scmp.eq.s32.totalorder %s98, 3
      %p289 = por %p287, %p288
      %p291 = scmp.ne.s32.totalorder %s274, %s290
      %p292 = scmp.eq.s32.totalorder %s98, 0
      %p293 = por %p291, %p292
      %s294 = ssub.s32 %s100, %s107
      %p295 = scmp.eq.s32.totalorder %s294, 0
      %s297 = sadd.s32 %s296, 1
      %s298 = scalar_select %p295, %s296, %s297
      %p301 = pneg %p295
      %p302 = scmp.eq.s32.totalorder %s92, 3
      %p303 = por %p301, %p302
      %p304 = scmp.ne.s32.totalorder %s296, %s299
      %p305 = scmp.eq.s32.totalorder %s92, 0
      %p306 = por %p304, %p305
      %p307 = scmp.ne.s32.totalorder %s296, %s299
      %p308 = scmp.eq.s32.totalorder %s97, 3
      %p309 = por %p307, %p308
      %p310 = scmp.ne.s32.totalorder %s299, %s300
      %p311 = scmp.eq.s32.totalorder %s97, 0
      %p312 = por %p310, %p311
      %p313 = scmp.ne.s32.totalorder %s299, %s300
      %p314 = scmp.eq.s32.totalorder %s98, 3
      %p315 = por %p313, %p314
      %p317 = scmp.ne.s32.totalorder %s300, %s316
      %p318 = scmp.eq.s32.totalorder %s98, 0
      %p319 = por %p317, %p318
      %s320 = ssub.s32 %s100, %s107
      %p321 = scmp.eq.s32.totalorder %s320, 0
      %s323 = sadd.s32 %s322, 1
      %s324 = scalar_select %p321, %s322, %s323
      %p327 = pneg %p321
      %p328 = scmp.eq.s32.totalorder %s92, 3
      %p329 = por %p327, %p328
      %p330 = scmp.ne.s32.totalorder %s322, %s325
      %p331 = scmp.eq.s32.totalorder %s92, 0
      %p332 = por %p330, %p331
      %p333 = scmp.ne.s32.totalorder %s322, %s325
      %p334 = scmp.eq.s32.totalorder %s97, 3
      %p335 = por %p333, %p334
      %p336 = scmp.ne.s32.totalorder %s325, %s326
      %p337 = scmp.eq.s32.totalorder %s97, 0
      %p338 = por %p336, %p337
      %p339 = scmp.ne.s32.totalorder %s325, %s326
      %p340 = scmp.eq.s32.totalorder %s98, 3
      %p341 = por %p339, %p340
      %p343 = scmp.ne.s32.totalorder %s326, %s342
      %p344 = scmp.eq.s32.totalorder %s98, 0
      %p345 = por %p343, %p344
      %s346 = ssub.s32 %s100, %s107
      %p347 = scmp.eq.s32.totalorder %s346, 0
      %s349 = sadd.s32 %s348, 1
      %s350 = scalar_select %p347, %s348, %s349
      %p353 = pneg %p347
      %p354 = scmp.eq.s32.totalorder %s92, 3
      %p355 = por %p353, %p354
      %p356 = scmp.ne.s32.totalorder %s348, %s351
      %p357 = scmp.eq.s32.totalorder %s92, 0
      %p358 = por %p356, %p357
      %p359 = scmp.ne.s32.totalorder %s348, %s351
      %p360 = scmp.eq.s32.totalorder %s97, 3
      %p361 = por %p359, %p360
      %p362 = scmp.ne.s32.totalorder %s351, %s352
      %p363 = scmp.eq.s32.totalorder %s97, 0
      %p364 = por %p362, %p363
      %p365 = scmp.ne.s32.totalorder %s351, %s352
      %p366 = scmp.eq.s32.totalorder %s98, 3
      %p367 = por %p365, %p366
      %p369 = scmp.ne.s32.totalorder %s352, %s368
      %p370 = scmp.eq.s32.totalorder %s98, 0
      %p371 = por %p369, %p370
      %s372 = ssub.s32 %s100, %s107
      %p373 = scmp.eq.s32.totalorder %s372, 0
      %s375 = sadd.s32 %s374, 1
      %s376 = scalar_select %p373, %s374, %s375
      %p379 = pneg %p373
      %p380 = scmp.eq.s32.totalorder %s92, 3
      %p381 = por %p379, %p380
      %p382 = scmp.ne.s32.totalorder %s374, %s377
      %p383 = scmp.eq.s32.totalorder %s92, 0
      %p384 = por %p382, %p383
      %p385 = scmp.ne.s32.totalorder %s374, %s377
      %p386 = scmp.eq.s32.totalorder %s97, 3
      %p387 = por %p385, %p386
      %p388 = scmp.ne.s32.totalorder %s377, %s378
      %p389 = scmp.eq.s32.totalorder %s97, 0
      %p390 = por %p388, %p389
      %p391 = scmp.ne.s32.totalorder %s377, %s378
      %p392 = scmp.eq.s32.totalorder %s98, 3
      %p393 = por %p391, %p392
      %p395 = scmp.ne.s32.totalorder %s378, %s394
      %p396 = scmp.eq.s32.totalorder %s98, 0
      %p397 = por %p395, %p396
      %s398 = ssub.s32 %s100, %s107
      %p399 = scmp.eq.s32.totalorder %s398, 0
      %s401 = sadd.s32 %s400, 1
      %s402 = scalar_select %p399, %s400, %s401
      %p405 = pneg %p399
      %p406 = scmp.eq.s32.totalorder %s92, 3
      %p407 = por %p405, %p406
      %p408 = scmp.ne.s32.totalorder %s400, %s403
      %p409 = scmp.eq.s32.totalorder %s92, 0
      %p410 = por %p408, %p409
      %p411 = scmp.ne.s32.totalorder %s400, %s403
      %p412 = scmp.eq.s32.totalorder %s97, 3
      %p413 = por %p411, %p412
      %p414 = scmp.ne.s32.totalorder %s403, %s404
      %p415 = scmp.eq.s32.totalorder %s97, 0
      %p416 = por %p414, %p415
      %p417 = scmp.ne.s32.totalorder %s403, %s404
      %p418 = scmp.eq.s32.totalorder %s98, 3
      %p419 = por %p417, %p418
      %p421 = scmp.ne.s32.totalorder %s404, %s420
      %p422 = scmp.eq.s32.totalorder %s98, 0
      %p423 = por %p421, %p422
      %s424 = ssub.s32 %s100, %s107
      %p425 = scmp.eq.s32.totalorder %s424, 0
      %s427 = sadd.s32 %s426, 1
      %s428 = scalar_select %p425, %s426, %s427
      %p431 = pneg %p425
      %p432 = scmp.eq.s32.totalorder %s92, 3
      %p433 = por %p431, %p432
      %p434 = scmp.ne.s32.totalorder %s426, %s429
      %p435 = scmp.eq.s32.totalorder %s92, 0
      %p436 = por %p434, %p435
      %p437 = scmp.ne.s32.totalorder %s426, %s429
      %p438 = scmp.eq.s32.totalorder %s97, 3
      %p439 = por %p437, %p438
      %p440 = scmp.ne.s32.totalorder %s429, %s430
      %p441 = scmp.eq.s32.totalorder %s97, 0
      %p442 = por %p440, %p441
      %p443 = scmp.ne.s32.totalorder %s429, %s430
      %p444 = scmp.eq.s32.totalorder %s98, 3
      %p445 = por %p443, %p444
      %p447 = scmp.ne.s32.totalorder %s430, %s446
      %p448 = scmp.eq.s32.totalorder %s98, 0
      %p449 = por %p447, %p448
      %s450 = ssub.s32 %s100, %s107
      %p451 = scmp.eq.s32.totalorder %s450, 0
      %s453 = sadd.s32 %s452, 1
      %s454 = scalar_select %p451, %s452, %s453
      %p457 = pneg %p451
      %p458 = scmp.eq.s32.totalorder %s92, 3
      %p459 = por %p457, %p458
      %p460 = scmp.ne.s32.totalorder %s452, %s455
      %p461 = scmp.eq.s32.totalorder %s92, 0
      %p462 = por %p460, %p461
      %p463 = scmp.ne.s32.totalorder %s452, %s455
      %p464 = scmp.eq.s32.totalorder %s97, 3
      %p465 = por %p463, %p464
      %p466 = scmp.ne.s32.totalorder %s455, %s456
      %p467 = scmp.eq.s32.totalorder %s97, 0
      %p468 = por %p466, %p467
      %p469 = scmp.ne.s32.totalorder %s455, %s456
      %p470 = scmp.eq.s32.totalorder %s98, 3
      %p471 = por %p469, %p470
      %p473 = scmp.ne.s32.totalorder %s456, %s472
      %p474 = scmp.eq.s32.totalorder %s98, 0
      %p475 = por %p473, %p474
      %s476 = ssub.s32 %s100, %s107
      %p477 = scmp.eq.s32.totalorder %s476, 0
      %s479 = sadd.s32 %s478, 1
      %s480 = scalar_select %p477, %s478, %s479
      %p483 = pneg %p477
      %p484 = scmp.eq.s32.totalorder %s92, 3
      %p485 = por %p483, %p484
      %p486 = scmp.ne.s32.totalorder %s478, %s481
      %p487 = scmp.eq.s32.totalorder %s92, 0
      %p488 = por %p486, %p487
      %p489 = scmp.ne.s32.totalorder %s478, %s481
      %p490 = scmp.eq.s32.totalorder %s97, 3
      %p491 = por %p489, %p490
      %p492 = scmp.ne.s32.totalorder %s481, %s482
      %p493 = scmp.eq.s32.totalorder %s97, 0
      %p494 = por %p492, %p493
      %p495 = scmp.ne.s32.totalorder %s481, %s482
      %p496 = scmp.eq.s32.totalorder %s98, 3
      %p497 = por %p495, %p496
      %p499 = scmp.ne.s32.totalorder %s482, %s498
      %p500 = scmp.eq.s32.totalorder %s98, 0
      %p501 = por %p499, %p500
      %s502 = ssub.s32 %s100, %s107
      %p503 = scmp.eq.s32.totalorder %s502, 0
      %s505 = sadd.s32 %s504, 1
      %s506 = scalar_select %p503, %s504, %s505
      %p509 = pneg %p503
      %p510 = scmp.eq.s32.totalorder %s92, 3
      %p511 = por %p509, %p510
      %p512 = scmp.ne.s32.totalorder %s504, %s507
      %p513 = scmp.eq.s32.totalorder %s92, 0
      %p514 = por %p512, %p513
      %p515 = scmp.ne.s32.totalorder %s504, %s507
      %p516 = scmp.eq.s32.totalorder %s97, 3
      %p517 = por %p515, %p516
      %p518 = scmp.ne.s32.totalorder %s507, %s508
      %p519 = scmp.eq.s32.totalorder %s97, 0
      %p520 = por %p518, %p519
      %p521 = scmp.ne.s32.totalorder %s507, %s508
      %p522 = scmp.eq.s32.totalorder %s98, 3
      %p523 = por %p521, %p522
      %p525 = scmp.ne.s32.totalorder %s508, %s524
      %p526 = scmp.eq.s32.totalorder %s98, 0
      %p527 = por %p525, %p526
      %s528 = ssub.s32 %s100, %s107
      %p529 = scmp.eq.s32.totalorder %s528, 0
      %s531 = sadd.s32 %s530, 1
      %s532 = scalar_select %p529, %s530, %s531
      %p535 = pneg %p529
      %p536 = scmp.eq.s32.totalorder %s92, 3
      %p537 = por %p535, %p536
      %p538 = scmp.ne.s32.totalorder %s530, %s533
      %p539 = scmp.eq.s32.totalorder %s92, 0
      %p540 = por %p538, %p539
      %p541 = scmp.ne.s32.totalorder %s530, %s533
      %p542 = scmp.eq.s32.totalorder %s97, 3
      %p543 = por %p541, %p542
      %p544 = scmp.ne.s32.totalorder %s533, %s534
      %p545 = scmp.eq.s32.totalorder %s97, 0
      %p546 = por %p544, %p545
      %p547 = scmp.ne.s32.totalorder %s533, %s534
      %p548 = scmp.eq.s32.totalorder %s98, 3
      %p549 = por %p547, %p548
      %p551 = scmp.ne.s32.totalorder %s534, %s550
      %p552 = scmp.eq.s32.totalorder %s98, 0
      %p553 = por %p551, %p552
      %s554 = ssub.s32 %s100, %s107
      %p555 = scmp.eq.s32.totalorder %s554, 0
      %s557 = sadd.s32 %s556, 1
      %s558 = scalar_select %p555, %s556, %s557
      %p561 = pneg %p555
      %p562 = scmp.eq.s32.totalorder %s92, 3
      %p563 = por %p561, %p562
      %p564 = scmp.ne.s32.totalorder %s556, %s559
      %p565 = scmp.eq.s32.totalorder %s92, 0
      %p566 = por %p564, %p565
      %p567 = scmp.ne.s32.totalorder %s556, %s559
      %p568 = scmp.eq.s32.totalorder %s97, 3
      %p569 = por %p567, %p568
      %p570 = scmp.ne.s32.totalorder %s559, %s560
      %p571 = scmp.eq.s32.totalorder %s97, 0
      %p572 = por %p570, %p571
      %p573 = scmp.ne.s32.totalorder %s559, %s560
      %p574 = scmp.eq.s32.totalorder %s98, 3
      %p575 = por %p573, %p574
      %p577 = scmp.ne.s32.totalorder %s560, %s576
      %p578 = scmp.eq.s32.totalorder %s98, 0
      %p579 = por %p577, %p578
      %s580 = ssub.s32 %s100, %s107
      %p581 = scmp.eq.s32.totalorder %s580, 0
      %s583 = sadd.s32 %s582, 1
      %s584 = scalar_select %p581, %s582, %s583
      %p587 = pneg %p581
      %p588 = scmp.eq.s32.totalorder %s92, 3
      %p589 = por %p587, %p588
      %p590 = scmp.ne.s32.totalorder %s582, %s585
      %p591 = scmp.eq.s32.totalorder %s92, 0
      %p592 = por %p590, %p591
      %p593 = scmp.ne.s32.totalorder %s582, %s585
      %p594 = scmp.eq.s32.totalorder %s97, 3
      %p595 = por %p593, %p594
      %p596 = scmp.ne.s32.totalorder %s585, %s586
      %p597 = scmp.eq.s32.totalorder %s97, 0
      %p598 = por %p596, %p597
      %p599 = scmp.ne.s32.totalorder %s585, %s586
      %p600 = scmp.eq.s32.totalorder %s98, 3
      %p601 = por %p599, %p600
      %p603 = scmp.ne.s32.totalorder %s586, %s602
      %p604 = scmp.eq.s32.totalorder %s98, 0
      %p605 = por %p603, %p604
      %s606 = ssub.s32 %s100, %s107
      %p607 = scmp.eq.s32.totalorder %s606, 0
      %s609 = sadd.s32 %s608, 1
      %s610 = scalar_select %p607, %s608, %s609
      %p613 = pneg %p607
      %p614 = scmp.eq.s32.totalorder %s92, 3
      %p615 = por %p613, %p614
      %p616 = scmp.ne.s32.totalorder %s608, %s611
      %p617 = scmp.eq.s32.totalorder %s92, 0
      %p618 = por %p616, %p617
      %p619 = scmp.ne.s32.totalorder %s608, %s611
      %p620 = scmp.eq.s32.totalorder %s97, 3
      %p621 = por %p619, %p620
      %p622 = scmp.ne.s32.totalorder %s611, %s612
      %p623 = scmp.eq.s32.totalorder %s97, 0
      %p624 = por %p622, %p623
      %p625 = scmp.ne.s32.totalorder %s611, %s612
      %p626 = scmp.eq.s32.totalorder %s98, 3
      %p627 = por %p625, %p626
      %p629 = scmp.ne.s32.totalorder %s612, %s628
      %p630 = scmp.eq.s32.totalorder %s98, 0
      %p631 = por %p629, %p630
      %s632 = ssub.s32 %s100, %s107
      %p633 = scmp.eq.s32.totalorder %s632, 0
      %s635 = sadd.s32 %s634, 1
      %s636 = scalar_select %p633, %s634, %s635
      %p639 = pneg %p633
      %p640 = scmp.eq.s32.totalorder %s92, 3
      %p641 = por %p639, %p640
      %p642 = scmp.ne.s32.totalorder %s634, %s637
      %p643 = scmp.eq.s32.totalorder %s92, 0
      %p644 = por %p642, %p643
      %p645 = scmp.ne.s32.totalorder %s634, %s637
      %p646 = scmp.eq.s32.totalorder %s97, 3
      %p647 = por %p645, %p646
      %p648 = scmp.ne.s32.totalorder %s637, %s638
      %p649 = scmp.eq.s32.totalorder %s97, 0
      %p650 = por %p648, %p649
      %p651 = scmp.ne.s32.totalorder %s637, %s638
      %p652 = scmp.eq.s32.totalorder %s98, 3
      %p653 = por %p651, %p652
      %p655 = scmp.ne.s32.totalorder %s638, %s654
      %p656 = scmp.eq.s32.totalorder %s98, 0
      %p657 = por %p655, %p656
      %s658 = ssub.s32 %s100, %s107
      %p659 = scmp.eq.s32.totalorder %s658, 0
      %s661 = sadd.s32 %s660, 1
      %s662 = scalar_select %p659, %s660, %s661
      %p665 = pneg %p659
      %p666 = scmp.eq.s32.totalorder %s92, 3
      %p667 = por %p665, %p666
      %p668 = scmp.ne.s32.totalorder %s660, %s663
      %p669 = scmp.eq.s32.totalorder %s92, 0
      %p670 = por %p668, %p669
      %p671 = scmp.ne.s32.totalorder %s660, %s663
      %p672 = scmp.eq.s32.totalorder %s97, 3
      %p673 = por %p671, %p672
      %p674 = scmp.ne.s32.totalorder %s663, %s664
      %p675 = scmp.eq.s32.totalorder %s97, 0
      %p676 = por %p674, %p675
      %p677 = scmp.ne.s32.totalorder %s663, %s664
      %p678 = scmp.eq.s32.totalorder %s98, 3
      %p679 = por %p677, %p678
      %p681 = scmp.ne.s32.totalorder %s664, %s680
      %p682 = scmp.eq.s32.totalorder %s98, 0
      %p683 = por %p681, %p682
      %s684 = ssub.s32 %s100, %s107
      %p685 = scmp.eq.s32.totalorder %s684, 0
      %s687 = sadd.s32 %s686, 1
      %s688 = scalar_select %p685, %s686, %s687
      %p691 = pneg %p685
      %p692 = scmp.eq.s32.totalorder %s92, 3
      %p693 = por %p691, %p692
      %p694 = scmp.ne.s32.totalorder %s686, %s689
      %p695 = scmp.eq.s32.totalorder %s92, 0
      %p696 = por %p694, %p695
      %p697 = scmp.ne.s32.totalorder %s686, %s689
      %p698 = scmp.eq.s32.totalorder %s97, 3
      %p699 = por %p697, %p698
      %p700 = scmp.ne.s32.totalorder %s689, %s690
      %p701 = scmp.eq.s32.totalorder %s97, 0
      %p702 = por %p700, %p701
      %p703 = scmp.ne.s32.totalorder %s689, %s690
      %p704 = scmp.eq.s32.totalorder %s98, 3
      %p705 = por %p703, %p704
      %p707 = scmp.ne.s32.totalorder %s690, %s706
      %p708 = scmp.eq.s32.totalorder %s98, 0
      %p709 = por %p707, %p708
      %s710 = ssub.s32 %s100, %s107
      %p711 = scmp.eq.s32.totalorder %s710, 0
      %s713 = sadd.s32 %s712, 1
      %s714 = scalar_select %p711, %s712, %s713
      %p717 = pneg %p711
      %p718 = scmp.eq.s32.totalorder %s92, 3
      %p719 = por %p717, %p718
      %p720 = scmp.ne.s32.totalorder %s712, %s715
      %p721 = scmp.eq.s32.totalorder %s92, 0
      %p722 = por %p720, %p721
      %p723 = scmp.ne.s32.totalorder %s712, %s715
      %p724 = scmp.eq.s32.totalorder %s97, 3
      %p725 = por %p723, %p724
      %p726 = scmp.ne.s32.totalorder %s715, %s716
      %p727 = scmp.eq.s32.totalorder %s97, 0
      %p728 = por %p726, %p727
      %p729 = scmp.ne.s32.totalorder %s715, %s716
      %p730 = scmp.eq.s32.totalorder %s98, 3
      %p731 = por %p729, %p730
      %p733 = scmp.ne.s32.totalorder %s716, %s732
      %p734 = scmp.eq.s32.totalorder %s98, 0
      %p735 = por %p733, %p734
      %s736 = ssub.s32 %s100, %s107
      %p737 = scmp.eq.s32.totalorder %s736, 0
      %s739 = sadd.s32 %s738, 1
      %s740 = scalar_select %p737, %s738, %s739
      %p743 = pneg %p737
      %p744 = scmp.eq.s32.totalorder %s92, 3
      %p745 = por %p743, %p744
      %p746 = scmp.ne.s32.totalorder %s738, %s741
      %p747 = scmp.eq.s32.totalorder %s92, 0
      %p748 = por %p746, %p747
      %p749 = scmp.ne.s32.totalorder %s738, %s741
      %p750 = scmp.eq.s32.totalorder %s97, 3
      %p751 = por %p749, %p750
      %p752 = scmp.ne.s32.totalorder %s741, %s742
      %p753 = scmp.eq.s32.totalorder %s97, 0
      %p754 = por %p752, %p753
      %p755 = scmp.ne.s32.totalorder %s741, %s742
      %p756 = scmp.eq.s32.totalorder %s98, 3
      %p757 = por %p755, %p756
      %p759 = scmp.ne.s32.totalorder %s742, %s758
      %p760 = scmp.eq.s32.totalorder %s98, 0
      %p761 = por %p759, %p760
      %s762 = ssub.s32 %s100, %s107
      %p763 = scmp.eq.s32.totalorder %s762, 0
      %s765 = sadd.s32 %s764, 1
      %s766 = scalar_select %p763, %s764, %s765
      %p769 = pneg %p763
      %p770 = scmp.eq.s32.totalorder %s92, 3
      %p771 = por %p769, %p770
      %p772 = scmp.ne.s32.totalorder %s764, %s767
      %p773 = scmp.eq.s32.totalorder %s92, 0
      %p774 = por %p772, %p773
      %p775 = scmp.ne.s32.totalorder %s764, %s767
      %p776 = scmp.eq.s32.totalorder %s97, 3
      %p777 = por %p775, %p776
      %p778 = scmp.ne.s32.totalorder %s767, %s768
      %p779 = scmp.eq.s32.totalorder %s97, 0
      %p780 = por %p778, %p779
      %p781 = scmp.ne.s32.totalorder %s767, %s768
      %p782 = scmp.eq.s32.totalorder %s98, 3
      %p783 = por %p781, %p782
      %p785 = scmp.ne.s32.totalorder %s768, %s784
      %p786 = scmp.eq.s32.totalorder %s98, 0
      %p787 = por %p785, %p786
      %s788 = ssub.s32 %s100, %s107
      %p789 = scmp.eq.s32.totalorder %s788, 0
      %s791 = sadd.s32 %s790, 1
      %s792 = scalar_select %p789, %s790, %s791
      %p795 = pneg %p789
      %p796 = scmp.eq.s32.totalorder %s92, 3
      %p797 = por %p795, %p796
      %p798 = scmp.ne.s32.totalorder %s790, %s793
      %p799 = scmp.eq.s32.totalorder %s92, 0
      %p800 = por %p798, %p799
      %p801 = scmp.ne.s32.totalorder %s790, %s793
      %p802 = scmp.eq.s32.totalorder %s97, 3
      %p803 = por %p801, %p802
      %p804 = scmp.ne.s32.totalorder %s793, %s794
      %p805 = scmp.eq.s32.totalorder %s97, 0
      %p806 = por %p804, %p805
      %p807 = scmp.ne.s32.totalorder %s793, %s794
      %p808 = scmp.eq.s32.totalorder %s98, 3
      %p809 = por %p807, %p808
      %p811 = scmp.ne.s32.totalorder %s794, %s810
      %p812 = scmp.eq.s32.totalorder %s98, 0
      %p813 = por %p811, %p812
      %s814 = ssub.s32 %s100, %s107
      %p815 = scmp.eq.s32.totalorder %s814, 0
      %s817 = sadd.s32 %s816, 1
      %s818 = scalar_select %p815, %s816, %s817
      %p821 = pneg %p815
      %p822 = scmp.eq.s32.totalorder %s92, 3
      %p823 = por %p821, %p822
      %p824 = scmp.ne.s32.totalorder %s816, %s819
      %p825 = scmp.eq.s32.totalorder %s92, 0
      %p826 = por %p824, %p825
      %p827 = scmp.ne.s32.totalorder %s816, %s819
      %p828 = scmp.eq.s32.totalorder %s97, 3
      %p829 = por %p827, %p828
      %p830 = scmp.ne.s32.totalorder %s819, %s820
      %p831 = scmp.eq.s32.totalorder %s97, 0
      %p832 = por %p830, %p831
      %p833 = scmp.ne.s32.totalorder %s819, %s820
      %p834 = scmp.eq.s32.totalorder %s98, 3
      %p835 = por %p833, %p834
      %p837 = scmp.ne.s32.totalorder %s820, %s836
      %p838 = scmp.eq.s32.totalorder %s98, 0
      %p839 = por %p837, %p838
      %s840 = ssub.s32 %s100, %s107
      %p841 = scmp.eq.s32.totalorder %s840, 0
      %s843 = sadd.s32 %s842, 1
      %s844 = scalar_select %p841, %s842, %s843
      %p847 = pneg %p841
      %p848 = scmp.eq.s32.totalorder %s92, 3
      %p849 = por %p847, %p848
      %p850 = scmp.ne.s32.totalorder %s842, %s845
      %p851 = scmp.eq.s32.totalorder %s92, 0
      %p852 = por %p850, %p851
      %p853 = scmp.ne.s32.totalorder %s842, %s845
      %p854 = scmp.eq.s32.totalorder %s97, 3
      %p855 = por %p853, %p854
      %p856 = scmp.ne.s32.totalorder %s845, %s846
      %p857 = scmp.eq.s32.totalorder %s97, 0
      %p858 = por %p856, %p857
      %p859 = scmp.ne.s32.totalorder %s845, %s846
      %p860 = scmp.eq.s32.totalorder %s98, 3
      %p861 = por %p859, %p860
      %p863 = scmp.ne.s32.totalorder %s846, %s862
      %p864 = scmp.eq.s32.totalorder %s98, 0
      %p865 = por %p863, %p864
      %s866 = ssub.s32 %s100, %s107
      %p867 = scmp.eq.s32.totalorder %s866, 0
      %s869 = sadd.s32 %s868, 1
      %s870 = scalar_select %p867, %s868, %s869
      %p873 = pneg %p867
      %p874 = scmp.eq.s32.totalorder %s92, 3
      %p875 = por %p873, %p874
      %p876 = scmp.ne.s32.totalorder %s868, %s871
      %p877 = scmp.eq.s32.totalorder %s92, 0
      %p878 = por %p876, %p877
      %p879 = scmp.ne.s32.totalorder %s868, %s871
      %p880 = scmp.eq.s32.totalorder %s97, 3
      %p881 = por %p879, %p880
      %p882 = scmp.ne.s32.totalorder %s871, %s872
      %p883 = scmp.eq.s32.totalorder %s97, 0
      %p884 = por %p882, %p883
      %p885 = scmp.ne.s32.totalorder %s871, %s872
      %p886 = scmp.eq.s32.totalorder %s98, 3
      %p887 = por %p885, %p886
      %p889 = scmp.ne.s32.totalorder %s872, %s888
      %p890 = scmp.eq.s32.totalorder %s98, 0
      %p891 = por %p889, %p890
      %s892 = ssub.s32 %s100, %s107
      %p893 = scmp.eq.s32.totalorder %s892, 0
      %s895 = sadd.s32 %s894, 1
      %s896 = scalar_select %p893, %s894, %s895
      %p899 = pneg %p893
      %p900 = scmp.eq.s32.totalorder %s92, 3
      %p901 = por %p899, %p900
      %p902 = scmp.ne.s32.totalorder %s894, %s897
      %p903 = scmp.eq.s32.totalorder %s92, 0
      %p904 = por %p902, %p903
      %p905 = scmp.ne.s32.totalorder %s894, %s897
      %p906 = scmp.eq.s32.totalorder %s97, 3
      %p907 = por %p905, %p906
      %p908 = scmp.ne.s32.totalorder %s897, %s898
      %p909 = scmp.eq.s32.totalorder %s97, 0
      %p910 = por %p908, %p909
      %p911 = scmp.ne.s32.totalorder %s897, %s898
      %p912 = scmp.eq.s32.totalorder %s98, 3
      %p913 = por %p911, %p912
      %p915 = scmp.ne.s32.totalorder %s898, %s914
      %p916 = scmp.eq.s32.totalorder %s98, 0
      %p917 = por %p915, %p916
      %s918 = ssub.s32 %s100, %s107
      %p919 = scmp.eq.s32.totalorder %s918, 0
      %s921 = sadd.s32 %s920, 1
      %s922 = scalar_select %p919, %s920, %s921
      %p925 = pneg %p919
      %p926 = scmp.eq.s32.totalorder %s92, 3
      %p927 = por %p925, %p926
      %p928 = scmp.ne.s32.totalorder %s920, %s923
      %p929 = scmp.eq.s32.totalorder %s92, 0
      %p930 = por %p928, %p929
      %p931 = scmp.ne.s32.totalorder %s920, %s923
      %p932 = scmp.eq.s32.totalorder %s97, 3
      %p933 = por %p931, %p932
      %p934 = scmp.ne.s32.totalorder %s923, %s924
      %p935 = scmp.eq.s32.totalorder %s97, 0
      %p936 = por %p934, %p935
      %p937 = scmp.ne.s32.totalorder %s923, %s924
      %p938 = scmp.eq.s32.totalorder %s98, 3
      %p939 = por %p937, %p938
      %p941 = scmp.ne.s32.totalorder %s924, %s940
      %p942 = scmp.eq.s32.totalorder %s98, 0
      %p943 = por %p941, %p942
      %s944 = ssub.s32 %s99, %s111
      %p945 = scmp.eq.s32.totalorder %s944, 0
      %s947 = sadd.s32 %s946, 1
      %s948 = scalar_select %p945, %s946, %s947
      %p951 = pneg %p945
      %p952 = scmp.eq.s32.totalorder %s92, 3
      %p953 = por %p951, %p952
      %p954 = scmp.ne.s32.totalorder %s946, %s949
      %p955 = scmp.eq.s32.totalorder %s92, 0
      %p956 = por %p954, %p955
      %p957 = scmp.ne.s32.totalorder %s946, %s949
      %p958 = scmp.eq.s32.totalorder %s97, 3
      %p959 = por %p957, %p958
      %p960 = scmp.ne.s32.totalorder %s949, %s950
      %p961 = scmp.eq.s32.totalorder %s97, 0
      %p962 = por %p960, %p961
      %p963 = scmp.ne.s32.totalorder %s949, %s950
      %p964 = scmp.eq.s32.totalorder %s98, 3
      %p965 = por %p963, %p964
      %p967 = scmp.ne.s32.totalorder %s950, %s966
      %p968 = scmp.eq.s32.totalorder %s98, 0
      %p969 = por %p967, %p968
      %p970 = scmp.le.s32.totalorder 1, %s92
      %p971 = scmp.lt.s32.totalorder %s92, 5
      %p972 = pnand %p970, %p971
      %p973 = pneg %p972
      // Predicated region
      $region9: #{ane_transformer_forward.3} parent=5 // pred_check
        _
      $region10: #{ane_transformer_forward.3} parent=5 // pred_check_branch
        %975 = sbr.rel (%p972) target = $region12
      $region11: #{ane_transformer_forward.3} parent=5 // pred_region
        %s976 = ssub.s32 %s92, 1
      $region12: #{ane_transformer_forward.3} parent=5 // pred_fallthru
        _
      %p977 = scmp.lt.s32.totalorder %s92, 4
      // Predicated region
      $region13: #{ane_transformer_forward.3} parent=5 // pred_check
        %p978 = pneg %p977
      $region14: #{ane_transformer_forward.3} parent=5 // pred_check_branch
        %980 = sbr.rel (%p978) target = $region16
      $region15: #{ane_transformer_forward.3} parent=5 // pred_region
        // Predicated region
        $region17: #{ane_transformer_forward.3} parent=15 // pred_check
          %p981 = pneg %p124
        $region18: #{ane_transformer_forward.3} parent=15 // pred_check_branch
          %983 = sbr.rel (%p981) target = $region20
        $region19: #{ane_transformer_forward.3} parent=15 // pred_region
          %s984 = sand.u32 %s114, 1
          %s985 = scalar_lea.sflag [#allocation4], %s984
          %s986 = sand.u32 %s114, 1
          %s987 = smul.addr %s986, 16
          %s988 = scalar_lea.vmem [#allocation3], %s987
          %s990 = ssub.s32 256, 256
          %991 = vsyncadd %s985, %s990
          %s992 = smul.addr %s99, 2
          %s993 = smul.addr %s992, 128
          %s994 = scalar_lea.hbm %s1, %s993
          %s995 = sshll.u32 %s988, 4
          %s996 = int_to_ptr.vmem [resolvable:$true] %s995
          %1001 = dma.hbm_to_vmem [thread:$0]  %s994, 256, %s996, %s985, 128, 128, 8
        $region20: #{ane_transformer_forward.3} parent=15 // pred_fallthru
          _
        // Predicated region
        $region21: #{ane_transformer_forward.3} parent=15 // pred_check
          %p1002 = pneg %p150
        $region22: #{ane_transformer_forward.3} parent=15 // pred_check_branch
          %1004 = sbr.rel (%p1002) target = $region24
        $region23: #{ane_transformer_forward.3} parent=15 // pred_region
          %p1005 = scmp.lt.s32.totalorder %s99, 1
          %s1006 = scalar_select %p1005, %s99, 1
          %s1007 = smul.addr %s1006, 2
          %s1008 = smul.addr %s1007, 8
          %s1009 = scalar_lea.vmem %s3, %s1008
        $region24: #{ane_transformer_forward.3} parent=15 // pred_fallthru
          _
        // Predicated region
        $region25: #{ane_transformer_forward.3} parent=15 // pred_check
          %p1010 = pneg %p176
        $region26: #{ane_transformer_forward.3} parent=15 // pred_check_branch
          %1012 = sbr.rel (%p1010) target = $region28
        $region27: #{ane_transformer_forward.3} parent=15 // pred_region
          %s1013 = sand.u32 %s92, 1
          %s1014 = scalar_lea.sflag [#allocation7], %s1013
          %s1015 = sand.u32 %s166, 1
          %s1016 = smul.addr %s1015, 16
          %s1017 = scalar_lea.vmem [#allocation6], %s1016
          %s1019 = ssub.s32 256, 256
          %1020 = vsyncadd %s1014, %s1019
          %s1021 = smul.addr %s99, 2
          %s1022 = smul.addr %s1021, 128
          %s1023 = scalar_lea.hbm %s5, %s1022
          %s1024 = sshll.u32 %s1017, 4
          %s1025 = int_to_ptr.vmem [resolvable:$true] %s1024
          %1030 = dma.hbm_to_vmem [thread:$0]  %s1023, 256, %s1025, %s1014, 128, 128, 8
        $region28: #{ane_transformer_forward.3} parent=15 // pred_fallthru
          _
        // Predicated region
        $region29: #{ane_transformer_forward.3} parent=15 // pred_check
          %p1031 = pneg %p202
        $region30: #{ane_transformer_forward.3} parent=15 // pred_check_branch
          %1033 = sbr.rel (%p1031) target = $region32
        $region31: #{ane_transformer_forward.3} parent=15 // pred_region
          %p1034 = scmp.lt.s32.totalorder %s99, 1
          %s1035 = scalar_select %p1034, %s99, 1
          %s1036 = smul.addr %s1035, 2
          %s1037 = smul.addr %s1036, 8
          %s1038 = scalar_lea.vmem %s7, %s1037
        $region32: #{ane_transformer_forward.3} parent=15 // pred_fallthru
          _
        // Predicated region
        $region33: #{ane_transformer_forward.3} parent=15 // pred_check
          %p1039 = pneg %p228
        $region34: #{ane_transformer_forward.3} parent=15 // pred_check_branch
          %1041 = sbr.rel (%p1039) target = $region36
        $region35: #{ane_transformer_forward.3} parent=15 // pred_region
          %p1042 = scmp.lt.s32.totalorder %s99, 1
          %s1043 = scalar_select %p1042, %s99, 1
          %s1044 = smul.addr %s1043, 2
          %s1045 = smul.addr %s1044, 8
          %s1046 = scalar_lea.vmem %s9, %s1045
        $region36: #{ane_transformer_forward.3} parent=15 // pred_fallthru
          _
        // Predicated region
        $region37: #{ane_transformer_forward.3} parent=15 // pred_check
          %p1047 = pneg %p254
        $region38: #{ane_transformer_forward.3} parent=15 // pred_check_branch
          %1049 = sbr.rel (%p1047) target = $region40
        $region39: #{ane_transformer_forward.3} parent=15 // pred_region
          %p1050 = scmp.lt.s32.totalorder %s99, 1
          %s1051 = scalar_select %p1050, %s99, 1
          %s1052 = scalar_lea.vmem %s11, %s1051
        $region40: #{ane_transformer_forward.3} parent=15 // pred_fallthru
          _
        // Predicated region
        $region41: #{ane_transformer_forward.3} parent=15 // pred_check
          %p1053 = pneg %p280
        $region42: #{ane_transformer_forward.3} parent=15 // pred_check_branch
          %1055 = sbr.rel (%p1053) target = $region44
        $region43: #{ane_transformer_forward.3} parent=15 // pred_region
          %s1056 = sand.u32 %s92, 1
          %s1057 = scalar_lea.sflag [#allocation7], %s1056
          %s1058 = sand.u32 %s270, 1
          %s1059 = smul.addr %s1058, 64
          %s1060 = scalar_lea.vmem [#allocation8], %s1059
          %s1062 = ssub.s32 1024, 1024
          %1063 = vsyncadd %s1057, %s1062
          %s1064 = smul.addr %s100, 16
          %s1065 = smul.addr %s1064, 64
          %s1066 = scalar_lea.hbm %s13, %s1065
          %s1067 = sshll.u32 %s1060, 4
          %s1068 = int_to_ptr.vmem [resolvable:$true] %s1067
          %1073 = dma.hbm_to_vmem [thread:$0]  %s1066, 1024, %s1068, %s1057, 64, 64, 4
        $region44: #{ane_transformer_forward.3} parent=15 // pred_fallthru
          _
        // Predicated region
        $region45: #{ane_transformer_forward.3} parent=15 // pred_check
          %p1074 = pneg %p306
        $region46: #{ane_transformer_forward.3} parent=15 // pred_check_branch
          %1076 = sbr.rel (%p1074) target = $region48
        $region47: #{ane_transformer_forward.3} parent=15 // pred_region
          %s1077 = sand.u32 %s92, 1
          %s1078 = scalar_lea.sflag [#allocation10], %s1077
          %s1079 = sand.u32 %s296, 1
          %s1080 = scalar_lea.vmem [#allocation9], %s1079
          %s1082 = ssub.s32 16, 16
          %1083 = vsyncadd %s1078, %s1082
          %s1084 = smul.addr %s100, 16
          %s1085 = scalar_lea.hbm %s15, %s1084
          %s1087 = sshll.u32 %s1080, 4
          %s1088 = int_to_ptr.vmem [resolvable:$true] %s1087
          %1090 = dma.hbm_to_vmem [thread:$0]  %s1085, 16, %s1088, %s1078
        $region48: #{ane_transformer_forward.3} parent=15 // pred_fallthru
          _
        // Predicated region
        $region49: #{ane_transformer_forward.3} parent=15 // pred_check
          %p1091 = pneg %p332
        $region50: #{ane_transformer_forward.3} parent=15 // pred_check_branch
          %1093 = sbr.rel (%p1091) target = $region52
        $region51: #{ane_transformer_forward.3} parent=15 // pred_region
          %s1094 = sand.u32 %s92, 1
          %s1095 = scalar_lea.sflag [#allocation10], %s1094
          %s1096 = sand.u32 %s322, 1
          %s1097 = smul.addr %s1096, 64
          %s1098 = scalar_lea.vmem [#allocation11], %s1097
          %s1100 = ssub.s32 1024, 1024
          %1101 = vsyncadd %s1095, %s1100
          %s1102 = smul.addr %s100, 16
          %s1103 = smul.addr %s1102, 64
          %s1104 = scalar_lea.hbm %s17, %s1103
          %s1105 = sshll.u32 %s1098, 4
          %s1106 = int_to_ptr.vmem [resolvable:$true] %s1105
          %1111 = dma.hbm_to_vmem [thread:$0]  %s1104, 1024, %s1106, %s1095, 64, 64, 4
        $region52: #{ane_transformer_forward.3} parent=15 // pred_fallthru
          _
        // Predicated region
        $region53: #{ane_transformer_forward.3} parent=15 // pred_check
          %p1112 = pneg %p358
        $region54: #{ane_transformer_forward.3} parent=15 // pred_check_branch
          %1114 = sbr.rel (%p1112) target = $region56
        $region55: #{ane_transformer_forward.3} parent=15 // pred_region
          %s1115 = sand.u32 %s92, 1
          %s1116 = scalar_lea.sflag [#allocation13], %s1115
          %s1117 = sand.u32 %s348, 1
          %s1118 = scalar_lea.vmem [#allocation12], %s1117
          %s1120 = ssub.s32 16, 16
          %1121 = vsyncadd %s1116, %s1120
          %s1122 = smul.addr %s100, 16
          %s1123 = scalar_lea.hbm %s19, %s1122
          %s1125 = sshll.u32 %s1118, 4
          %s1126 = int_to_ptr.vmem [resolvable:$true] %s1125
          %1128 = dma.hbm_to_vmem [thread:$0]  %s1123, 16, %s1126, %s1116
        $region56: #{ane_transformer_forward.3} parent=15 // pred_fallthru
          _
        // Predicated region
        $region57: #{ane_transformer_forward.3} parent=15 // pred_check
          %p1129 = pneg %p384
        $region58: #{ane_transformer_forward.3} parent=15 // pred_check_branch
          %1131 = sbr.rel (%p1129) target = $region60
        $region59: #{ane_transformer_forward.3} parent=15 // pred_region
          %s1132 = sand.u32 %s92, 1
          %s1133 = scalar_lea.sflag [#allocation13], %s1132
          %s1134 = sand.u32 %s374, 1
          %s1135 = smul.addr %s1134, 64
          %s1136 = scalar_lea.vmem [#allocation14], %s1135
          %s1138 = ssub.s32 1024, 1024
          %1139 = vsyncadd %s1133, %s1138
          %s1140 = smul.addr %s100, 16
          %s1141 = smul.addr %s1140, 64
          %s1142 = scalar_lea.hbm %s21, %s1141
          %s1143 = sshll.u32 %s1136, 4
          %s1144 = int_to_ptr.vmem [resolvable:$true] %s1143
          %1149 = dma.hbm_to_vmem [thread:$0]  %s1142, 1024, %s1144, %s1133, 64, 64, 4
        $region60: #{ane_transformer_forward.3} parent=15 // pred_fallthru
          _
        // Predicated region
        $region61: #{ane_transformer_forward.3} parent=15 // pred_check
          %p1150 = pneg %p410
        $region62: #{ane_transformer_forward.3} parent=15 // pred_check_branch
          %1152 = sbr.rel (%p1150) target = $region64
        $region63: #{ane_transformer_forward.3} parent=15 // pred_region
          %s1153 = sand.u32 %s92, 1
          %s1154 = scalar_lea.sflag [#allocation16], %s1153
          %s1155 = sand.u32 %s400, 1
          %s1156 = scalar_lea.vmem [#allocation15], %s1155
          %s1158 = ssub.s32 16, 16
          %1159 = vsyncadd %s1154, %s1158
          %s1160 = smul.addr %s100, 16
          %s1161 = scalar_lea.hbm %s23, %s1160
          %s1163 = sshll.u32 %s1156, 4
          %s1164 = int_to_ptr.vmem [resolvable:$true] %s1163
          %1166 = dma.hbm_to_vmem [thread:$0]  %s1161, 16, %s1164, %s1154
        $region64: #{ane_transformer_forward.3} parent=15 // pred_fallthru
          _
        // Predicated region
        $region65: #{ane_transformer_forward.3} parent=15 // pred_check
          %p1167 = pneg %p436
        $region66: #{ane_transformer_forward.3} parent=15 // pred_check_branch
          %1169 = sbr.rel (%p1167) target = $region68
        $region67: #{ane_transformer_forward.3} parent=15 // pred_region
          %p1170 = scmp.lt.s32.totalorder %s100, 1
          %s1171 = scalar_select %p1170, %s100, 1
          %s1172 = smul.addr %s1171, 16
          %s1173 = smul.addr %s1172, 4
          %s1174 = scalar_lea.vmem %s25, %s1173
        $region68: #{ane_transformer_forward.3} parent=15 // pred_fallthru
          _
        // Predicated region
        $region69: #{ane_transformer_forward.3} parent=15 // pred_check
          %p1175 = pneg %p462
        $region70: #{ane_transformer_forward.3} parent=15 // pred_check_branch
          %1177 = sbr.rel (%p1175) target = $region72
        $region71: #{ane_transformer_forward.3} parent=15 // pred_region
          %s1178 = sand.u32 %s92, 1
          %s1179 = scalar_lea.sflag [#allocation16], %s1178
          %s1180 = sand.u32 %s452, 1
          %s1181 = scalar_lea.vmem [#allocation17], %s1180
          %s1183 = ssub.s32 16, 16
          %1184 = vsyncadd %s1179, %s1183
          %s1185 = smul.addr %s100, 16
          %s1186 = scalar_lea.hbm %s27, %s1185
          %s1188 = sshll.u32 %s1181, 4
          %s1189 = int_to_ptr.vmem [resolvable:$true] %s1188
          %1191 = dma.hbm_to_vmem [thread:$0]  %s1186, 16, %s1189, %s1179
        $region72: #{ane_transformer_forward.3} parent=15 // pred_fallthru
          _
        // Predicated region
        $region73: #{ane_transformer_forward.3} parent=15 // pred_check
          %p1192 = pneg %p488
        $region74: #{ane_transformer_forward.3} parent=15 // pred_check_branch
          %1194 = sbr.rel (%p1192) target = $region76
        $region75: #{ane_transformer_forward.3} parent=15 // pred_region
          %s1195 = sand.u32 %s92, 1
          %s1196 = scalar_lea.sflag [#allocation19], %s1195
          %s1197 = sand.u32 %s478, 1
          %s1198 = scalar_lea.vmem [#allocation18], %s1197
          %s1200 = ssub.s32 16, 16
          %1201 = vsyncadd %s1196, %s1200
          %s1202 = smul.addr %s100, 16
          %s1203 = scalar_lea.hbm %s29, %s1202
          %s1205 = sshll.u32 %s1198, 4
          %s1206 = int_to_ptr.vmem [resolvable:$true] %s1205
          %1208 = dma.hbm_to_vmem [thread:$0]  %s1203, 16, %s1206, %s1196
        $region76: #{ane_transformer_forward.3} parent=15 // pred_fallthru
          _
        // Predicated region
        $region77: #{ane_transformer_forward.3} parent=15 // pred_check
          %p1209 = pneg %p514
        $region78: #{ane_transformer_forward.3} parent=15 // pred_check_branch
          %1211 = sbr.rel (%p1209) target = $region80
        $region79: #{ane_transformer_forward.3} parent=15 // pred_region
          %s1212 = sand.u32 %s92, 1
          %s1213 = scalar_lea.sflag [#allocation19], %s1212
          %s1214 = sand.u32 %s504, 1
          %s1215 = scalar_lea.vmem [#allocation20], %s1214
          %s1217 = ssub.s32 16, 16
          %1218 = vsyncadd %s1213, %s1217
          %s1219 = smul.addr %s100, 16
          %s1220 = scalar_lea.hbm %s31, %s1219
          %s1222 = sshll.u32 %s1215, 4
          %s1223 = int_to_ptr.vmem [resolvable:$true] %s1222
          %1225 = dma.hbm_to_vmem [thread:$0]  %s1220, 16, %s1223, %s1213
        $region80: #{ane_transformer_forward.3} parent=15 // pred_fallthru
          _
        // Predicated region
        $region81: #{ane_transformer_forward.3} parent=15 // pred_check
          %p1226 = pneg %p540
        $region82: #{ane_transformer_forward.3} parent=15 // pred_check_branch
          %1228 = sbr.rel (%p1226) target = $region84
        $region83: #{ane_transformer_forward.3} parent=15 // pred_region
          %p1229 = scmp.lt.s32.totalorder %s100, 1
          %s1230 = scalar_select %p1229, %s100, 1
          %s1231 = smul.addr %s1230, 16
          %s1232 = smul.addr %s1231, 4
          %s1233 = scalar_lea.vmem %s33, %s1232
        $region84: #{ane_transformer_forward.3} parent=15 // pred_fallthru
          _
        // Predicated region
        $region85: #{ane_transformer_forward.3} parent=15 // pred_check
          %p1234 = pneg %p566
        $region86: #{ane_transformer_forward.3} parent=15 // pred_check_branch
          %1236 = sbr.rel (%p1234) target = $region88
        $region87: #{ane_transformer_forward.3} parent=15 // pred_region
          %p1237 = scmp.lt.s32.totalorder %s100, 1
          %s1238 = scalar_select %p1237, %s100, 1
          %s1239 = scalar_lea.vmem %s35, %s1238
        $region88: #{ane_transformer_forward.3} parent=15 // pred_fallthru
          _
        // Predicated region
        $region89: #{ane_transformer_forward.3} parent=15 // pred_check
          %p1240 = pneg %p592
        $region90: #{ane_transformer_forward.3} parent=15 // pred_check_branch
          %1242 = sbr.rel (%p1240) target = $region92
        $region91: #{ane_transformer_forward.3} parent=15 // pred_region
          %p1243 = scmp.lt.s32.totalorder %s100, 1
          %s1244 = scalar_select %p1243, %s100, 1
          %s1245 = smul.addr %s1244, 16
          %s1246 = smul.addr %s1245, 4
          %s1247 = scalar_lea.vmem %s37, %s1246
        $region92: #{ane_transformer_forward.3} parent=15 // pred_fallthru
          _
        // Predicated region
        $region93: #{ane_transformer_forward.3} parent=15 // pred_check
          %p1248 = pneg %p618
        $region94: #{ane_transformer_forward.3} parent=15 // pred_check_branch
          %1250 = sbr.rel (%p1248) target = $region96
        $region95: #{ane_transformer_forward.3} parent=15 // pred_region
          %p1251 = scmp.lt.s32.totalorder %s100, 1
          %s1252 = scalar_select %p1251, %s100, 1
          %s1253 = scalar_lea.vmem %s39, %s1252
        $region96: #{ane_transformer_forward.3} parent=15 // pred_fallthru
          _
        // Predicated region
        $region97: #{ane_transformer_forward.3} parent=15 // pred_check
          %p1254 = pneg %p644
        $region98: #{ane_transformer_forward.3} parent=15 // pred_check_branch
          %1256 = sbr.rel (%p1254) target = $region100
        $region99: #{ane_transformer_forward.3} parent=15 // pred_region
          %p1257 = scmp.lt.s32.totalorder %s100, 1
          %s1258 = scalar_select %p1257, %s100, 1
          %s1259 = smul.addr %s1258, 16
          %s1260 = smul.addr %s1259, 4
          %s1261 = scalar_lea.vmem %s41, %s1260
        $region100: #{ane_transformer_forward.3} parent=15 // pred_fallthru
          _
        // Predicated region
        $region101: #{ane_transformer_forward.3} parent=15 // pred_check
          %p1262 = pneg %p670
        $region102: #{ane_transformer_forward.3} parent=15 // pred_check_branch
          %1264 = sbr.rel (%p1262) target = $region104
        $region103: #{ane_transformer_forward.3} parent=15 // pred_region
          %p1265 = scmp.lt.s32.totalorder %s100, 1
          %s1266 = scalar_select %p1265, %s100, 1
          %s1267 = scalar_lea.vmem %s43, %s1266
        $region104: #{ane_transformer_forward.3} parent=15 // pred_fallthru
          _
        // Predicated region
        $region105: #{ane_transformer_forward.3} parent=15 // pred_check
          %p1268 = pneg %p696
        $region106: #{ane_transformer_forward.3} parent=15 // pred_check_branch
          %1270 = sbr.rel (%p1268) target = $region108
        $region107: #{ane_transformer_forward.3} parent=15 // pred_region
          %p1271 = scmp.lt.s32.totalorder %s100, 1
          %s1272 = scalar_select %p1271, %s100, 1
          %s1273 = smul.addr %s1272, 16
          %s1274 = smul.addr %s1273, 4
          %s1275 = scalar_lea.vmem %s45, %s1274
        $region108: #{ane_transformer_forward.3} parent=15 // pred_fallthru
          _
        // Predicated region
        $region109: #{ane_transformer_forward.3} parent=15 // pred_check
          %p1276 = pneg %p722
        $region110: #{ane_transformer_forward.3} parent=15 // pred_check_branch
          %1278 = sbr.rel (%p1276) target = $region112
        $region111: #{ane_transformer_forward.3} parent=15 // pred_region
          %p1279 = scmp.lt.s32.totalorder %s100, 1
          %s1280 = scalar_select %p1279, %s100, 1
          %s1281 = scalar_lea.vmem %s47, %s1280
        $region112: #{ane_transformer_forward.3} parent=15 // pred_fallthru
          _
        // Predicated region
        $region113: #{ane_transformer_forward.3} parent=15 // pred_check
          %p1282 = pneg %p748
        $region114: #{ane_transformer_forward.3} parent=15 // pred_check_branch
          %1284 = sbr.rel (%p1282) target = $region116
        $region115: #{ane_transformer_forward.3} parent=15 // pred_region
          %p1285 = scmp.lt.s32.totalorder %s100, 1
          %s1286 = scalar_select %p1285, %s100, 1
          %s1287 = scalar_lea.vmem %s49, %s1286
        $region116: #{ane_transformer_forward.3} parent=15 // pred_fallthru
          _
        // Predicated region
        $region117: #{ane_transformer_forward.3} parent=15 // pred_check
          %p1288 = pneg %p774
        $region118: #{ane_transformer_forward.3} parent=15 // pred_check_branch
          %1290 = sbr.rel (%p1288) target = $region120
        $region119: #{ane_transformer_forward.3} parent=15 // pred_region
          %p1291 = scmp.lt.s32.totalorder %s100, 1
          %s1292 = scalar_select %p1291, %s100, 1
          %s1293 = scalar_lea.vmem %s51, %s1292
        $region120: #{ane_transformer_forward.3} parent=15 // pred_fallthru
          _
        // Predicated region
        $region121: #{ane_transformer_forward.3} parent=15 // pred_check
          %p1294 = pneg %p800
        $region122: #{ane_transformer_forward.3} parent=15 // pred_check_branch
          %1296 = sbr.rel (%p1294) target = $region124
        $region123: #{ane_transformer_forward.3} parent=15 // pred_region
          %p1297 = scmp.lt.s32.totalorder %s100, 1
          %s1298 = scalar_select %p1297, %s100, 1
          %s1299 = smul.addr %s1298, 32
          %s1300 = smul.addr %s1299, 4
          %s1301 = scalar_lea.vmem %s53, %s1300
        $region124: #{ane_transformer_forward.3} parent=15 // pred_fallthru
          _
        // Predicated region
        $region125: #{ane_transformer_forward.3} parent=15 // pred_check
          %p1302 = pneg %p826
        $region126: #{ane_transformer_forward.3} parent=15 // pred_check_branch
          %1304 = sbr.rel (%p1302) target = $region128
        $region127: #{ane_transformer_forward.3} parent=15 // pred_region
          %p1305 = scmp.lt.s32.totalorder %s100, 1
          %s1306 = scalar_select %p1305, %s100, 1
          %s1307 = smul.addr %s1306, 2
          %s1308 = scalar_lea.vmem %s55, %s1307
        $region128: #{ane_transformer_forward.3} parent=15 // pred_fallthru
          _
        // Predicated region
        $region129: #{ane_transformer_forward.3} parent=15 // pred_check
          %p1309 = pneg %p852
        $region130: #{ane_transformer_forward.3} parent=15 // pred_check_branch
          %1311 = sbr.rel (%p1309) target = $region132
        $region131: #{ane_transformer_forward.3} parent=15 // pred_region
          %p1312 = scmp.lt.s32.totalorder %s100, 1
          %s1313 = scalar_select %p1312, %s100, 1
          %s1314 = smul.addr %s1313, 32
          %s1315 = smul.addr %s1314, 4
          %s1316 = scalar_lea.vmem %s57, %s1315
        $region132: #{ane_transformer_forward.3} parent=15 // pred_fallthru
          _
        // Predicated region
        $region133: #{ane_transformer_forward.3} parent=15 // pred_check
          %p1317 = pneg %p878
        $region134: #{ane_transformer_forward.3} parent=15 // pred_check_branch
          %1319 = sbr.rel (%p1317) target = $region136
        $region135: #{ane_transformer_forward.3} parent=15 // pred_region
          %p1320 = scmp.lt.s32.totalorder %s100, 1
          %s1321 = scalar_select %p1320, %s100, 1
          %s1322 = scalar_lea.vmem %s59, %s1321
        $region136: #{ane_transformer_forward.3} parent=15 // pred_fallthru
          _
        // Predicated region
        $region137: #{ane_transformer_forward.3} parent=15 // pred_check
          %p1323 = pneg %p904
        $region138: #{ane_transformer_forward.3} parent=15 // pred_check_branch
          %1325 = sbr.rel (%p1323) target = $region140
        $region139: #{ane_transformer_forward.3} parent=15 // pred_region
          %p1326 = scmp.lt.s32.totalorder %s100, 1
          %s1327 = scalar_select %p1326, %s100, 1
          %s1328 = scalar_lea.vmem %s61, %s1327
        $region140: #{ane_transformer_forward.3} parent=15 // pred_fallthru
          _
        // Predicated region
        $region141: #{ane_transformer_forward.3} parent=15 // pred_check
          %p1329 = pneg %p930
        $region142: #{ane_transformer_forward.3} parent=15 // pred_check_branch
          %1331 = sbr.rel (%p1329) target = $region144
        $region143: #{ane_transformer_forward.3} parent=15 // pred_region
          %p1332 = scmp.lt.s32.totalorder %s100, 1
          %s1333 = scalar_select %p1332, %s100, 1
          %s1334 = scalar_lea.vmem %s63, %s1333
        $region144: #{ane_transformer_forward.3} parent=15 // pred_fallthru
          _
      $region16: #{ane_transformer_forward.3} parent=5 // pred_fallthru
        _
      %p1335 = scmp.le.s32.totalorder 1, %s92
      %p1336 = scmp.lt.s32.totalorder %s92, 5
      %p1337 = pnand %p1335, %p1336
      %p1338 = pneg %p1337
      // Predicated region
      $region145: #{ane_transformer_forward.3} parent=5 // pred_check
        _
      $region146: #{ane_transformer_forward.3} parent=5 // pred_check_branch
        %1340 = sbr.rel (%p1337) target = $region148
      $region147: #{ane_transformer_forward.3} parent=5 // pred_region
        %s1341 = ssub.s32 %s92, 1
        %s1342 = sand.u32 %s117, 1
        %s1343 = scalar_lea.sflag [#allocation4], %s1342
        %s1344 = sand.u32 %s117, 1
        %s1345 = smul.addr %s1344, 16
        %s1346 = scalar_lea.vmem [#allocation3], %s1345
        // Predicated region
        $region149: #{ane_transformer_forward.3} parent=147 // pred_check
          %p1347 = pneg %p130
        $region150: #{ane_transformer_forward.3} parent=147 // pred_check_branch
          %1349 = sbr.rel (%p1347) target = $region152
        $region151: #{ane_transformer_forward.3} parent=147 // pred_region
          %1350 = dma.done %s1343, 256
        $region152: #{ane_transformer_forward.3} parent=147 // pred_fallthru
          _
        %s1351 = sand.u32 %s97, 1
        %s1352 = scalar_lea.sflag [#allocation7], %s1351
        %s1353 = sand.u32 %s169, 1
        %s1354 = smul.addr %s1353, 16
        %s1355 = scalar_lea.vmem [#allocation6], %s1354
        // Predicated region
        $region153: #{ane_transformer_forward.3} parent=147 // pred_check
          %p1356 = pneg %p182
        $region154: #{ane_transformer_forward.3} parent=147 // pred_check_branch
          %1358 = sbr.rel (%p1356) target = $region156
        $region155: #{ane_transformer_forward.3} parent=147 // pred_region
          %1359 = dma.done %s1352, 256
        $region156: #{ane_transformer_forward.3} parent=147 // pred_fallthru
          _
        %s1360 = sand.u32 %s97, 1
        %s1361 = scalar_lea.sflag [#allocation7], %s1360
        %s1362 = sand.u32 %s273, 1
        %s1363 = smul.addr %s1362, 64
        %s1364 = scalar_lea.vmem [#allocation8], %s1363
        // Predicated region
        $region157: #{ane_transformer_forward.3} parent=147 // pred_check
          %p1365 = pneg %p286
        $region158: #{ane_transformer_forward.3} parent=147 // pred_check_branch
          %1367 = sbr.rel (%p1365) target = $region160
        $region159: #{ane_transformer_forward.3} parent=147 // pred_region
          %1368 = dma.done %s1361, 1024
        $region160: #{ane_transformer_forward.3} parent=147 // pred_fallthru
          _
        %s1369 = sand.u32 %s97, 1
        %s1370 = scalar_lea.sflag [#allocation10], %s1369
        %s1371 = sand.u32 %s299, 1
        %s1372 = scalar_lea.vmem [#allocation9], %s1371
        // Predicated region
        $region161: #{ane_transformer_forward.3} parent=147 // pred_check
          %p1373 = pneg %p312
        $region162: #{ane_transformer_forward.3} parent=147 // pred_check_branch
          %1375 = sbr.rel (%p1373) target = $region164
        $region163: #{ane_transformer_forward.3} parent=147 // pred_region
          %1376 = dma.done %s1370, 16
        $region164: #{ane_transformer_forward.3} parent=147 // pred_fallthru
          _
        %s1377 = sand.u32 %s97, 1
        %s1378 = scalar_lea.sflag [#allocation10], %s1377
        %s1379 = sand.u32 %s325, 1
        %s1380 = smul.addr %s1379, 64
        %s1381 = scalar_lea.vmem [#allocation11], %s1380
        // Predicated region
        $region165: #{ane_transformer_forward.3} parent=147 // pred_check
          %p1382 = pneg %p338
        $region166: #{ane_transformer_forward.3} parent=147 // pred_check_branch
          %1384 = sbr.rel (%p1382) target = $region168
        $region167: #{ane_transformer_forward.3} parent=147 // pred_region
          %1385 = dma.done %s1378, 1024
        $region168: #{ane_transformer_forward.3} parent=147 // pred_fallthru
          _
        %s1386 = sand.u32 %s97, 1
        %s1387 = scalar_lea.sflag [#allocation13], %s1386
        %s1388 = sand.u32 %s351, 1
        %s1389 = scalar_lea.vmem [#allocation12], %s1388
        // Predicated region
        $region169: #{ane_transformer_forward.3} parent=147 // pred_check
          %p1390 = pneg %p364
        $region170: #{ane_transformer_forward.3} parent=147 // pred_check_branch
          %1392 = sbr.rel (%p1390) target = $region172
        $region171: #{ane_transformer_forward.3} parent=147 // pred_region
          %1393 = dma.done %s1387, 16
        $region172: #{ane_transformer_forward.3} parent=147 // pred_fallthru
          _
        %s1394 = sand.u32 %s97, 1
        %s1395 = scalar_lea.sflag [#allocation13], %s1394
        %s1396 = sand.u32 %s377, 1
        %s1397 = smul.addr %s1396, 64
        %s1398 = scalar_lea.vmem [#allocation14], %s1397
        // Predicated region
        $region173: #{ane_transformer_forward.3} parent=147 // pred_check
          %p1399 = pneg %p390
        $region174: #{ane_transformer_forward.3} parent=147 // pred_check_branch
          %1401 = sbr.rel (%p1399) target = $region176
        $region175: #{ane_transformer_forward.3} parent=147 // pred_region
          %1402 = dma.done %s1395, 1024
        $region176: #{ane_transformer_forward.3} parent=147 // pred_fallthru
          _
        %s1403 = sand.u32 %s97, 1
        %s1404 = scalar_lea.sflag [#allocation16], %s1403
        %s1405 = sand.u32 %s403, 1
        %s1406 = scalar_lea.vmem [#allocation15], %s1405
        // Predicated region
        $region177: #{ane_transformer_forward.3} parent=147 // pred_check
          %p1407 = pneg %p416
        $region178: #{ane_transformer_forward.3} parent=147 // pred_check_branch
          %1409 = sbr.rel (%p1407) target = $region180
        $region179: #{ane_transformer_forward.3} parent=147 // pred_region
          %1410 = dma.done %s1404, 16
        $region180: #{ane_transformer_forward.3} parent=147 // pred_fallthru
          _
        %s1411 = sand.u32 %s97, 1
        %s1412 = scalar_lea.sflag [#allocation16], %s1411
        %s1413 = sand.u32 %s455, 1
        %s1414 = scalar_lea.vmem [#allocation17], %s1413
        // Predicated region
        $region181: #{ane_transformer_forward.3} parent=147 // pred_check
          %p1415 = pneg %p468
        $region182: #{ane_transformer_forward.3} parent=147 // pred_check_branch
          %1417 = sbr.rel (%p1415) target = $region184
        $region183: #{ane_transformer_forward.3} parent=147 // pred_region
          %1418 = dma.done %s1412, 16
        $region184: #{ane_transformer_forward.3} parent=147 // pred_fallthru
          _
        %s1419 = sand.u32 %s97, 1
        %s1420 = scalar_lea.sflag [#allocation19], %s1419
        %s1421 = sand.u32 %s481, 1
        %s1422 = scalar_lea.vmem [#allocation18], %s1421
        // Predicated region
        $region185: #{ane_transformer_forward.3} parent=147 // pred_check
          %p1423 = pneg %p494
        $region186: #{ane_transformer_forward.3} parent=147 // pred_check_branch
          %1425 = sbr.rel (%p1423) target = $region188
        $region187: #{ane_transformer_forward.3} parent=147 // pred_region
          %1426 = dma.done %s1420, 16
        $region188: #{ane_transformer_forward.3} parent=147 // pred_fallthru
          _
        %s1427 = sand.u32 %s97, 1
        %s1428 = scalar_lea.sflag [#allocation19], %s1427
        %s1429 = sand.u32 %s507, 1
        %s1430 = scalar_lea.vmem [#allocation20], %s1429
        // Predicated region
        $region189: #{ane_transformer_forward.3} parent=147 // pred_check
          %p1431 = pneg %p520
        $region190: #{ane_transformer_forward.3} parent=147 // pred_check_branch
          %1433 = sbr.rel (%p1431) target = $region192
        $region191: #{ane_transformer_forward.3} parent=147 // pred_region
          %1434 = dma.done %s1428, 16
        $region192: #{ane_transformer_forward.3} parent=147 // pred_fallthru
          _
        %s1435 = sand.u32 %s117, 1
        %s1436 = scalar_lea.sflag [#allocation4], %s1435
        %s1437 = sand.u32 %s117, 1
        %s1438 = smul.addr %s1437, 16
        %s1439 = scalar_lea.vmem [#allocation3], %s1438
        %p1440 = pneg %p130
        %p1441 = pneg %p127
        %p1442 = scmp.lt.s32.totalorder %s101, 1
        %s1443 = scalar_select %p1442, %s101, 1
        %s1444 = smul.addr %s1443, 2
        %s1445 = smul.addr %s1444, 8
        %s1446 = scalar_lea.vmem %s3, %s1445
        %p1447 = pneg %p156
        %p1448 = pneg %p153
        %s1449 = sand.u32 %s97, 1
        %s1450 = scalar_lea.sflag [#allocation7], %s1449
        %s1451 = sand.u32 %s169, 1
        %s1452 = smul.addr %s1451, 16
        %s1453 = scalar_lea.vmem [#allocation6], %s1452
        %p1454 = pneg %p182
        %p1455 = pneg %p179
        %p1456 = scmp.lt.s32.totalorder %s101, 1
        %s1457 = scalar_select %p1456, %s101, 1
        %s1458 = smul.addr %s1457, 2
        %s1459 = smul.addr %s1458, 8
        %s1460 = scalar_lea.vmem %s7, %s1459
        %p1461 = pneg %p208
        %p1462 = pneg %p205
        %p1463 = scmp.lt.s32.totalorder %s101, 1
        %s1464 = scalar_select %p1463, %s101, 1
        %s1465 = smul.addr %s1464, 2
        %s1466 = smul.addr %s1465, 8
        %s1467 = scalar_lea.vmem %s9, %s1466
        %p1468 = pneg %p234
        %p1469 = pneg %p231
        %p1470 = scmp.lt.s32.totalorder %s101, 1
        %s1471 = scalar_select %p1470, %s101, 1
        %s1472 = scalar_lea.vmem %s11, %s1471
        %p1473 = pneg %p260
        %p1474 = pneg %p257
        %s1475 = sand.u32 %s97, 1
        %s1476 = scalar_lea.sflag [#allocation7], %s1475
        %s1477 = sand.u32 %s273, 1
        %s1478 = smul.addr %s1477, 64
        %s1479 = scalar_lea.vmem [#allocation8], %s1478
        %p1480 = pneg %p286
        %p1481 = pneg %p283
        %s1482 = sand.u32 %s97, 1
        %s1483 = scalar_lea.sflag [#allocation10], %s1482
        %s1484 = sand.u32 %s299, 1
        %s1485 = scalar_lea.vmem [#allocation9], %s1484
        %p1486 = pneg %p312
        %p1487 = pneg %p309
        %s1488 = sand.u32 %s97, 1
        %s1489 = scalar_lea.sflag [#allocation10], %s1488
        %s1490 = sand.u32 %s325, 1
        %s1491 = smul.addr %s1490, 64
        %s1492 = scalar_lea.vmem [#allocation11], %s1491
        %p1493 = pneg %p338
        %p1494 = pneg %p335
        %s1495 = sand.u32 %s97, 1
        %s1496 = scalar_lea.sflag [#allocation13], %s1495
        %s1497 = sand.u32 %s351, 1
        %s1498 = scalar_lea.vmem [#allocation12], %s1497
        %p1499 = pneg %p364
        %p1500 = pneg %p361
        %s1501 = sand.u32 %s97, 1
        %s1502 = scalar_lea.sflag [#allocation13], %s1501
        %s1503 = sand.u32 %s377, 1
        %s1504 = smul.addr %s1503, 64
        %s1505 = scalar_lea.vmem [#allocation14], %s1504
        %p1506 = pneg %p390
        %p1507 = pneg %p387
        %s1508 = sand.u32 %s97, 1
        %s1509 = scalar_lea.sflag [#allocation16], %s1508
        %s1510 = sand.u32 %s403, 1
        %s1511 = scalar_lea.vmem [#allocation15], %s1510
        %p1512 = pneg %p416
        %p1513 = pneg %p413
        %p1514 = scmp.lt.s32.totalorder %s102, 1
        %s1515 = scalar_select %p1514, %s102, 1
        %s1516 = smul.addr %s1515, 16
        %s1517 = smul.addr %s1516, 4
        %s1518 = scalar_lea.vmem %s25, %s1517
        %p1519 = pneg %p442
        %p1520 = pneg %p439
        %s1521 = sand.u32 %s97, 1
        %s1522 = scalar_lea.sflag [#allocation16], %s1521
        %s1523 = sand.u32 %s455, 1
        %s1524 = scalar_lea.vmem [#allocation17], %s1523
        %p1525 = pneg %p468
        %p1526 = pneg %p465
        %s1527 = sand.u32 %s97, 1
        %s1528 = scalar_lea.sflag [#allocation19], %s1527
        %s1529 = sand.u32 %s481, 1
        %s1530 = scalar_lea.vmem [#allocation18], %s1529
        %p1531 = pneg %p494
        %p1532 = pneg %p491
        %s1533 = sand.u32 %s97, 1
        %s1534 = scalar_lea.sflag [#allocation19], %s1533
        %s1535 = sand.u32 %s507, 1
        %s1536 = scalar_lea.vmem [#allocation20], %s1535
        %p1537 = pneg %p520
        %p1538 = pneg %p517
        %p1539 = scmp.lt.s32.totalorder %s102, 1
        %s1540 = scalar_select %p1539, %s102, 1
        %s1541 = smul.addr %s1540, 16
        %s1542 = smul.addr %s1541, 4
        %s1543 = scalar_lea.vmem %s33, %s1542
        %p1544 = pneg %p546
        %p1545 = pneg %p543
        %p1546 = scmp.lt.s32.totalorder %s102, 1
        %s1547 = scalar_select %p1546, %s102, 1
        %s1548 = scalar_lea.vmem %s35, %s1547
        %p1549 = pneg %p572
        %p1550 = pneg %p569
        %p1551 = scmp.lt.s32.totalorder %s102, 1
        %s1552 = scalar_select %p1551, %s102, 1
        %s1553 = smul.addr %s1552, 16
        %s1554 = smul.addr %s1553, 4
        %s1555 = scalar_lea.vmem %s37, %s1554
        %p1556 = pneg %p598
        %p1557 = pneg %p595
        %p1558 = scmp.lt.s32.totalorder %s102, 1
        %s1559 = scalar_select %p1558, %s102, 1
        %s1560 = scalar_lea.vmem %s39, %s1559
        %p1561 = pneg %p624
        %p1562 = pneg %p621
        %p1563 = scmp.lt.s32.totalorder %s102, 1
        %s1564 = scalar_select %p1563, %s102, 1
        %s1565 = smul.addr %s1564, 16
        %s1566 = smul.addr %s1565, 4
        %s1567 = scalar_lea.vmem %s41, %s1566
        %p1568 = pneg %p650
        %p1569 = pneg %p647
        %p1570 = scmp.lt.s32.totalorder %s102, 1
        %s1571 = scalar_select %p1570, %s102, 1
        %s1572 = scalar_lea.vmem %s43, %s1571
        %p1573 = pneg %p676
        %p1574 = pneg %p673
        %p1575 = scmp.lt.s32.totalorder %s102, 1
        %s1576 = scalar_select %p1575, %s102, 1
        %s1577 = smul.addr %s1576, 16
        %s1578 = smul.addr %s1577, 4
        %s1579 = scalar_lea.vmem %s45, %s1578
        %p1580 = pneg %p702
        %p1581 = pneg %p699
        %p1582 = scmp.lt.s32.totalorder %s102, 1
        %s1583 = scalar_select %p1582, %s102, 1
        %s1584 = scalar_lea.vmem %s47, %s1583
        %p1585 = pneg %p728
        %p1586 = pneg %p725
        %p1587 = scmp.lt.s32.totalorder %s102, 1
        %s1588 = scalar_select %p1587, %s102, 1
        %s1589 = scalar_lea.vmem %s49, %s1588
        %p1590 = pneg %p754
        %p1591 = pneg %p751
        %p1592 = scmp.lt.s32.totalorder %s102, 1
        %s1593 = scalar_select %p1592, %s102, 1
        %s1594 = scalar_lea.vmem %s51, %s1593
        %p1595 = pneg %p780
        %p1596 = pneg %p777
        %p1597 = scmp.lt.s32.totalorder %s102, 1
        %s1598 = scalar_select %p1597, %s102, 1
        %s1599 = smul.addr %s1598, 32
        %s1600 = smul.addr %s1599, 4
        %s1601 = scalar_lea.vmem %s53, %s1600
        %p1602 = pneg %p806
        %p1603 = pneg %p803
        %p1604 = scmp.lt.s32.totalorder %s102, 1
        %s1605 = scalar_select %p1604, %s102, 1
        %s1606 = smul.addr %s1605, 2
        %s1607 = scalar_lea.vmem %s55, %s1606
        %p1608 = pneg %p832
        %p1609 = pneg %p829
        %p1610 = scmp.lt.s32.totalorder %s102, 1
        %s1611 = scalar_select %p1610, %s102, 1
        %s1612 = smul.addr %s1611, 32
        %s1613 = smul.addr %s1612, 4
        %s1614 = scalar_lea.vmem %s57, %s1613
        %p1615 = pneg %p858
        %p1616 = pneg %p855
        %p1617 = scmp.lt.s32.totalorder %s102, 1
        %s1618 = scalar_select %p1617, %s102, 1
        %s1619 = scalar_lea.vmem %s59, %s1618
        %p1620 = pneg %p884
        %p1621 = pneg %p881
        %p1622 = scmp.lt.s32.totalorder %s102, 1
        %s1623 = scalar_select %p1622, %s102, 1
        %s1624 = scalar_lea.vmem %s61, %s1623
        %p1625 = pneg %p910
        %p1626 = pneg %p907
        %p1627 = scmp.lt.s32.totalorder %s102, 1
        %s1628 = scalar_select %p1627, %s102, 1
        %s1629 = scalar_lea.vmem %s63, %s1628
        %p1630 = pneg %p936
        %p1631 = pneg %p933
        %p1632 = pneg %p962
        %p1633 = pneg %p959
        %s1634 = sand.u32 %s949, 1
        %s1635 = scalar_lea.sflag [#allocation5], %s1634
        %s1636 = sand.u32 %s949, 1
        %s1637 = smul.addr %s1636, 16
        %s1638 = scalar_lea.vmem [#allocation21], %s1637
        %p1639 = scmp.lt.s32.totalorder %s101, 1
        %s1640 = scalar_select %p1639, %s101, 1
        %s1641 = smul.addr %s1640, 2
        %s1642 = smul.addr %s1641, 8
        %s1643 = scalar_lea.vmem %s3, %s1642
        %p1644 = scmp.lt.s32.totalorder %s101, 1
        %s1645 = scalar_select %p1644, %s101, 1
        %s1646 = smul.addr %s1645, 2
        %s1647 = smul.addr %s1646, 8
        %s1648 = scalar_lea.vmem %s7, %s1647
        %p1649 = scmp.lt.s32.totalorder %s101, 1
        %s1650 = scalar_select %p1649, %s101, 1
        %s1651 = smul.addr %s1650, 2
        %s1652 = smul.addr %s1651, 8
        %s1653 = scalar_lea.vmem %s9, %s1652
        %p1654 = scmp.lt.s32.totalorder %s101, 1
        %s1655 = scalar_select %p1654, %s101, 1
        %s1656 = scalar_lea.vmem %s11, %s1655
        %p1657 = scmp.lt.s32.totalorder %s102, 1
        %s1658 = scalar_select %p1657, %s102, 1
        %s1659 = smul.addr %s1658, 16
        %s1660 = smul.addr %s1659, 4
        %s1661 = scalar_lea.vmem %s25, %s1660
        %p1662 = scmp.lt.s32.totalorder %s102, 1
        %s1663 = scalar_select %p1662, %s102, 1
        %s1664 = smul.addr %s1663, 16
        %s1665 = smul.addr %s1664, 4
        %s1666 = scalar_lea.vmem %s33, %s1665
        %p1667 = scmp.lt.s32.totalorder %s102, 1
        %s1668 = scalar_select %p1667, %s102, 1
        %s1669 = scalar_lea.vmem %s35, %s1668
        %p1670 = scmp.lt.s32.totalorder %s102, 1
        %s1671 = scalar_select %p1670, %s102, 1
        %s1672 = smul.addr %s1671, 16
        %s1673 = smul.addr %s1672, 4
        %s1674 = scalar_lea.vmem %s37, %s1673
        %p1675 = scmp.lt.s32.totalorder %s102, 1
        %s1676 = scalar_select %p1675, %s102, 1
        %s1677 = scalar_lea.vmem %s39, %s1676
        %p1678 = scmp.lt.s32.totalorder %s102, 1
        %s1679 = scalar_select %p1678, %s102, 1
        %s1680 = smul.addr %s1679, 16
        %s1681 = smul.addr %s1680, 4
        %s1682 = scalar_lea.vmem %s41, %s1681
        %p1683 = scmp.lt.s32.totalorder %s102, 1
        %s1684 = scalar_select %p1683, %s102, 1
        %s1685 = scalar_lea.vmem %s43, %s1684
        %p1686 = scmp.lt.s32.totalorder %s102, 1
        %s1687 = scalar_select %p1686, %s102, 1
        %s1688 = smul.addr %s1687, 16
        %s1689 = smul.addr %s1688, 4
        %s1690 = scalar_lea.vmem %s45, %s1689
        %p1691 = scmp.lt.s32.totalorder %s102, 1
        %s1692 = scalar_select %p1691, %s102, 1
        %s1693 = scalar_lea.vmem %s47, %s1692
        %p1694 = scmp.lt.s32.totalorder %s102, 1
        %s1695 = scalar_select %p1694, %s102, 1
        %s1696 = scalar_lea.vmem %s49, %s1695
        %p1697 = scmp.lt.s32.totalorder %s102, 1
        %s1698 = scalar_select %p1697, %s102, 1
        %s1699 = scalar_lea.vmem %s51, %s1698
        %p1700 = scmp.lt.s32.totalorder %s102, 1
        %s1701 = scalar_select %p1700, %s102, 1
        %s1702 = smul.addr %s1701, 32
        %s1703 = smul.addr %s1702, 4
        %s1704 = scalar_lea.vmem %s53, %s1703
        %p1705 = scmp.lt.s32.totalorder %s102, 1
        %s1706 = scalar_select %p1705, %s102, 1
        %s1707 = smul.addr %s1706, 2
        %s1708 = scalar_lea.vmem %s55, %s1707
        %p1709 = scmp.lt.s32.totalorder %s102, 1
        %s1710 = scalar_select %p1709, %s102, 1
        %s1711 = smul.addr %s1710, 32
        %s1712 = smul.addr %s1711, 4
        %s1713 = scalar_lea.vmem %s57, %s1712
        %p1714 = scmp.lt.s32.totalorder %s102, 1
        %s1715 = scalar_select %p1714, %s102, 1
        %s1716 = scalar_lea.vmem %s59, %s1715
        %p1717 = scmp.lt.s32.totalorder %s102, 1
        %s1718 = scalar_select %p1717, %s102, 1
        %s1719 = scalar_lea.vmem %s61, %s1718
        %p1720 = scmp.lt.s32.totalorder %s102, 1
        %s1721 = scalar_select %p1720, %s102, 1
        %s1722 = scalar_lea.vmem %s63, %s1721
        %p1724 = scmp.eq.s32.totalorder %s102, 0
        // Predicated region
        $region193: #{ane_transformer_forward.3} parent=147 // pred_check
          %p1725 = pneg %p1724
        $region194: #{ane_transformer_forward.3} parent=147 // pred_check_branch
          %1727 = sbr.rel (%p1725) target = $region196
        $region195: #{ane_transformer_forward.3} parent=147 // pred_region
          %v1728 = vld [vmem:[%s1346] sm:$0xff]
          %v1729 = vld [vmem:[%s1346 + $0x8] sm:$0xff]
          %1730 = vst [vmem:[#allocation2] sm:$0xff] %v1728
          %1731 = vst [vmem:[#allocation2 + $0x8] sm:$0xff] %v1729
        $region196: #{ane_transformer_forward.3} parent=147 // pred_fallthru
          _
        %v1732 = vld [vmem:[#allocation2] sm:$0xff]
        %v1733 = vld [vmem:[#allocation2 + $0x8] sm:$0xff]
        %v1734 = vld [vmem:[%s1643] sm:$0xff]
        %v1735 = vld [vmem:[%s1643 + $0x8] sm:$0xff]
        %v1736 = vld [vmem:[%s1355] sm:$0xff]
        %v1737 = vld [vmem:[%s1355 + $0x8] sm:$0xff]
        %v1738 = vld [vmem:[%s1648] sm:$0xff]
        %v1739 = vld [vmem:[%s1648 + $0x8] sm:$0xff]
        %v1740 = vld [vmem:[%s1653] sm:$0xff]
        %v1741 = vld [vmem:[%s1653 + $0x8] sm:$0xff]
        %v1742 = vld [vmem:[%s1656] sm:$0x1]
        %v1743 = vld [vmem:[%s1364] sm:$0xf]
        %v1744 = vld [vmem:[%s1364 + $0x4] sm:$0xf]
        %v1745 = vld [vmem:[%s1364 + $0x8] sm:$0xf]
        %v1746 = vld [vmem:[%s1364 + $0xc] sm:$0xf]
        %v1747 = vld [vmem:[%s1364 + $0x10] sm:$0xf]
        %v1748 = vld [vmem:[%s1364 + $0x14] sm:$0xf]
        %v1749 = vld [vmem:[%s1364 + $0x18] sm:$0xf]
        %v1750 = vld [vmem:[%s1364 + $0x1c] sm:$0xf]
        %v1751 = vld [vmem:[%s1364 + $0x20] sm:$0xf]
        %v1752 = vld [vmem:[%s1364 + $0x24] sm:$0xf]
        %v1753 = vld [vmem:[%s1364 + $0x28] sm:$0xf]
        %v1754 = vld [vmem:[%s1364 + $0x2c] sm:$0xf]
        %v1755 = vld [vmem:[%s1364 + $0x30] sm:$0xf]
        %v1756 = vld [vmem:[%s1364 + $0x34] sm:$0xf]
        %v1757 = vld [vmem:[%s1364 + $0x38] sm:$0xf]
        %v1758 = vld [vmem:[%s1364 + $0x3c] sm:$0xf]
        %v1759 = vld [vmem:[%s1372] sm:$0x1]
        %v1760 = vld [vmem:[%s1381] sm:$0xf]
        %v1761 = vld [vmem:[%s1381 + $0x4] sm:$0xf]
        %v1762 = vld [vmem:[%s1381 + $0x8] sm:$0xf]
        %v1763 = vld [vmem:[%s1381 + $0xc] sm:$0xf]
        %v1764 = vld [vmem:[%s1381 + $0x10] sm:$0xf]
        %v1765 = vld [vmem:[%s1381 + $0x14] sm:$0xf]
        %v1766 = vld [vmem:[%s1381 + $0x18] sm:$0xf]
        %v1767 = vld [vmem:[%s1381 + $0x1c] sm:$0xf]
        %v1768 = vld [vmem:[%s1381 + $0x20] sm:$0xf]
        %v1769 = vld [vmem:[%s1381 + $0x24] sm:$0xf]
        %v1770 = vld [vmem:[%s1381 + $0x28] sm:$0xf]
        %v1771 = vld [vmem:[%s1381 + $0x2c] sm:$0xf]
        %v1772 = vld [vmem:[%s1381 + $0x30] sm:$0xf]
        %v1773 = vld [vmem:[%s1381 + $0x34] sm:$0xf]
        %v1774 = vld [vmem:[%s1381 + $0x38] sm:$0xf]
        %v1775 = vld [vmem:[%s1381 + $0x3c] sm:$0xf]
        %v1776 = vld [vmem:[%s1389] sm:$0x1]
        %v1777 = vld [vmem:[%s1398] sm:$0xf]
        %v1778 = vld [vmem:[%s1398 + $0x4] sm:$0xf]
        %v1779 = vld [vmem:[%s1398 + $0x8] sm:$0xf]
        %v1780 = vld [vmem:[%s1398 + $0xc] sm:$0xf]
        %v1781 = vld [vmem:[%s1398 + $0x10] sm:$0xf]
        %v1782 = vld [vmem:[%s1398 + $0x14] sm:$0xf]
        %v1783 = vld [vmem:[%s1398 + $0x18] sm:$0xf]
        %v1784 = vld [vmem:[%s1398 + $0x1c] sm:$0xf]
        %v1785 = vld [vmem:[%s1398 + $0x20] sm:$0xf]
        %v1786 = vld [vmem:[%s1398 + $0x24] sm:$0xf]
        %v1787 = vld [vmem:[%s1398 + $0x28] sm:$0xf]
        %v1788 = vld [vmem:[%s1398 + $0x2c] sm:$0xf]
        %v1789 = vld [vmem:[%s1398 + $0x30] sm:$0xf]
        %v1790 = vld [vmem:[%s1398 + $0x34] sm:$0xf]
        %v1791 = vld [vmem:[%s1398 + $0x38] sm:$0xf]
        %v1792 = vld [vmem:[%s1398 + $0x3c] sm:$0xf]
        %v1793 = vld [vmem:[%s1406] sm:$0x1]
        %v1794 = vld [vmem:[%s1661] sm:$0xf]
        %v1795 = vld [vmem:[%s1661 + $0x4] sm:$0xf]
        %v1796 = vld [vmem:[%s1661 + $0x8] sm:$0xf]
        %v1797 = vld [vmem:[%s1661 + $0xc] sm:$0xf]
        %v1798 = vld [vmem:[%s1661 + $0x10] sm:$0xf]
        %v1799 = vld [vmem:[%s1661 + $0x14] sm:$0xf]
        %v1800 = vld [vmem:[%s1661 + $0x18] sm:$0xf]
        %v1801 = vld [vmem:[%s1661 + $0x1c] sm:$0xf]
        %v1802 = vld [vmem:[%s1661 + $0x20] sm:$0xf]
        %v1803 = vld [vmem:[%s1661 + $0x24] sm:$0xf]
        %v1804 = vld [vmem:[%s1661 + $0x28] sm:$0xf]
        %v1805 = vld [vmem:[%s1661 + $0x2c] sm:$0xf]
        %v1806 = vld [vmem:[%s1661 + $0x30] sm:$0xf]
        %v1807 = vld [vmem:[%s1661 + $0x34] sm:$0xf]
        %v1808 = vld [vmem:[%s1661 + $0x38] sm:$0xf]
        %v1809 = vld [vmem:[%s1661 + $0x3c] sm:$0xf]
        %v1810 = vld [vmem:[%s1414] sm:$0x1]
        %v1811 = vld [vmem:[%s1422] sm:$0x1]
        %v1812 = vld [vmem:[%s1430] sm:$0x1]
        %v1813 = vadd.f32 %v1732, %v1736
        %v1814 = vadd.f32 %v1733, %v1737
        %v1815 = vpack.c.bf16 %v1814, %v1813
        %v1817 = vlaneseq
        %v1818 = vshrl.u32 %v1817, 7
        %v1819 = vsub.s32 0, %v1818
        %v1820 = vrot.slane %v1759, %v1819
        %v1838 = vunpack.c.l.b16 %v1743
        %v1839 = vunpack.c.l.b16 %v1744
        %v1840 = vunpack.c.l.b16 %v1745
        %v1841 = vunpack.c.l.b16 %v1746
        %v1842 = vunpack.c.l.b16 %v1747
        %v1843 = vunpack.c.l.b16 %v1748
        %v1844 = vunpack.c.l.b16 %v1749
        %v1845 = vunpack.c.l.b16 %v1750
        %v1846 = vunpack.c.l.b16 %v1751
        %v1847 = vunpack.c.l.b16 %v1752
        %v1848 = vunpack.c.l.b16 %v1753
        %v1849 = vunpack.c.l.b16 %v1754
        %v1850 = vunpack.c.l.b16 %v1755
        %v1851 = vunpack.c.l.b16 %v1756
        %v1852 = vunpack.c.l.b16 %v1757
        %v1853 = vunpack.c.l.b16 %v1758
        %v1854 = vpack.c.b16 %v1839, %v1838
        %v1855 = vpack.c.b16 %v1841, %v1840
        %v1856 = vpack.c.b16 %v1843, %v1842
        %v1857 = vpack.c.b16 %v1845, %v1844
        %v1858 = vpack.c.b16 %v1847, %v1846
        %v1859 = vpack.c.b16 %v1849, %v1848
        %v1860 = vpack.c.b16 %v1851, %v1850
        %v1861 = vpack.c.b16 %v1853, %v1852
        %1870 = vmatprep.subr.bf16.mxu0 0
        %1871 = vmatpush1.bf16.msra.mxu0 %v1861
        %1872 = vmatprep.subr.bf16.mxu0 0
        %1873 = vmatpush1.bf16.msra.mxu0 %v1860
        %1874 = vmatprep.subr.bf16.mxu0 0
        %1875 = vmatpush1.bf16.msra.mxu0 %v1859
        %1876 = vmatprep.subr.bf16.mxu0 0
        %1877 = vmatpush1.bf16.msra.mxu0 %v1858
        %1878 = vmatprep.subr.bf16.mxu0 0
        %1879 = vmatpush1.bf16.msra.mxu0 %v1857
        %1880 = vmatprep.subr.bf16.mxu0 0
        %1881 = vmatpush1.bf16.msra.mxu0 %v1856
        %1882 = vmatprep.subr.bf16.mxu0 0
        %1883 = vmatpush1.bf16.msra.mxu0 %v1855
        %1884 = vmatprep.subr.bf16.mxu0 0
        %1885 = vmatpush1.bf16.msra.mxu0 %v1854
        %1886 = vmatprep.subr.bf16.mxu0 0
        %1887 = vmatpush2.bf16.msra.mxu0 0
        %1888 = vmatprep.subr.bf16.mxu0 0
        %1889 = vmatpush2.bf16.msra.mxu0 0
        %1890 = vmatprep.subr.bf16.mxu0 0
        %1891 = vmatpush2.bf16.msra.mxu0 0
        %1892 = vmatprep.subr.bf16.mxu0 0
        %1893 = vmatpush2.bf16.msra.mxu0 0
        %1894 = vmatprep.subr.bf16.mxu0 0
        %1895 = vmatpush2.bf16.msra.mxu0 0
        %1896 = vmatprep.subr.bf16.mxu0 0
        %1897 = vmatpush2.bf16.msra.mxu0 0
        %1898 = vmatprep.subr.bf16.mxu0 0
        %1899 = vmatpush2.bf16.msra.mxu0 0
        %1900 = vmatprep.subr.bf16.mxu0 0
        %1901 = vmatpush2.bf16.msra.mxu0 0
        %1902 = vmatprep.mubr.bf16.mxu0 0
        %1903 = vmatmul.mubr.bf16.gmra.mxu0 %v1815
        %v1904 = vpop.f32.mrf.mxu0
        %v1905 = vadd.f32 %v1820, %v1904
        %v1906 = vpop.f32.mrf.mxu0
        %v1907 = vpop.f32.mrf.mxu0
        %v1908 = vadd.f32 %v1820, %v1907
        %v1909 = vpop.f32.mrf.mxu0
        %1910 = vdwg.mxu0
        %v1912 = vlaneseq
        %v1913 = vshrl.u32 %v1912, 7
        %v1914 = vsub.s32 0, %v1913
        %v1915 = vrot.slane %v1776, %v1914
        %v1933 = vunpack.c.l.b16 %v1760
        %v1934 = vunpack.c.l.b16 %v1761
        %v1935 = vunpack.c.l.b16 %v1762
        %v1936 = vunpack.c.l.b16 %v1763
        %v1937 = vunpack.c.l.b16 %v1764
        %v1938 = vunpack.c.l.b16 %v1765
        %v1939 = vunpack.c.l.b16 %v1766
        %v1940 = vunpack.c.l.b16 %v1767
        %v1941 = vunpack.c.l.b16 %v1768
        %v1942 = vunpack.c.l.b16 %v1769
        %v1943 = vunpack.c.l.b16 %v1770
        %v1944 = vunpack.c.l.b16 %v1771
        %v1945 = vunpack.c.l.b16 %v1772
        %v1946 = vunpack.c.l.b16 %v1773
        %v1947 = vunpack.c.l.b16 %v1774
        %v1948 = vunpack.c.l.b16 %v1775
        %v1949 = vpack.c.b16 %v1934, %v1933
        %v1950 = vpack.c.b16 %v1936, %v1935
        %v1951 = vpack.c.b16 %v1938, %v1937
        %v1952 = vpack.c.b16 %v1940, %v1939
        %v1953 = vpack.c.b16 %v1942, %v1941
        %v1954 = vpack.c.b16 %v1944, %v1943
        %v1955 = vpack.c.b16 %v1946, %v1945
        %v1956 = vpack.c.b16 %v1948, %v1947
        %1965 = vmatprep.subr.bf16.mxu0 0
        %1966 = vmatpush1.bf16.msra.mxu0 %v1956
        %1967 = vmatprep.subr.bf16.mxu0 0
        %1968 = vmatpush1.bf16.msra.mxu0 %v1955
        %1969 = vmatprep.subr.bf16.mxu0 0
        %1970 = vmatpush1.bf16.msra.mxu0 %v1954
        %1971 = vmatprep.subr.bf16.mxu0 0
        %1972 = vmatpush1.bf16.msra.mxu0 %v1953
        %1973 = vmatprep.subr.bf16.mxu0 0
        %1974 = vmatpush1.bf16.msra.mxu0 %v1952
        %1975 = vmatprep.subr.bf16.mxu0 0
        %1976 = vmatpush1.bf16.msra.mxu0 %v1951
        %1977 = vmatprep.subr.bf16.mxu0 0
        %1978 = vmatpush1.bf16.msra.mxu0 %v1950
        %1979 = vmatprep.subr.bf16.mxu0 0
        %1980 = vmatpush1.bf16.msra.mxu0 %v1949
        %1981 = vmatprep.subr.bf16.mxu0 0
        %1982 = vmatpush2.bf16.msra.mxu0 0
        %1983 = vmatprep.subr.bf16.mxu0 0
        %1984 = vmatpush2.bf16.msra.mxu0 0
        %1985 = vmatprep.subr.bf16.mxu0 0
        %1986 = vmatpush2.bf16.msra.mxu0 0
        %1987 = vmatprep.subr.bf16.mxu0 0
        %1988 = vmatpush2.bf16.msra.mxu0 0
        %1989 = vmatprep.subr.bf16.mxu0 0
        %1990 = vmatpush2.bf16.msra.mxu0 0
        %1991 = vmatprep.subr.bf16.mxu0 0
        %1992 = vmatpush2.bf16.msra.mxu0 0
        %1993 = vmatprep.subr.bf16.mxu0 0
        %1994 = vmatpush2.bf16.msra.mxu0 0
        %1995 = vmatprep.subr.bf16.mxu0 0
        %1996 = vmatpush2.bf16.msra.mxu0 0
        %1997 = vmatprep.mubr.bf16.mxu0 0
        %1998 = vmatmul.mubr.bf16.gmra.mxu0 %v1815
        %v1999 = vpop.f32.mrf.mxu0
        %v2000 = vadd.f32 %v1915, %v1999
        %v2001 = vpop.f32.mrf.mxu0
        %v2002 = vpop.f32.mrf.mxu0
        %v2003 = vadd.f32 %v1915, %v2002
        %v2004 = vpop.f32.mrf.mxu0
        %2005 = vdwg.mxu0
        %v2006 = vpack.c.bf16 %v1733, %v1732
        %v2008 = vlaneseq
        %v2009 = vshrl.u32 %v2008, 7
        %v2010 = vsub.s32 0, %v2009
        %v2011 = vrot.slane %v1793, %v2010
        %v2029 = vunpack.c.l.b16 %v1777
        %v2030 = vunpack.c.l.b16 %v1778
        %v2031 = vunpack.c.l.b16 %v1779
        %v2032 = vunpack.c.l.b16 %v1780
        %v2033 = vunpack.c.l.b16 %v1781
        %v2034 = vunpack.c.l.b16 %v1782
        %v2035 = vunpack.c.l.b16 %v1783
        %v2036 = vunpack.c.l.b16 %v1784
        %v2037 = vunpack.c.l.b16 %v1785
        %v2038 = vunpack.c.l.b16 %v1786
        %v2039 = vunpack.c.l.b16 %v1787
        %v2040 = vunpack.c.l.b16 %v1788
        %v2041 = vunpack.c.l.b16 %v1789
        %v2042 = vunpack.c.l.b16 %v1790
        %v2043 = vunpack.c.l.b16 %v1791
        %v2044 = vunpack.c.l.b16 %v1792
        %v2045 = vpack.c.b16 %v2030, %v2029
        %v2046 = vpack.c.b16 %v2032, %v2031
        %v2047 = vpack.c.b16 %v2034, %v2033
        %v2048 = vpack.c.b16 %v2036, %v2035
        %v2049 = vpack.c.b16 %v2038, %v2037
        %v2050 = vpack.c.b16 %v2040, %v2039
        %v2051 = vpack.c.b16 %v2042, %v2041
        %v2052 = vpack.c.b16 %v2044, %v2043
        %2061 = vmatprep.subr.bf16.mxu0 0
        %2062 = vmatpush1.bf16.msra.mxu0 %v2052
        %2063 = vmatprep.subr.bf16.mxu0 0
        %2064 = vmatpush1.bf16.msra.mxu0 %v2051
        %2065 = vmatprep.subr.bf16.mxu0 0
        %2066 = vmatpush1.bf16.msra.mxu0 %v2050
        %2067 = vmatprep.subr.bf16.mxu0 0
        %2068 = vmatpush1.bf16.msra.mxu0 %v2049
        %2069 = vmatprep.subr.bf16.mxu0 0
        %2070 = vmatpush1.bf16.msra.mxu0 %v2048
        %2071 = vmatprep.subr.bf16.mxu0 0
        %2072 = vmatpush1.bf16.msra.mxu0 %v2047
        %2073 = vmatprep.subr.bf16.mxu0 0
        %2074 = vmatpush1.bf16.msra.mxu0 %v2046
        %2075 = vmatprep.subr.bf16.mxu0 0
        %2076 = vmatpush1.bf16.msra.mxu0 %v2045
        %2077 = vmatprep.subr.bf16.mxu0 0
        %2078 = vmatpush2.bf16.msra.mxu0 0
        %2079 = vmatprep.subr.bf16.mxu0 0
        %2080 = vmatpush2.bf16.msra.mxu0 0
        %2081 = vmatprep.subr.bf16.mxu0 0
        %2082 = vmatpush2.bf16.msra.mxu0 0
        %2083 = vmatprep.subr.bf16.mxu0 0
        %2084 = vmatpush2.bf16.msra.mxu0 0
        %2085 = vmatprep.subr.bf16.mxu0 0
        %2086 = vmatpush2.bf16.msra.mxu0 0
        %2087 = vmatprep.subr.bf16.mxu0 0
        %2088 = vmatpush2.bf16.msra.mxu0 0
        %2089 = vmatprep.subr.bf16.mxu0 0
        %2090 = vmatpush2.bf16.msra.mxu0 0
        %2091 = vmatprep.subr.bf16.mxu0 0
        %2092 = vmatpush2.bf16.msra.mxu0 0
        %2093 = vmatprep.mubr.bf16.mxu0 0
        %2094 = vmatmul.mubr.bf16.gmra.mxu0 %v2006
        %v2095 = vpop.f32.mrf.mxu0
        %v2096 = vadd.f32 %v2011, %v2095
        %v2097 = vpop.f32.mrf.mxu0
        %v2098 = vpop.f32.mrf.mxu0
        %v2099 = vadd.f32 %v2011, %v2098
        %v2100 = vpop.f32.mrf.mxu0
        %2101 = vdwg.mxu0
        %v2102 = vpack.c.bf16 %v1908, %v1905
        %v2103 = vpack.c.bf16 %v2003, %v2000
        %v2104 = vpack.c.bf16 %v2099, %v2096
        %vm2105 = vcmask 261120
        %v2107 = vsel %vm2105, %v2102, 0
        %v2110 = vsel %vm2105, %v2103, 0
        %2112 = vmatprep.subr.bf16.mxu0 0
        %2113 = vmatpush1.bf16.xpose.msra.mxu0 0
        %2114 = vmatprep.subr.bf16.mxu0 0
        %2115 = vmatpush1.bf16.xpose.msra.mxu0 0
        %2116 = vmatprep.subr.bf16.mxu0 0
        %2117 = vmatpush1.bf16.xpose.msra.mxu0 0
        %2118 = vmatprep.subr.bf16.mxu0 0
        %2119 = vmatpush1.bf16.xpose.msra.mxu0 0
        %2120 = vmatprep.subr.bf16.mxu0 0
        %2121 = vmatpush1.bf16.xpose.msra.mxu0 0
        %2122 = vmatprep.subr.bf16.mxu0 0
        %2123 = vmatpush1.bf16.xpose.msra.mxu0 0
        %2124 = vmatprep.subr.bf16.mxu0 0
        %2125 = vmatpush1.bf16.xpose.msra.mxu0 0
        %2126 = vmatprep.subr.bf16.mxu0 0
        %2127 = vmatpush1.bf16.xpose.msra.mxu0 %v2110
        %2128 = vmatprep.subr.bf16.mxu0 0
        %2129 = vmatpush2.bf16.xpose.msra.mxu0 0
        %2130 = vmatprep.subr.bf16.mxu0 0
        %2131 = vmatpush2.bf16.xpose.msra.mxu0 0
        %2132 = vmatprep.subr.bf16.mxu0 0
        %2133 = vmatpush2.bf16.xpose.msra.mxu0 0
        %2134 = vmatprep.subr.bf16.mxu0 0
        %2135 = vmatpush2.bf16.xpose.msra.mxu0 0
        %2136 = vmatprep.subr.bf16.mxu0 0
        %2137 = vmatpush2.bf16.xpose.msra.mxu0 0
        %2138 = vmatprep.subr.bf16.mxu0 0
        %2139 = vmatpush2.bf16.xpose.msra.mxu0 0
        %2140 = vmatprep.subr.bf16.mxu0 0
        %2141 = vmatpush2.bf16.xpose.msra.mxu0 0
        %2142 = vmatprep.subr.bf16.mxu0 0
        %2143 = vmatpush2.bf16.xpose.msra.mxu0 0
        %2144 = vmatprep.mubr.bf16.mxu0 0
        %2145 = vmatmul.mubr.bf16.gmra.mxu0 %v2107
        %v2146 = vpop.f32.mrf.mxu0
        %v2147 = vadd.f32 0.0, %v2146
        %v2148 = vpop.f32.mrf.mxu0
        %v2149 = vpop.f32.mrf.mxu0
        %v2150 = vadd.f32 0.0, %v2149
        %v2151 = vpop.f32.mrf.mxu0
        %2152 = vdwg.mxu0
        %v2153 = vmul.f32 %v2147, 0.17677669
        %v2154 = vmul.f32 %v2150, 0.17677669
        %v2155 = vadd.f32 %v2153, %v1740
        %v2156 = vadd.f32 %v2154, %v1741
        %vm2157 = vcmask 130048
        %v2158 = vsel %vm2157, %v2155, -inf
        %2159 = vmax.xlane.f32.xlu0 %v2158
        %v2160 = vpop.xlane.xlu0 %2159
        %v2161 = vsel %vm2157, %v2156, -inf
        %2162 = vmax.xlane.f32.xlu0 %v2161
        %v2163 = vpop.xlane.xlu0 %2162
        %v2164 = vsub.f32 %v2155, %v2160
        %v2165 = vsub.f32 %v2156, %v2163
        %v2166 = vmul.f32 %v2164, 1.442695
        %v2167 = vpow.pop %v2166
        %v2168 = vmul.f32 %v2165, 1.442695
        %v2169 = vpow.pop %v2168
        %v2170 = vsel %vm2157, %v2167, 0.0
        %2171 = vadd.xlane.f32.xlu0 %v2170
        %v2172 = vpop.xlane.xlu0 %2171
        %v2173 = vsel %vm2157, %v2169, 0.0
        %2174 = vadd.xlane.f32.xlu0 %v2173
        %v2175 = vpop.xlane.xlu0 %2174
        %v2176 = vrcp.pop %v2172
        %v2177 = vrcp.pop %v2175
        %v2178 = vmul.f32 %v2167, %v2176
        %v2179 = vmul.f32 %v2169, %v2177
        %v2180 = vpack.c.bf16 %v2179, %v2178
        %v2182 = vsel %vm2157, %v2180, 0
        %2184 = vmatprep.subr.bf16.mxu0 0
        %2185 = vmatpush1.bf16.msra.mxu0 0
        %2186 = vmatprep.subr.bf16.mxu0 0
        %2187 = vmatpush1.bf16.msra.mxu0 0
        %2188 = vmatprep.subr.bf16.mxu0 0
        %2189 = vmatpush1.bf16.msra.mxu0 0
        %2190 = vmatprep.subr.bf16.mxu0 0
        %2191 = vmatpush1.bf16.msra.mxu0 0
        %2192 = vmatprep.subr.bf16.mxu0 0
        %2193 = vmatpush1.bf16.msra.mxu0 0
        %2194 = vmatprep.subr.bf16.mxu0 0
        %2195 = vmatpush1.bf16.msra.mxu0 0
        %2196 = vmatprep.subr.bf16.mxu0 0
        %2197 = vmatpush1.bf16.msra.mxu0 0
        %2198 = vmatprep.subr.bf16.mxu0 0
        %2199 = vmatpush1.bf16.msra.mxu0 %v2104
        %2200 = vmatprep.subr.bf16.mxu0 0
        %2201 = vmatpush2.bf16.msra.mxu0 0
        %2202 = vmatprep.subr.bf16.mxu0 0
        %2203 = vmatpush2.bf16.msra.mxu0 0
        %2204 = vmatprep.subr.bf16.mxu0 0
        %2205 = vmatpush2.bf16.msra.mxu0 0
        %2206 = vmatprep.subr.bf16.mxu0 0
        %2207 = vmatpush2.bf16.msra.mxu0 0
        %2208 = vmatprep.subr.bf16.mxu0 0
        %2209 = vmatpush2.bf16.msra.mxu0 0
        %2210 = vmatprep.subr.bf16.mxu0 0
        %2211 = vmatpush2.bf16.msra.mxu0 0
        %2212 = vmatprep.subr.bf16.mxu0 0
        %2213 = vmatpush2.bf16.msra.mxu0 0
        %2214 = vmatprep.subr.bf16.mxu0 0
        %2215 = vmatpush2.bf16.msra.mxu0 0
        %2216 = vmatprep.mubr.bf16.mxu0 0
        %2217 = vmatmul.mubr.bf16.gmra.mxu0 %v2182
        %v2218 = vpop.f32.mrf.mxu0
        %v2219 = vadd.f32 0.0, %v2218
        %v2220 = vpop.f32.mrf.mxu0
        %v2221 = vpop.f32.mrf.mxu0
        %v2222 = vadd.f32 0.0, %v2221
        %v2223 = vpop.f32.mrf.mxu0
        %2224 = vdwg.mxu0
        %v2225 = vpack.c.bf16 %v2222, %v2219
        %2227 = vrot.lane.b32.xlu0 %v2102, 96
        %v2228 = vpop.permute.xlu0 %2227
        %2230 = vrot.lane.b32.xlu0 %v2103, 96
        %v2231 = vpop.permute.xlu0 %2230
        %v2233 = vsel %vm2105, %v2228, 0
        %v2236 = vsel %vm2105, %v2231, 0
        %2238 = vmatprep.subr.bf16.mxu0 0
        %2239 = vmatpush1.bf16.xpose.msra.mxu0 0
        %2240 = vmatprep.subr.bf16.mxu0 0
        %2241 = vmatpush1.bf16.xpose.msra.mxu0 0
        %2242 = vmatprep.subr.bf16.mxu0 0
        %2243 = vmatpush1.bf16.xpose.msra.mxu0 0
        %2244 = vmatprep.subr.bf16.mxu0 0
        %2245 = vmatpush1.bf16.xpose.msra.mxu0 0
        %2246 = vmatprep.subr.bf16.mxu0 0
        %2247 = vmatpush1.bf16.xpose.msra.mxu0 0
        %2248 = vmatprep.subr.bf16.mxu0 0
        %2249 = vmatpush1.bf16.xpose.msra.mxu0 0
        %2250 = vmatprep.subr.bf16.mxu0 0
        %2251 = vmatpush1.bf16.xpose.msra.mxu0 0
        %2252 = vmatprep.subr.bf16.mxu0 0
        %2253 = vmatpush1.bf16.xpose.msra.mxu0 %v2236
        %2254 = vmatprep.subr.bf16.mxu0 0
        %2255 = vmatpush2.bf16.xpose.msra.mxu0 0
        %2256 = vmatprep.subr.bf16.mxu0 0
        %2257 = vmatpush2.bf16.xpose.msra.mxu0 0
        %2258 = vmatprep.subr.bf16.mxu0 0
        %2259 = vmatpush2.bf16.xpose.msra.mxu0 0
        %2260 = vmatprep.subr.bf16.mxu0 0
        %2261 = vmatpush2.bf16.xpose.msra.mxu0 0
        %2262 = vmatprep.subr.bf16.mxu0 0
        %2263 = vmatpush2.bf16.xpose.msra.mxu0 0
        %2264 = vmatprep.subr.bf16.mxu0 0
        %2265 = vmatpush2.bf16.xpose.msra.mxu0 0
        %2266 = vmatprep.subr.bf16.mxu0 0
        %2267 = vmatpush2.bf16.xpose.msra.mxu0 0
        %2268 = vmatprep.subr.bf16.mxu0 0
        %2269 = vmatpush2.bf16.xpose.msra.mxu0 0
        %2270 = vmatprep.mubr.bf16.mxu0 0
        %2271 = vmatmul.mubr.bf16.gmra.mxu0 %v2233
        %v2272 = vpop.f32.mrf.mxu0
        %v2273 = vadd.f32 0.0, %v2272
        %v2274 = vpop.f32.mrf.mxu0
        %v2275 = vpop.f32.mrf.mxu0
        %v2276 = vadd.f32 0.0, %v2275
        %v2277 = vpop.f32.mrf.mxu0
        %2278 = vdwg.mxu0
        %v2279 = vmul.f32 %v2273, 0.17677669
        %v2280 = vmul.f32 %v2276, 0.17677669
        %v2281 = vadd.f32 %v2279, %v1740
        %v2282 = vadd.f32 %v2280, %v1741
        %v2283 = vsel %vm2157, %v2281, -inf
        %2284 = vmax.xlane.f32.xlu0 %v2283
        %v2285 = vpop.xlane.xlu0 %2284
        %v2286 = vsel %vm2157, %v2282, -inf
        %2287 = vmax.xlane.f32.xlu0 %v2286
        %v2288 = vpop.xlane.xlu0 %2287
        %v2289 = vsub.f32 %v2281, %v2285
        %v2290 = vsub.f32 %v2282, %v2288
        %v2291 = vmul.f32 %v2289, 1.442695
        %v2292 = vpow.pop %v2291
        %v2293 = vmul.f32 %v2290, 1.442695
        %v2294 = vpow.pop %v2293
        %v2295 = vsel %vm2157, %v2292, 0.0
        %2296 = vadd.xlane.f32.xlu0 %v2295
        %v2297 = vpop.xlane.xlu0 %2296
        %v2298 = vsel %vm2157, %v2294, 0.0
        %2299 = vadd.xlane.f32.xlu0 %v2298
        %v2300 = vpop.xlane.xlu0 %2299
        %v2301 = vrcp.pop %v2297
        %v2302 = vrcp.pop %v2300
        %v2303 = vmul.f32 %v2292, %v2301
        %v2304 = vmul.f32 %v2294, %v2302
        %v2305 = vpack.c.bf16 %v2304, %v2303
        %2307 = vrot.lane.b32.xlu0 %v2104, 96
        %v2308 = vpop.permute.xlu0 %2307
        %v2311 = vsel %vm2157, %v2305, 0
        %2313 = vmatprep.subr.bf16.mxu0 0
        %2314 = vmatpush1.bf16.msra.mxu0 0
        %2315 = vmatprep.subr.bf16.mxu0 0
        %2316 = vmatpush1.bf16.msra.mxu0 0
        %2317 = vmatprep.subr.bf16.mxu0 0
        %2318 = vmatpush1.bf16.msra.mxu0 0
        %2319 = vmatprep.subr.bf16.mxu0 0
        %2320 = vmatpush1.bf16.msra.mxu0 0
        %2321 = vmatprep.subr.bf16.mxu0 0
        %2322 = vmatpush1.bf16.msra.mxu0 0
        %2323 = vmatprep.subr.bf16.mxu0 0
        %2324 = vmatpush1.bf16.msra.mxu0 0
        %2325 = vmatprep.subr.bf16.mxu0 0
        %2326 = vmatpush1.bf16.msra.mxu0 0
        %2327 = vmatprep.subr.bf16.mxu0 0
        %2328 = vmatpush1.bf16.msra.mxu0 %v2308
        %2329 = vmatprep.subr.bf16.mxu0 0
        %2330 = vmatpush2.bf16.msra.mxu0 0
        %2331 = vmatprep.subr.bf16.mxu0 0
        %2332 = vmatpush2.bf16.msra.mxu0 0
        %2333 = vmatprep.subr.bf16.mxu0 0
        %2334 = vmatpush2.bf16.msra.mxu0 0
        %2335 = vmatprep.subr.bf16.mxu0 0
        %2336 = vmatpush2.bf16.msra.mxu0 0
        %2337 = vmatprep.subr.bf16.mxu0 0
        %2338 = vmatpush2.bf16.msra.mxu0 0
        %2339 = vmatprep.subr.bf16.mxu0 0
        %2340 = vmatpush2.bf16.msra.mxu0 0
        %2341 = vmatprep.subr.bf16.mxu0 0
        %2342 = vmatpush2.bf16.msra.mxu0 0
        %2343 = vmatprep.subr.bf16.mxu0 0
        %2344 = vmatpush2.bf16.msra.mxu0 0
        %2345 = vmatprep.mubr.bf16.mxu0 0
        %2346 = vmatmul.mubr.bf16.gmra.mxu0 %v2311
        %v2347 = vpop.f32.mrf.mxu0
        %v2348 = vadd.f32 0.0, %v2347
        %v2349 = vpop.f32.mrf.mxu0
        %v2350 = vpop.f32.mrf.mxu0
        %v2351 = vadd.f32 0.0, %v2350
        %v2352 = vpop.f32.mrf.mxu0
        %2353 = vdwg.mxu0
        %v2354 = vpack.c.bf16 %v2351, %v2348
        %v2359 = vunpack.c.l.b16 %v1798
        %v2360 = vunpack.c.l.b16 %v1799
        %v2361 = vunpack.c.l.b16 %v1800
        %v2362 = vunpack.c.l.b16 %v1801
        %v2363 = vpack.c.b16 %v2360, %v2359
        %v2364 = vpack.c.b16 %v2362, %v2361
        %v2368 = vsel %vm2105, %v2354, 0
        %2370 = vmatprep.subr.bf16.mxu0 0
        %2371 = vmatpush1.bf16.msra.mxu0 0
        %2372 = vmatprep.subr.bf16.mxu0 0
        %2373 = vmatpush1.bf16.msra.mxu0 0
        %2374 = vmatprep.subr.bf16.mxu0 0
        %2375 = vmatpush1.bf16.msra.mxu0 0
        %2376 = vmatprep.subr.bf16.mxu0 0
        %2377 = vmatpush1.bf16.msra.mxu0 0
        %2378 = vmatprep.subr.bf16.mxu0 0
        %2379 = vmatpush1.bf16.msra.mxu0 0
        %2380 = vmatprep.subr.bf16.mxu0 0
        %2381 = vmatpush1.bf16.msra.mxu0 0
        %2382 = vmatprep.subr.bf16.mxu0 0
        %2383 = vmatpush1.bf16.msra.mxu0 %v2364
        %2384 = vmatprep.subr.bf16.mxu0 0
        %2385 = vmatpush1.bf16.msra.mxu0 %v2363
        %2386 = vmatprep.subr.bf16.mxu0 0
        %2387 = vmatpush2.bf16.msra.mxu0 0
        %2388 = vmatprep.subr.bf16.mxu0 0
        %2389 = vmatpush2.bf16.msra.mxu0 0
        %2390 = vmatprep.subr.bf16.mxu0 0
        %2391 = vmatpush2.bf16.msra.mxu0 0
        %2392 = vmatprep.subr.bf16.mxu0 0
        %2393 = vmatpush2.bf16.msra.mxu0 0
        %2394 = vmatprep.subr.bf16.mxu0 0
        %2395 = vmatpush2.bf16.msra.mxu0 0
        %2396 = vmatprep.subr.bf16.mxu0 0
        %2397 = vmatpush2.bf16.msra.mxu0 0
        %2398 = vmatprep.subr.bf16.mxu0 0
        %2399 = vmatpush2.bf16.msra.mxu0 0
        %2400 = vmatprep.subr.bf16.mxu0 0
        %2401 = vmatpush2.bf16.msra.mxu0 0
        %2402 = vmatprep.mubr.bf16.mxu0 0
        %2403 = vmatmul.mubr.bf16.gmra.mxu0 %v2368
        %v2404 = vpop.f32.mrf.mxu0
        %v2405 = vadd.f32 0.0, %v2404
        %v2406 = vpop.f32.mrf.mxu0
        %v2407 = vpop.f32.mrf.mxu0
        %v2408 = vadd.f32 0.0, %v2407
        %v2409 = vpop.f32.mrf.mxu0
        %2410 = vdwg.mxu0
        %v2415 = vunpack.c.l.b16 %v1794
        %v2416 = vunpack.c.l.b16 %v1795
        %v2417 = vunpack.c.l.b16 %v1796
        %v2418 = vunpack.c.l.b16 %v1797
        %v2419 = vpack.c.b16 %v2416, %v2415
        %v2420 = vpack.c.b16 %v2418, %v2417
        %v2424 = vsel %vm2105, %v2225, 0
        %2426 = vmatprep.subr.bf16.mxu0 0
        %2427 = vmatpush1.bf16.msra.mxu0 0
        %2428 = vmatprep.subr.bf16.mxu0 0
        %2429 = vmatpush1.bf16.msra.mxu0 0
        %2430 = vmatprep.subr.bf16.mxu0 0
        %2431 = vmatpush1.bf16.msra.mxu0 0
        %2432 = vmatprep.subr.bf16.mxu0 0
        %2433 = vmatpush1.bf16.msra.mxu0 0
        %2434 = vmatprep.subr.bf16.mxu0 0
        %2435 = vmatpush1.bf16.msra.mxu0 0
        %2436 = vmatprep.subr.bf16.mxu0 0
        %2437 = vmatpush1.bf16.msra.mxu0 0
        %2438 = vmatprep.subr.bf16.mxu0 0
        %2439 = vmatpush1.bf16.msra.mxu0 %v2420
        %2440 = vmatprep.subr.bf16.mxu0 0
        %2441 = vmatpush1.bf16.msra.mxu0 %v2419
        %2442 = vmatprep.subr.bf16.mxu0 0
        %2443 = vmatpush2.bf16.msra.mxu0 0
        %2444 = vmatprep.subr.bf16.mxu0 0
        %2445 = vmatpush2.bf16.msra.mxu0 0
        %2446 = vmatprep.subr.bf16.mxu0 0
        %2447 = vmatpush2.bf16.msra.mxu0 0
        %2448 = vmatprep.subr.bf16.mxu0 0
        %2449 = vmatpush2.bf16.msra.mxu0 0
        %2450 = vmatprep.subr.bf16.mxu0 0
        %2451 = vmatpush2.bf16.msra.mxu0 0
        %2452 = vmatprep.subr.bf16.mxu0 0
        %2453 = vmatpush2.bf16.msra.mxu0 0
        %2454 = vmatprep.subr.bf16.mxu0 0
        %2455 = vmatpush2.bf16.msra.mxu0 0
        %2456 = vmatprep.subr.bf16.mxu0 0
        %2457 = vmatpush2.bf16.msra.mxu0 0
        %2458 = vmatprep.mubr.bf16.mxu0 0
        %2459 = vmatmul.mubr.bf16.gmra.mxu0 %v2424
        %v2460 = vpop.f32.mrf.mxu0
        %v2461 = vadd.f32 %v2405, %v2460
        %v2462 = vpop.f32.mrf.mxu0
        %v2463 = vpop.f32.mrf.mxu0
        %v2464 = vadd.f32 %v2408, %v2463
        %v2465 = vpop.f32.mrf.mxu0
        %2466 = vdwg.mxu0
        %2467 = vrot.lane.b32.xlu0 %v2102, 64
        %v2468 = vpop.permute.xlu0 %2467
        %2469 = vrot.lane.b32.xlu0 %v2103, 64
        %v2470 = vpop.permute.xlu0 %2469
        %v2472 = vsel %vm2105, %v2468, 0
        %v2475 = vsel %vm2105, %v2470, 0
        %2477 = vmatprep.subr.bf16.mxu0 0
        %2478 = vmatpush1.bf16.xpose.msra.mxu0 0
        %2479 = vmatprep.subr.bf16.mxu0 0
        %2480 = vmatpush1.bf16.xpose.msra.mxu0 0
        %2481 = vmatprep.subr.bf16.mxu0 0
        %2482 = vmatpush1.bf16.xpose.msra.mxu0 0
        %2483 = vmatprep.subr.bf16.mxu0 0
        %2484 = vmatpush1.bf16.xpose.msra.mxu0 0
        %2485 = vmatprep.subr.bf16.mxu0 0
        %2486 = vmatpush1.bf16.xpose.msra.mxu0 0
        %2487 = vmatprep.subr.bf16.mxu0 0
        %2488 = vmatpush1.bf16.xpose.msra.mxu0 0
        %2489 = vmatprep.subr.bf16.mxu0 0
        %2490 = vmatpush1.bf16.xpose.msra.mxu0 0
        %2491 = vmatprep.subr.bf16.mxu0 0
        %2492 = vmatpush1.bf16.xpose.msra.mxu0 %v2475
        %2493 = vmatprep.subr.bf16.mxu0 0
        %2494 = vmatpush2.bf16.xpose.msra.mxu0 0
        %2495 = vmatprep.subr.bf16.mxu0 0
        %2496 = vmatpush2.bf16.xpose.msra.mxu0 0
        %2497 = vmatprep.subr.bf16.mxu0 0
        %2498 = vmatpush2.bf16.xpose.msra.mxu0 0
        %2499 = vmatprep.subr.bf16.mxu0 0
        %2500 = vmatpush2.bf16.xpose.msra.mxu0 0
        %2501 = vmatprep.subr.bf16.mxu0 0
        %2502 = vmatpush2.bf16.xpose.msra.mxu0 0
        %2503 = vmatprep.subr.bf16.mxu0 0
        %2504 = vmatpush2.bf16.xpose.msra.mxu0 0
        %2505 = vmatprep.subr.bf16.mxu0 0
        %2506 = vmatpush2.bf16.xpose.msra.mxu0 0
        %2507 = vmatprep.subr.bf16.mxu0 0
        %2508 = vmatpush2.bf16.xpose.msra.mxu0 0
        %2509 = vmatprep.mubr.bf16.mxu0 0
        %2510 = vmatmul.mubr.bf16.gmra.mxu0 %v2472
        %v2511 = vpop.f32.mrf.mxu0
        %v2512 = vadd.f32 0.0, %v2511
        %v2513 = vpop.f32.mrf.mxu0
        %v2514 = vpop.f32.mrf.mxu0
        %v2515 = vadd.f32 0.0, %v2514
        %v2516 = vpop.f32.mrf.mxu0
        %2517 = vdwg.mxu0
        %v2518 = vmul.f32 %v2512, 0.17677669
        %v2519 = vmul.f32 %v2515, 0.17677669
        %v2520 = vadd.f32 %v2518, %v1740
        %v2521 = vadd.f32 %v2519, %v1741
        %v2522 = vsel %vm2157, %v2520, -inf
        %2523 = vmax.xlane.f32.xlu0 %v2522
        %v2524 = vpop.xlane.xlu0 %2523
        %v2525 = vsel %vm2157, %v2521, -inf
        %2526 = vmax.xlane.f32.xlu0 %v2525
        %v2527 = vpop.xlane.xlu0 %2526
        %v2528 = vsub.f32 %v2520, %v2524
        %v2529 = vsub.f32 %v2521, %v2527
        %v2530 = vmul.f32 %v2528, 1.442695
        %v2531 = vpow.pop %v2530
        %v2532 = vmul.f32 %v2529, 1.442695
        %v2533 = vpow.pop %v2532
        %v2534 = vsel %vm2157, %v2531, 0.0
        %2535 = vadd.xlane.f32.xlu0 %v2534
        %v2536 = vpop.xlane.xlu0 %2535
        %v2537 = vsel %vm2157, %v2533, 0.0
        %2538 = vadd.xlane.f32.xlu0 %v2537
        %v2539 = vpop.xlane.xlu0 %2538
        %v2540 = vrcp.pop %v2536
        %v2541 = vrcp.pop %v2539
        %v2542 = vmul.f32 %v2531, %v2540
        %v2543 = vmul.f32 %v2533, %v2541
        %v2544 = vpack.c.bf16 %v2543, %v2542
        %2545 = vrot.lane.b32.xlu0 %v2104, 64
        %v2546 = vpop.permute.xlu0 %2545
        %v2549 = vsel %vm2157, %v2544, 0
        %2551 = vmatprep.subr.bf16.mxu0 0
        %2552 = vmatpush1.bf16.msra.mxu0 0
        %2553 = vmatprep.subr.bf16.mxu0 0
        %2554 = vmatpush1.bf16.msra.mxu0 0
        %2555 = vmatprep.subr.bf16.mxu0 0
        %2556 = vmatpush1.bf16.msra.mxu0 0
        %2557 = vmatprep.subr.bf16.mxu0 0
        %2558 = vmatpush1.bf16.msra.mxu0 0
        %2559 = vmatprep.subr.bf16.mxu0 0
        %2560 = vmatpush1.bf16.msra.mxu0 0
        %2561 = vmatprep.subr.bf16.mxu0 0
        %2562 = vmatpush1.bf16.msra.mxu0 0
        %2563 = vmatprep.subr.bf16.mxu0 0
        %2564 = vmatpush1.bf16.msra.mxu0 0
        %2565 = vmatprep.subr.bf16.mxu0 0
        %2566 = vmatpush1.bf16.msra.mxu0 %v2546
        %2567 = vmatprep.subr.bf16.mxu0 0
        %2568 = vmatpush2.bf16.msra.mxu0 0
        %2569 = vmatprep.subr.bf16.mxu0 0
        %2570 = vmatpush2.bf16.msra.mxu0 0
        %2571 = vmatprep.subr.bf16.mxu0 0
        %2572 = vmatpush2.bf16.msra.mxu0 0
        %2573 = vmatprep.subr.bf16.mxu0 0
        %2574 = vmatpush2.bf16.msra.mxu0 0
        %2575 = vmatprep.subr.bf16.mxu0 0
        %2576 = vmatpush2.bf16.msra.mxu0 0
        %2577 = vmatprep.subr.bf16.mxu0 0
        %2578 = vmatpush2.bf16.msra.mxu0 0
        %2579 = vmatprep.subr.bf16.mxu0 0
        %2580 = vmatpush2.bf16.msra.mxu0 0
        %2581 = vmatprep.subr.bf16.mxu0 0
        %2582 = vmatpush2.bf16.msra.mxu0 0
        %2583 = vmatprep.mubr.bf16.mxu0 0
        %2584 = vmatmul.mubr.bf16.gmra.mxu0 %v2549
        %v2585 = vpop.f32.mrf.mxu0
        %v2586 = vadd.f32 0.0, %v2585
        %v2587 = vpop.f32.mrf.mxu0
        %v2588 = vpop.f32.mrf.mxu0
        %v2589 = vadd.f32 0.0, %v2588
        %v2590 = vpop.f32.mrf.mxu0
        %2591 = vdwg.mxu0
        %v2592 = vpack.c.bf16 %v2589, %v2586
        %v2597 = vunpack.c.l.b16 %v1802
        %v2598 = vunpack.c.l.b16 %v1803
        %v2599 = vunpack.c.l.b16 %v1804
        %v2600 = vunpack.c.l.b16 %v1805
        %v2601 = vpack.c.b16 %v2598, %v2597
        %v2602 = vpack.c.b16 %v2600, %v2599
        %v2606 = vsel %vm2105, %v2592, 0
        %2608 = vmatprep.subr.bf16.mxu0 0
        %2609 = vmatpush1.bf16.msra.mxu0 0
        %2610 = vmatprep.subr.bf16.mxu0 0
        %2611 = vmatpush1.bf16.msra.mxu0 0
        %2612 = vmatprep.subr.bf16.mxu0 0
        %2613 = vmatpush1.bf16.msra.mxu0 0
        %2614 = vmatprep.subr.bf16.mxu0 0
        %2615 = vmatpush1.bf16.msra.mxu0 0
        %2616 = vmatprep.subr.bf16.mxu0 0
        %2617 = vmatpush1.bf16.msra.mxu0 0
        %2618 = vmatprep.subr.bf16.mxu0 0
        %2619 = vmatpush1.bf16.msra.mxu0 0
        %2620 = vmatprep.subr.bf16.mxu0 0
        %2621 = vmatpush1.bf16.msra.mxu0 %v2602
        %2622 = vmatprep.subr.bf16.mxu0 0
        %2623 = vmatpush1.bf16.msra.mxu0 %v2601
        %2624 = vmatprep.subr.bf16.mxu0 0
        %2625 = vmatpush2.bf16.msra.mxu0 0
        %2626 = vmatprep.subr.bf16.mxu0 0
        %2627 = vmatpush2.bf16.msra.mxu0 0
        %2628 = vmatprep.subr.bf16.mxu0 0
        %2629 = vmatpush2.bf16.msra.mxu0 0
        %2630 = vmatprep.subr.bf16.mxu0 0
        %2631 = vmatpush2.bf16.msra.mxu0 0
        %2632 = vmatprep.subr.bf16.mxu0 0
        %2633 = vmatpush2.bf16.msra.mxu0 0
        %2634 = vmatprep.subr.bf16.mxu0 0
        %2635 = vmatpush2.bf16.msra.mxu0 0
        %2636 = vmatprep.subr.bf16.mxu0 0
        %2637 = vmatpush2.bf16.msra.mxu0 0
        %2638 = vmatprep.subr.bf16.mxu0 0
        %2639 = vmatpush2.bf16.msra.mxu0 0
        %2640 = vmatprep.mubr.bf16.mxu0 0
        %2641 = vmatmul.mubr.bf16.gmra.mxu0 %v2606
        %v2642 = vpop.f32.mrf.mxu0
        %v2643 = vadd.f32 0.0, %v2642
        %v2644 = vpop.f32.mrf.mxu0
        %v2645 = vpop.f32.mrf.mxu0
        %v2646 = vadd.f32 0.0, %v2645
        %v2647 = vpop.f32.mrf.mxu0
        %2648 = vdwg.mxu0
        %v2649 = vadd.f32 %v2461, %v2643
        %v2650 = vadd.f32 %v2464, %v2646
        %2651 = vrot.lane.b32.xlu0 %v2102, 32
        %v2652 = vpop.permute.xlu0 %2651
        %2653 = vrot.lane.b32.xlu0 %v2103, 32
        %v2654 = vpop.permute.xlu0 %2653
        %v2656 = vsel %vm2105, %v2652, 0
        %v2659 = vsel %vm2105, %v2654, 0
        %2661 = vmatprep.subr.bf16.mxu0 0
        %2662 = vmatpush1.bf16.xpose.msra.mxu0 0
        %2663 = vmatprep.subr.bf16.mxu0 0
        %2664 = vmatpush1.bf16.xpose.msra.mxu0 0
        %2665 = vmatprep.subr.bf16.mxu0 0
        %2666 = vmatpush1.bf16.xpose.msra.mxu0 0
        %2667 = vmatprep.subr.bf16.mxu0 0
        %2668 = vmatpush1.bf16.xpose.msra.mxu0 0
        %2669 = vmatprep.subr.bf16.mxu0 0
        %2670 = vmatpush1.bf16.xpose.msra.mxu0 0
        %2671 = vmatprep.subr.bf16.mxu0 0
        %2672 = vmatpush1.bf16.xpose.msra.mxu0 0
        %2673 = vmatprep.subr.bf16.mxu0 0
        %2674 = vmatpush1.bf16.xpose.msra.mxu0 0
        %2675 = vmatprep.subr.bf16.mxu0 0
        %2676 = vmatpush1.bf16.xpose.msra.mxu0 %v2659
        %2677 = vmatprep.subr.bf16.mxu0 0
        %2678 = vmatpush2.bf16.xpose.msra.mxu0 0
        %2679 = vmatprep.subr.bf16.mxu0 0
        %2680 = vmatpush2.bf16.xpose.msra.mxu0 0
        %2681 = vmatprep.subr.bf16.mxu0 0
        %2682 = vmatpush2.bf16.xpose.msra.mxu0 0
        %2683 = vmatprep.subr.bf16.mxu0 0
        %2684 = vmatpush2.bf16.xpose.msra.mxu0 0
        %2685 = vmatprep.subr.bf16.mxu0 0
        %2686 = vmatpush2.bf16.xpose.msra.mxu0 0
        %2687 = vmatprep.subr.bf16.mxu0 0
        %2688 = vmatpush2.bf16.xpose.msra.mxu0 0
        %2689 = vmatprep.subr.bf16.mxu0 0
        %2690 = vmatpush2.bf16.xpose.msra.mxu0 0
        %2691 = vmatprep.subr.bf16.mxu0 0
        %2692 = vmatpush2.bf16.xpose.msra.mxu0 0
        %2693 = vmatprep.mubr.bf16.mxu0 0
        %2694 = vmatmul.mubr.bf16.gmra.mxu0 %v2656
        %v2695 = vpop.f32.mrf.mxu0
        %v2696 = vadd.f32 0.0, %v2695
        %v2697 = vpop.f32.mrf.mxu0
        %v2698 = vpop.f32.mrf.mxu0
        %v2699 = vadd.f32 0.0, %v2698
        %v2700 = vpop.f32.mrf.mxu0
        %2701 = vdwg.mxu0
        %v2702 = vmul.f32 %v2696, 0.17677669
        %v2703 = vmul.f32 %v2699, 0.17677669
        %v2704 = vadd.f32 %v2702, %v1740
        %v2705 = vadd.f32 %v2703, %v1741
        %v2706 = vsel %vm2157, %v2704, -inf
        %2707 = vmax.xlane.f32.xlu0 %v2706
        %v2708 = vpop.xlane.xlu0 %2707
        %v2709 = vsel %vm2157, %v2705, -inf
        %2710 = vmax.xlane.f32.xlu0 %v2709
        %v2711 = vpop.xlane.xlu0 %2710
        %v2712 = vsub.f32 %v2704, %v2708
        %v2713 = vsub.f32 %v2705, %v2711
        %v2714 = vmul.f32 %v2712, 1.442695
        %v2715 = vpow.pop %v2714
        %v2716 = vmul.f32 %v2713, 1.442695
        %v2717 = vpow.pop %v2716
        %v2718 = vsel %vm2157, %v2715, 0.0
        %2719 = vadd.xlane.f32.xlu0 %v2718
        %v2720 = vpop.xlane.xlu0 %2719
        %v2721 = vsel %vm2157, %v2717, 0.0
        %2722 = vadd.xlane.f32.xlu0 %v2721
        %v2723 = vpop.xlane.xlu0 %2722
        %v2724 = vrcp.pop %v2720
        %v2725 = vrcp.pop %v2723
        %v2726 = vmul.f32 %v2715, %v2724
        %v2727 = vmul.f32 %v2717, %v2725
        %v2728 = vpack.c.bf16 %v2727, %v2726
        %2729 = vrot.lane.b32.xlu0 %v2104, 32
        %v2730 = vpop.permute.xlu0 %2729
        %v2733 = vsel %vm2157, %v2728, 0
        %2735 = vmatprep.subr.bf16.mxu0 0
        %2736 = vmatpush1.bf16.msra.mxu0 0
        %2737 = vmatprep.subr.bf16.mxu0 0
        %2738 = vmatpush1.bf16.msra.mxu0 0
        %2739 = vmatprep.subr.bf16.mxu0 0
        %2740 = vmatpush1.bf16.msra.mxu0 0
        %2741 = vmatprep.subr.bf16.mxu0 0
        %2742 = vmatpush1.bf16.msra.mxu0 0
        %2743 = vmatprep.subr.bf16.mxu0 0
        %2744 = vmatpush1.bf16.msra.mxu0 0
        %2745 = vmatprep.subr.bf16.mxu0 0
        %2746 = vmatpush1.bf16.msra.mxu0 0
        %2747 = vmatprep.subr.bf16.mxu0 0
        %2748 = vmatpush1.bf16.msra.mxu0 0
        %2749 = vmatprep.subr.bf16.mxu0 0
        %2750 = vmatpush1.bf16.msra.mxu0 %v2730
        %2751 = vmatprep.subr.bf16.mxu0 0
        %2752 = vmatpush2.bf16.msra.mxu0 0
        %2753 = vmatprep.subr.bf16.mxu0 0
        %2754 = vmatpush2.bf16.msra.mxu0 0
        %2755 = vmatprep.subr.bf16.mxu0 0
        %2756 = vmatpush2.bf16.msra.mxu0 0
        %2757 = vmatprep.subr.bf16.mxu0 0
        %2758 = vmatpush2.bf16.msra.mxu0 0
        %2759 = vmatprep.subr.bf16.mxu0 0
        %2760 = vmatpush2.bf16.msra.mxu0 0
        %2761 = vmatprep.subr.bf16.mxu0 0
        %2762 = vmatpush2.bf16.msra.mxu0 0
        %2763 = vmatprep.subr.bf16.mxu0 0
        %2764 = vmatpush2.bf16.msra.mxu0 0
        %2765 = vmatprep.subr.bf16.mxu0 0
        %2766 = vmatpush2.bf16.msra.mxu0 0
        %2767 = vmatprep.mubr.bf16.mxu0 0
        %2768 = vmatmul.mubr.bf16.gmra.mxu0 %v2733
        %v2769 = vpop.f32.mrf.mxu0
        %v2770 = vadd.f32 0.0, %v2769
        %v2771 = vpop.f32.mrf.mxu0
        %v2772 = vpop.f32.mrf.mxu0
        %v2773 = vadd.f32 0.0, %v2772
        %v2774 = vpop.f32.mrf.mxu0
        %2775 = vdwg.mxu0
        %v2776 = vpack.c.bf16 %v2773, %v2770
        %v2781 = vunpack.c.l.b16 %v1806
        %v2782 = vunpack.c.l.b16 %v1807
        %v2783 = vunpack.c.l.b16 %v1808
        %v2784 = vunpack.c.l.b16 %v1809
        %v2785 = vpack.c.b16 %v2782, %v2781
        %v2786 = vpack.c.b16 %v2784, %v2783
        %v2790 = vsel %vm2105, %v2776, 0
        %2792 = vmatprep.subr.bf16.mxu0 0
        %2793 = vmatpush1.bf16.msra.mxu0 0
        %2794 = vmatprep.subr.bf16.mxu0 0
        %2795 = vmatpush1.bf16.msra.mxu0 0
        %2796 = vmatprep.subr.bf16.mxu0 0
        %2797 = vmatpush1.bf16.msra.mxu0 0
        %2798 = vmatprep.subr.bf16.mxu0 0
        %2799 = vmatpush1.bf16.msra.mxu0 0
        %2800 = vmatprep.subr.bf16.mxu0 0
        %2801 = vmatpush1.bf16.msra.mxu0 0
        %2802 = vmatprep.subr.bf16.mxu0 0
        %2803 = vmatpush1.bf16.msra.mxu0 0
        %2804 = vmatprep.subr.bf16.mxu0 0
        %2805 = vmatpush1.bf16.msra.mxu0 %v2786
        %2806 = vmatprep.subr.bf16.mxu0 0
        %2807 = vmatpush1.bf16.msra.mxu0 %v2785
        %2808 = vmatprep.subr.bf16.mxu0 0
        %2809 = vmatpush2.bf16.msra.mxu0 0
        %2810 = vmatprep.subr.bf16.mxu0 0
        %2811 = vmatpush2.bf16.msra.mxu0 0
        %2812 = vmatprep.subr.bf16.mxu0 0
        %2813 = vmatpush2.bf16.msra.mxu0 0
        %2814 = vmatprep.subr.bf16.mxu0 0
        %2815 = vmatpush2.bf16.msra.mxu0 0
        %2816 = vmatprep.subr.bf16.mxu0 0
        %2817 = vmatpush2.bf16.msra.mxu0 0
        %2818 = vmatprep.subr.bf16.mxu0 0
        %2819 = vmatpush2.bf16.msra.mxu0 0
        %2820 = vmatprep.subr.bf16.mxu0 0
        %2821 = vmatpush2.bf16.msra.mxu0 0
        %2822 = vmatprep.subr.bf16.mxu0 0
        %2823 = vmatpush2.bf16.msra.mxu0 0
        %2824 = vmatprep.mubr.bf16.mxu0 0
        %2825 = vmatmul.mubr.bf16.gmra.mxu0 %v2790
        %v2826 = vpop.f32.mrf.mxu0
        %v2827 = vadd.f32 0.0, %v2826
        %v2828 = vpop.f32.mrf.mxu0
        %v2829 = vpop.f32.mrf.mxu0
        %v2830 = vadd.f32 0.0, %v2829
        %v2831 = vpop.f32.mrf.mxu0
        %2832 = vdwg.mxu0
        %v2833 = vadd.f32 %v2649, %v2827
        %v2834 = vadd.f32 %v2650, %v2830
        %v2836 = vlaneseq
        %v2837 = vshrl.u32 %v2836, 7
        %v2838 = vsub.s32 0, %v2837
        %v2839 = vrot.slane %v1810, %v2838
        %v2841 = vadd.f32 %v2833, %v2839
        %v2842 = vadd.f32 %v2834, %v2839
        %v2843 = vadd.f32 %v1732, %v2841
        %v2844 = vadd.f32 %v1733, %v2842
        %2845 = vadd.xlane.f32.xlu0 %v2843
        %v2846 = vpop.xlane.xlu0 %2845
        %2847 = vadd.xlane.f32.xlu0 %v2844
        %v2848 = vpop.xlane.xlu0 %2847
        %v2849 = vrcp.pop 128.0
        %v2850 = vmul.f32 %v2846, %v2849
        %v2851 = vmul.f32 %v2848, %v2849
        %v2852 = vsub.f32 %v2843, %v2850
        %v2853 = vsub.f32 %v2844, %v2851
        %v2854 = vmul.f32 %v2852, %v2852
        %v2855 = vmul.f32 %v2853, %v2853
        %2856 = vadd.xlane.f32.xlu0 %v2854
        %v2857 = vpop.xlane.xlu0 %2856
        %2858 = vadd.xlane.f32.xlu0 %v2855
        %v2859 = vpop.xlane.xlu0 %2858
        %v2860 = vmul.f32 %v2857, %v2849
        %v2861 = vmul.f32 %v2859, %v2849
        %v2862 = vadd.f32 %v2860, 1e-05
        %v2863 = vadd.f32 %v2861, 1e-05
        %v2864 = vrsqrt.pop %v2862
        %v2865 = vrsqrt.pop %v2863
        %v2866 = vmul.f32 %v2852, %v2864
        %v2867 = vmul.f32 %v2853, %v2865
        %v2869 = vlaneseq
        %v2870 = vshrl.u32 %v2869, 7
        %v2871 = vsub.s32 0, %v2870
        %v2872 = vrot.slane %v1812, %v2871
        %v2874 = vadd.f32 %v2866, %v2872
        %v2875 = vadd.f32 %v2867, %v2872
        %v2877 = vlaneseq
        %v2878 = vshrl.u32 %v2877, 7
        %v2879 = vsub.s32 0, %v2878
        %v2880 = vrot.slane %v1811, %v2879
        %v2882 = vmul.f32 %v2874, %v2880
        %v2883 = vmul.f32 %v2875, %v2880
        %v2884 = vld [vmem:[%s1666] sm:$0xf]
        %v2885 = vld [vmem:[%s1666 + $0x4] sm:$0xf]
        %v2886 = vld [vmem:[%s1666 + $0x8] sm:$0xf]
        %v2887 = vld [vmem:[%s1666 + $0xc] sm:$0xf]
        %v2888 = vld [vmem:[%s1666 + $0x10] sm:$0xf]
        %v2889 = vld [vmem:[%s1666 + $0x14] sm:$0xf]
        %v2890 = vld [vmem:[%s1666 + $0x18] sm:$0xf]
        %v2891 = vld [vmem:[%s1666 + $0x1c] sm:$0xf]
        %v2892 = vld [vmem:[%s1666 + $0x20] sm:$0xf]
        %v2893 = vld [vmem:[%s1666 + $0x24] sm:$0xf]
        %v2894 = vld [vmem:[%s1666 + $0x28] sm:$0xf]
        %v2895 = vld [vmem:[%s1666 + $0x2c] sm:$0xf]
        %v2896 = vld [vmem:[%s1666 + $0x30] sm:$0xf]
        %v2897 = vld [vmem:[%s1666 + $0x34] sm:$0xf]
        %v2898 = vld [vmem:[%s1666 + $0x38] sm:$0xf]
        %v2899 = vld [vmem:[%s1666 + $0x3c] sm:$0xf]
        %v2900 = vld [vmem:[%s1669] sm:$0x1]
        %v2901 = vld [vmem:[%s1674] sm:$0xf]
        %v2902 = vld [vmem:[%s1674 + $0x4] sm:$0xf]
        %v2903 = vld [vmem:[%s1674 + $0x8] sm:$0xf]
        %v2904 = vld [vmem:[%s1674 + $0xc] sm:$0xf]
        %v2905 = vld [vmem:[%s1674 + $0x10] sm:$0xf]
        %v2906 = vld [vmem:[%s1674 + $0x14] sm:$0xf]
        %v2907 = vld [vmem:[%s1674 + $0x18] sm:$0xf]
        %v2908 = vld [vmem:[%s1674 + $0x1c] sm:$0xf]
        %v2909 = vld [vmem:[%s1674 + $0x20] sm:$0xf]
        %v2910 = vld [vmem:[%s1674 + $0x24] sm:$0xf]
        %v2911 = vld [vmem:[%s1674 + $0x28] sm:$0xf]
        %v2912 = vld [vmem:[%s1674 + $0x2c] sm:$0xf]
        %v2913 = vld [vmem:[%s1674 + $0x30] sm:$0xf]
        %v2914 = vld [vmem:[%s1674 + $0x34] sm:$0xf]
        %v2915 = vld [vmem:[%s1674 + $0x38] sm:$0xf]
        %v2916 = vld [vmem:[%s1674 + $0x3c] sm:$0xf]
        %v2917 = vld [vmem:[%s1677] sm:$0x1]
        %v2918 = vld [vmem:[%s1682] sm:$0xf]
        %v2919 = vld [vmem:[%s1682 + $0x4] sm:$0xf]
        %v2920 = vld [vmem:[%s1682 + $0x8] sm:$0xf]
        %v2921 = vld [vmem:[%s1682 + $0xc] sm:$0xf]
        %v2922 = vld [vmem:[%s1682 + $0x10] sm:$0xf]
        %v2923 = vld [vmem:[%s1682 + $0x14] sm:$0xf]
        %v2924 = vld [vmem:[%s1682 + $0x18] sm:$0xf]
        %v2925 = vld [vmem:[%s1682 + $0x1c] sm:$0xf]
        %v2926 = vld [vmem:[%s1682 + $0x20] sm:$0xf]
        %v2927 = vld [vmem:[%s1682 + $0x24] sm:$0xf]
        %v2928 = vld [vmem:[%s1682 + $0x28] sm:$0xf]
        %v2929 = vld [vmem:[%s1682 + $0x2c] sm:$0xf]
        %v2930 = vld [vmem:[%s1682 + $0x30] sm:$0xf]
        %v2931 = vld [vmem:[%s1682 + $0x34] sm:$0xf]
        %v2932 = vld [vmem:[%s1682 + $0x38] sm:$0xf]
        %v2933 = vld [vmem:[%s1682 + $0x3c] sm:$0xf]
        %v2934 = vld [vmem:[%s1685] sm:$0x1]
        %v2935 = vld [vmem:[%s1690] sm:$0xf]
        %v2936 = vld [vmem:[%s1690 + $0x4] sm:$0xf]
        %v2937 = vld [vmem:[%s1690 + $0x8] sm:$0xf]
        %v2938 = vld [vmem:[%s1690 + $0xc] sm:$0xf]
        %v2939 = vld [vmem:[%s1690 + $0x10] sm:$0xf]
        %v2940 = vld [vmem:[%s1690 + $0x14] sm:$0xf]
        %v2941 = vld [vmem:[%s1690 + $0x18] sm:$0xf]
        %v2942 = vld [vmem:[%s1690 + $0x1c] sm:$0xf]
        %v2943 = vld [vmem:[%s1690 + $0x20] sm:$0xf]
        %v2944 = vld [vmem:[%s1690 + $0x24] sm:$0xf]
        %v2945 = vld [vmem:[%s1690 + $0x28] sm:$0xf]
        %v2946 = vld [vmem:[%s1690 + $0x2c] sm:$0xf]
        %v2947 = vld [vmem:[%s1690 + $0x30] sm:$0xf]
        %v2948 = vld [vmem:[%s1690 + $0x34] sm:$0xf]
        %v2949 = vld [vmem:[%s1690 + $0x38] sm:$0xf]
        %v2950 = vld [vmem:[%s1690 + $0x3c] sm:$0xf]
        %v2951 = vld [vmem:[%s1693] sm:$0x1]
        %v2952 = vld [vmem:[%s1696] sm:$0x1]
        %v2953 = vld [vmem:[%s1699] sm:$0x1]
        %v2954 = vadd.f32 %v2882, %v1736
        %v2955 = vadd.f32 %v2883, %v1737
        %v2956 = vadd.f32 %v1734, %v1738
        %v2957 = vadd.f32 %v1735, %v1739
        %v2958 = vpack.c.bf16 %v2955, %v2954
        %v2960 = vlaneseq
        %v2961 = vshrl.u32 %v2960, 7
        %v2962 = vsub.s32 0, %v2961
        %v2963 = vrot.slane %v2900, %v2962
        %v2981 = vunpack.c.l.b16 %v2884
        %v2982 = vunpack.c.l.b16 %v2885
        %v2983 = vunpack.c.l.b16 %v2886
        %v2984 = vunpack.c.l.b16 %v2887
        %v2985 = vunpack.c.l.b16 %v2888
        %v2986 = vunpack.c.l.b16 %v2889
        %v2987 = vunpack.c.l.b16 %v2890
        %v2988 = vunpack.c.l.b16 %v2891
        %v2989 = vunpack.c.l.b16 %v2892
        %v2990 = vunpack.c.l.b16 %v2893
        %v2991 = vunpack.c.l.b16 %v2894
        %v2992 = vunpack.c.l.b16 %v2895
        %v2993 = vunpack.c.l.b16 %v2896
        %v2994 = vunpack.c.l.b16 %v2897
        %v2995 = vunpack.c.l.b16 %v2898
        %v2996 = vunpack.c.l.b16 %v2899
        %v2997 = vpack.c.b16 %v2982, %v2981
        %v2998 = vpack.c.b16 %v2984, %v2983
        %v2999 = vpack.c.b16 %v2986, %v2985
        %v3000 = vpack.c.b16 %v2988, %v2987
        %v3001 = vpack.c.b16 %v2990, %v2989
        %v3002 = vpack.c.b16 %v2992, %v2991
        %v3003 = vpack.c.b16 %v2994, %v2993
        %v3004 = vpack.c.b16 %v2996, %v2995
        %3013 = vmatprep.subr.bf16.mxu0 0
        %3014 = vmatpush1.bf16.msra.mxu0 %v3004
        %3015 = vmatprep.subr.bf16.mxu0 0
        %3016 = vmatpush1.bf16.msra.mxu0 %v3003
        %3017 = vmatprep.subr.bf16.mxu0 0
        %3018 = vmatpush1.bf16.msra.mxu0 %v3002
        %3019 = vmatprep.subr.bf16.mxu0 0
        %3020 = vmatpush1.bf16.msra.mxu0 %v3001
        %3021 = vmatprep.subr.bf16.mxu0 0
        %3022 = vmatpush1.bf16.msra.mxu0 %v3000
        %3023 = vmatprep.subr.bf16.mxu0 0
        %3024 = vmatpush1.bf16.msra.mxu0 %v2999
        %3025 = vmatprep.subr.bf16.mxu0 0
        %3026 = vmatpush1.bf16.msra.mxu0 %v2998
        %3027 = vmatprep.subr.bf16.mxu0 0
        %3028 = vmatpush1.bf16.msra.mxu0 %v2997
        %3029 = vmatprep.subr.bf16.mxu0 0
        %3030 = vmatpush2.bf16.msra.mxu0 0
        %3031 = vmatprep.subr.bf16.mxu0 0
        %3032 = vmatpush2.bf16.msra.mxu0 0
        %3033 = vmatprep.subr.bf16.mxu0 0
        %3034 = vmatpush2.bf16.msra.mxu0 0
        %3035 = vmatprep.subr.bf16.mxu0 0
        %3036 = vmatpush2.bf16.msra.mxu0 0
        %3037 = vmatprep.subr.bf16.mxu0 0
        %3038 = vmatpush2.bf16.msra.mxu0 0
        %3039 = vmatprep.subr.bf16.mxu0 0
        %3040 = vmatpush2.bf16.msra.mxu0 0
        %3041 = vmatprep.subr.bf16.mxu0 0
        %3042 = vmatpush2.bf16.msra.mxu0 0
        %3043 = vmatprep.subr.bf16.mxu0 0
        %3044 = vmatpush2.bf16.msra.mxu0 0
        %3045 = vmatprep.mubr.bf16.mxu0 0
        %3046 = vmatmul.mubr.bf16.gmra.mxu0 %v2958
        %v3047 = vpop.f32.mrf.mxu0
        %v3048 = vadd.f32 %v2963, %v3047
        %v3049 = vpop.f32.mrf.mxu0
        %v3050 = vpop.f32.mrf.mxu0
        %v3051 = vadd.f32 %v2963, %v3050
        %v3052 = vpop.f32.mrf.mxu0
        %3053 = vdwg.mxu0
        %v3054 = vpack.c.bf16 %v2957, %v2956
        %v3056 = vlaneseq
        %v3057 = vshrl.u32 %v3056, 7
        %v3058 = vsub.s32 0, %v3057
        %v3059 = vrot.slane %v2917, %v3058
        %v3077 = vunpack.c.l.b16 %v2901
        %v3078 = vunpack.c.l.b16 %v2902
        %v3079 = vunpack.c.l.b16 %v2903
        %v3080 = vunpack.c.l.b16 %v2904
        %v3081 = vunpack.c.l.b16 %v2905
        %v3082 = vunpack.c.l.b16 %v2906
        %v3083 = vunpack.c.l.b16 %v2907
        %v3084 = vunpack.c.l.b16 %v2908
        %v3085 = vunpack.c.l.b16 %v2909
        %v3086 = vunpack.c.l.b16 %v2910
        %v3087 = vunpack.c.l.b16 %v2911
        %v3088 = vunpack.c.l.b16 %v2912
        %v3089 = vunpack.c.l.b16 %v2913
        %v3090 = vunpack.c.l.b16 %v2914
        %v3091 = vunpack.c.l.b16 %v2915
        %v3092 = vunpack.c.l.b16 %v2916
        %v3093 = vpack.c.b16 %v3078, %v3077
        %v3094 = vpack.c.b16 %v3080, %v3079
        %v3095 = vpack.c.b16 %v3082, %v3081
        %v3096 = vpack.c.b16 %v3084, %v3083
        %v3097 = vpack.c.b16 %v3086, %v3085
        %v3098 = vpack.c.b16 %v3088, %v3087
        %v3099 = vpack.c.b16 %v3090, %v3089
        %v3100 = vpack.c.b16 %v3092, %v3091
        %3109 = vmatprep.subr.bf16.mxu0 0
        %3110 = vmatpush1.bf16.msra.mxu0 %v3100
        %3111 = vmatprep.subr.bf16.mxu0 0
        %3112 = vmatpush1.bf16.msra.mxu0 %v3099
        %3113 = vmatprep.subr.bf16.mxu0 0
        %3114 = vmatpush1.bf16.msra.mxu0 %v3098
        %3115 = vmatprep.subr.bf16.mxu0 0
        %3116 = vmatpush1.bf16.msra.mxu0 %v3097
        %3117 = vmatprep.subr.bf16.mxu0 0
        %3118 = vmatpush1.bf16.msra.mxu0 %v3096
        %3119 = vmatprep.subr.bf16.mxu0 0
        %3120 = vmatpush1.bf16.msra.mxu0 %v3095
        %3121 = vmatprep.subr.bf16.mxu0 0
        %3122 = vmatpush1.bf16.msra.mxu0 %v3094
        %3123 = vmatprep.subr.bf16.mxu0 0
        %3124 = vmatpush1.bf16.msra.mxu0 %v3093
        %3125 = vmatprep.subr.bf16.mxu0 0
        %3126 = vmatpush2.bf16.msra.mxu0 0
        %3127 = vmatprep.subr.bf16.mxu0 0
        %3128 = vmatpush2.bf16.msra.mxu0 0
        %3129 = vmatprep.subr.bf16.mxu0 0
        %3130 = vmatpush2.bf16.msra.mxu0 0
        %3131 = vmatprep.subr.bf16.mxu0 0
        %3132 = vmatpush2.bf16.msra.mxu0 0
        %3133 = vmatprep.subr.bf16.mxu0 0
        %3134 = vmatpush2.bf16.msra.mxu0 0
        %3135 = vmatprep.subr.bf16.mxu0 0
        %3136 = vmatpush2.bf16.msra.mxu0 0
        %3137 = vmatprep.subr.bf16.mxu0 0
        %3138 = vmatpush2.bf16.msra.mxu0 0
        %3139 = vmatprep.subr.bf16.mxu0 0
        %3140 = vmatpush2.bf16.msra.mxu0 0
        %3141 = vmatprep.mubr.bf16.mxu0 0
        %3142 = vmatmul.mubr.bf16.gmra.mxu0 %v3054
        %v3143 = vpop.f32.mrf.mxu0
        %v3144 = vadd.f32 %v3059, %v3143
        %v3145 = vpop.f32.mrf.mxu0
        %v3146 = vpop.f32.mrf.mxu0
        %v3147 = vadd.f32 %v3059, %v3146
        %v3148 = vpop.f32.mrf.mxu0
        %3149 = vdwg.mxu0
        %v3150 = vpack.c.bf16 %v1735, %v1734
        %v3152 = vlaneseq
        %v3153 = vshrl.u32 %v3152, 7
        %v3154 = vsub.s32 0, %v3153
        %v3155 = vrot.slane %v2934, %v3154
        %v3173 = vunpack.c.l.b16 %v2918
        %v3174 = vunpack.c.l.b16 %v2919
        %v3175 = vunpack.c.l.b16 %v2920
        %v3176 = vunpack.c.l.b16 %v2921
        %v3177 = vunpack.c.l.b16 %v2922
        %v3178 = vunpack.c.l.b16 %v2923
        %v3179 = vunpack.c.l.b16 %v2924
        %v3180 = vunpack.c.l.b16 %v2925
        %v3181 = vunpack.c.l.b16 %v2926
        %v3182 = vunpack.c.l.b16 %v2927
        %v3183 = vunpack.c.l.b16 %v2928
        %v3184 = vunpack.c.l.b16 %v2929
        %v3185 = vunpack.c.l.b16 %v2930
        %v3186 = vunpack.c.l.b16 %v2931
        %v3187 = vunpack.c.l.b16 %v2932
        %v3188 = vunpack.c.l.b16 %v2933
        %v3189 = vpack.c.b16 %v3174, %v3173
        %v3190 = vpack.c.b16 %v3176, %v3175
        %v3191 = vpack.c.b16 %v3178, %v3177
        %v3192 = vpack.c.b16 %v3180, %v3179
        %v3193 = vpack.c.b16 %v3182, %v3181
        %v3194 = vpack.c.b16 %v3184, %v3183
        %v3195 = vpack.c.b16 %v3186, %v3185
        %v3196 = vpack.c.b16 %v3188, %v3187
        %3205 = vmatprep.subr.bf16.mxu0 0
        %3206 = vmatpush1.bf16.msra.mxu0 %v3196
        %3207 = vmatprep.subr.bf16.mxu0 0
        %3208 = vmatpush1.bf16.msra.mxu0 %v3195
        %3209 = vmatprep.subr.bf16.mxu0 0
        %3210 = vmatpush1.bf16.msra.mxu0 %v3194
        %3211 = vmatprep.subr.bf16.mxu0 0
        %3212 = vmatpush1.bf16.msra.mxu0 %v3193
        %3213 = vmatprep.subr.bf16.mxu0 0
        %3214 = vmatpush1.bf16.msra.mxu0 %v3192
        %3215 = vmatprep.subr.bf16.mxu0 0
        %3216 = vmatpush1.bf16.msra.mxu0 %v3191
        %3217 = vmatprep.subr.bf16.mxu0 0
        %3218 = vmatpush1.bf16.msra.mxu0 %v3190
        %3219 = vmatprep.subr.bf16.mxu0 0
        %3220 = vmatpush1.bf16.msra.mxu0 %v3189
        %3221 = vmatprep.subr.bf16.mxu0 0
        %3222 = vmatpush2.bf16.msra.mxu0 0
        %3223 = vmatprep.subr.bf16.mxu0 0
        %3224 = vmatpush2.bf16.msra.mxu0 0
        %3225 = vmatprep.subr.bf16.mxu0 0
        %3226 = vmatpush2.bf16.msra.mxu0 0
        %3227 = vmatprep.subr.bf16.mxu0 0
        %3228 = vmatpush2.bf16.msra.mxu0 0
        %3229 = vmatprep.subr.bf16.mxu0 0
        %3230 = vmatpush2.bf16.msra.mxu0 0
        %3231 = vmatprep.subr.bf16.mxu0 0
        %3232 = vmatpush2.bf16.msra.mxu0 0
        %3233 = vmatprep.subr.bf16.mxu0 0
        %3234 = vmatpush2.bf16.msra.mxu0 0
        %3235 = vmatprep.subr.bf16.mxu0 0
        %3236 = vmatpush2.bf16.msra.mxu0 0
        %3237 = vmatprep.mubr.bf16.mxu0 0
        %3238 = vmatmul.mubr.bf16.gmra.mxu0 %v3150
        %v3239 = vpop.f32.mrf.mxu0
        %v3240 = vadd.f32 %v3155, %v3239
        %v3241 = vpop.f32.mrf.mxu0
        %v3242 = vpop.f32.mrf.mxu0
        %v3243 = vadd.f32 %v3155, %v3242
        %v3244 = vpop.f32.mrf.mxu0
        %3245 = vdwg.mxu0
        %v3246 = vpack.c.bf16 %v3051, %v3048
        %v3247 = vpack.c.bf16 %v3147, %v3144
        %v3248 = vpack.c.bf16 %v3243, %v3240
        %v3250 = vsel %vm2105, %v3246, 0
        %v3253 = vsel %vm2105, %v3247, 0
        %3255 = vmatprep.subr.bf16.mxu0 0
        %3256 = vmatpush1.bf16.xpose.msra.mxu0 0
        %3257 = vmatprep.subr.bf16.mxu0 0
        %3258 = vmatpush1.bf16.xpose.msra.mxu0 0
        %3259 = vmatprep.subr.bf16.mxu0 0
        %3260 = vmatpush1.bf16.xpose.msra.mxu0 0
        %3261 = vmatprep.subr.bf16.mxu0 0
        %3262 = vmatpush1.bf16.xpose.msra.mxu0 0
        %3263 = vmatprep.subr.bf16.mxu0 0
        %3264 = vmatpush1.bf16.xpose.msra.mxu0 0
        %3265 = vmatprep.subr.bf16.mxu0 0
        %3266 = vmatpush1.bf16.xpose.msra.mxu0 0
        %3267 = vmatprep.subr.bf16.mxu0 0
        %3268 = vmatpush1.bf16.xpose.msra.mxu0 0
        %3269 = vmatprep.subr.bf16.mxu0 0
        %3270 = vmatpush1.bf16.xpose.msra.mxu0 %v3253
        %3271 = vmatprep.subr.bf16.mxu0 0
        %3272 = vmatpush2.bf16.xpose.msra.mxu0 0
        %3273 = vmatprep.subr.bf16.mxu0 0
        %3274 = vmatpush2.bf16.xpose.msra.mxu0 0
        %3275 = vmatprep.subr.bf16.mxu0 0
        %3276 = vmatpush2.bf16.xpose.msra.mxu0 0
        %3277 = vmatprep.subr.bf16.mxu0 0
        %3278 = vmatpush2.bf16.xpose.msra.mxu0 0
        %3279 = vmatprep.subr.bf16.mxu0 0
        %3280 = vmatpush2.bf16.xpose.msra.mxu0 0
        %3281 = vmatprep.subr.bf16.mxu0 0
        %3282 = vmatpush2.bf16.xpose.msra.mxu0 0
        %3283 = vmatprep.subr.bf16.mxu0 0
        %3284 = vmatpush2.bf16.xpose.msra.mxu0 0
        %3285 = vmatprep.subr.bf16.mxu0 0
        %3286 = vmatpush2.bf16.xpose.msra.mxu0 0
        %3287 = vmatprep.mubr.bf16.mxu0 0
        %3288 = vmatmul.mubr.bf16.gmra.mxu0 %v3250
        %v3289 = vpop.f32.mrf.mxu0
        %v3290 = vadd.f32 0.0, %v3289
        %v3291 = vpop.f32.mrf.mxu0
        %v3292 = vpop.f32.mrf.mxu0
        %v3293 = vadd.f32 0.0, %v3292
        %v3294 = vpop.f32.mrf.mxu0
        %3295 = vdwg.mxu0
        %v3296 = vmul.f32 %v3290, 0.17677669
        %v3297 = vmul.f32 %v3293, 0.17677669
        %v3299 = vlaneseq
        %v3300 = vshrl.u32 %v3299, 7
        %v3301 = vsub.s32 0, %v3300
        %v3302 = vrot.slane %v1742, %v3301
        %v3304 = vadd.f32 %v3296, %v3302
        %v3305 = vadd.f32 %v3297, %v3302
        %v3306 = vsel %vm2157, %v3304, -inf
        %3307 = vmax.xlane.f32.xlu0 %v3306
        %v3308 = vpop.xlane.xlu0 %3307
        %v3309 = vsel %vm2157, %v3305, -inf
        %3310 = vmax.xlane.f32.xlu0 %v3309
        %v3311 = vpop.xlane.xlu0 %3310
        %v3312 = vsub.f32 %v3304, %v3308
        %v3313 = vsub.f32 %v3305, %v3311
        %v3314 = vmul.f32 %v3312, 1.442695
        %v3315 = vpow.pop %v3314
        %v3316 = vmul.f32 %v3313, 1.442695
        %v3317 = vpow.pop %v3316
        %v3318 = vsel %vm2157, %v3315, 0.0
        %3319 = vadd.xlane.f32.xlu0 %v3318
        %v3320 = vpop.xlane.xlu0 %3319
        %v3321 = vsel %vm2157, %v3317, 0.0
        %3322 = vadd.xlane.f32.xlu0 %v3321
        %v3323 = vpop.xlane.xlu0 %3322
        %v3324 = vrcp.pop %v3320
        %v3325 = vrcp.pop %v3323
        %v3326 = vmul.f32 %v3315, %v3324
        %v3327 = vmul.f32 %v3317, %v3325
        %v3328 = vpack.c.bf16 %v3327, %v3326
        %v3330 = vsel %vm2157, %v3328, 0
        %3332 = vmatprep.subr.bf16.mxu0 0
        %3333 = vmatpush1.bf16.msra.mxu0 0
        %3334 = vmatprep.subr.bf16.mxu0 0
        %3335 = vmatpush1.bf16.msra.mxu0 0
        %3336 = vmatprep.subr.bf16.mxu0 0
        %3337 = vmatpush1.bf16.msra.mxu0 0
        %3338 = vmatprep.subr.bf16.mxu0 0
        %3339 = vmatpush1.bf16.msra.mxu0 0
        %3340 = vmatprep.subr.bf16.mxu0 0
        %3341 = vmatpush1.bf16.msra.mxu0 0
        %3342 = vmatprep.subr.bf16.mxu0 0
        %3343 = vmatpush1.bf16.msra.mxu0 0
        %3344 = vmatprep.subr.bf16.mxu0 0
        %3345 = vmatpush1.bf16.msra.mxu0 0
        %3346 = vmatprep.subr.bf16.mxu0 0
        %3347 = vmatpush1.bf16.msra.mxu0 %v3248
        %3348 = vmatprep.subr.bf16.mxu0 0
        %3349 = vmatpush2.bf16.msra.mxu0 0
        %3350 = vmatprep.subr.bf16.mxu0 0
        %3351 = vmatpush2.bf16.msra.mxu0 0
        %3352 = vmatprep.subr.bf16.mxu0 0
        %3353 = vmatpush2.bf16.msra.mxu0 0
        %3354 = vmatprep.subr.bf16.mxu0 0
        %3355 = vmatpush2.bf16.msra.mxu0 0
        %3356 = vmatprep.subr.bf16.mxu0 0
        %3357 = vmatpush2.bf16.msra.mxu0 0
        %3358 = vmatprep.subr.bf16.mxu0 0
        %3359 = vmatpush2.bf16.msra.mxu0 0
        %3360 = vmatprep.subr.bf16.mxu0 0
        %3361 = vmatpush2.bf16.msra.mxu0 0
        %3362 = vmatprep.subr.bf16.mxu0 0
        %3363 = vmatpush2.bf16.msra.mxu0 0
        %3364 = vmatprep.mubr.bf16.mxu0 0
        %3365 = vmatmul.mubr.bf16.gmra.mxu0 %v3330
        %v3366 = vpop.f32.mrf.mxu0
        %v3367 = vadd.f32 0.0, %v3366
        %v3368 = vpop.f32.mrf.mxu0
        %v3369 = vpop.f32.mrf.mxu0
        %v3370 = vadd.f32 0.0, %v3369
        %v3371 = vpop.f32.mrf.mxu0
        %3372 = vdwg.mxu0
        %v3373 = vpack.c.bf16 %v3370, %v3367
        %3375 = vrot.lane.b32.xlu0 %v3246, 96
        %v3376 = vpop.permute.xlu0 %3375
        %3378 = vrot.lane.b32.xlu0 %v3247, 96
        %v3379 = vpop.permute.xlu0 %3378
        %v3381 = vsel %vm2105, %v3376, 0
        %v3384 = vsel %vm2105, %v3379, 0
        %3386 = vmatprep.subr.bf16.mxu0 0
        %3387 = vmatpush1.bf16.xpose.msra.mxu0 0
        %3388 = vmatprep.subr.bf16.mxu0 0
        %3389 = vmatpush1.bf16.xpose.msra.mxu0 0
        %3390 = vmatprep.subr.bf16.mxu0 0
        %3391 = vmatpush1.bf16.xpose.msra.mxu0 0
        %3392 = vmatprep.subr.bf16.mxu0 0
        %3393 = vmatpush1.bf16.xpose.msra.mxu0 0
        %3394 = vmatprep.subr.bf16.mxu0 0
        %3395 = vmatpush1.bf16.xpose.msra.mxu0 0
        %3396 = vmatprep.subr.bf16.mxu0 0
        %3397 = vmatpush1.bf16.xpose.msra.mxu0 0
        %3398 = vmatprep.subr.bf16.mxu0 0
        %3399 = vmatpush1.bf16.xpose.msra.mxu0 0
        %3400 = vmatprep.subr.bf16.mxu0 0
        %3401 = vmatpush1.bf16.xpose.msra.mxu0 %v3384
        %3402 = vmatprep.subr.bf16.mxu0 0
        %3403 = vmatpush2.bf16.xpose.msra.mxu0 0
        %3404 = vmatprep.subr.bf16.mxu0 0
        %3405 = vmatpush2.bf16.xpose.msra.mxu0 0
        %3406 = vmatprep.subr.bf16.mxu0 0
        %3407 = vmatpush2.bf16.xpose.msra.mxu0 0
        %3408 = vmatprep.subr.bf16.mxu0 0
        %3409 = vmatpush2.bf16.xpose.msra.mxu0 0
        %3410 = vmatprep.subr.bf16.mxu0 0
        %3411 = vmatpush2.bf16.xpose.msra.mxu0 0
        %3412 = vmatprep.subr.bf16.mxu0 0
        %3413 = vmatpush2.bf16.xpose.msra.mxu0 0
        %3414 = vmatprep.subr.bf16.mxu0 0
        %3415 = vmatpush2.bf16.xpose.msra.mxu0 0
        %3416 = vmatprep.subr.bf16.mxu0 0
        %3417 = vmatpush2.bf16.xpose.msra.mxu0 0
        %3418 = vmatprep.mubr.bf16.mxu0 0
        %3419 = vmatmul.mubr.bf16.gmra.mxu0 %v3381
        %v3420 = vpop.f32.mrf.mxu0
        %v3421 = vadd.f32 0.0, %v3420
        %v3422 = vpop.f32.mrf.mxu0
        %v3423 = vpop.f32.mrf.mxu0
        %v3424 = vadd.f32 0.0, %v3423
        %v3425 = vpop.f32.mrf.mxu0
        %3426 = vdwg.mxu0
        %v3427 = vmul.f32 %v3421, 0.17677669
        %v3428 = vmul.f32 %v3424, 0.17677669
        %v3429 = vadd.f32 %v3427, %v3302
        %v3430 = vadd.f32 %v3428, %v3302
        %v3431 = vsel %vm2157, %v3429, -inf
        %3432 = vmax.xlane.f32.xlu0 %v3431
        %v3433 = vpop.xlane.xlu0 %3432
        %v3434 = vsel %vm2157, %v3430, -inf
        %3435 = vmax.xlane.f32.xlu0 %v3434
        %v3436 = vpop.xlane.xlu0 %3435
        %v3437 = vsub.f32 %v3429, %v3433
        %v3438 = vsub.f32 %v3430, %v3436
        %v3439 = vmul.f32 %v3437, 1.442695
        %v3440 = vpow.pop %v3439
        %v3441 = vmul.f32 %v3438, 1.442695
        %v3442 = vpow.pop %v3441
        %v3443 = vsel %vm2157, %v3440, 0.0
        %3444 = vadd.xlane.f32.xlu0 %v3443
        %v3445 = vpop.xlane.xlu0 %3444
        %v3446 = vsel %vm2157, %v3442, 0.0
        %3447 = vadd.xlane.f32.xlu0 %v3446
        %v3448 = vpop.xlane.xlu0 %3447
        %v3449 = vrcp.pop %v3445
        %v3450 = vrcp.pop %v3448
        %v3451 = vmul.f32 %v3440, %v3449
        %v3452 = vmul.f32 %v3442, %v3450
        %v3453 = vpack.c.bf16 %v3452, %v3451
        %3455 = vrot.lane.b32.xlu0 %v3248, 96
        %v3456 = vpop.permute.xlu0 %3455
        %v3459 = vsel %vm2157, %v3453, 0
        %3461 = vmatprep.subr.bf16.mxu0 0
        %3462 = vmatpush1.bf16.msra.mxu0 0
        %3463 = vmatprep.subr.bf16.mxu0 0
        %3464 = vmatpush1.bf16.msra.mxu0 0
        %3465 = vmatprep.subr.bf16.mxu0 0
        %3466 = vmatpush1.bf16.msra.mxu0 0
        %3467 = vmatprep.subr.bf16.mxu0 0
        %3468 = vmatpush1.bf16.msra.mxu0 0
        %3469 = vmatprep.subr.bf16.mxu0 0
        %3470 = vmatpush1.bf16.msra.mxu0 0
        %3471 = vmatprep.subr.bf16.mxu0 0
        %3472 = vmatpush1.bf16.msra.mxu0 0
        %3473 = vmatprep.subr.bf16.mxu0 0
        %3474 = vmatpush1.bf16.msra.mxu0 0
        %3475 = vmatprep.subr.bf16.mxu0 0
        %3476 = vmatpush1.bf16.msra.mxu0 %v3456
        %3477 = vmatprep.subr.bf16.mxu0 0
        %3478 = vmatpush2.bf16.msra.mxu0 0
        %3479 = vmatprep.subr.bf16.mxu0 0
        %3480 = vmatpush2.bf16.msra.mxu0 0
        %3481 = vmatprep.subr.bf16.mxu0 0
        %3482 = vmatpush2.bf16.msra.mxu0 0
        %3483 = vmatprep.subr.bf16.mxu0 0
        %3484 = vmatpush2.bf16.msra.mxu0 0
        %3485 = vmatprep.subr.bf16.mxu0 0
        %3486 = vmatpush2.bf16.msra.mxu0 0
        %3487 = vmatprep.subr.bf16.mxu0 0
        %3488 = vmatpush2.bf16.msra.mxu0 0
        %3489 = vmatprep.subr.bf16.mxu0 0
        %3490 = vmatpush2.bf16.msra.mxu0 0
        %3491 = vmatprep.subr.bf16.mxu0 0
        %3492 = vmatpush2.bf16.msra.mxu0 0
        %3493 = vmatprep.mubr.bf16.mxu0 0
        %3494 = vmatmul.mubr.bf16.gmra.mxu0 %v3459
        %v3495 = vpop.f32.mrf.mxu0
        %v3496 = vadd.f32 0.0, %v3495
        %v3497 = vpop.f32.mrf.mxu0
        %v3498 = vpop.f32.mrf.mxu0
        %v3499 = vadd.f32 0.0, %v3498
        %v3500 = vpop.f32.mrf.mxu0
        %3501 = vdwg.mxu0
        %v3502 = vpack.c.bf16 %v3499, %v3496
        %v3507 = vunpack.c.l.b16 %v2939
        %v3508 = vunpack.c.l.b16 %v2940
        %v3509 = vunpack.c.l.b16 %v2941
        %v3510 = vunpack.c.l.b16 %v2942
        %v3511 = vpack.c.b16 %v3508, %v3507
        %v3512 = vpack.c.b16 %v3510, %v3509
        %v3516 = vsel %vm2105, %v3502, 0
        %3518 = vmatprep.subr.bf16.mxu0 0
        %3519 = vmatpush1.bf16.msra.mxu0 0
        %3520 = vmatprep.subr.bf16.mxu0 0
        %3521 = vmatpush1.bf16.msra.mxu0 0
        %3522 = vmatprep.subr.bf16.mxu0 0
        %3523 = vmatpush1.bf16.msra.mxu0 0
        %3524 = vmatprep.subr.bf16.mxu0 0
        %3525 = vmatpush1.bf16.msra.mxu0 0
        %3526 = vmatprep.subr.bf16.mxu0 0
        %3527 = vmatpush1.bf16.msra.mxu0 0
        %3528 = vmatprep.subr.bf16.mxu0 0
        %3529 = vmatpush1.bf16.msra.mxu0 0
        %3530 = vmatprep.subr.bf16.mxu0 0
        %3531 = vmatpush1.bf16.msra.mxu0 %v3512
        %3532 = vmatprep.subr.bf16.mxu0 0
        %3533 = vmatpush1.bf16.msra.mxu0 %v3511
        %3534 = vmatprep.subr.bf16.mxu0 0
        %3535 = vmatpush2.bf16.msra.mxu0 0
        %3536 = vmatprep.subr.bf16.mxu0 0
        %3537 = vmatpush2.bf16.msra.mxu0 0
        %3538 = vmatprep.subr.bf16.mxu0 0
        %3539 = vmatpush2.bf16.msra.mxu0 0
        %3540 = vmatprep.subr.bf16.mxu0 0
        %3541 = vmatpush2.bf16.msra.mxu0 0
        %3542 = vmatprep.subr.bf16.mxu0 0
        %3543 = vmatpush2.bf16.msra.mxu0 0
        %3544 = vmatprep.subr.bf16.mxu0 0
        %3545 = vmatpush2.bf16.msra.mxu0 0
        %3546 = vmatprep.subr.bf16.mxu0 0
        %3547 = vmatpush2.bf16.msra.mxu0 0
        %3548 = vmatprep.subr.bf16.mxu0 0
        %3549 = vmatpush2.bf16.msra.mxu0 0
        %3550 = vmatprep.mubr.bf16.mxu0 0
        %3551 = vmatmul.mubr.bf16.gmra.mxu0 %v3516
        %v3552 = vpop.f32.mrf.mxu0
        %v3553 = vadd.f32 0.0, %v3552
        %v3554 = vpop.f32.mrf.mxu0
        %v3555 = vpop.f32.mrf.mxu0
        %v3556 = vadd.f32 0.0, %v3555
        %v3557 = vpop.f32.mrf.mxu0
        %3558 = vdwg.mxu0
        %v3563 = vunpack.c.l.b16 %v2935
        %v3564 = vunpack.c.l.b16 %v2936
        %v3565 = vunpack.c.l.b16 %v2937
        %v3566 = vunpack.c.l.b16 %v2938
        %v3567 = vpack.c.b16 %v3564, %v3563
        %v3568 = vpack.c.b16 %v3566, %v3565
        %v3572 = vsel %vm2105, %v3373, 0
        %3574 = vmatprep.subr.bf16.mxu0 0
        %3575 = vmatpush1.bf16.msra.mxu0 0
        %3576 = vmatprep.subr.bf16.mxu0 0
        %3577 = vmatpush1.bf16.msra.mxu0 0
        %3578 = vmatprep.subr.bf16.mxu0 0
        %3579 = vmatpush1.bf16.msra.mxu0 0
        %3580 = vmatprep.subr.bf16.mxu0 0
        %3581 = vmatpush1.bf16.msra.mxu0 0
        %3582 = vmatprep.subr.bf16.mxu0 0
        %3583 = vmatpush1.bf16.msra.mxu0 0
        %3584 = vmatprep.subr.bf16.mxu0 0
        %3585 = vmatpush1.bf16.msra.mxu0 0
        %3586 = vmatprep.subr.bf16.mxu0 0
        %3587 = vmatpush1.bf16.msra.mxu0 %v3568
        %3588 = vmatprep.subr.bf16.mxu0 0
        %3589 = vmatpush1.bf16.msra.mxu0 %v3567
        %3590 = vmatprep.subr.bf16.mxu0 0
        %3591 = vmatpush2.bf16.msra.mxu0 0
        %3592 = vmatprep.subr.bf16.mxu0 0
        %3593 = vmatpush2.bf16.msra.mxu0 0
        %3594 = vmatprep.subr.bf16.mxu0 0
        %3595 = vmatpush2.bf16.msra.mxu0 0
        %3596 = vmatprep.subr.bf16.mxu0 0
        %3597 = vmatpush2.bf16.msra.mxu0 0
        %3598 = vmatprep.subr.bf16.mxu0 0
        %3599 = vmatpush2.bf16.msra.mxu0 0
        %3600 = vmatprep.subr.bf16.mxu0 0
        %3601 = vmatpush2.bf16.msra.mxu0 0
        %3602 = vmatprep.subr.bf16.mxu0 0
        %3603 = vmatpush2.bf16.msra.mxu0 0
        %3604 = vmatprep.subr.bf16.mxu0 0
        %3605 = vmatpush2.bf16.msra.mxu0 0
        %3606 = vmatprep.mubr.bf16.mxu0 0
        %3607 = vmatmul.mubr.bf16.gmra.mxu0 %v3572
        %v3608 = vpop.f32.mrf.mxu0
        %v3609 = vadd.f32 %v3553, %v3608
        %v3610 = vpop.f32.mrf.mxu0
        %v3611 = vpop.f32.mrf.mxu0
        %v3612 = vadd.f32 %v3556, %v3611
        %v3613 = vpop.f32.mrf.mxu0
        %3614 = vdwg.mxu0
        %3615 = vrot.lane.b32.xlu0 %v3246, 64
        %v3616 = vpop.permute.xlu0 %3615
        %3617 = vrot.lane.b32.xlu0 %v3247, 64
        %v3618 = vpop.permute.xlu0 %3617
        %v3620 = vsel %vm2105, %v3616, 0
        %v3623 = vsel %vm2105, %v3618, 0
        %3625 = vmatprep.subr.bf16.mxu0 0
        %3626 = vmatpush1.bf16.xpose.msra.mxu0 0
        %3627 = vmatprep.subr.bf16.mxu0 0
        %3628 = vmatpush1.bf16.xpose.msra.mxu0 0
        %3629 = vmatprep.subr.bf16.mxu0 0
        %3630 = vmatpush1.bf16.xpose.msra.mxu0 0
        %3631 = vmatprep.subr.bf16.mxu0 0
        %3632 = vmatpush1.bf16.xpose.msra.mxu0 0
        %3633 = vmatprep.subr.bf16.mxu0 0
        %3634 = vmatpush1.bf16.xpose.msra.mxu0 0
        %3635 = vmatprep.subr.bf16.mxu0 0
        %3636 = vmatpush1.bf16.xpose.msra.mxu0 0
        %3637 = vmatprep.subr.bf16.mxu0 0
        %3638 = vmatpush1.bf16.xpose.msra.mxu0 0
        %3639 = vmatprep.subr.bf16.mxu0 0
        %3640 = vmatpush1.bf16.xpose.msra.mxu0 %v3623
        %3641 = vmatprep.subr.bf16.mxu0 0
        %3642 = vmatpush2.bf16.xpose.msra.mxu0 0
        %3643 = vmatprep.subr.bf16.mxu0 0
        %3644 = vmatpush2.bf16.xpose.msra.mxu0 0
        %3645 = vmatprep.subr.bf16.mxu0 0
        %3646 = vmatpush2.bf16.xpose.msra.mxu0 0
        %3647 = vmatprep.subr.bf16.mxu0 0
        %3648 = vmatpush2.bf16.xpose.msra.mxu0 0
        %3649 = vmatprep.subr.bf16.mxu0 0
        %3650 = vmatpush2.bf16.xpose.msra.mxu0 0
        %3651 = vmatprep.subr.bf16.mxu0 0
        %3652 = vmatpush2.bf16.xpose.msra.mxu0 0
        %3653 = vmatprep.subr.bf16.mxu0 0
        %3654 = vmatpush2.bf16.xpose.msra.mxu0 0
        %3655 = vmatprep.subr.bf16.mxu0 0
        %3656 = vmatpush2.bf16.xpose.msra.mxu0 0
        %3657 = vmatprep.mubr.bf16.mxu0 0
        %3658 = vmatmul.mubr.bf16.gmra.mxu0 %v3620
        %v3659 = vpop.f32.mrf.mxu0
        %v3660 = vadd.f32 0.0, %v3659
        %v3661 = vpop.f32.mrf.mxu0
        %v3662 = vpop.f32.mrf.mxu0
        %v3663 = vadd.f32 0.0, %v3662
        %v3664 = vpop.f32.mrf.mxu0
        %3665 = vdwg.mxu0
        %v3666 = vmul.f32 %v3660, 0.17677669
        %v3667 = vmul.f32 %v3663, 0.17677669
        %v3668 = vadd.f32 %v3666, %v3302
        %v3669 = vadd.f32 %v3667, %v3302
        %v3670 = vsel %vm2157, %v3668, -inf
        %3671 = vmax.xlane.f32.xlu0 %v3670
        %v3672 = vpop.xlane.xlu0 %3671
        %v3673 = vsel %vm2157, %v3669, -inf
        %3674 = vmax.xlane.f32.xlu0 %v3673
        %v3675 = vpop.xlane.xlu0 %3674
        %v3676 = vsub.f32 %v3668, %v3672
        %v3677 = vsub.f32 %v3669, %v3675
        %v3678 = vmul.f32 %v3676, 1.442695
        %v3679 = vpow.pop %v3678
        %v3680 = vmul.f32 %v3677, 1.442695
        %v3681 = vpow.pop %v3680
        %v3682 = vsel %vm2157, %v3679, 0.0
        %3683 = vadd.xlane.f32.xlu0 %v3682
        %v3684 = vpop.xlane.xlu0 %3683
        %v3685 = vsel %vm2157, %v3681, 0.0
        %3686 = vadd.xlane.f32.xlu0 %v3685
        %v3687 = vpop.xlane.xlu0 %3686
        %v3688 = vrcp.pop %v3684
        %v3689 = vrcp.pop %v3687
        %v3690 = vmul.f32 %v3679, %v3688
        %v3691 = vmul.f32 %v3681, %v3689
        %v3692 = vpack.c.bf16 %v3691, %v3690
        %3693 = vrot.lane.b32.xlu0 %v3248, 64
        %v3694 = vpop.permute.xlu0 %3693
        %v3697 = vsel %vm2157, %v3692, 0
        %3699 = vmatprep.subr.bf16.mxu0 0
        %3700 = vmatpush1.bf16.msra.mxu0 0
        %3701 = vmatprep.subr.bf16.mxu0 0
        %3702 = vmatpush1.bf16.msra.mxu0 0
        %3703 = vmatprep.subr.bf16.mxu0 0
        %3704 = vmatpush1.bf16.msra.mxu0 0
        %3705 = vmatprep.subr.bf16.mxu0 0
        %3706 = vmatpush1.bf16.msra.mxu0 0
        %3707 = vmatprep.subr.bf16.mxu0 0
        %3708 = vmatpush1.bf16.msra.mxu0 0
        %3709 = vmatprep.subr.bf16.mxu0 0
        %3710 = vmatpush1.bf16.msra.mxu0 0
        %3711 = vmatprep.subr.bf16.mxu0 0
        %3712 = vmatpush1.bf16.msra.mxu0 0
        %3713 = vmatprep.subr.bf16.mxu0 0
        %3714 = vmatpush1.bf16.msra.mxu0 %v3694
        %3715 = vmatprep.subr.bf16.mxu0 0
        %3716 = vmatpush2.bf16.msra.mxu0 0
        %3717 = vmatprep.subr.bf16.mxu0 0
        %3718 = vmatpush2.bf16.msra.mxu0 0
        %3719 = vmatprep.subr.bf16.mxu0 0
        %3720 = vmatpush2.bf16.msra.mxu0 0
        %3721 = vmatprep.subr.bf16.mxu0 0
        %3722 = vmatpush2.bf16.msra.mxu0 0
        %3723 = vmatprep.subr.bf16.mxu0 0
        %3724 = vmatpush2.bf16.msra.mxu0 0
        %3725 = vmatprep.subr.bf16.mxu0 0
        %3726 = vmatpush2.bf16.msra.mxu0 0
        %3727 = vmatprep.subr.bf16.mxu0 0
        %3728 = vmatpush2.bf16.msra.mxu0 0
        %3729 = vmatprep.subr.bf16.mxu0 0
        %3730 = vmatpush2.bf16.msra.mxu0 0
        %3731 = vmatprep.mubr.bf16.mxu0 0
        %3732 = vmatmul.mubr.bf16.gmra.mxu0 %v3697
        %v3733 = vpop.f32.mrf.mxu0
        %v3734 = vadd.f32 0.0, %v3733
        %v3735 = vpop.f32.mrf.mxu0
        %v3736 = vpop.f32.mrf.mxu0
        %v3737 = vadd.f32 0.0, %v3736
        %v3738 = vpop.f32.mrf.mxu0
        %3739 = vdwg.mxu0
        %v3740 = vpack.c.bf16 %v3737, %v3734
        %v3745 = vunpack.c.l.b16 %v2943
        %v3746 = vunpack.c.l.b16 %v2944
        %v3747 = vunpack.c.l.b16 %v2945
        %v3748 = vunpack.c.l.b16 %v2946
        %v3749 = vpack.c.b16 %v3746, %v3745
        %v3750 = vpack.c.b16 %v3748, %v3747
        %v3754 = vsel %vm2105, %v3740, 0
        %3756 = vmatprep.subr.bf16.mxu0 0
        %3757 = vmatpush1.bf16.msra.mxu0 0
        %3758 = vmatprep.subr.bf16.mxu0 0
        %3759 = vmatpush1.bf16.msra.mxu0 0
        %3760 = vmatprep.subr.bf16.mxu0 0
        %3761 = vmatpush1.bf16.msra.mxu0 0
        %3762 = vmatprep.subr.bf16.mxu0 0
        %3763 = vmatpush1.bf16.msra.mxu0 0
        %3764 = vmatprep.subr.bf16.mxu0 0
        %3765 = vmatpush1.bf16.msra.mxu0 0
        %3766 = vmatprep.subr.bf16.mxu0 0
        %3767 = vmatpush1.bf16.msra.mxu0 0
        %3768 = vmatprep.subr.bf16.mxu0 0
        %3769 = vmatpush1.bf16.msra.mxu0 %v3750
        %3770 = vmatprep.subr.bf16.mxu0 0
        %3771 = vmatpush1.bf16.msra.mxu0 %v3749
        %3772 = vmatprep.subr.bf16.mxu0 0
        %3773 = vmatpush2.bf16.msra.mxu0 0
        %3774 = vmatprep.subr.bf16.mxu0 0
        %3775 = vmatpush2.bf16.msra.mxu0 0
        %3776 = vmatprep.subr.bf16.mxu0 0
        %3777 = vmatpush2.bf16.msra.mxu0 0
        %3778 = vmatprep.subr.bf16.mxu0 0
        %3779 = vmatpush2.bf16.msra.mxu0 0
        %3780 = vmatprep.subr.bf16.mxu0 0
        %3781 = vmatpush2.bf16.msra.mxu0 0
        %3782 = vmatprep.subr.bf16.mxu0 0
        %3783 = vmatpush2.bf16.msra.mxu0 0
        %3784 = vmatprep.subr.bf16.mxu0 0
        %3785 = vmatpush2.bf16.msra.mxu0 0
        %3786 = vmatprep.subr.bf16.mxu0 0
        %3787 = vmatpush2.bf16.msra.mxu0 0
        %3788 = vmatprep.mubr.bf16.mxu0 0
        %3789 = vmatmul.mubr.bf16.gmra.mxu0 %v3754
        %v3790 = vpop.f32.mrf.mxu0
        %v3791 = vadd.f32 0.0, %v3790
        %v3792 = vpop.f32.mrf.mxu0
        %v3793 = vpop.f32.mrf.mxu0
        %v3794 = vadd.f32 0.0, %v3793
        %v3795 = vpop.f32.mrf.mxu0
        %3796 = vdwg.mxu0
        %v3797 = vadd.f32 %v3609, %v3791
        %v3798 = vadd.f32 %v3612, %v3794
        %3799 = vrot.lane.b32.xlu0 %v3246, 32
        %v3800 = vpop.permute.xlu0 %3799
        %3801 = vrot.lane.b32.xlu0 %v3247, 32
        %v3802 = vpop.permute.xlu0 %3801
        %v3804 = vsel %vm2105, %v3800, 0
        %v3807 = vsel %vm2105, %v3802, 0
        %3809 = vmatprep.subr.bf16.mxu0 0
        %3810 = vmatpush1.bf16.xpose.msra.mxu0 0
        %3811 = vmatprep.subr.bf16.mxu0 0
        %3812 = vmatpush1.bf16.xpose.msra.mxu0 0
        %3813 = vmatprep.subr.bf16.mxu0 0
        %3814 = vmatpush1.bf16.xpose.msra.mxu0 0
        %3815 = vmatprep.subr.bf16.mxu0 0
        %3816 = vmatpush1.bf16.xpose.msra.mxu0 0
        %3817 = vmatprep.subr.bf16.mxu0 0
        %3818 = vmatpush1.bf16.xpose.msra.mxu0 0
        %3819 = vmatprep.subr.bf16.mxu0 0
        %3820 = vmatpush1.bf16.xpose.msra.mxu0 0
        %3821 = vmatprep.subr.bf16.mxu0 0
        %3822 = vmatpush1.bf16.xpose.msra.mxu0 0
        %3823 = vmatprep.subr.bf16.mxu0 0
        %3824 = vmatpush1.bf16.xpose.msra.mxu0 %v3807
        %3825 = vmatprep.subr.bf16.mxu0 0
        %3826 = vmatpush2.bf16.xpose.msra.mxu0 0
        %3827 = vmatprep.subr.bf16.mxu0 0
        %3828 = vmatpush2.bf16.xpose.msra.mxu0 0
        %3829 = vmatprep.subr.bf16.mxu0 0
        %3830 = vmatpush2.bf16.xpose.msra.mxu0 0
        %3831 = vmatprep.subr.bf16.mxu0 0
        %3832 = vmatpush2.bf16.xpose.msra.mxu0 0
        %3833 = vmatprep.subr.bf16.mxu0 0
        %3834 = vmatpush2.bf16.xpose.msra.mxu0 0
        %3835 = vmatprep.subr.bf16.mxu0 0
        %3836 = vmatpush2.bf16.xpose.msra.mxu0 0
        %3837 = vmatprep.subr.bf16.mxu0 0
        %3838 = vmatpush2.bf16.xpose.msra.mxu0 0
        %3839 = vmatprep.subr.bf16.mxu0 0
        %3840 = vmatpush2.bf16.xpose.msra.mxu0 0
        %3841 = vmatprep.mubr.bf16.mxu0 0
        %3842 = vmatmul.mubr.bf16.gmra.mxu0 %v3804
        %v3843 = vpop.f32.mrf.mxu0
        %v3844 = vadd.f32 0.0, %v3843
        %v3845 = vpop.f32.mrf.mxu0
        %v3846 = vpop.f32.mrf.mxu0
        %v3847 = vadd.f32 0.0, %v3846
        %v3848 = vpop.f32.mrf.mxu0
        %3849 = vdwg.mxu0
        %v3850 = vmul.f32 %v3844, 0.17677669
        %v3851 = vmul.f32 %v3847, 0.17677669
        %v3852 = vadd.f32 %v3850, %v3302
        %v3853 = vadd.f32 %v3851, %v3302
        %v3854 = vsel %vm2157, %v3852, -inf
        %3855 = vmax.xlane.f32.xlu0 %v3854
        %v3856 = vpop.xlane.xlu0 %3855
        %v3857 = vsel %vm2157, %v3853, -inf
        %3858 = vmax.xlane.f32.xlu0 %v3857
        %v3859 = vpop.xlane.xlu0 %3858
        %v3860 = vsub.f32 %v3852, %v3856
        %v3861 = vsub.f32 %v3853, %v3859
        %v3862 = vmul.f32 %v3860, 1.442695
        %v3863 = vpow.pop %v3862
        %v3864 = vmul.f32 %v3861, 1.442695
        %v3865 = vpow.pop %v3864
        %v3866 = vsel %vm2157, %v3863, 0.0
        %3867 = vadd.xlane.f32.xlu0 %v3866
        %v3868 = vpop.xlane.xlu0 %3867
        %v3869 = vsel %vm2157, %v3865, 0.0
        %3870 = vadd.xlane.f32.xlu0 %v3869
        %v3871 = vpop.xlane.xlu0 %3870
        %v3872 = vrcp.pop %v3868
        %v3873 = vrcp.pop %v3871
        %v3874 = vmul.f32 %v3863, %v3872
        %v3875 = vmul.f32 %v3865, %v3873
        %v3876 = vpack.c.bf16 %v3875, %v3874
        %3877 = vrot.lane.b32.xlu0 %v3248, 32
        %v3878 = vpop.permute.xlu0 %3877
        %v3881 = vsel %vm2157, %v3876, 0
        %3883 = vmatprep.subr.bf16.mxu0 0
        %3884 = vmatpush1.bf16.msra.mxu0 0
        %3885 = vmatprep.subr.bf16.mxu0 0
        %3886 = vmatpush1.bf16.msra.mxu0 0
        %3887 = vmatprep.subr.bf16.mxu0 0
        %3888 = vmatpush1.bf16.msra.mxu0 0
        %3889 = vmatprep.subr.bf16.mxu0 0
        %3890 = vmatpush1.bf16.msra.mxu0 0
        %3891 = vmatprep.subr.bf16.mxu0 0
        %3892 = vmatpush1.bf16.msra.mxu0 0
        %3893 = vmatprep.subr.bf16.mxu0 0
        %3894 = vmatpush1.bf16.msra.mxu0 0
        %3895 = vmatprep.subr.bf16.mxu0 0
        %3896 = vmatpush1.bf16.msra.mxu0 0
        %3897 = vmatprep.subr.bf16.mxu0 0
        %3898 = vmatpush1.bf16.msra.mxu0 %v3878
        %3899 = vmatprep.subr.bf16.mxu0 0
        %3900 = vmatpush2.bf16.msra.mxu0 0
        %3901 = vmatprep.subr.bf16.mxu0 0
        %3902 = vmatpush2.bf16.msra.mxu0 0
        %3903 = vmatprep.subr.bf16.mxu0 0
        %3904 = vmatpush2.bf16.msra.mxu0 0
        %3905 = vmatprep.subr.bf16.mxu0 0
        %3906 = vmatpush2.bf16.msra.mxu0 0
        %3907 = vmatprep.subr.bf16.mxu0 0
        %3908 = vmatpush2.bf16.msra.mxu0 0
        %3909 = vmatprep.subr.bf16.mxu0 0
        %3910 = vmatpush2.bf16.msra.mxu0 0
        %3911 = vmatprep.subr.bf16.mxu0 0
        %3912 = vmatpush2.bf16.msra.mxu0 0
        %3913 = vmatprep.subr.bf16.mxu0 0
        %3914 = vmatpush2.bf16.msra.mxu0 0
        %3915 = vmatprep.mubr.bf16.mxu0 0
        %3916 = vmatmul.mubr.bf16.gmra.mxu0 %v3881
        %v3917 = vpop.f32.mrf.mxu0
        %v3918 = vadd.f32 0.0, %v3917
        %v3919 = vpop.f32.mrf.mxu0
        %v3920 = vpop.f32.mrf.mxu0
        %v3921 = vadd.f32 0.0, %v3920
        %v3922 = vpop.f32.mrf.mxu0
        %3923 = vdwg.mxu0
        %v3924 = vpack.c.bf16 %v3921, %v3918
        %v3929 = vunpack.c.l.b16 %v2947
        %v3930 = vunpack.c.l.b16 %v2948
        %v3931 = vunpack.c.l.b16 %v2949
        %v3932 = vunpack.c.l.b16 %v2950
        %v3933 = vpack.c.b16 %v3930, %v3929
        %v3934 = vpack.c.b16 %v3932, %v3931
        %v3938 = vsel %vm2105, %v3924, 0
        %3940 = vmatprep.subr.bf16.mxu0 0
        %3941 = vmatpush1.bf16.msra.mxu0 0
        %3942 = vmatprep.subr.bf16.mxu0 0
        %3943 = vmatpush1.bf16.msra.mxu0 0
        %3944 = vmatprep.subr.bf16.mxu0 0
        %3945 = vmatpush1.bf16.msra.mxu0 0
        %3946 = vmatprep.subr.bf16.mxu0 0
        %3947 = vmatpush1.bf16.msra.mxu0 0
        %3948 = vmatprep.subr.bf16.mxu0 0
        %3949 = vmatpush1.bf16.msra.mxu0 0
        %3950 = vmatprep.subr.bf16.mxu0 0
        %3951 = vmatpush1.bf16.msra.mxu0 0
        %3952 = vmatprep.subr.bf16.mxu0 0
        %3953 = vmatpush1.bf16.msra.mxu0 %v3934
        %3954 = vmatprep.subr.bf16.mxu0 0
        %3955 = vmatpush1.bf16.msra.mxu0 %v3933
        %3956 = vmatprep.subr.bf16.mxu0 0
        %3957 = vmatpush2.bf16.msra.mxu0 0
        %3958 = vmatprep.subr.bf16.mxu0 0
        %3959 = vmatpush2.bf16.msra.mxu0 0
        %3960 = vmatprep.subr.bf16.mxu0 0
        %3961 = vmatpush2.bf16.msra.mxu0 0
        %3962 = vmatprep.subr.bf16.mxu0 0
        %3963 = vmatpush2.bf16.msra.mxu0 0
        %3964 = vmatprep.subr.bf16.mxu0 0
        %3965 = vmatpush2.bf16.msra.mxu0 0
        %3966 = vmatprep.subr.bf16.mxu0 0
        %3967 = vmatpush2.bf16.msra.mxu0 0
        %3968 = vmatprep.subr.bf16.mxu0 0
        %3969 = vmatpush2.bf16.msra.mxu0 0
        %3970 = vmatprep.subr.bf16.mxu0 0
        %3971 = vmatpush2.bf16.msra.mxu0 0
        %3972 = vmatprep.mubr.bf16.mxu0 0
        %3973 = vmatmul.mubr.bf16.gmra.mxu0 %v3938
        %v3974 = vpop.f32.mrf.mxu0
        %v3975 = vadd.f32 0.0, %v3974
        %v3976 = vpop.f32.mrf.mxu0
        %v3977 = vpop.f32.mrf.mxu0
        %v3978 = vadd.f32 0.0, %v3977
        %v3979 = vpop.f32.mrf.mxu0
        %3980 = vdwg.mxu0
        %v3981 = vadd.f32 %v3797, %v3975
        %v3982 = vadd.f32 %v3798, %v3978
        %v3984 = vlaneseq
        %v3985 = vshrl.u32 %v3984, 7
        %v3986 = vsub.s32 0, %v3985
        %v3987 = vrot.slane %v2951, %v3986
        %v3989 = vadd.f32 %v3981, %v3987
        %v3990 = vadd.f32 %v3982, %v3987
        %v3991 = vadd.f32 %v2882, %v3989
        %v3992 = vadd.f32 %v2883, %v3990
        %3993 = vadd.xlane.f32.xlu0 %v3991
        %v3994 = vpop.xlane.xlu0 %3993
        %3995 = vadd.xlane.f32.xlu0 %v3992
        %v3996 = vpop.xlane.xlu0 %3995
        %v3997 = vmul.f32 %v3994, %v2849
        %v3998 = vmul.f32 %v3996, %v2849
        %v3999 = vsub.f32 %v3991, %v3997
        %v4000 = vsub.f32 %v3992, %v3998
        %v4001 = vmul.f32 %v3999, %v3999
        %v4002 = vmul.f32 %v4000, %v4000
        %4003 = vadd.xlane.f32.xlu0 %v4001
        %v4004 = vpop.xlane.xlu0 %4003
        %4005 = vadd.xlane.f32.xlu0 %v4002
        %v4006 = vpop.xlane.xlu0 %4005
        %v4007 = vmul.f32 %v4004, %v2849
        %v4008 = vmul.f32 %v4006, %v2849
        %v4009 = vadd.f32 %v4007, 1e-05
        %v4010 = vadd.f32 %v4008, 1e-05
        %v4011 = vrsqrt.pop %v4009
        %v4012 = vrsqrt.pop %v4010
        %v4013 = vmul.f32 %v3999, %v4011
        %v4014 = vmul.f32 %v4000, %v4012
        %v4016 = vlaneseq
        %v4017 = vshrl.u32 %v4016, 7
        %v4018 = vsub.s32 0, %v4017
        %v4019 = vrot.slane %v2953, %v4018
        %v4021 = vadd.f32 %v4013, %v4019
        %v4022 = vadd.f32 %v4014, %v4019
        %v4024 = vlaneseq
        %v4025 = vshrl.u32 %v4024, 7
        %v4026 = vsub.s32 0, %v4025
        %v4027 = vrot.slane %v2952, %v4026
        %v4029 = vmul.f32 %v4021, %v4027
        %v4030 = vmul.f32 %v4022, %v4027
        %v4031 = vld [vmem:[%s1704] sm:$0xff]
        %v4032 = vld [vmem:[%s1704 + $0x8] sm:$0xff]
        %v4033 = vld [vmem:[%s1704 + $0x10] sm:$0xff]
        %v4034 = vld [vmem:[%s1704 + $0x18] sm:$0xff]
        %v4035 = vld [vmem:[%s1704 + $0x20] sm:$0xff]
        %v4036 = vld [vmem:[%s1704 + $0x28] sm:$0xff]
        %v4037 = vld [vmem:[%s1704 + $0x30] sm:$0xff]
        %v4038 = vld [vmem:[%s1704 + $0x38] sm:$0xff]
        %v4039 = vld [vmem:[%s1704 + $0x40] sm:$0xff]
        %v4040 = vld [vmem:[%s1704 + $0x48] sm:$0xff]
        %v4041 = vld [vmem:[%s1704 + $0x50] sm:$0xff]
        %v4042 = vld [vmem:[%s1704 + $0x58] sm:$0xff]
        %v4043 = vld [vmem:[%s1704 + $0x60] sm:$0xff]
        %v4044 = vld [vmem:[%s1704 + $0x68] sm:$0xff]
        %v4045 = vld [vmem:[%s1704 + $0x70] sm:$0xff]
        %v4046 = vld [vmem:[%s1704 + $0x78] sm:$0xff]
        %v4047 = vld [vmem:[%s1708] sm:$0x3]
        %v4048 = vld [vmem:[%s1713] sm:$0xf]
        %v4049 = vld [vmem:[%s1713 + $0x4] sm:$0xf]
        %v4050 = vld [vmem:[%s1713 + $0x8] sm:$0xf]
        %v4051 = vld [vmem:[%s1713 + $0xc] sm:$0xf]
        %v4052 = vld [vmem:[%s1713 + $0x10] sm:$0xf]
        %v4053 = vld [vmem:[%s1713 + $0x14] sm:$0xf]
        %v4054 = vld [vmem:[%s1713 + $0x18] sm:$0xf]
        %v4055 = vld [vmem:[%s1713 + $0x1c] sm:$0xf]
        %v4056 = vld [vmem:[%s1713 + $0x20] sm:$0xf]
        %v4057 = vld [vmem:[%s1713 + $0x24] sm:$0xf]
        %v4058 = vld [vmem:[%s1713 + $0x28] sm:$0xf]
        %v4059 = vld [vmem:[%s1713 + $0x2c] sm:$0xf]
        %v4060 = vld [vmem:[%s1713 + $0x30] sm:$0xf]
        %v4061 = vld [vmem:[%s1713 + $0x34] sm:$0xf]
        %v4062 = vld [vmem:[%s1713 + $0x38] sm:$0xf]
        %v4063 = vld [vmem:[%s1713 + $0x3c] sm:$0xf]
        %v4064 = vld [vmem:[%s1713 + $0x40] sm:$0xf]
        %v4065 = vld [vmem:[%s1713 + $0x44] sm:$0xf]
        %v4066 = vld [vmem:[%s1713 + $0x48] sm:$0xf]
        %v4067 = vld [vmem:[%s1713 + $0x4c] sm:$0xf]
        %v4068 = vld [vmem:[%s1713 + $0x50] sm:$0xf]
        %v4069 = vld [vmem:[%s1713 + $0x54] sm:$0xf]
        %v4070 = vld [vmem:[%s1713 + $0x58] sm:$0xf]
        %v4071 = vld [vmem:[%s1713 + $0x5c] sm:$0xf]
        %v4072 = vld [vmem:[%s1713 + $0x60] sm:$0xf]
        %v4073 = vld [vmem:[%s1713 + $0x64] sm:$0xf]
        %v4074 = vld [vmem:[%s1713 + $0x68] sm:$0xf]
        %v4075 = vld [vmem:[%s1713 + $0x6c] sm:$0xf]
        %v4076 = vld [vmem:[%s1713 + $0x70] sm:$0xf]
        %v4077 = vld [vmem:[%s1713 + $0x74] sm:$0xf]
        %v4078 = vld [vmem:[%s1713 + $0x78] sm:$0xf]
        %v4079 = vld [vmem:[%s1713 + $0x7c] sm:$0xf]
        %v4080 = vld [vmem:[%s1716] sm:$0x1]
        %v4081 = vld [vmem:[%s1719] sm:$0x1]
        %v4082 = vld [vmem:[%s1722] sm:$0x1]
        %v4083 = vpack.c.bf16 %v4030, %v4029
        %v4085 = vlaneseq
        %v4086 = vshrl.u32 %v4085, 7
        %v4087 = vsub.s32 0, %v4086
        %v4088 = vrot.slane %v4047, %v4087
        %v4089 = vlaneseq
        %v4090 = vshrl.u32 %v4089, 7
        %v4091 = vsub.s32 1, %v4090
        %v4092 = vrot.slane %v4047, %v4091
        %v4111 = vunpack.c.l.b16 %v4031
        %v4112 = vunpack.c.h.b16 %v4031
        %v4113 = vunpack.c.l.b16 %v4032
        %v4114 = vunpack.c.h.b16 %v4032
        %v4115 = vunpack.c.l.b16 %v4033
        %v4116 = vunpack.c.h.b16 %v4033
        %v4117 = vunpack.c.l.b16 %v4034
        %v4118 = vunpack.c.h.b16 %v4034
        %v4119 = vunpack.c.l.b16 %v4035
        %v4120 = vunpack.c.h.b16 %v4035
        %v4121 = vunpack.c.l.b16 %v4036
        %v4122 = vunpack.c.h.b16 %v4036
        %v4123 = vunpack.c.l.b16 %v4037
        %v4124 = vunpack.c.h.b16 %v4037
        %v4125 = vunpack.c.l.b16 %v4038
        %v4126 = vunpack.c.h.b16 %v4038
        %v4127 = vunpack.c.l.b16 %v4039
        %v4128 = vunpack.c.h.b16 %v4039
        %v4129 = vunpack.c.l.b16 %v4040
        %v4130 = vunpack.c.h.b16 %v4040
        %v4131 = vunpack.c.l.b16 %v4041
        %v4132 = vunpack.c.h.b16 %v4041
        %v4133 = vunpack.c.l.b16 %v4042
        %v4134 = vunpack.c.h.b16 %v4042
        %v4135 = vunpack.c.l.b16 %v4043
        %v4136 = vunpack.c.h.b16 %v4043
        %v4137 = vunpack.c.l.b16 %v4044
        %v4138 = vunpack.c.h.b16 %v4044
        %v4139 = vunpack.c.l.b16 %v4045
        %v4140 = vunpack.c.h.b16 %v4045
        %v4141 = vunpack.c.l.b16 %v4046
        %v4142 = vunpack.c.h.b16 %v4046
        %v4143 = vpack.c.b16 %v4113, %v4111
        %v4144 = vpack.c.b16 %v4114, %v4112
        %v4145 = vpack.c.b16 %v4117, %v4115
        %v4146 = vpack.c.b16 %v4118, %v4116
        %v4147 = vpack.c.b16 %v4121, %v4119
        %v4148 = vpack.c.b16 %v4122, %v4120
        %v4149 = vpack.c.b16 %v4125, %v4123
        %v4150 = vpack.c.b16 %v4126, %v4124
        %v4151 = vpack.c.b16 %v4129, %v4127
        %v4152 = vpack.c.b16 %v4130, %v4128
        %v4153 = vpack.c.b16 %v4133, %v4131
        %v4154 = vpack.c.b16 %v4134, %v4132
        %v4155 = vpack.c.b16 %v4137, %v4135
        %v4156 = vpack.c.b16 %v4138, %v4136
        %v4157 = vpack.c.b16 %v4141, %v4139
        %v4158 = vpack.c.b16 %v4142, %v4140
        %4175 = vmatprep.subr.bf16.mxu0 %v4158
        %4176 = vmatpush1.bf16.msra.mxu0 %v4157
        %4177 = vmatprep.subr.bf16.mxu0 %v4156
        %4178 = vmatpush1.bf16.msra.mxu0 %v4155
        %4179 = vmatprep.subr.bf16.mxu0 %v4154
        %4180 = vmatpush1.bf16.msra.mxu0 %v4153
        %4181 = vmatprep.subr.bf16.mxu0 %v4152
        %4182 = vmatpush1.bf16.msra.mxu0 %v4151
        %4183 = vmatprep.subr.bf16.mxu0 %v4150
        %4184 = vmatpush1.bf16.msra.mxu0 %v4149
        %4185 = vmatprep.subr.bf16.mxu0 %v4148
        %4186 = vmatpush1.bf16.msra.mxu0 %v4147
        %4187 = vmatprep.subr.bf16.mxu0 %v4146
        %4188 = vmatpush1.bf16.msra.mxu0 %v4145
        %4189 = vmatprep.subr.bf16.mxu0 %v4144
        %4190 = vmatpush1.bf16.msra.mxu0 %v4143
        %4191 = vmatprep.subr.bf16.mxu0 0
        %4192 = vmatpush2.bf16.msra.mxu0 0
        %4193 = vmatprep.subr.bf16.mxu0 0
        %4194 = vmatpush2.bf16.msra.mxu0 0
        %4195 = vmatprep.subr.bf16.mxu0 0
        %4196 = vmatpush2.bf16.msra.mxu0 0
        %4197 = vmatprep.subr.bf16.mxu0 0
        %4198 = vmatpush2.bf16.msra.mxu0 0
        %4199 = vmatprep.subr.bf16.mxu0 0
        %4200 = vmatpush2.bf16.msra.mxu0 0
        %4201 = vmatprep.subr.bf16.mxu0 0
        %4202 = vmatpush2.bf16.msra.mxu0 0
        %4203 = vmatprep.subr.bf16.mxu0 0
        %4204 = vmatpush2.bf16.msra.mxu0 0
        %4205 = vmatprep.subr.bf16.mxu0 0
        %4206 = vmatpush2.bf16.msra.mxu0 0
        %4207 = vmatprep.mubr.bf16.mxu0 0
        %4208 = vmatmul.mubr.bf16.gmra.mxu0 %v4083
        %v4209 = vpop.f32.mrf.mxu0
        %v4210 = vadd.f32 %v4088, %v4209
        %v4211 = vpop.f32.mrf.mxu0
        %v4212 = vadd.f32 %v4092, %v4211
        %v4213 = vpop.f32.mrf.mxu0
        %v4214 = vadd.f32 %v4088, %v4213
        %v4215 = vpop.f32.mrf.mxu0
        %v4216 = vadd.f32 %v4092, %v4215
        %4217 = vdwg.mxu0
        %v4218 = vmax.f32 %v4210, 0.0
        %v4219 = vmax.f32 %v4212, 0.0
        %v4220 = vmax.f32 %v4214, 0.0
        %v4221 = vmax.f32 %v4216, 0.0
        %v4222 = vpack.c.bf16 %v4220, %v4218
        %v4223 = vpack.c.bf16 %v4221, %v4219
        %v4225 = vlaneseq
        %v4226 = vshrl.u32 %v4225, 7
        %v4227 = vsub.s32 0, %v4226
        %v4228 = vrot.slane %v4080, %v4227
        %v4262 = vunpack.c.l.b16 %v4048
        %v4263 = vunpack.c.l.b16 %v4049
        %v4264 = vunpack.c.l.b16 %v4050
        %v4265 = vunpack.c.l.b16 %v4051
        %v4266 = vunpack.c.l.b16 %v4052
        %v4267 = vunpack.c.l.b16 %v4053
        %v4268 = vunpack.c.l.b16 %v4054
        %v4269 = vunpack.c.l.b16 %v4055
        %v4270 = vunpack.c.l.b16 %v4056
        %v4271 = vunpack.c.l.b16 %v4057
        %v4272 = vunpack.c.l.b16 %v4058
        %v4273 = vunpack.c.l.b16 %v4059
        %v4274 = vunpack.c.l.b16 %v4060
        %v4275 = vunpack.c.l.b16 %v4061
        %v4276 = vunpack.c.l.b16 %v4062
        %v4277 = vunpack.c.l.b16 %v4063
        %v4278 = vunpack.c.l.b16 %v4064
        %v4279 = vunpack.c.l.b16 %v4065
        %v4280 = vunpack.c.l.b16 %v4066
        %v4281 = vunpack.c.l.b16 %v4067
        %v4282 = vunpack.c.l.b16 %v4068
        %v4283 = vunpack.c.l.b16 %v4069
        %v4284 = vunpack.c.l.b16 %v4070
        %v4285 = vunpack.c.l.b16 %v4071
        %v4286 = vunpack.c.l.b16 %v4072
        %v4287 = vunpack.c.l.b16 %v4073
        %v4288 = vunpack.c.l.b16 %v4074
        %v4289 = vunpack.c.l.b16 %v4075
        %v4290 = vunpack.c.l.b16 %v4076
        %v4291 = vunpack.c.l.b16 %v4077
        %v4292 = vunpack.c.l.b16 %v4078
        %v4293 = vunpack.c.l.b16 %v4079
        %v4294 = vpack.c.b16 %v4263, %v4262
        %v4295 = vpack.c.b16 %v4265, %v4264
        %v4296 = vpack.c.b16 %v4267, %v4266
        %v4297 = vpack.c.b16 %v4269, %v4268
        %v4298 = vpack.c.b16 %v4271, %v4270
        %v4299 = vpack.c.b16 %v4273, %v4272
        %v4300 = vpack.c.b16 %v4275, %v4274
        %v4301 = vpack.c.b16 %v4277, %v4276
        %v4302 = vpack.c.b16 %v4279, %v4278
        %v4303 = vpack.c.b16 %v4281, %v4280
        %v4304 = vpack.c.b16 %v4283, %v4282
        %v4305 = vpack.c.b16 %v4285, %v4284
        %v4306 = vpack.c.b16 %v4287, %v4286
        %v4307 = vpack.c.b16 %v4289, %v4288
        %v4308 = vpack.c.b16 %v4291, %v4290
        %v4309 = vpack.c.b16 %v4293, %v4292
        %4326 = vmatprep.subr.bf16.mxu0 0
        %4327 = vmatpush1.bf16.msra.mxu0 %v4301
        %4328 = vmatprep.subr.bf16.mxu0 0
        %4329 = vmatpush1.bf16.msra.mxu0 %v4300
        %4330 = vmatprep.subr.bf16.mxu0 0
        %4331 = vmatpush1.bf16.msra.mxu0 %v4299
        %4332 = vmatprep.subr.bf16.mxu0 0
        %4333 = vmatpush1.bf16.msra.mxu0 %v4298
        %4334 = vmatprep.subr.bf16.mxu0 0
        %4335 = vmatpush1.bf16.msra.mxu0 %v4297
        %4336 = vmatprep.subr.bf16.mxu0 0
        %4337 = vmatpush1.bf16.msra.mxu0 %v4296
        %4338 = vmatprep.subr.bf16.mxu0 0
        %4339 = vmatpush1.bf16.msra.mxu0 %v4295
        %4340 = vmatprep.subr.bf16.mxu0 0
        %4341 = vmatpush1.bf16.msra.mxu0 %v4294
        %4342 = vmatprep.subr.bf16.mxu0 0
        %4343 = vmatpush2.bf16.msra.mxu0 %v4309
        %4344 = vmatprep.subr.bf16.mxu0 0
        %4345 = vmatpush2.bf16.msra.mxu0 %v4308
        %4346 = vmatprep.subr.bf16.mxu0 0
        %4347 = vmatpush2.bf16.msra.mxu0 %v4307
        %4348 = vmatprep.subr.bf16.mxu0 0
        %4349 = vmatpush2.bf16.msra.mxu0 %v4306
        %4350 = vmatprep.subr.bf16.mxu0 0
        %4351 = vmatpush2.bf16.msra.mxu0 %v4305
        %4352 = vmatprep.subr.bf16.mxu0 0
        %4353 = vmatpush2.bf16.msra.mxu0 %v4304
        %4354 = vmatprep.subr.bf16.mxu0 0
        %4355 = vmatpush2.bf16.msra.mxu0 %v4303
        %4356 = vmatprep.subr.bf16.mxu0 0
        %4357 = vmatpush2.bf16.msra.mxu0 %v4302
        %4358 = vmatprep.mubr.bf16.mxu0 %v4223
        %4359 = vmatmul.mubr.bf16.gmra.mxu0 %v4222
        %v4360 = vpop.f32.mrf.mxu0
        %v4361 = vadd.f32 %v4228, %v4360
        %v4362 = vpop.f32.mrf.mxu0
        %v4363 = vpop.f32.mrf.mxu0
        %v4364 = vadd.f32 %v4228, %v4363
        %v4365 = vpop.f32.mrf.mxu0
        %4366 = vdwg.mxu0
        %v4367 = vadd.f32 %v4029, %v4361
        %v4368 = vadd.f32 %v4030, %v4364
        %4369 = vadd.xlane.f32.xlu0 %v4367
        %v4370 = vpop.xlane.xlu0 %4369
        %4371 = vadd.xlane.f32.xlu0 %v4368
        %v4372 = vpop.xlane.xlu0 %4371
        %v4373 = vmul.f32 %v4370, %v2849
        %v4374 = vmul.f32 %v4372, %v2849
        %v4375 = vsub.f32 %v4367, %v4373
        %v4376 = vsub.f32 %v4368, %v4374
        %v4377 = vmul.f32 %v4375, %v4375
        %v4378 = vmul.f32 %v4376, %v4376
        %4379 = vadd.xlane.f32.xlu0 %v4377
        %v4380 = vpop.xlane.xlu0 %4379
        %4381 = vadd.xlane.f32.xlu0 %v4378
        %v4382 = vpop.xlane.xlu0 %4381
        %v4383 = vmul.f32 %v4380, %v2849
        %v4384 = vmul.f32 %v4382, %v2849
        %v4385 = vadd.f32 %v4383, 1e-05
        %v4386 = vadd.f32 %v4384, 1e-05
        %v4387 = vrsqrt.pop %v4385
        %v4388 = vrsqrt.pop %v4386
        %v4389 = vmul.f32 %v4375, %v4387
        %v4390 = vmul.f32 %v4376, %v4388
        %v4392 = vlaneseq
        %v4393 = vshrl.u32 %v4392, 7
        %v4394 = vsub.s32 0, %v4393
        %v4395 = vrot.slane %v4082, %v4394
        %v4397 = vadd.f32 %v4389, %v4395
        %v4398 = vadd.f32 %v4390, %v4395
        %v4400 = vlaneseq
        %v4401 = vshrl.u32 %v4400, 7
        %v4402 = vsub.s32 0, %v4401
        %v4403 = vrot.slane %v4081, %v4402
        %v4405 = vmul.f32 %v4397, %v4403
        %v4406 = vmul.f32 %v4398, %v4403
        %4407 = vst [vmem:[#allocation2] sm:$0xff] %v4405
        %4408 = vst [vmem:[#allocation2 + $0x8] sm:$0xff] %v4406
        %p4409 = scmp.eq.s32.totalorder %s102, 1
        // Predicated region
        $region197: #{ane_transformer_forward.3} parent=147 // pred_check
          %p4410 = pneg %p4409
        $region198: #{ane_transformer_forward.3} parent=147 // pred_check_branch
          %4412 = sbr.rel (%p4410) target = $region200
        $region199: #{ane_transformer_forward.3} parent=147 // pred_region
          %4413 = vst [vmem:[%s1638] sm:$0xff] %v4405
          %4414 = vst [vmem:[%s1638 + $0x8] sm:$0xff] %v4406
        $region200: #{ane_transformer_forward.3} parent=147 // pred_fallthru
          _
        %s4415 = sand.u32 %s949, 1
        %s4416 = scalar_lea.sflag [#allocation5], %s4415
        %s4417 = sand.u32 %s949, 1
        %s4418 = smul.addr %s4417, 16
        %s4419 = scalar_lea.vmem [#allocation21], %s4418
        // Predicated region
        $region201: #{ane_transformer_forward.3} parent=147 // pred_check
          %p4420 = pneg %p959
        $region202: #{ane_transformer_forward.3} parent=147 // pred_check_branch
          %4422 = sbr.rel (%p4420) target = $region204
        $region203: #{ane_transformer_forward.3} parent=147 // pred_region
          %s4424 = ssub.s32 256, 256
          %4425 = vsyncadd %s4416, %s4424
          %s4426 = smul.addr %s101, 2
          %s4427 = smul.addr %s4426, 128
          %s4428 = scalar_lea.hbm %s65, %s4427
          %s4429 = sshll.u32 %s4419, 4
          %s4430 = int_to_ptr.vmem [resolvable:$true] %s4429
          %4435 = dma.vmem_to_hbm [thread:$0]  %s4430, 256, %s4428, %s4416, 128, 128, 8
        $region204: #{ane_transformer_forward.3} parent=147 // pred_fallthru
          _
      $region148: #{ane_transformer_forward.3} parent=5 // pred_fallthru
        _
      %p4436 = scmp.le.s32.totalorder 2, %s92
      // Predicated region
      $region205: #{ane_transformer_forward.3} parent=5 // pred_check
        %p4437 = pneg %p4436
      $region206: #{ane_transformer_forward.3} parent=5 // pred_check_branch
        %4439 = sbr.rel (%p4437) target = $region208
      $region207: #{ane_transformer_forward.3} parent=5 // pred_region
        %s4440 = ssub.s32 %s92, 2
        // Predicated region
        $region209: #{ane_transformer_forward.3} parent=207 // pred_check
          %p4441 = pneg %p965
        $region210: #{ane_transformer_forward.3} parent=207 // pred_check_branch
          %4443 = sbr.rel (%p4441) target = $region212
        $region211: #{ane_transformer_forward.3} parent=207 // pred_region
          %s4444 = sand.u32 %s950, 1
          %s4445 = scalar_lea.sflag [#allocation5], %s4444
          %s4446 = sand.u32 %s950, 1
          %s4447 = smul.addr %s4446, 16
          %s4448 = scalar_lea.vmem [#allocation21], %s4447
          %4449 = dma.done %s4445, 256
        $region212: #{ane_transformer_forward.3} parent=207 // pred_fallthru
          _
      $region208: #{ane_transformer_forward.3} parent=5 // pred_fallthru
        _
    $region6: #{ane_transformer_forward.3} parent=1 // loop_footer
      %s96 = sadd.s32 1, %s92
    $region7: #{ane_transformer_forward.3} parent=1 // loop_footer_branch
      %91 = sbr.rel target = $region3
    $region8: #{ane_transformer_forward.3} parent=1 // loop_exit
      _
    %4450 = vsyncpa [#allocation4], 1
    %s4451 = scalar_lea.sflag [#allocation4], 1
    %4452 = vsyncpa %s4451, 1
    %4453 = vsyncpa [#allocation7], 1
    %s4454 = scalar_lea.sflag [#allocation7], 1
    %4455 = vsyncpa %s4454, 1
    %4456 = vsyncpa [#allocation10], 1
    %s4457 = scalar_lea.sflag [#allocation10], 1
    %4458 = vsyncpa %s4457, 1
    %4459 = vsyncpa [#allocation13], 1
    %s4460 = scalar_lea.sflag [#allocation13], 1
    %4461 = vsyncpa %s4460, 1
    %4462 = vsyncpa [#allocation16], 1
    %s4463 = scalar_lea.sflag [#allocation16], 1
    %4464 = vsyncpa %s4463, 1
    %4465 = vsyncpa [#allocation19], 1
    %s4466 = scalar_lea.sflag [#allocation19], 1
    %4467 = vsyncpa %s4466, 1
    %4468 = vsyncpa [#allocation5], 1
    %s4469 = scalar_lea.sflag [#allocation5], 1
    %4470 = vsyncpa %s4469, 1

</llo_original>
